<compile_context>
chip_gen: v7x
topology: tpu7x:2x2x1
jax: 0.10.0
libtpu: 0.0.40
codegen_flags: <defaults>
</compile_context>

<pallas_src>
import functools

import jax
import jax.numpy as jnp
from jax.experimental import pallas as pl
from jax.experimental.pallas import tpu as pltpu


HIDDEN_DIMS = (1024, 1024, 2048)
NEG_SLOPE = 0.01          # torch nn.LeakyReLU default negative_slope
_LANE = 128
_SUBLANE = 16             # multiple of 16 -> clean bf16 sublane packing


def _round_up(x: int, m: int) -> int:
    return (x + m - 1) // m * m


def _pick_tile(total: int, t_max: int, align: int) -> int:
    """Largest multiple of `align` <= min(t_max, total) that divides `total`.
    `total` must itself be a multiple of `align`."""
    t = max(align, (min(t_max, total) // align) * align)
    while total % t:
        t -= align
    return t


def _vmem_budget_bytes() -> int:
    """Per-generation VMEM budget: leave headroom for compiler scratch.
    v5e/v6e: 128 MiB physical -> up to 96 MiB; v7x: 64 MiB physical -> 48 MiB."""
    try:
        cap = int(getattr(pltpu.get_tpu_info(), "vmem_capacity_bytes",
                          64 * 1024 * 1024))
    except Exception:
        cap = 64 * 1024 * 1024          # conservative default (v7x-safe)
    return max(32 * 1024 * 1024, min(cap - 16 * 1024 * 1024, 96 * 1024 * 1024))


# ---------------------------------------------------------------------------
# Kernel 1: hidden stack (code -> 1024 -> 1024 -> 2048, LeakyReLU after each)
# ---------------------------------------------------------------------------
def _s3_hidden_kernel(x_ref, w1_ref, b1_ref, w2_ref, b2_ref, w3_ref, b3_ref,
                      *out_refs, negative_slope: float):
    def dense_act(h_bf16, w_ref, b_ref):
        y = jnp.dot(h_bf16, w_ref[...], preferred_element_type=jnp.float32)
        y = y + b_ref[...]
        return jnp.where(y >= 0, y, negative_slope * y)   # LeakyReLU(0.01)

    h = dense_act(x_ref[...].astype(jnp.bfloat16), w1_ref, b1_ref)
    h = dense_act(h.astype(jnp.bfloat16), w2_ref, b2_ref)
    h = dense_act(h.astype(jnp.bfloat16), w3_ref, b3_ref)

    out_refs[0][...] = h.astype(jnp.bfloat16)   # bf16 feed to the output layer
    if len(out_refs) > 1:                       # optional f32 `acts` output
        out_refs[1][...] = h


# ---------------------------------------------------------------------------
# Kernel 2: output layer, streaming W_out column tiles (lane-dense)
# ---------------------------------------------------------------------------
def _s3_out_kernel(h_ref, wo_ref, bo_ref, expr_ref):
    y = jnp.dot(h_ref[...], wo_ref[...], preferred_element_type=jnp.float32)
    expr_ref[...] = y + bo_ref[...]


# ---------------------------------------------------------------------------
# Wrapper
# ---------------------------------------------------------------------------
def s3_decoder_forward(params, code, n_genes: int | None = None,
                       output_acts: bool = False, *,
                       tm_max: int = 256, tn_max: int | None = None):
    """Pallas implementation of S3_decoder.forward."""
    (w1, b1), (w2, b2), (w3, b3), (wo, bo) = params
    batch, dim_code = code.shape
    d1, d2, d3 = HIDDEN_DIMS
    n_stored = wo.shape[1]
    if n_genes is None:
        n_genes = n_stored
    assert n_genes <= n_stored
    assert w1.shape == (dim_code, d1) and w2.shape == (d1, d2)
    assert w3.shape == (d2, d3) and wo.shape[0] == d3

    vmem_budget = _vmem_budget_bytes()
    if tn_max is None:
        # 2048-wide column tiles when VMEM is plentiful (v5e/v6e), 1024 on v7x.
        tn_max = 2048 if vmem_budget >= 64 * 1024 * 1024 else 1024

    # ---- batch tiling (code is tiny; per-call pad here is negligible) ------
    tm = min(tm_max, _round_up(batch, _SUBLANE))
    m_pad = _round_up(batch, tm)
    x = code.astype(jnp.float32)
    if m_pad != batch:
        x = jnp.pad(x, ((0, m_pad - batch), (0, 0)))

    # ---- output-gene tiling: weights are pre-padded at init ---------------
    n_pad = n_stored
    if n_pad % _LANE:
        # Fallback for raw/unpadded parameters; init_s3_decoder_params pads
        # once so this per-call copy of W_out is normally never taken.
        n_pad = _round_up(n_stored, _LANE)
        wo = jnp.pad(wo, ((0, 0), (0, n_pad - n_stored)))
        bo = jnp.pad(bo, ((0, 0), (0, n_pad - n_stored)))
    tn = _pick_tile(n_pad, tn_max, _LANE)

    # ---- call 1: hidden stack ----------------------------------------------
    hidden_kernel = functools.partial(_s3_hidden_kernel,
                                      negative_slope=NEG_SLOPE)
    hid_out_shapes = [jax.ShapeDtypeStruct((m_pad, d3), jnp.bfloat16)]
    hid_out_specs = [pl.BlockSpec((tm, d3), lambda i: (i, 0))]
    if output_acts:
        hid_out_shapes.append(jax.ShapeDtypeStruct((m_pad, d3), jnp.float32))
        hid_out_specs.append(pl.BlockSpec((tm, d3), lambda i: (i, 0)))

    hidden_outs = pl.pallas_call(
        hidden_kernel,
        out_shape=tuple(hid_out_shapes),
        grid_spec=pltpu.PrefetchScalarGridSpec(
            num_scalar_prefetch=0,
            grid=(m_pad // tm,),
            in_specs=[
                pl.BlockSpec((tm, dim_code), lambda i: (i, 0)),   # code tile
                pl.BlockSpec((dim_code, d1), lambda i: (0, 0)),   # W1 (whole)
                pl.BlockSpec((1, d1),        lambda i: (0, 0)),   # b1
                pl.BlockSpec((d1, d2),       lambda i: (0, 0)),   # W2 (whole)
                pl.BlockSpec((1, d2),        lambda i: (0, 0)),   # b2
                pl.BlockSpec((d2, d3),       lambda i: (0, 0)),   # W3 (whole)
                pl.BlockSpec((1, d3),        lambda i: (0, 0)),   # b3
            ],
            out_specs=hid_out_specs,
        ),
        compiler_params=pltpu.CompilerParams(
            dimension_semantics=("parallel",),
            vmem_limit_bytes=vmem_budget,
        ),
    )(x, w1, b1, w2, b2, w3, b3)

    h_bf16 = hidden_outs[0]
    acts_f32 = hidden_outs[1] if output_acts else None

    # ---- call 2: output layer, column axis outer + parallel ----------------
    # W_out block index depends only on the column-tile index, so with the
    # column axis OUTER it is DMA'd from HBM exactly once per forward; the
    # small bf16 H tile is what gets (cheaply) re-fetched across batch tiles.
    expr = pl.pallas_call(
        _s3_out_kernel,
        out_shape=jax.ShapeDtypeStruct((m_pad, n_pad), jnp.float32),
        grid_spec=pltpu.PrefetchScalarGridSpec(
            num_scalar_prefetch=0,
            grid=(n_pad // tn, m_pad // tm),
            in_specs=[
                pl.BlockSpec((tm, d3), lambda jc, im: (im, 0)),   # H (bf16)
                pl.BlockSpec((d3, tn), lambda jc, im: (0, jc)),   # W_out tile
                pl.BlockSpec((1, tn),  lambda jc, im: (0, jc)),   # b_out tile
            ],
            out_specs=pl.BlockSpec((tm, tn), lambda jc, im: (im, jc)),
        ),
        compiler_params=pltpu.CompilerParams(
            dimension_semantics=("parallel", "parallel"),
            vmem_limit_bytes=vmem_budget,
        ),
    )(h_bf16, wo, bo)

    expr = expr[:batch, :n_genes]
    if output_acts:
        return expr, acts_f32[:batch]
    return expr


# ---------------------------------------------------------------------------
# Parameter init: bf16 weights, f32 biases; output layer padded to lane
# multiples ONCE here (never per forward call).
# ---------------------------------------------------------------------------
def init_s3_decoder_params(key, n_genes: int, dim_code: int,
                           *, lane_align: int = _LANE):
    dims = [dim_code, *HIDDEN_DIMS, n_genes]
    n_layers = len(dims) - 1
    params = []
    for li, (fan_in, fan_out) in enumerate(zip(dims[:-1], dims[1:])):
        key, k_w, k_b = jax.random.split(key, 3)
        bound = 1.0 / (fan_in ** 0.5)
        w = jax.random.uniform(k_w, (fan_in, fan_out), jnp.float32, -bound, bound)
        b = jax.random.uniform(k_b, (1, fan_out), jnp.float32, -bound, bound)
        if li == n_layers - 1:
            n_pad = _round_up(fan_out, lane_align)
            if n_pad != fan_out:
                w = jnp.pad(w, ((0, 0), (0, n_pad - fan_out)))
                b = jnp.pad(b, ((0, 0), (0, n_pad - fan_out)))
        params.append((w.astype(jnp.bfloat16), b))
    return params


def s3_decoder_forward_ref(params, code, n_genes: int):
    """Pure-JAX reference with identical bf16-weight / f32-accumulate path."""
    h = code.astype(jnp.float32)
    for (w, b) in params[:-1]:
        h = jnp.dot(h.astype(jnp.bfloat16), w,
                    preferred_element_type=jnp.float32) + b
        h = jnp.where(h >= 0, h, NEG_SLOPE * h)
    w_out, b_out = params[-1]
    expr = jnp.dot(h.astype(jnp.bfloat16), w_out,
                   preferred_element_type=jnp.float32) + b_out
    return expr[:, :n_genes], h


if __name__ == "__main__":
    # Small shapes consistent with the module (hidden dims fixed by the spec).
    batch = 8
    dim_code = 32
    n_genes = 300      # deliberately NOT a multiple of 128: exercises init pad

    key = jax.random.PRNGKey(0)
    k_code, k_params = jax.random.split(key)

    code = jax.random.normal(k_code, (batch, dim_code), jnp.float32)
    params = init_s3_decoder_params(k_params, n_genes=n_genes,
                                    dim_code=dim_code)

    expr_hat, acts = s3_decoder_forward(params, code, n_genes=n_genes,
                                        output_acts=True)
    expr_hat = jax.block_until_ready(expr_hat)
    acts = jax.block_until_ready(acts)
    assert expr_hat.shape == (batch, n_genes)
    assert acts.shape == (batch, HIDDEN_DIMS[-1])

    # acts-free variant (no acts out_shape / store / writeback)
    expr_only = s3_decoder_forward(params, code, n_genes=n_genes)
    expr_only = jax.block_until_ready(expr_only)
    assert expr_only.shape == (batch, n_genes)

    ref_expr, ref_acts = s3_decoder_forward_ref(params, code, n_genes)
    ref_expr = jax.block_until_ready(ref_expr)
    ref_acts = jax.block_until_ready(ref_acts)

    assert jnp.allclose(expr_hat, ref_expr, rtol=1e-2, atol=1e-2)
    assert jnp.allclose(expr_only, ref_expr, rtol=1e-2, atol=1e-2)
    assert jnp.allclose(acts, ref_acts, rtol=1e-2, atol=1e-2)

    print("KERNEL_OK")
</pallas_src>

<mosaic_0001>
module attributes {stable_mosaic.version = 11 : i64} {
  func.func @_s3_hidden_kernel(%arg0: i32, %arg1: memref<16x32xf32, #tpu.memory_space<vmem>>, %arg2: memref<32x1024xbf16, #tpu.memory_space<vmem>>, %arg3: memref<1x1024xf32, #tpu.memory_space<vmem>>, %arg4: memref<1024x1024xbf16, #tpu.memory_space<vmem>>, %arg5: memref<1x1024xf32, #tpu.memory_space<vmem>>, %arg6: memref<1024x2048xbf16, #tpu.memory_space<vmem>>, %arg7: memref<1x2048xf32, #tpu.memory_space<vmem>>, %arg8: memref<16x2048xbf16, #tpu.memory_space<vmem>>, %arg9: memref<16x2048xf32, #tpu.memory_space<vmem>>) attributes {dimension_semantics = [#tpu.dimension_semantics<parallel>], iteration_bounds = array<i64: 1>, scalar_prefetch = 0 : i64, scratch_operands = 0 : i64, tpu.core_type = #tpu.core_type<tc>, window_params = [{transform_indices = @transform_0, window_bounds = array<i64: 16, 32>}, {pipeline_mode = #tpu.pipeline_mode<synchronous>, transform_indices = @transform_1, window_bounds = array<i64: 32, 1024>}, {pipeline_mode = #tpu.pipeline_mode<synchronous>, transform_indices = @transform_2, window_bounds = array<i64: 1, 1024>}, {pipeline_mode = #tpu.pipeline_mode<synchronous>, transform_indices = @transform_3, window_bounds = array<i64: 1024, 1024>}, {pipeline_mode = #tpu.pipeline_mode<synchronous>, transform_indices = @transform_4, window_bounds = array<i64: 1, 1024>}, {pipeline_mode = #tpu.pipeline_mode<synchronous>, transform_indices = @transform_5, window_bounds = array<i64: 1024, 2048>}, {pipeline_mode = #tpu.pipeline_mode<synchronous>, transform_indices = @transform_6, window_bounds = array<i64: 1, 2048>}, {transform_indices = @transform_7, window_bounds = array<i64: 16, 2048>}, {transform_indices = @transform_8, window_bounds = array<i64: 16, 2048>}]} {
    %c0 = arith.constant 0 : index
    %c0_0 = arith.constant 0 : index
    %0 = vector.load %arg1[%c0, %c0_0] : memref<16x32xf32, #tpu.memory_space<vmem>>, vector<16x32xf32>
    %1 = arith.truncf %0 : vector<16x32xf32> to vector<16x32xbf16>
    %c0_1 = arith.constant 0 : index
    %c0_2 = arith.constant 0 : index
    %2 = vector.load %arg2[%c0_1, %c0_2] : memref<32x1024xbf16, #tpu.memory_space<vmem>>, vector<32x1024xbf16>
    %cst = arith.constant dense<0.000000e+00> : vector<16x1024xf32>
    %3 = tpu.matmul %1, %2, %cst {dimension_numbers = #tpu.dot_dimension_numbers<[1], [0], [0], [1], [0, 0, 1, 1], [], []>} : vector<16x32xbf16>, vector<32x1024xbf16>, vector<16x1024xf32> -> vector<16x1024xf32>
    %c0_3 = arith.constant 0 : index
    %c0_4 = arith.constant 0 : index
    %4 = vector.load %arg3[%c0_3, %c0_4] : memref<1x1024xf32, #tpu.memory_space<vmem>>, vector<1x1024xf32>
    %5 = vector.broadcast %4 : vector<1x1024xf32> to vector<16x1024xf32>
    %6 = arith.addf %3, %5 : vector<16x1024xf32>
    %cst_5 = arith.constant 0.000000e+00 : f32
    %7 = vector.broadcast %cst_5 : f32 to vector<16x1024xf32>
    %8 = arith.cmpf oge, %6, %7 : vector<16x1024xf32>
    %cst_6 = arith.constant 0.00999999977 : f32
    %9 = vector.broadcast %cst_6 : f32 to vector<16x1024xf32>
    %10 = arith.mulf %9, %6 : vector<16x1024xf32>
    %11 = arith.select %8, %6, %10 : vector<16x1024xi1>, vector<16x1024xf32>
    %12 = arith.truncf %11 : vector<16x1024xf32> to vector<16x1024xbf16>
    %c0_7 = arith.constant 0 : index
    %c0_8 = arith.constant 0 : index
    %13 = vector.load %arg4[%c0_7, %c0_8] : memref<1024x1024xbf16, #tpu.memory_space<vmem>>, vector<1024x1024xbf16>
    %cst_9 = arith.constant dense<0.000000e+00> : vector<16x1024xf32>
    %14 = tpu.matmul %12, %13, %cst_9 {dimension_numbers = #tpu.dot_dimension_numbers<[1], [0], [0], [1], [0, 0, 1, 1], [], []>} : vector<16x1024xbf16>, vector<1024x1024xbf16>, vector<16x1024xf32> -> vector<16x1024xf32>
    %c0_10 = arith.constant 0 : index
    %c0_11 = arith.constant 0 : index
    %15 = vector.load %arg5[%c0_10, %c0_11] : memref<1x1024xf32, #tpu.memory_space<vmem>>, vector<1x1024xf32>
    %16 = vector.broadcast %15 : vector<1x1024xf32> to vector<16x1024xf32>
    %17 = arith.addf %14, %16 : vector<16x1024xf32>
    %cst_12 = arith.constant 0.000000e+00 : f32
    %18 = vector.broadcast %cst_12 : f32 to vector<16x1024xf32>
    %19 = arith.cmpf oge, %17, %18 : vector<16x1024xf32>
    %cst_13 = arith.constant 0.00999999977 : f32
    %20 = vector.broadcast %cst_13 : f32 to vector<16x1024xf32>
    %21 = arith.mulf %20, %17 : vector<16x1024xf32>
    %22 = arith.select %19, %17, %21 : vector<16x1024xi1>, vector<16x1024xf32>
    %23 = arith.truncf %22 : vector<16x1024xf32> to vector<16x1024xbf16>
    %c0_14 = arith.constant 0 : index
    %c0_15 = arith.constant 0 : index
    %24 = vector.load %arg6[%c0_14, %c0_15] : memref<1024x2048xbf16, #tpu.memory_space<vmem>>, vector<1024x2048xbf16>
    %cst_16 = arith.constant dense<0.000000e+00> : vector<16x2048xf32>
    %25 = tpu.matmul %23, %24, %cst_16 {dimension_numbers = #tpu.dot_dimension_numbers<[1], [0], [0], [1], [0, 0, 1, 1], [], []>} : vector<16x1024xbf16>, vector<1024x2048xbf16>, vector<16x2048xf32> -> vector<16x2048xf32>
    %c0_17 = arith.constant 0 : index
    %c0_18 = arith.constant 0 : index
    %26 = vector.load %arg7[%c0_17, %c0_18] : memref<1x2048xf32, #tpu.memory_space<vmem>>, vector<1x2048xf32>
    %27 = vector.broadcast %26 : vector<1x2048xf32> to vector<16x2048xf32>
    %28 = arith.addf %25, %27 : vector<16x2048xf32>
    %cst_19 = arith.constant 0.000000e+00 : f32
    %29 = vector.broadcast %cst_19 : f32 to vector<16x2048xf32>
    %30 = arith.cmpf oge, %28, %29 : vector<16x2048xf32>
    %cst_20 = arith.constant 0.00999999977 : f32
    %31 = vector.broadcast %cst_20 : f32 to vector<16x2048xf32>
    %32 = arith.mulf %31, %28 : vector<16x2048xf32>
    %33 = arith.select %30, %28, %32 : vector<16x2048xi1>, vector<16x2048xf32>
    %34 = arith.truncf %33 : vector<16x2048xf32> to vector<16x2048xbf16>
    %c0_21 = arith.constant 0 : index
    %c0_22 = arith.constant 0 : index
    %35 = vector.load %arg8[%c0_21, %c0_22] : memref<16x2048xbf16, #tpu.memory_space<vmem>>, vector<16x2048xbf16>
    tpu.vector_store %arg8[%c0_21, %c0_22], %34 {strides = array<i32>} : memref<16x2048xbf16, #tpu.memory_space<vmem>>, vector<16x2048xbf16>,
    %c0_23 = arith.constant 0 : index
    %c0_24 = arith.constant 0 : index
    %36 = vector.load %arg9[%c0_23, %c0_24] : memref<16x2048xf32, #tpu.memory_space<vmem>>, vector<16x2048xf32>
    tpu.vector_store %arg9[%c0_23, %c0_24], %33 {strides = array<i32>} : memref<16x2048xf32, #tpu.memory_space<vmem>>, vector<16x2048xf32>,
    return
  }
  func.func @transform_0(%arg0: i32) -> (i32, i32) {
    %c0_i32 = arith.constant 0 : i32
    %c0_i32_0 = arith.constant 0 : i32
    return %arg0, %c0_i32 : i32, i32
  }
  func.func @transform_1(%arg0: i32) -> (i32, i32) {
    %c0_i32 = arith.constant 0 : i32
    %c0_i32_0 = arith.constant 0 : i32
    %c0_i32_1 = arith.constant 0 : i32
    return %c0_i32, %c0_i32_0 : i32, i32
  }
  func.func @transform_2(%arg0: i32) -> (i32, i32) {
    %c0_i32 = arith.constant 0 : i32
    %c0_i32_0 = arith.constant 0 : i32
    %c0_i32_1 = arith.constant 0 : i32
    return %c0_i32, %c0_i32_0 : i32, i32
  }
  func.func @transform_3(%arg0: i32) -> (i32, i32) {
    %c0_i32 = arith.constant 0 : i32
    %c0_i32_0 = arith.constant 0 : i32
    %c0_i32_1 = arith.constant 0 : i32
    return %c0_i32, %c0_i32_0 : i32, i32
  }
  func.func @transform_4(%arg0: i32) -> (i32, i32) {
    %c0_i32 = arith.constant 0 : i32
    %c0_i32_0 = arith.constant 0 : i32
    %c0_i32_1 = arith.constant 0 : i32
    return %c0_i32, %c0_i32_0 : i32, i32
  }
  func.func @transform_5(%arg0: i32) -> (i32, i32) {
    %c0_i32 = arith.constant 0 : i32
    %c0_i32_0 = arith.constant 0 : i32
    %c0_i32_1 = arith.constant 0 : i32
    return %c0_i32, %c0_i32_0 : i32, i32
  }
  func.func @transform_6(%arg0: i32) -> (i32, i32) {
    %c0_i32 = arith.constant 0 : i32
    %c0_i32_0 = arith.constant 0 : i32
    %c0_i32_1 = arith.constant 0 : i32
    return %c0_i32, %c0_i32_0 : i32, i32
  }
  func.func @transform_7(%arg0: i32) -> (i32, i32) {
    %c0_i32 = arith.constant 0 : i32
    %c0_i32_0 = arith.constant 0 : i32
    return %arg0, %c0_i32 : i32, i32
  }
  func.func @transform_8(%arg0: i32) -> (i32, i32) {
    %c0_i32 = arith.constant 0 : i32
    %c0_i32_0 = arith.constant 0 : i32
    return %arg0, %c0_i32 : i32, i32
  }
}

</mosaic_0001>

<llo_original>
// kernel: tpu_custom_call.1
$region0: #{tpu_custom_call.1}
  #allocation0 [shape = 'u32[]', space=smem, size = 0x4, offset = 0x4, fixed_abs, tag = 'smem constant byte address 0x4 - core index']
  #allocation1 [shape = 'u32[144,128]{1,0:T(1,128)}', space=vmem, size = 0x12000, scoped, tag = 'internal scratch']
  %s0 = inlined_call_operand.hbm [shape: f32[16,32], index: 0, kind: input, shape index: {}]
  %s1 = inlined_call_operand.hbm [shape: bf16[32,1024], index: 1, kind: input, shape index: {}]
  %s2 = inlined_call_operand.hbm [shape: f32[1,1024], index: 2, kind: input, shape index: {}]
  %s3 = inlined_call_operand.hbm [shape: bf16[1024,1024], index: 3, kind: input, shape index: {}]
  %s4 = inlined_call_operand.hbm [shape: f32[1,1024], index: 4, kind: input, shape index: {}]
  %s5 = inlined_call_operand.hbm [shape: bf16[1024,2048], index: 5, kind: input, shape index: {}]
  %s6 = inlined_call_operand.hbm [shape: f32[1,2048], index: 6, kind: input, shape index: {}]
  %s7 = inlined_call_operand.hbm [shape: bf16[16,2048], index: 7, kind: output, shape index: {0}]
  %s8 = inlined_call_operand.hbm [shape: f32[16,2048], index: 8, kind: output, shape index: {1}]
  %9 = xla_tuple %s7, %s8
  %s10 = sld [smem:[#allocation0]]
  $region74: #{tpu_custom_call.1} parent=0
    _
  %s12 = ssub.s32 1, %s10
  %s13 = scalar_select 0, %s12, %s10
  $region1: #{tpu_custom_call.1} parent=0
    #allocation2 [shape = 'u8[8192]{0}', space=vmem, size = 0x2000, scoped, tag = 'input window, operand 0, single buffered']
    #allocation3 [shape = 's32[1]{0}', space=sflag, size = 0x4, scoped, tag = 'scoped memory for tpu_custom_call.1']
    #allocation4 [shape = 's32[1]{0}', space=sflag, size = 0x4, scoped, tag = 'scoped memory for tpu_custom_call.1']
    #allocation5 [shape = 'u8[65536]{0}', space=vmem, size = 0x10000, scoped, tag = 'input window, operand 1, single buffered']
    #allocation6 [shape = 's32[1]{0}', space=sflag, size = 0x4, scoped, tag = 'scoped memory for tpu_custom_call.1']
    #allocation7 [shape = 'u8[4096]{0}', space=vmem, size = 0x1000, scoped, tag = 'input window, operand 2, single buffered']
    #allocation8 [shape = 'u8[2097152]{0}', space=vmem, size = 0x200000, scoped, tag = 'input window, operand 3, single buffered']
    #allocation9 [shape = 's32[1]{0}', space=sflag, size = 0x4, scoped, tag = 'scoped memory for tpu_custom_call.1']
    #allocation10 [shape = 'u8[4096]{0}', space=vmem, size = 0x1000, scoped, tag = 'input window, operand 4, single buffered']
    #allocation11 [shape = 'u8[4194304]{0}', space=vmem, size = 0x400000, scoped, tag = 'input window, operand 5, single buffered']
    #allocation12 [shape = 's32[1]{0}', space=sflag, size = 0x4, scoped, tag = 'scoped memory for tpu_custom_call.1']
    #allocation13 [shape = 'u8[8192]{0}', space=vmem, size = 0x2000, scoped, tag = 'input window, operand 6, single buffered']
    #allocation14 [shape = 'u8[65536]{0}', space=vmem, size = 0x10000, scoped, tag = 'output window, operand 0, single buffered']
    #allocation15 [shape = 'u8[131072]{0}', space=vmem, size = 0x20000, scoped, tag = 'output window, operand 1, single buffered']
    #allocation16 [shape = 's32[1]{0}', space=sflag, size = 0x4, scoped, tag = 'scoped memory for tpu_custom_call.1']
    %14 = vsyncpa [#allocation3], 0
    %15 = vsyncpa [#allocation6], 0
    %16 = vsyncpa [#allocation9], 0
    %17 = vsyncpa [#allocation12], 0
    %18 = vsyncpa [#allocation4], 0
    %19 = vsyncpa [#allocation16], 0
    // Predicated region
    $region2: #{tpu_custom_call.1} parent=1 // pred_check
      _
    $region3: #{tpu_custom_call.1} parent=1 // pred_check_branch
      %21 = sbr.rel (0) target = $region5
    $region4: #{tpu_custom_call.1} parent=1 // pred_region
      %s23 = ssub.s32 256, 256
      %24 = vsyncadd [#allocation3], %s23
      %s25 = sshll.u32 [#allocation2], 4
      %s26 = int_to_ptr.vmem [resolvable:$true] %s25
      %31 = dma.hbm_to_vmem [thread:$0]  %s0, 256, %s26, [#allocation3], 128, 128, 8
    $region5: #{tpu_custom_call.1} parent=1 // pred_fallthru
      _
    // Predicated region
    $region6: #{tpu_custom_call.1} parent=1 // pred_check
      _
    $region7: #{tpu_custom_call.1} parent=1 // pred_check_branch
      %33 = sbr.rel (0) target = $region9
    $region8: #{tpu_custom_call.1} parent=1 // pred_region
      %s35 = ssub.s32 2048, 2048
      %36 = vsyncadd [#allocation6], %s35
      %s37 = sshll.u32 [#allocation5], 4
      %s38 = int_to_ptr.vmem [resolvable:$true] %s37
      %43 = dma.hbm_to_vmem [thread:$0]  %s1, 2048, %s38, [#allocation6], 512, 512, 32
    $region9: #{tpu_custom_call.1} parent=1 // pred_fallthru
      _
    // Predicated region
    $region10: #{tpu_custom_call.1} parent=1 // pred_check
      _
    $region11: #{tpu_custom_call.1} parent=1 // pred_check_branch
      %45 = sbr.rel (0) target = $region13
    $region12: #{tpu_custom_call.1} parent=1 // pred_region
      %s47 = ssub.s32 128, 128
      %48 = vsyncadd [#allocation6], %s47
      %s50 = sshll.u32 [#allocation7], 4
      %s51 = int_to_ptr.vmem [resolvable:$true] %s50
      %53 = dma.hbm_to_vmem [thread:$0]  %s2, 128, %s51, [#allocation6]
    $region13: #{tpu_custom_call.1} parent=1 // pred_fallthru
      _
    // Predicated region
    $region14: #{tpu_custom_call.1} parent=1 // pred_check
      _
    $region15: #{tpu_custom_call.1} parent=1 // pred_check_branch
      %55 = sbr.rel (0) target = $region17
    $region16: #{tpu_custom_call.1} parent=1 // pred_region
      %s57 = ssub.s32 65536, 65536
      %58 = vsyncadd [#allocation9], %s57
      %s59 = sshll.u32 [#allocation8], 4
      %s60 = int_to_ptr.vmem [resolvable:$true] %s59
      %65 = dma.hbm_to_vmem [thread:$0]  %s3, 65536, %s60, [#allocation9], 512, 512, 32
    $region17: #{tpu_custom_call.1} parent=1 // pred_fallthru
      _
    // Predicated region
    $region18: #{tpu_custom_call.1} parent=1 // pred_check
      _
    $region19: #{tpu_custom_call.1} parent=1 // pred_check_branch
      %67 = sbr.rel (0) target = $region21
    $region20: #{tpu_custom_call.1} parent=1 // pred_region
      %s69 = ssub.s32 128, 128
      %70 = vsyncadd [#allocation9], %s69
      %s72 = sshll.u32 [#allocation10], 4
      %s73 = int_to_ptr.vmem [resolvable:$true] %s72
      %75 = dma.hbm_to_vmem [thread:$0]  %s4, 128, %s73, [#allocation9]
    $region21: #{tpu_custom_call.1} parent=1 // pred_fallthru
      _
    // Predicated region
    $region22: #{tpu_custom_call.1} parent=1 // pred_check
      _
    $region23: #{tpu_custom_call.1} parent=1 // pred_check_branch
      %77 = sbr.rel (0) target = $region25
    $region24: #{tpu_custom_call.1} parent=1 // pred_region
      %s79 = ssub.s32 131072, 131072
      %80 = vsyncadd [#allocation12], %s79
      %s81 = sshll.u32 [#allocation11], 4
      %s82 = int_to_ptr.vmem [resolvable:$true] %s81
      %87 = dma.hbm_to_vmem [thread:$0]  %s5, 131072, %s82, [#allocation12], 1024, 1024, 64
    $region25: #{tpu_custom_call.1} parent=1 // pred_fallthru
      _
    // Predicated region
    $region26: #{tpu_custom_call.1} parent=1 // pred_check
      _
    $region27: #{tpu_custom_call.1} parent=1 // pred_check_branch
      %89 = sbr.rel (0) target = $region29
    $region28: #{tpu_custom_call.1} parent=1 // pred_region
      %s91 = ssub.s32 256, 256
      %92 = vsyncadd [#allocation12], %s91
      %s94 = sshll.u32 [#allocation13], 4
      %s95 = int_to_ptr.vmem [resolvable:$true] %s94
      %97 = dma.hbm_to_vmem [thread:$0]  %s6, 256, %s95, [#allocation12]
    $region29: #{tpu_custom_call.1} parent=1 // pred_fallthru
      _
    // Predicated region
    $region30: #{tpu_custom_call.1} parent=1 // pred_check
      _
    $region31: #{tpu_custom_call.1} parent=1 // pred_check_branch
      %99 = sbr.rel (0) target = $region33
    $region32: #{tpu_custom_call.1} parent=1 // pred_region
      %100 = dma.done [#allocation3], 256
    $region33: #{tpu_custom_call.1} parent=1 // pred_fallthru
      _
    // Predicated region
    $region34: #{tpu_custom_call.1} parent=1 // pred_check
      _
    $region35: #{tpu_custom_call.1} parent=1 // pred_check_branch
      %102 = sbr.rel (0) target = $region37
    $region36: #{tpu_custom_call.1} parent=1 // pred_region
      %103 = dma.done [#allocation6], 2048
    $region37: #{tpu_custom_call.1} parent=1 // pred_fallthru
      _
    // Predicated region
    $region38: #{tpu_custom_call.1} parent=1 // pred_check
      _
    $region39: #{tpu_custom_call.1} parent=1 // pred_check_branch
      %105 = sbr.rel (0) target = $region41
    $region40: #{tpu_custom_call.1} parent=1 // pred_region
      %106 = dma.done [#allocation6], 128
    $region41: #{tpu_custom_call.1} parent=1 // pred_fallthru
      _
    // Predicated region
    $region42: #{tpu_custom_call.1} parent=1 // pred_check
      _
    $region43: #{tpu_custom_call.1} parent=1 // pred_check_branch
      %108 = sbr.rel (0) target = $region45
    $region44: #{tpu_custom_call.1} parent=1 // pred_region
      %109 = dma.done [#allocation9], 65536
    $region45: #{tpu_custom_call.1} parent=1 // pred_fallthru
      _
    // Predicated region
    $region46: #{tpu_custom_call.1} parent=1 // pred_check
      _
    $region47: #{tpu_custom_call.1} parent=1 // pred_check_branch
      %111 = sbr.rel (0) target = $region49
    $region48: #{tpu_custom_call.1} parent=1 // pred_region
      %112 = dma.done [#allocation9], 128
    $region49: #{tpu_custom_call.1} parent=1 // pred_fallthru
      _
    // Predicated region
    $region50: #{tpu_custom_call.1} parent=1 // pred_check
      _
    $region51: #{tpu_custom_call.1} parent=1 // pred_check_branch
      %114 = sbr.rel (0) target = $region53
    $region52: #{tpu_custom_call.1} parent=1 // pred_region
      %115 = dma.done [#allocation12], 131072
    $region53: #{tpu_custom_call.1} parent=1 // pred_fallthru
      _
    // Predicated region
    $region54: #{tpu_custom_call.1} parent=1 // pred_check
      _
    $region55: #{tpu_custom_call.1} parent=1 // pred_check_branch
      %117 = sbr.rel (0) target = $region57
    $region56: #{tpu_custom_call.1} parent=1 // pred_region
      %118 = dma.done [#allocation12], 256
    $region57: #{tpu_custom_call.1} parent=1 // pred_fallthru
      _
    %v120 = vld [vmem:[#allocation2] sm:$0xff]
    %v121 = vld [vmem:[#allocation2 + $0x8] sm:$0xff]
    %v122 = vpack.c.bf16 %v121, %v120
    %v123 = vld [vmem:[#allocation5] sm:$0xff]
    %v124 = vld [vmem:[#allocation5 + $0x8] sm:$0xff]
    %v125 = vld [vmem:[#allocation5 + $0x10] sm:$0xff]
    %v126 = vld [vmem:[#allocation5 + $0x18] sm:$0xff]
    %v127 = vld [vmem:[#allocation5 + $0x20] sm:$0xff]
    %v128 = vld [vmem:[#allocation5 + $0x28] sm:$0xff]
    %v129 = vld [vmem:[#allocation5 + $0x30] sm:$0xff]
    %v130 = vld [vmem:[#allocation5 + $0x38] sm:$0xff]
    %v131 = vld [vmem:[#allocation5 + $0x40] sm:$0xff]
    %v132 = vld [vmem:[#allocation5 + $0x48] sm:$0xff]
    %v133 = vld [vmem:[#allocation5 + $0x50] sm:$0xff]
    %v134 = vld [vmem:[#allocation5 + $0x58] sm:$0xff]
    %v135 = vld [vmem:[#allocation5 + $0x60] sm:$0xff]
    %v136 = vld [vmem:[#allocation5 + $0x68] sm:$0xff]
    %v137 = vld [vmem:[#allocation5 + $0x70] sm:$0xff]
    %v138 = vld [vmem:[#allocation5 + $0x78] sm:$0xff]
    %v139 = vld [vmem:[#allocation7] sm:$0xff]
    %v141 = vlaneseq
    %v142 = vshrl.u32 %v141, 7
    %v143 = vsub.s32 0, %v142
    %v144 = vrot.slane %v139, %v143
    %v145 = vlaneseq
    %v146 = vshrl.u32 %v145, 7
    %v147 = vsub.s32 1, %v146
    %v148 = vrot.slane %v139, %v147
    %v149 = vlaneseq
    %v150 = vshrl.u32 %v149, 7
    %v151 = vsub.s32 2, %v150
    %v152 = vrot.slane %v139, %v151
    %v153 = vlaneseq
    %v154 = vshrl.u32 %v153, 7
    %v155 = vsub.s32 3, %v154
    %v156 = vrot.slane %v139, %v155
    %v157 = vlaneseq
    %v158 = vshrl.u32 %v157, 7
    %v159 = vsub.s32 4, %v158
    %v160 = vrot.slane %v139, %v159
    %v161 = vlaneseq
    %v162 = vshrl.u32 %v161, 7
    %v163 = vsub.s32 5, %v162
    %v164 = vrot.slane %v139, %v163
    %v165 = vlaneseq
    %v166 = vshrl.u32 %v165, 7
    %v167 = vsub.s32 6, %v166
    %v168 = vrot.slane %v139, %v167
    %v169 = vlaneseq
    %v170 = vshrl.u32 %v169, 7
    %v171 = vsub.s32 7, %v170
    %v172 = vrot.slane %v139, %v171
    %v197 = vunpack.c.l.b16 %v123
    %v198 = vunpack.c.h.b16 %v123
    %v199 = vunpack.c.l.b16 %v124
    %v200 = vunpack.c.h.b16 %v124
    %v201 = vunpack.c.l.b16 %v125
    %v202 = vunpack.c.h.b16 %v125
    %v203 = vunpack.c.l.b16 %v126
    %v204 = vunpack.c.h.b16 %v126
    %v205 = vunpack.c.l.b16 %v127
    %v206 = vunpack.c.h.b16 %v127
    %v207 = vunpack.c.l.b16 %v128
    %v208 = vunpack.c.h.b16 %v128
    %v209 = vunpack.c.l.b16 %v129
    %v210 = vunpack.c.h.b16 %v129
    %v211 = vunpack.c.l.b16 %v130
    %v212 = vunpack.c.h.b16 %v130
    %v213 = vunpack.c.l.b16 %v131
    %v214 = vunpack.c.h.b16 %v131
    %v215 = vunpack.c.l.b16 %v132
    %v216 = vunpack.c.h.b16 %v132
    %v217 = vunpack.c.l.b16 %v133
    %v218 = vunpack.c.h.b16 %v133
    %v219 = vunpack.c.l.b16 %v134
    %v220 = vunpack.c.h.b16 %v134
    %v221 = vunpack.c.l.b16 %v135
    %v222 = vunpack.c.h.b16 %v135
    %v223 = vunpack.c.l.b16 %v136
    %v224 = vunpack.c.h.b16 %v136
    %v225 = vunpack.c.l.b16 %v137
    %v226 = vunpack.c.h.b16 %v137
    %v227 = vunpack.c.l.b16 %v138
    %v228 = vunpack.c.h.b16 %v138
    %v229 = vpack.c.b16 %v205, %v197
    %v230 = vpack.c.b16 %v206, %v198
    %v231 = vpack.c.b16 %v207, %v199
    %v232 = vpack.c.b16 %v208, %v200
    %v233 = vpack.c.b16 %v209, %v201
    %v234 = vpack.c.b16 %v210, %v202
    %v235 = vpack.c.b16 %v211, %v203
    %v236 = vpack.c.b16 %v212, %v204
    %v237 = vpack.c.b16 %v221, %v213
    %v238 = vpack.c.b16 %v222, %v214
    %v239 = vpack.c.b16 %v223, %v215
    %v240 = vpack.c.b16 %v224, %v216
    %v241 = vpack.c.b16 %v225, %v217
    %v242 = vpack.c.b16 %v226, %v218
    %v243 = vpack.c.b16 %v227, %v219
    %v244 = vpack.c.b16 %v228, %v220
    %vm261 = vcmask 261120
    %v263 = vsel %vm261, %v122, 0
    %265 = vmatprep.subr.bf16.mxu0 %v230
    %266 = vmatpush1.bf16.msra.mxu0 %v229
    %267 = vmatprep.subr.bf16.mxu0 %v238
    %268 = vmatpush1.bf16.msra.mxu0 %v237
    %269 = vmatprep.subr.bf16.mxu0 0
    %270 = vmatpush1.bf16.msra.mxu0 0
    %271 = vmatprep.subr.bf16.mxu0 0
    %272 = vmatpush1.bf16.msra.mxu0 0
    %273 = vmatprep.subr.bf16.mxu0 0
    %274 = vmatpush1.bf16.msra.mxu0 0
    %275 = vmatprep.subr.bf16.mxu0 0
    %276 = vmatpush1.bf16.msra.mxu0 0
    %277 = vmatprep.subr.bf16.mxu0 0
    %278 = vmatpush1.bf16.msra.mxu0 0
    %279 = vmatprep.subr.bf16.mxu0 0
    %280 = vmatpush1.bf16.msra.mxu0 0
    %281 = vmatprep.subr.bf16.mxu0 0
    %282 = vmatpush1.bf16.msra.mxu0 0
    %283 = vmatprep.subr.bf16.mxu0 0
    %284 = vmatpush1.bf16.msra.mxu0 0
    %285 = vmatprep.subr.bf16.mxu0 0
    %286 = vmatpush1.bf16.msra.mxu0 0
    %287 = vmatprep.subr.bf16.mxu0 0
    %288 = vmatpush1.bf16.msra.mxu0 0
    %289 = vmatprep.subr.bf16.mxu0 0
    %290 = vmatpush1.bf16.msra.mxu0 0
    %291 = vmatprep.subr.bf16.mxu0 0
    %292 = vmatpush1.bf16.msra.mxu0 0
    %293 = vmatprep.subr.bf16.mxu0 0
    %294 = vmatpush1.bf16.msra.mxu0 0
    %295 = vmatprep.subr.bf16.mxu0 0
    %296 = vmatpush1.bf16.msra.mxu0 0
    %297 = vmatprep.mubr.bf16.mxu0 0
    %298 = vmatmul.mubr.bf16.gmra.mrb[0].mxu0 %v263
    %v299 = vpop.f32.mrb[0].mxu0
    %v300 = vadd.f32 %v144, %v299
    %v301 = vpop.f32.mrb[0].mxu0
    %v302 = vadd.f32 %v148, %v301
    %v303 = vpop.f32.mrb[0].mxu0
    %v304 = vadd.f32 %v144, %v303
    %v305 = vpop.f32.mrb[0].mxu0
    %v306 = vadd.f32 %v148, %v305
    %307 = vdwg.mxu0
    %308 = vmatprep.subr.bf16.mxu0 %v232
    %309 = vmatpush1.bf16.msra.mxu0 %v231
    %310 = vmatprep.subr.bf16.mxu0 %v240
    %311 = vmatpush1.bf16.msra.mxu0 %v239
    %312 = vmatprep.subr.bf16.mxu0 0
    %313 = vmatpush1.bf16.msra.mxu0 0
    %314 = vmatprep.subr.bf16.mxu0 0
    %315 = vmatpush1.bf16.msra.mxu0 0
    %316 = vmatprep.subr.bf16.mxu0 0
    %317 = vmatpush1.bf16.msra.mxu0 0
    %318 = vmatprep.subr.bf16.mxu0 0
    %319 = vmatpush1.bf16.msra.mxu0 0
    %320 = vmatprep.subr.bf16.mxu0 0
    %321 = vmatpush1.bf16.msra.mxu0 0
    %322 = vmatprep.subr.bf16.mxu0 0
    %323 = vmatpush1.bf16.msra.mxu0 0
    %324 = vmatprep.subr.bf16.mxu0 0
    %325 = vmatpush1.bf16.msra.mxu0 0
    %326 = vmatprep.subr.bf16.mxu0 0
    %327 = vmatpush1.bf16.msra.mxu0 0
    %328 = vmatprep.subr.bf16.mxu0 0
    %329 = vmatpush1.bf16.msra.mxu0 0
    %330 = vmatprep.subr.bf16.mxu0 0
    %331 = vmatpush1.bf16.msra.mxu0 0
    %332 = vmatprep.subr.bf16.mxu0 0
    %333 = vmatpush1.bf16.msra.mxu0 0
    %334 = vmatprep.subr.bf16.mxu0 0
    %335 = vmatpush1.bf16.msra.mxu0 0
    %336 = vmatprep.subr.bf16.mxu0 0
    %337 = vmatpush1.bf16.msra.mxu0 0
    %338 = vmatprep.subr.bf16.mxu0 0
    %339 = vmatpush1.bf16.msra.mxu0 0
    %340 = vmatprep.mubr.bf16.mxu0 0
    %341 = vmatmul.mubr.bf16.gmra.mrb[0].mxu0 %v263
    %v342 = vpop.f32.mrb[0].mxu0
    %v343 = vadd.f32 %v152, %v342
    %v344 = vpop.f32.mrb[0].mxu0
    %v345 = vadd.f32 %v156, %v344
    %v346 = vpop.f32.mrb[0].mxu0
    %v347 = vadd.f32 %v152, %v346
    %v348 = vpop.f32.mrb[0].mxu0
    %v349 = vadd.f32 %v156, %v348
    %350 = vdwg.mxu0
    %351 = vmatprep.subr.bf16.mxu0 %v234
    %352 = vmatpush1.bf16.msra.mxu0 %v233
    %353 = vmatprep.subr.bf16.mxu0 %v242
    %354 = vmatpush1.bf16.msra.mxu0 %v241
    %355 = vmatprep.subr.bf16.mxu0 0
    %356 = vmatpush1.bf16.msra.mxu0 0
    %357 = vmatprep.subr.bf16.mxu0 0
    %358 = vmatpush1.bf16.msra.mxu0 0
    %359 = vmatprep.subr.bf16.mxu0 0
    %360 = vmatpush1.bf16.msra.mxu0 0
    %361 = vmatprep.subr.bf16.mxu0 0
    %362 = vmatpush1.bf16.msra.mxu0 0
    %363 = vmatprep.subr.bf16.mxu0 0
    %364 = vmatpush1.bf16.msra.mxu0 0
    %365 = vmatprep.subr.bf16.mxu0 0
    %366 = vmatpush1.bf16.msra.mxu0 0
    %367 = vmatprep.subr.bf16.mxu0 0
    %368 = vmatpush1.bf16.msra.mxu0 0
    %369 = vmatprep.subr.bf16.mxu0 0
    %370 = vmatpush1.bf16.msra.mxu0 0
    %371 = vmatprep.subr.bf16.mxu0 0
    %372 = vmatpush1.bf16.msra.mxu0 0
    %373 = vmatprep.subr.bf16.mxu0 0
    %374 = vmatpush1.bf16.msra.mxu0 0
    %375 = vmatprep.subr.bf16.mxu0 0
    %376 = vmatpush1.bf16.msra.mxu0 0
    %377 = vmatprep.subr.bf16.mxu0 0
    %378 = vmatpush1.bf16.msra.mxu0 0
    %379 = vmatprep.subr.bf16.mxu0 0
    %380 = vmatpush1.bf16.msra.mxu0 0
    %381 = vmatprep.subr.bf16.mxu0 0
    %382 = vmatpush1.bf16.msra.mxu0 0
    %383 = vmatprep.mubr.bf16.mxu0 0
    %384 = vmatmul.mubr.bf16.gmra.mrb[0].mxu0 %v263
    %v385 = vpop.f32.mrb[0].mxu0
    %v386 = vadd.f32 %v160, %v385
    %v387 = vpop.f32.mrb[0].mxu0
    %v388 = vadd.f32 %v164, %v387
    %v389 = vpop.f32.mrb[0].mxu0
    %v390 = vadd.f32 %v160, %v389
    %v391 = vpop.f32.mrb[0].mxu0
    %v392 = vadd.f32 %v164, %v391
    %393 = vdwg.mxu0
    %394 = vmatprep.subr.bf16.mxu0 %v236
    %395 = vmatpush1.bf16.msra.mxu0 %v235
    %396 = vmatprep.subr.bf16.mxu0 %v244
    %397 = vmatpush1.bf16.msra.mxu0 %v243
    %398 = vmatprep.subr.bf16.mxu0 0
    %399 = vmatpush1.bf16.msra.mxu0 0
    %400 = vmatprep.subr.bf16.mxu0 0
    %401 = vmatpush1.bf16.msra.mxu0 0
    %402 = vmatprep.subr.bf16.mxu0 0
    %403 = vmatpush1.bf16.msra.mxu0 0
    %404 = vmatprep.subr.bf16.mxu0 0
    %405 = vmatpush1.bf16.msra.mxu0 0
    %406 = vmatprep.subr.bf16.mxu0 0
    %407 = vmatpush1.bf16.msra.mxu0 0
    %408 = vmatprep.subr.bf16.mxu0 0
    %409 = vmatpush1.bf16.msra.mxu0 0
    %410 = vmatprep.subr.bf16.mxu0 0
    %411 = vmatpush1.bf16.msra.mxu0 0
    %412 = vmatprep.subr.bf16.mxu0 0
    %413 = vmatpush1.bf16.msra.mxu0 0
    %414 = vmatprep.subr.bf16.mxu0 0
    %415 = vmatpush1.bf16.msra.mxu0 0
    %416 = vmatprep.subr.bf16.mxu0 0
    %417 = vmatpush1.bf16.msra.mxu0 0
    %418 = vmatprep.subr.bf16.mxu0 0
    %419 = vmatpush1.bf16.msra.mxu0 0
    %420 = vmatprep.subr.bf16.mxu0 0
    %421 = vmatpush1.bf16.msra.mxu0 0
    %422 = vmatprep.subr.bf16.mxu0 0
    %423 = vmatpush1.bf16.msra.mxu0 0
    %424 = vmatprep.subr.bf16.mxu0 0
    %425 = vmatpush1.bf16.msra.mxu0 0
    %426 = vmatprep.mubr.bf16.mxu0 0
    %427 = vmatmul.mubr.bf16.gmra.mrb[0].mxu0 %v263
    %v428 = vpop.f32.mrb[0].mxu0
    %v429 = vadd.f32 %v168, %v428
    %v430 = vpop.f32.mrb[0].mxu0
    %v431 = vadd.f32 %v172, %v430
    %v432 = vpop.f32.mrb[0].mxu0
    %v433 = vadd.f32 %v168, %v432
    %v434 = vpop.f32.mrb[0].mxu0
    %v435 = vadd.f32 %v172, %v434
    %436 = vdwg.mxu0
    %vm437 = vcmp.ge.f32.partialorder %v300, 0.0
    %vm438 = vcmp.ge.f32.partialorder %v302, 0.0
    %vm439 = vcmp.ge.f32.partialorder %v343, 0.0
    %vm440 = vcmp.ge.f32.partialorder %v345, 0.0
    %vm441 = vcmp.ge.f32.partialorder %v386, 0.0
    %vm442 = vcmp.ge.f32.partialorder %v388, 0.0
    %vm443 = vcmp.ge.f32.partialorder %v429, 0.0
    %vm444 = vcmp.ge.f32.partialorder %v431, 0.0
    %vm445 = vcmp.ge.f32.partialorder %v304, 0.0
    %vm446 = vcmp.ge.f32.partialorder %v306, 0.0
    %vm447 = vcmp.ge.f32.partialorder %v347, 0.0
    %vm448 = vcmp.ge.f32.partialorder %v349, 0.0
    %vm449 = vcmp.ge.f32.partialorder %v390, 0.0
    %vm450 = vcmp.ge.f32.partialorder %v392, 0.0
    %vm451 = vcmp.ge.f32.partialorder %v433, 0.0
    %vm452 = vcmp.ge.f32.partialorder %v435, 0.0
    %v453 = vmul.f32 %v300, 0.01
    %v454 = vmul.f32 %v302, 0.01
    %v455 = vmul.f32 %v343, 0.01
    %v456 = vmul.f32 %v345, 0.01
    %v457 = vmul.f32 %v386, 0.01
    %v458 = vmul.f32 %v388, 0.01
    %v459 = vmul.f32 %v429, 0.01
    %v460 = vmul.f32 %v431, 0.01
    %v461 = vmul.f32 %v304, 0.01
    %v462 = vmul.f32 %v306, 0.01
    %v463 = vmul.f32 %v347, 0.01
    %v464 = vmul.f32 %v349, 0.01
    %v465 = vmul.f32 %v390, 0.01
    %v466 = vmul.f32 %v392, 0.01
    %v467 = vmul.f32 %v433, 0.01
    %v468 = vmul.f32 %v435, 0.01
    %v469 = vsel %vm437, %v300, %v453
    %v470 = vsel %vm438, %v302, %v454
    %v471 = vsel %vm439, %v343, %v455
    %v472 = vsel %vm440, %v345, %v456
    %v473 = vsel %vm441, %v386, %v457
    %v474 = vsel %vm442, %v388, %v458
    %v475 = vsel %vm443, %v429, %v459
    %v476 = vsel %vm444, %v431, %v460
    %v477 = vsel %vm445, %v304, %v461
    %v478 = vsel %vm446, %v306, %v462
    %v479 = vsel %vm447, %v347, %v463
    %v480 = vsel %vm448, %v349, %v464
    %v481 = vsel %vm449, %v390, %v465
    %v482 = vsel %vm450, %v392, %v466
    %v483 = vsel %vm451, %v433, %v467
    %v484 = vsel %vm452, %v435, %v468
    %v485 = vpack.c.bf16 %v477, %v469
    %v486 = vpack.c.bf16 %v478, %v470
    %v487 = vpack.c.bf16 %v479, %v471
    %v488 = vpack.c.bf16 %v480, %v472
    %v489 = vpack.c.bf16 %v481, %v473
    %v490 = vpack.c.bf16 %v482, %v474
    %v491 = vpack.c.bf16 %v483, %v475
    %v492 = vpack.c.bf16 %v484, %v476
    %v493 = vld [vmem:[#allocation8] sm:$0xff]
    %v494 = vld [vmem:[#allocation8 + $0x8] sm:$0xff]
    %v495 = vld [vmem:[#allocation8 + $0x10] sm:$0xff]
    %v496 = vld [vmem:[#allocation8 + $0x18] sm:$0xff]
    %v497 = vld [vmem:[#allocation8 + $0x20] sm:$0xff]
    %v498 = vld [vmem:[#allocation8 + $0x28] sm:$0xff]
    %v499 = vld [vmem:[#allocation8 + $0x30] sm:$0xff]
    %v500 = vld [vmem:[#allocation8 + $0x38] sm:$0xff]
    %v501 = vld [vmem:[#allocation8 + $0x40] sm:$0xff]
    %v502 = vld [vmem:[#allocation8 + $0x48] sm:$0xff]
    %v503 = vld [vmem:[#allocation8 + $0x50] sm:$0xff]
    %v504 = vld [vmem:[#allocation8 + $0x58] sm:$0xff]
    %v505 = vld [vmem:[#allocation8 + $0x60] sm:$0xff]
    %v506 = vld [vmem:[#allocation8 + $0x68] sm:$0xff]
    %v507 = vld [vmem:[#allocation8 + $0x70] sm:$0xff]
    %v508 = vld [vmem:[#allocation8 + $0x78] sm:$0xff]
    %v509 = vld [vmem:[#allocation8 + $0x80] sm:$0xff]
    %v510 = vld [vmem:[#allocation8 + $0x88] sm:$0xff]
    %v511 = vld [vmem:[#allocation8 + $0x90] sm:$0xff]
    %v512 = vld [vmem:[#allocation8 + $0x98] sm:$0xff]
    %v513 = vld [vmem:[#allocation8 + $0xa0] sm:$0xff]
    %v514 = vld [vmem:[#allocation8 + $0xa8] sm:$0xff]
    %v515 = vld [vmem:[#allocation8 + $0xb0] sm:$0xff]
    %v516 = vld [vmem:[#allocation8 + $0xb8] sm:$0xff]
    %v517 = vld [vmem:[#allocation8 + $0xc0] sm:$0xff]
    %v518 = vld [vmem:[#allocation8 + $0xc8] sm:$0xff]
    %v519 = vld [vmem:[#allocation8 + $0xd0] sm:$0xff]
    %v520 = vld [vmem:[#allocation8 + $0xd8] sm:$0xff]
    %v521 = vld [vmem:[#allocation8 + $0xe0] sm:$0xff]
    %v522 = vld [vmem:[#allocation8 + $0xe8] sm:$0xff]
    %v523 = vld [vmem:[#allocation8 + $0xf0] sm:$0xff]
    %v524 = vld [vmem:[#allocation8 + $0xf8] sm:$0xff]
    %v525 = vld [vmem:[#allocation8 + $0x100] sm:$0xff]
    %v526 = vld [vmem:[#allocation8 + $0x108] sm:$0xff]
    %v527 = vld [vmem:[#allocation8 + $0x110] sm:$0xff]
    %v528 = vld [vmem:[#allocation8 + $0x118] sm:$0xff]
    %v529 = vld [vmem:[#allocation8 + $0x120] sm:$0xff]
    %v530 = vld [vmem:[#allocation8 + $0x128] sm:$0xff]
    %v531 = vld [vmem:[#allocation8 + $0x130] sm:$0xff]
    %v532 = vld [vmem:[#allocation8 + $0x138] sm:$0xff]
    %v533 = vld [vmem:[#allocation8 + $0x140] sm:$0xff]
    %v534 = vld [vmem:[#allocation8 + $0x148] sm:$0xff]
    %v535 = vld [vmem:[#allocation8 + $0x150] sm:$0xff]
    %v536 = vld [vmem:[#allocation8 + $0x158] sm:$0xff]
    %v537 = vld [vmem:[#allocation8 + $0x160] sm:$0xff]
    %v538 = vld [vmem:[#allocation8 + $0x168] sm:$0xff]
    %v539 = vld [vmem:[#allocation8 + $0x170] sm:$0xff]
    %v540 = vld [vmem:[#allocation8 + $0x178] sm:$0xff]
    %v541 = vld [vmem:[#allocation8 + $0x180] sm:$0xff]
    %v542 = vld [vmem:[#allocation8 + $0x188] sm:$0xff]
    %v543 = vld [vmem:[#allocation8 + $0x190] sm:$0xff]
    %v544 = vld [vmem:[#allocation8 + $0x198] sm:$0xff]
    %v545 = vld [vmem:[#allocation8 + $0x1a0] sm:$0xff]
    %v546 = vld [vmem:[#allocation8 + $0x1a8] sm:$0xff]
    %v547 = vld [vmem:[#allocation8 + $0x1b0] sm:$0xff]
    %v548 = vld [vmem:[#allocation8 + $0x1b8] sm:$0xff]
    %v549 = vld [vmem:[#allocation8 + $0x1c0] sm:$0xff]
    %v550 = vld [vmem:[#allocation8 + $0x1c8] sm:$0xff]
    %v551 = vld [vmem:[#allocation8 + $0x1d0] sm:$0xff]
    %v552 = vld [vmem:[#allocation8 + $0x1d8] sm:$0xff]
    %v553 = vld [vmem:[#allocation8 + $0x1e0] sm:$0xff]
    %v554 = vld [vmem:[#allocation8 + $0x1e8] sm:$0xff]
    %v555 = vld [vmem:[#allocation8 + $0x1f0] sm:$0xff]
    %v556 = vld [vmem:[#allocation8 + $0x1f8] sm:$0xff]
    %v557 = vld [vmem:[#allocation8 + $0x200] sm:$0xff]
    %v558 = vld [vmem:[#allocation8 + $0x208] sm:$0xff]
    %v559 = vld [vmem:[#allocation8 + $0x210] sm:$0xff]
    %v560 = vld [vmem:[#allocation8 + $0x218] sm:$0xff]
    %v561 = vld [vmem:[#allocation8 + $0x220] sm:$0xff]
    %v562 = vld [vmem:[#allocation8 + $0x228] sm:$0xff]
    %v563 = vld [vmem:[#allocation8 + $0x230] sm:$0xff]
    %v564 = vld [vmem:[#allocation8 + $0x238] sm:$0xff]
    %v565 = vld [vmem:[#allocation8 + $0x240] sm:$0xff]
    %v566 = vld [vmem:[#allocation8 + $0x248] sm:$0xff]
    %v567 = vld [vmem:[#allocation8 + $0x250] sm:$0xff]
    %v568 = vld [vmem:[#allocation8 + $0x258] sm:$0xff]
    %v569 = vld [vmem:[#allocation8 + $0x260] sm:$0xff]
    %v570 = vld [vmem:[#allocation8 + $0x268] sm:$0xff]
    %v571 = vld [vmem:[#allocation8 + $0x270] sm:$0xff]
    %v572 = vld [vmem:[#allocation8 + $0x278] sm:$0xff]
    %v573 = vld [vmem:[#allocation8 + $0x280] sm:$0xff]
    %v574 = vld [vmem:[#allocation8 + $0x288] sm:$0xff]
    %v575 = vld [vmem:[#allocation8 + $0x290] sm:$0xff]
    %v576 = vld [vmem:[#allocation8 + $0x298] sm:$0xff]
    %v577 = vld [vmem:[#allocation8 + $0x2a0] sm:$0xff]
    %v578 = vld [vmem:[#allocation8 + $0x2a8] sm:$0xff]
    %v579 = vld [vmem:[#allocation8 + $0x2b0] sm:$0xff]
    %v580 = vld [vmem:[#allocation8 + $0x2b8] sm:$0xff]
    %v581 = vld [vmem:[#allocation8 + $0x2c0] sm:$0xff]
    %v582 = vld [vmem:[#allocation8 + $0x2c8] sm:$0xff]
    %v583 = vld [vmem:[#allocation8 + $0x2d0] sm:$0xff]
    %v584 = vld [vmem:[#allocation8 + $0x2d8] sm:$0xff]
    %v585 = vld [vmem:[#allocation8 + $0x2e0] sm:$0xff]
    %v586 = vld [vmem:[#allocation8 + $0x2e8] sm:$0xff]
    %v587 = vld [vmem:[#allocation8 + $0x2f0] sm:$0xff]
    %v588 = vld [vmem:[#allocation8 + $0x2f8] sm:$0xff]
    %v589 = vld [vmem:[#allocation8 + $0x300] sm:$0xff]
    %v590 = vld [vmem:[#allocation8 + $0x308] sm:$0xff]
    %v591 = vld [vmem:[#allocation8 + $0x310] sm:$0xff]
    %v592 = vld [vmem:[#allocation8 + $0x318] sm:$0xff]
    %v593 = vld [vmem:[#allocation8 + $0x320] sm:$0xff]
    %v594 = vld [vmem:[#allocation8 + $0x328] sm:$0xff]
    %v595 = vld [vmem:[#allocation8 + $0x330] sm:$0xff]
    %v596 = vld [vmem:[#allocation8 + $0x338] sm:$0xff]
    %v597 = vld [vmem:[#allocation8 + $0x340] sm:$0xff]
    %v598 = vld [vmem:[#allocation8 + $0x348] sm:$0xff]
    %v599 = vld [vmem:[#allocation8 + $0x350] sm:$0xff]
    %v600 = vld [vmem:[#allocation8 + $0x358] sm:$0xff]
    %v601 = vld [vmem:[#allocation8 + $0x360] sm:$0xff]
    %v602 = vld [vmem:[#allocation8 + $0x368] sm:$0xff]
    %v603 = vld [vmem:[#allocation8 + $0x370] sm:$0xff]
    %v604 = vld [vmem:[#allocation8 + $0x378] sm:$0xff]
    %v605 = vld [vmem:[#allocation8 + $0x380] sm:$0xff]
    %v606 = vld [vmem:[#allocation8 + $0x388] sm:$0xff]
    %v607 = vld [vmem:[#allocation8 + $0x390] sm:$0xff]
    %v608 = vld [vmem:[#allocation8 + $0x398] sm:$0xff]
    %v609 = vld [vmem:[#allocation8 + $0x3a0] sm:$0xff]
    %v610 = vld [vmem:[#allocation8 + $0x3a8] sm:$0xff]
    %v611 = vld [vmem:[#allocation8 + $0x3b0] sm:$0xff]
    %v612 = vld [vmem:[#allocation8 + $0x3b8] sm:$0xff]
    %v613 = vld [vmem:[#allocation8 + $0x3c0] sm:$0xff]
    %v614 = vld [vmem:[#allocation8 + $0x3c8] sm:$0xff]
    %v615 = vld [vmem:[#allocation8 + $0x3d0] sm:$0xff]
    %v616 = vld [vmem:[#allocation8 + $0x3d8] sm:$0xff]
    %v617 = vld [vmem:[#allocation8 + $0x3e0] sm:$0xff]
    %v618 = vld [vmem:[#allocation8 + $0x3e8] sm:$0xff]
    %v619 = vld [vmem:[#allocation8 + $0x3f0] sm:$0xff]
    %v620 = vld [vmem:[#allocation8 + $0x3f8] sm:$0xff]
    %v621 = vld [vmem:[#allocation8 + $0x400] sm:$0xff]
    %v622 = vld [vmem:[#allocation8 + $0x408] sm:$0xff]
    %v623 = vld [vmem:[#allocation8 + $0x410] sm:$0xff]
    %v624 = vld [vmem:[#allocation8 + $0x418] sm:$0xff]
    %v625 = vld [vmem:[#allocation8 + $0x420] sm:$0xff]
    %v626 = vld [vmem:[#allocation8 + $0x428] sm:$0xff]
    %v627 = vld [vmem:[#allocation8 + $0x430] sm:$0xff]
    %v628 = vld [vmem:[#allocation8 + $0x438] sm:$0xff]
    %v629 = vld [vmem:[#allocation8 + $0x440] sm:$0xff]
    %v630 = vld [vmem:[#allocation8 + $0x448] sm:$0xff]
    %v631 = vld [vmem:[#allocation8 + $0x450] sm:$0xff]
    %v632 = vld [vmem:[#allocation8 + $0x458] sm:$0xff]
    %v633 = vld [vmem:[#allocation8 + $0x460] sm:$0xff]
    %v634 = vld [vmem:[#allocation8 + $0x468] sm:$0xff]
    %v635 = vld [vmem:[#allocation8 + $0x470] sm:$0xff]
    %v636 = vld [vmem:[#allocation8 + $0x478] sm:$0xff]
    %v637 = vld [vmem:[#allocation8 + $0x480] sm:$0xff]
    %v638 = vld [vmem:[#allocation8 + $0x488] sm:$0xff]
    %v639 = vld [vmem:[#allocation8 + $0x490] sm:$0xff]
    %v640 = vld [vmem:[#allocation8 + $0x498] sm:$0xff]
    %v641 = vld [vmem:[#allocation8 + $0x4a0] sm:$0xff]
    %v642 = vld [vmem:[#allocation8 + $0x4a8] sm:$0xff]
    %v643 = vld [vmem:[#allocation8 + $0x4b0] sm:$0xff]
    %v644 = vld [vmem:[#allocation8 + $0x4b8] sm:$0xff]
    %v645 = vld [vmem:[#allocation8 + $0x4c0] sm:$0xff]
    %v646 = vld [vmem:[#allocation8 + $0x4c8] sm:$0xff]
    %v647 = vld [vmem:[#allocation8 + $0x4d0] sm:$0xff]
    %v648 = vld [vmem:[#allocation8 + $0x4d8] sm:$0xff]
    %v649 = vld [vmem:[#allocation8 + $0x4e0] sm:$0xff]
    %v650 = vld [vmem:[#allocation8 + $0x4e8] sm:$0xff]
    %v651 = vld [vmem:[#allocation8 + $0x4f0] sm:$0xff]
    %v652 = vld [vmem:[#allocation8 + $0x4f8] sm:$0xff]
    %v653 = vld [vmem:[#allocation8 + $0x500] sm:$0xff]
    %v654 = vld [vmem:[#allocation8 + $0x508] sm:$0xff]
    %v655 = vld [vmem:[#allocation8 + $0x510] sm:$0xff]
    %v656 = vld [vmem:[#allocation8 + $0x518] sm:$0xff]
    %v657 = vld [vmem:[#allocation8 + $0x520] sm:$0xff]
    %v658 = vld [vmem:[#allocation8 + $0x528] sm:$0xff]
    %v659 = vld [vmem:[#allocation8 + $0x530] sm:$0xff]
    %v660 = vld [vmem:[#allocation8 + $0x538] sm:$0xff]
    %v661 = vld [vmem:[#allocation8 + $0x540] sm:$0xff]
    %v662 = vld [vmem:[#allocation8 + $0x548] sm:$0xff]
    %v663 = vld [vmem:[#allocation8 + $0x550] sm:$0xff]
    %v664 = vld [vmem:[#allocation8 + $0x558] sm:$0xff]
    %v665 = vld [vmem:[#allocation8 + $0x560] sm:$0xff]
    %v666 = vld [vmem:[#allocation8 + $0x568] sm:$0xff]
    %v667 = vld [vmem:[#allocation8 + $0x570] sm:$0xff]
    %v668 = vld [vmem:[#allocation8 + $0x578] sm:$0xff]
    %v669 = vld [vmem:[#allocation8 + $0x580] sm:$0xff]
    %v670 = vld [vmem:[#allocation8 + $0x588] sm:$0xff]
    %v671 = vld [vmem:[#allocation8 + $0x590] sm:$0xff]
    %v672 = vld [vmem:[#allocation8 + $0x598] sm:$0xff]
    %v673 = vld [vmem:[#allocation8 + $0x5a0] sm:$0xff]
    %v674 = vld [vmem:[#allocation8 + $0x5a8] sm:$0xff]
    %v675 = vld [vmem:[#allocation8 + $0x5b0] sm:$0xff]
    %v676 = vld [vmem:[#allocation8 + $0x5b8] sm:$0xff]
    %v677 = vld [vmem:[#allocation8 + $0x5c0] sm:$0xff]
    %v678 = vld [vmem:[#allocation8 + $0x5c8] sm:$0xff]
    %v679 = vld [vmem:[#allocation8 + $0x5d0] sm:$0xff]
    %v680 = vld [vmem:[#allocation8 + $0x5d8] sm:$0xff]
    %v681 = vld [vmem:[#allocation8 + $0x5e0] sm:$0xff]
    %v682 = vld [vmem:[#allocation8 + $0x5e8] sm:$0xff]
    %v683 = vld [vmem:[#allocation8 + $0x5f0] sm:$0xff]
    %v684 = vld [vmem:[#allocation8 + $0x5f8] sm:$0xff]
    %v685 = vld [vmem:[#allocation8 + $0x600] sm:$0xff]
    %v686 = vld [vmem:[#allocation8 + $0x608] sm:$0xff]
    %v687 = vld [vmem:[#allocation8 + $0x610] sm:$0xff]
    %v688 = vld [vmem:[#allocation8 + $0x618] sm:$0xff]
    %v689 = vld [vmem:[#allocation8 + $0x620] sm:$0xff]
    %v690 = vld [vmem:[#allocation8 + $0x628] sm:$0xff]
    %v691 = vld [vmem:[#allocation8 + $0x630] sm:$0xff]
    %v692 = vld [vmem:[#allocation8 + $0x638] sm:$0xff]
    %v693 = vld [vmem:[#allocation8 + $0x640] sm:$0xff]
    %v694 = vld [vmem:[#allocation8 + $0x648] sm:$0xff]
    %v695 = vld [vmem:[#allocation8 + $0x650] sm:$0xff]
    %v696 = vld [vmem:[#allocation8 + $0x658] sm:$0xff]
    %v697 = vld [vmem:[#allocation8 + $0x660] sm:$0xff]
    %v698 = vld [vmem:[#allocation8 + $0x668] sm:$0xff]
    %v699 = vld [vmem:[#allocation8 + $0x670] sm:$0xff]
    %v700 = vld [vmem:[#allocation8 + $0x678] sm:$0xff]
    %v701 = vld [vmem:[#allocation8 + $0x680] sm:$0xff]
    %v702 = vld [vmem:[#allocation8 + $0x688] sm:$0xff]
    %v703 = vld [vmem:[#allocation8 + $0x690] sm:$0xff]
    %v704 = vld [vmem:[#allocation8 + $0x698] sm:$0xff]
    %v705 = vld [vmem:[#allocation8 + $0x6a0] sm:$0xff]
    %v706 = vld [vmem:[#allocation8 + $0x6a8] sm:$0xff]
    %v707 = vld [vmem:[#allocation8 + $0x6b0] sm:$0xff]
    %v708 = vld [vmem:[#allocation8 + $0x6b8] sm:$0xff]
    %v709 = vld [vmem:[#allocation8 + $0x6c0] sm:$0xff]
    %v710 = vld [vmem:[#allocation8 + $0x6c8] sm:$0xff]
    %v711 = vld [vmem:[#allocation8 + $0x6d0] sm:$0xff]
    %v712 = vld [vmem:[#allocation8 + $0x6d8] sm:$0xff]
    %v713 = vld [vmem:[#allocation8 + $0x6e0] sm:$0xff]
    %v714 = vld [vmem:[#allocation8 + $0x6e8] sm:$0xff]
    %v715 = vld [vmem:[#allocation8 + $0x6f0] sm:$0xff]
    %v716 = vld [vmem:[#allocation8 + $0x6f8] sm:$0xff]
    %v717 = vld [vmem:[#allocation8 + $0x700] sm:$0xff]
    %v718 = vld [vmem:[#allocation8 + $0x708] sm:$0xff]
    %v719 = vld [vmem:[#allocation8 + $0x710] sm:$0xff]
    %v720 = vld [vmem:[#allocation8 + $0x718] sm:$0xff]
    %v721 = vld [vmem:[#allocation8 + $0x720] sm:$0xff]
    %v722 = vld [vmem:[#allocation8 + $0x728] sm:$0xff]
    %v723 = vld [vmem:[#allocation8 + $0x730] sm:$0xff]
    %v724 = vld [vmem:[#allocation8 + $0x738] sm:$0xff]
    %v725 = vld [vmem:[#allocation8 + $0x740] sm:$0xff]
    %v726 = vld [vmem:[#allocation8 + $0x748] sm:$0xff]
    %v727 = vld [vmem:[#allocation8 + $0x750] sm:$0xff]
    %v728 = vld [vmem:[#allocation8 + $0x758] sm:$0xff]
    %v729 = vld [vmem:[#allocation8 + $0x760] sm:$0xff]
    %v730 = vld [vmem:[#allocation8 + $0x768] sm:$0xff]
    %v731 = vld [vmem:[#allocation8 + $0x770] sm:$0xff]
    %v732 = vld [vmem:[#allocation8 + $0x778] sm:$0xff]
    %v733 = vld [vmem:[#allocation8 + $0x780] sm:$0xff]
    %v734 = vld [vmem:[#allocation8 + $0x788] sm:$0xff]
    %v735 = vld [vmem:[#allocation8 + $0x790] sm:$0xff]
    %v736 = vld [vmem:[#allocation8 + $0x798] sm:$0xff]
    %v737 = vld [vmem:[#allocation8 + $0x7a0] sm:$0xff]
    %v738 = vld [vmem:[#allocation8 + $0x7a8] sm:$0xff]
    %v739 = vld [vmem:[#allocation8 + $0x7b0] sm:$0xff]
    %v740 = vld [vmem:[#allocation8 + $0x7b8] sm:$0xff]
    %v741 = vld [vmem:[#allocation8 + $0x7c0] sm:$0xff]
    %v742 = vld [vmem:[#allocation8 + $0x7c8] sm:$0xff]
    %v743 = vld [vmem:[#allocation8 + $0x7d0] sm:$0xff]
    %v744 = vld [vmem:[#allocation8 + $0x7d8] sm:$0xff]
    %v745 = vld [vmem:[#allocation8 + $0x7e0] sm:$0xff]
    %v746 = vld [vmem:[#allocation8 + $0x7e8] sm:$0xff]
    %v747 = vld [vmem:[#allocation8 + $0x7f0] sm:$0xff]
    %v748 = vld [vmem:[#allocation8 + $0x7f8] sm:$0xff]
    %v749 = vld [vmem:[#allocation8 + $0x800] sm:$0xff]
    %v750 = vld [vmem:[#allocation8 + $0x808] sm:$0xff]
    %v751 = vld [vmem:[#allocation8 + $0x810] sm:$0xff]
    %v752 = vld [vmem:[#allocation8 + $0x818] sm:$0xff]
    %v753 = vld [vmem:[#allocation8 + $0x820] sm:$0xff]
    %v754 = vld [vmem:[#allocation8 + $0x828] sm:$0xff]
    %v755 = vld [vmem:[#allocation8 + $0x830] sm:$0xff]
    %v756 = vld [vmem:[#allocation8 + $0x838] sm:$0xff]
    %v757 = vld [vmem:[#allocation8 + $0x840] sm:$0xff]
    %v758 = vld [vmem:[#allocation8 + $0x848] sm:$0xff]
    %v759 = vld [vmem:[#allocation8 + $0x850] sm:$0xff]
    %v760 = vld [vmem:[#allocation8 + $0x858] sm:$0xff]
    %v761 = vld [vmem:[#allocation8 + $0x860] sm:$0xff]
    %v762 = vld [vmem:[#allocation8 + $0x868] sm:$0xff]
    %v763 = vld [vmem:[#allocation8 + $0x870] sm:$0xff]
    %v764 = vld [vmem:[#allocation8 + $0x878] sm:$0xff]
    %v765 = vld [vmem:[#allocation8 + $0x880] sm:$0xff]
    %v766 = vld [vmem:[#allocation8 + $0x888] sm:$0xff]
    %v767 = vld [vmem:[#allocation8 + $0x890] sm:$0xff]
    %v768 = vld [vmem:[#allocation8 + $0x898] sm:$0xff]
    %v769 = vld [vmem:[#allocation8 + $0x8a0] sm:$0xff]
    %v770 = vld [vmem:[#allocation8 + $0x8a8] sm:$0xff]
    %v771 = vld [vmem:[#allocation8 + $0x8b0] sm:$0xff]
    %v772 = vld [vmem:[#allocation8 + $0x8b8] sm:$0xff]
    %v773 = vld [vmem:[#allocation8 + $0x8c0] sm:$0xff]
    %v774 = vld [vmem:[#allocation8 + $0x8c8] sm:$0xff]
    %v775 = vld [vmem:[#allocation8 + $0x8d0] sm:$0xff]
    %v776 = vld [vmem:[#allocation8 + $0x8d8] sm:$0xff]
    %v777 = vld [vmem:[#allocation8 + $0x8e0] sm:$0xff]
    %v778 = vld [vmem:[#allocation8 + $0x8e8] sm:$0xff]
    %v779 = vld [vmem:[#allocation8 + $0x8f0] sm:$0xff]
    %v780 = vld [vmem:[#allocation8 + $0x8f8] sm:$0xff]
    %v781 = vld [vmem:[#allocation8 + $0x900] sm:$0xff]
    %v782 = vld [vmem:[#allocation8 + $0x908] sm:$0xff]
    %v783 = vld [vmem:[#allocation8 + $0x910] sm:$0xff]
    %v784 = vld [vmem:[#allocation8 + $0x918] sm:$0xff]
    %v785 = vld [vmem:[#allocation8 + $0x920] sm:$0xff]
    %v786 = vld [vmem:[#allocation8 + $0x928] sm:$0xff]
    %v787 = vld [vmem:[#allocation8 + $0x930] sm:$0xff]
    %v788 = vld [vmem:[#allocation8 + $0x938] sm:$0xff]
    %v789 = vld [vmem:[#allocation8 + $0x940] sm:$0xff]
    %v790 = vld [vmem:[#allocation8 + $0x948] sm:$0xff]
    %v791 = vld [vmem:[#allocation8 + $0x950] sm:$0xff]
    %v792 = vld [vmem:[#allocation8 + $0x958] sm:$0xff]
    %v793 = vld [vmem:[#allocation8 + $0x960] sm:$0xff]
    %v794 = vld [vmem:[#allocation8 + $0x968] sm:$0xff]
    %v795 = vld [vmem:[#allocation8 + $0x970] sm:$0xff]
    %v796 = vld [vmem:[#allocation8 + $0x978] sm:$0xff]
    %v797 = vld [vmem:[#allocation8 + $0x980] sm:$0xff]
    %v798 = vld [vmem:[#allocation8 + $0x988] sm:$0xff]
    %v799 = vld [vmem:[#allocation8 + $0x990] sm:$0xff]
    %v800 = vld [vmem:[#allocation8 + $0x998] sm:$0xff]
    %v801 = vld [vmem:[#allocation8 + $0x9a0] sm:$0xff]
    %v802 = vld [vmem:[#allocation8 + $0x9a8] sm:$0xff]
    %v803 = vld [vmem:[#allocation8 + $0x9b0] sm:$0xff]
    %v804 = vld [vmem:[#allocation8 + $0x9b8] sm:$0xff]
    %v805 = vld [vmem:[#allocation8 + $0x9c0] sm:$0xff]
    %v806 = vld [vmem:[#allocation8 + $0x9c8] sm:$0xff]
    %v807 = vld [vmem:[#allocation8 + $0x9d0] sm:$0xff]
    %v808 = vld [vmem:[#allocation8 + $0x9d8] sm:$0xff]
    %v809 = vld [vmem:[#allocation8 + $0x9e0] sm:$0xff]
    %v810 = vld [vmem:[#allocation8 + $0x9e8] sm:$0xff]
    %v811 = vld [vmem:[#allocation8 + $0x9f0] sm:$0xff]
    %v812 = vld [vmem:[#allocation8 + $0x9f8] sm:$0xff]
    %v813 = vld [vmem:[#allocation8 + $0xa00] sm:$0xff]
    %v814 = vld [vmem:[#allocation8 + $0xa08] sm:$0xff]
    %v815 = vld [vmem:[#allocation8 + $0xa10] sm:$0xff]
    %v816 = vld [vmem:[#allocation8 + $0xa18] sm:$0xff]
    %v817 = vld [vmem:[#allocation8 + $0xa20] sm:$0xff]
    %v818 = vld [vmem:[#allocation8 + $0xa28] sm:$0xff]
    %v819 = vld [vmem:[#allocation8 + $0xa30] sm:$0xff]
    %v820 = vld [vmem:[#allocation8 + $0xa38] sm:$0xff]
    %v821 = vld [vmem:[#allocation8 + $0xa40] sm:$0xff]
    %v822 = vld [vmem:[#allocation8 + $0xa48] sm:$0xff]
    %v823 = vld [vmem:[#allocation8 + $0xa50] sm:$0xff]
    %v824 = vld [vmem:[#allocation8 + $0xa58] sm:$0xff]
    %v825 = vld [vmem:[#allocation8 + $0xa60] sm:$0xff]
    %v826 = vld [vmem:[#allocation8 + $0xa68] sm:$0xff]
    %v827 = vld [vmem:[#allocation8 + $0xa70] sm:$0xff]
    %v828 = vld [vmem:[#allocation8 + $0xa78] sm:$0xff]
    %v829 = vld [vmem:[#allocation8 + $0xa80] sm:$0xff]
    %v830 = vld [vmem:[#allocation8 + $0xa88] sm:$0xff]
    %v831 = vld [vmem:[#allocation8 + $0xa90] sm:$0xff]
    %v832 = vld [vmem:[#allocation8 + $0xa98] sm:$0xff]
    %v833 = vld [vmem:[#allocation8 + $0xaa0] sm:$0xff]
    %v834 = vld [vmem:[#allocation8 + $0xaa8] sm:$0xff]
    %v835 = vld [vmem:[#allocation8 + $0xab0] sm:$0xff]
    %v836 = vld [vmem:[#allocation8 + $0xab8] sm:$0xff]
    %v837 = vld [vmem:[#allocation8 + $0xac0] sm:$0xff]
    %v838 = vld [vmem:[#allocation8 + $0xac8] sm:$0xff]
    %v839 = vld [vmem:[#allocation8 + $0xad0] sm:$0xff]
    %v840 = vld [vmem:[#allocation8 + $0xad8] sm:$0xff]
    %v841 = vld [vmem:[#allocation8 + $0xae0] sm:$0xff]
    %v842 = vld [vmem:[#allocation8 + $0xae8] sm:$0xff]
    %v843 = vld [vmem:[#allocation8 + $0xaf0] sm:$0xff]
    %v844 = vld [vmem:[#allocation8 + $0xaf8] sm:$0xff]
    %v845 = vld [vmem:[#allocation8 + $0xb00] sm:$0xff]
    %v846 = vld [vmem:[#allocation8 + $0xb08] sm:$0xff]
    %v847 = vld [vmem:[#allocation8 + $0xb10] sm:$0xff]
    %v848 = vld [vmem:[#allocation8 + $0xb18] sm:$0xff]
    %v849 = vld [vmem:[#allocation8 + $0xb20] sm:$0xff]
    %v850 = vld [vmem:[#allocation8 + $0xb28] sm:$0xff]
    %v851 = vld [vmem:[#allocation8 + $0xb30] sm:$0xff]
    %v852 = vld [vmem:[#allocation8 + $0xb38] sm:$0xff]
    %v853 = vld [vmem:[#allocation8 + $0xb40] sm:$0xff]
    %v854 = vld [vmem:[#allocation8 + $0xb48] sm:$0xff]
    %v855 = vld [vmem:[#allocation8 + $0xb50] sm:$0xff]
    %v856 = vld [vmem:[#allocation8 + $0xb58] sm:$0xff]
    %v857 = vld [vmem:[#allocation8 + $0xb60] sm:$0xff]
    %v858 = vld [vmem:[#allocation8 + $0xb68] sm:$0xff]
    %v859 = vld [vmem:[#allocation8 + $0xb70] sm:$0xff]
    %v860 = vld [vmem:[#allocation8 + $0xb78] sm:$0xff]
    %v861 = vld [vmem:[#allocation8 + $0xb80] sm:$0xff]
    %v862 = vld [vmem:[#allocation8 + $0xb88] sm:$0xff]
    %v863 = vld [vmem:[#allocation8 + $0xb90] sm:$0xff]
    %v864 = vld [vmem:[#allocation8 + $0xb98] sm:$0xff]
    %v865 = vld [vmem:[#allocation8 + $0xba0] sm:$0xff]
    %v866 = vld [vmem:[#allocation8 + $0xba8] sm:$0xff]
    %v867 = vld [vmem:[#allocation8 + $0xbb0] sm:$0xff]
    %v868 = vld [vmem:[#allocation8 + $0xbb8] sm:$0xff]
    %v869 = vld [vmem:[#allocation8 + $0xbc0] sm:$0xff]
    %v870 = vld [vmem:[#allocation8 + $0xbc8] sm:$0xff]
    %v871 = vld [vmem:[#allocation8 + $0xbd0] sm:$0xff]
    %v872 = vld [vmem:[#allocation8 + $0xbd8] sm:$0xff]
    %v873 = vld [vmem:[#allocation8 + $0xbe0] sm:$0xff]
    %v874 = vld [vmem:[#allocation8 + $0xbe8] sm:$0xff]
    %v875 = vld [vmem:[#allocation8 + $0xbf0] sm:$0xff]
    %v876 = vld [vmem:[#allocation8 + $0xbf8] sm:$0xff]
    %v877 = vld [vmem:[#allocation8 + $0xc00] sm:$0xff]
    %v878 = vld [vmem:[#allocation8 + $0xc08] sm:$0xff]
    %v879 = vld [vmem:[#allocation8 + $0xc10] sm:$0xff]
    %v880 = vld [vmem:[#allocation8 + $0xc18] sm:$0xff]
    %v881 = vld [vmem:[#allocation8 + $0xc20] sm:$0xff]
    %v882 = vld [vmem:[#allocation8 + $0xc28] sm:$0xff]
    %v883 = vld [vmem:[#allocation8 + $0xc30] sm:$0xff]
    %v884 = vld [vmem:[#allocation8 + $0xc38] sm:$0xff]
    %v885 = vld [vmem:[#allocation8 + $0xc40] sm:$0xff]
    %v886 = vld [vmem:[#allocation8 + $0xc48] sm:$0xff]
    %v887 = vld [vmem:[#allocation8 + $0xc50] sm:$0xff]
    %v888 = vld [vmem:[#allocation8 + $0xc58] sm:$0xff]
    %v889 = vld [vmem:[#allocation8 + $0xc60] sm:$0xff]
    %v890 = vld [vmem:[#allocation8 + $0xc68] sm:$0xff]
    %v891 = vld [vmem:[#allocation8 + $0xc70] sm:$0xff]
    %v892 = vld [vmem:[#allocation8 + $0xc78] sm:$0xff]
    %v893 = vld [vmem:[#allocation8 + $0xc80] sm:$0xff]
    %v894 = vld [vmem:[#allocation8 + $0xc88] sm:$0xff]
    %v895 = vld [vmem:[#allocation8 + $0xc90] sm:$0xff]
    %v896 = vld [vmem:[#allocation8 + $0xc98] sm:$0xff]
    %v897 = vld [vmem:[#allocation8 + $0xca0] sm:$0xff]
    %v898 = vld [vmem:[#allocation8 + $0xca8] sm:$0xff]
    %v899 = vld [vmem:[#allocation8 + $0xcb0] sm:$0xff]
    %v900 = vld [vmem:[#allocation8 + $0xcb8] sm:$0xff]
    %v901 = vld [vmem:[#allocation8 + $0xcc0] sm:$0xff]
    %v902 = vld [vmem:[#allocation8 + $0xcc8] sm:$0xff]
    %v903 = vld [vmem:[#allocation8 + $0xcd0] sm:$0xff]
    %v904 = vld [vmem:[#allocation8 + $0xcd8] sm:$0xff]
    %v905 = vld [vmem:[#allocation8 + $0xce0] sm:$0xff]
    %v906 = vld [vmem:[#allocation8 + $0xce8] sm:$0xff]
    %v907 = vld [vmem:[#allocation8 + $0xcf0] sm:$0xff]
    %v908 = vld [vmem:[#allocation8 + $0xcf8] sm:$0xff]
    %v909 = vld [vmem:[#allocation8 + $0xd00] sm:$0xff]
    %v910 = vld [vmem:[#allocation8 + $0xd08] sm:$0xff]
    %v911 = vld [vmem:[#allocation8 + $0xd10] sm:$0xff]
    %v912 = vld [vmem:[#allocation8 + $0xd18] sm:$0xff]
    %v913 = vld [vmem:[#allocation8 + $0xd20] sm:$0xff]
    %v914 = vld [vmem:[#allocation8 + $0xd28] sm:$0xff]
    %v915 = vld [vmem:[#allocation8 + $0xd30] sm:$0xff]
    %v916 = vld [vmem:[#allocation8 + $0xd38] sm:$0xff]
    %v917 = vld [vmem:[#allocation8 + $0xd40] sm:$0xff]
    %v918 = vld [vmem:[#allocation8 + $0xd48] sm:$0xff]
    %v919 = vld [vmem:[#allocation8 + $0xd50] sm:$0xff]
    %v920 = vld [vmem:[#allocation8 + $0xd58] sm:$0xff]
    %v921 = vld [vmem:[#allocation8 + $0xd60] sm:$0xff]
    %v922 = vld [vmem:[#allocation8 + $0xd68] sm:$0xff]
    %v923 = vld [vmem:[#allocation8 + $0xd70] sm:$0xff]
    %v924 = vld [vmem:[#allocation8 + $0xd78] sm:$0xff]
    %v925 = vld [vmem:[#allocation8 + $0xd80] sm:$0xff]
    %v926 = vld [vmem:[#allocation8 + $0xd88] sm:$0xff]
    %v927 = vld [vmem:[#allocation8 + $0xd90] sm:$0xff]
    %v928 = vld [vmem:[#allocation8 + $0xd98] sm:$0xff]
    %v929 = vld [vmem:[#allocation8 + $0xda0] sm:$0xff]
    %v930 = vld [vmem:[#allocation8 + $0xda8] sm:$0xff]
    %v931 = vld [vmem:[#allocation8 + $0xdb0] sm:$0xff]
    %v932 = vld [vmem:[#allocation8 + $0xdb8] sm:$0xff]
    %v933 = vld [vmem:[#allocation8 + $0xdc0] sm:$0xff]
    %v934 = vld [vmem:[#allocation8 + $0xdc8] sm:$0xff]
    %v935 = vld [vmem:[#allocation8 + $0xdd0] sm:$0xff]
    %v936 = vld [vmem:[#allocation8 + $0xdd8] sm:$0xff]
    %v937 = vld [vmem:[#allocation8 + $0xde0] sm:$0xff]
    %v938 = vld [vmem:[#allocation8 + $0xde8] sm:$0xff]
    %v939 = vld [vmem:[#allocation8 + $0xdf0] sm:$0xff]
    %v940 = vld [vmem:[#allocation8 + $0xdf8] sm:$0xff]
    %v941 = vld [vmem:[#allocation8 + $0xe00] sm:$0xff]
    %v942 = vld [vmem:[#allocation8 + $0xe08] sm:$0xff]
    %v943 = vld [vmem:[#allocation8 + $0xe10] sm:$0xff]
    %v944 = vld [vmem:[#allocation8 + $0xe18] sm:$0xff]
    %v945 = vld [vmem:[#allocation8 + $0xe20] sm:$0xff]
    %v946 = vld [vmem:[#allocation8 + $0xe28] sm:$0xff]
    %v947 = vld [vmem:[#allocation8 + $0xe30] sm:$0xff]
    %v948 = vld [vmem:[#allocation8 + $0xe38] sm:$0xff]
    %v949 = vld [vmem:[#allocation8 + $0xe40] sm:$0xff]
    %v950 = vld [vmem:[#allocation8 + $0xe48] sm:$0xff]
    %v951 = vld [vmem:[#allocation8 + $0xe50] sm:$0xff]
    %v952 = vld [vmem:[#allocation8 + $0xe58] sm:$0xff]
    %v953 = vld [vmem:[#allocation8 + $0xe60] sm:$0xff]
    %v954 = vld [vmem:[#allocation8 + $0xe68] sm:$0xff]
    %v955 = vld [vmem:[#allocation8 + $0xe70] sm:$0xff]
    %v956 = vld [vmem:[#allocation8 + $0xe78] sm:$0xff]
    %v957 = vld [vmem:[#allocation8 + $0xe80] sm:$0xff]
    %v958 = vld [vmem:[#allocation8 + $0xe88] sm:$0xff]
    %v959 = vld [vmem:[#allocation8 + $0xe90] sm:$0xff]
    %v960 = vld [vmem:[#allocation8 + $0xe98] sm:$0xff]
    %v961 = vld [vmem:[#allocation8 + $0xea0] sm:$0xff]
    %v962 = vld [vmem:[#allocation8 + $0xea8] sm:$0xff]
    %v963 = vld [vmem:[#allocation8 + $0xeb0] sm:$0xff]
    %v964 = vld [vmem:[#allocation8 + $0xeb8] sm:$0xff]
    %v965 = vld [vmem:[#allocation8 + $0xec0] sm:$0xff]
    %v966 = vld [vmem:[#allocation8 + $0xec8] sm:$0xff]
    %v967 = vld [vmem:[#allocation8 + $0xed0] sm:$0xff]
    %v968 = vld [vmem:[#allocation8 + $0xed8] sm:$0xff]
    %v969 = vld [vmem:[#allocation8 + $0xee0] sm:$0xff]
    %v970 = vld [vmem:[#allocation8 + $0xee8] sm:$0xff]
    %v971 = vld [vmem:[#allocation8 + $0xef0] sm:$0xff]
    %v972 = vld [vmem:[#allocation8 + $0xef8] sm:$0xff]
    %v973 = vld [vmem:[#allocation8 + $0xf00] sm:$0xff]
    %v974 = vld [vmem:[#allocation8 + $0xf08] sm:$0xff]
    %v975 = vld [vmem:[#allocation8 + $0xf10] sm:$0xff]
    %v976 = vld [vmem:[#allocation8 + $0xf18] sm:$0xff]
    %v977 = vld [vmem:[#allocation8 + $0xf20] sm:$0xff]
    %v978 = vld [vmem:[#allocation8 + $0xf28] sm:$0xff]
    %v979 = vld [vmem:[#allocation8 + $0xf30] sm:$0xff]
    %v980 = vld [vmem:[#allocation8 + $0xf38] sm:$0xff]
    %v981 = vld [vmem:[#allocation8 + $0xf40] sm:$0xff]
    %v982 = vld [vmem:[#allocation8 + $0xf48] sm:$0xff]
    %v983 = vld [vmem:[#allocation8 + $0xf50] sm:$0xff]
    %v984 = vld [vmem:[#allocation8 + $0xf58] sm:$0xff]
    %v985 = vld [vmem:[#allocation8 + $0xf60] sm:$0xff]
    %v986 = vld [vmem:[#allocation8 + $0xf68] sm:$0xff]
    %v987 = vld [vmem:[#allocation8 + $0xf70] sm:$0xff]
    %v988 = vld [vmem:[#allocation8 + $0xf78] sm:$0xff]
    %v989 = vld [vmem:[#allocation8 + $0xf80] sm:$0xff]
    %v990 = vld [vmem:[#allocation8 + $0xf88] sm:$0xff]
    %v991 = vld [vmem:[#allocation8 + $0xf90] sm:$0xff]
    %v992 = vld [vmem:[#allocation8 + $0xf98] sm:$0xff]
    %v993 = vld [vmem:[#allocation8 + $0xfa0] sm:$0xff]
    %v994 = vld [vmem:[#allocation8 + $0xfa8] sm:$0xff]
    %v995 = vld [vmem:[#allocation8 + $0xfb0] sm:$0xff]
    %v996 = vld [vmem:[#allocation8 + $0xfb8] sm:$0xff]
    %v997 = vld [vmem:[#allocation8 + $0xfc0] sm:$0xff]
    %v998 = vld [vmem:[#allocation8 + $0xfc8] sm:$0xff]
    %v999 = vld [vmem:[#allocation8 + $0xfd0] sm:$0xff]
    %v1000 = vld [vmem:[#allocation8 + $0xfd8] sm:$0xff]
    %v1001 = vld [vmem:[#allocation8 + $0xfe0] sm:$0xff]
    %v1002 = vld [vmem:[#allocation8 + $0xfe8] sm:$0xff]
    %v1003 = vld [vmem:[#allocation8 + $0xff0] sm:$0xff]
    %v1004 = vld [vmem:[#allocation8 + $0xff8] sm:$0xff]
    %v1005 = vld [vmem:[#allocation10] sm:$0xff]
    %v1007 = vlaneseq
    %v1008 = vshrl.u32 %v1007, 7
    %v1009 = vsub.s32 0, %v1008
    %v1010 = vrot.slane %v1005, %v1009
    %v1011 = vlaneseq
    %v1012 = vshrl.u32 %v1011, 7
    %v1013 = vsub.s32 1, %v1012
    %v1014 = vrot.slane %v1005, %v1013
    %v1015 = vlaneseq
    %v1016 = vshrl.u32 %v1015, 7
    %v1017 = vsub.s32 2, %v1016
    %v1018 = vrot.slane %v1005, %v1017
    %v1019 = vlaneseq
    %v1020 = vshrl.u32 %v1019, 7
    %v1021 = vsub.s32 3, %v1020
    %v1022 = vrot.slane %v1005, %v1021
    %v1023 = vlaneseq
    %v1024 = vshrl.u32 %v1023, 7
    %v1025 = vsub.s32 4, %v1024
    %v1026 = vrot.slane %v1005, %v1025
    %v1027 = vlaneseq
    %v1028 = vshrl.u32 %v1027, 7
    %v1029 = vsub.s32 5, %v1028
    %v1030 = vrot.slane %v1005, %v1029
    %v1031 = vlaneseq
    %v1032 = vshrl.u32 %v1031, 7
    %v1033 = vsub.s32 6, %v1032
    %v1034 = vrot.slane %v1005, %v1033
    %v1035 = vlaneseq
    %v1036 = vshrl.u32 %v1035, 7
    %v1037 = vsub.s32 7, %v1036
    %v1038 = vrot.slane %v1005, %v1037
    %v1559 = vunpack.c.l.b16 %v493
    %v1560 = vunpack.c.h.b16 %v493
    %v1561 = vunpack.c.l.b16 %v494
    %v1562 = vunpack.c.h.b16 %v494
    %v1563 = vunpack.c.l.b16 %v495
    %v1564 = vunpack.c.h.b16 %v495
    %v1565 = vunpack.c.l.b16 %v496
    %v1566 = vunpack.c.h.b16 %v496
    %v1567 = vunpack.c.l.b16 %v497
    %v1568 = vunpack.c.h.b16 %v497
    %v1569 = vunpack.c.l.b16 %v498
    %v1570 = vunpack.c.h.b16 %v498
    %v1571 = vunpack.c.l.b16 %v499
    %v1572 = vunpack.c.h.b16 %v499
    %v1573 = vunpack.c.l.b16 %v500
    %v1574 = vunpack.c.h.b16 %v500
    %v1575 = vunpack.c.l.b16 %v501
    %v1576 = vunpack.c.h.b16 %v501
    %v1577 = vunpack.c.l.b16 %v502
    %v1578 = vunpack.c.h.b16 %v502
    %v1579 = vunpack.c.l.b16 %v503
    %v1580 = vunpack.c.h.b16 %v503
    %v1581 = vunpack.c.l.b16 %v504
    %v1582 = vunpack.c.h.b16 %v504
    %v1583 = vunpack.c.l.b16 %v505
    %v1584 = vunpack.c.h.b16 %v505
    %v1585 = vunpack.c.l.b16 %v506
    %v1586 = vunpack.c.h.b16 %v506
    %v1587 = vunpack.c.l.b16 %v507
    %v1588 = vunpack.c.h.b16 %v507
    %v1589 = vunpack.c.l.b16 %v508
    %v1590 = vunpack.c.h.b16 %v508
    %v1591 = vunpack.c.l.b16 %v509
    %v1592 = vunpack.c.h.b16 %v509
    %v1593 = vunpack.c.l.b16 %v510
    %v1594 = vunpack.c.h.b16 %v510
    %v1595 = vunpack.c.l.b16 %v511
    %v1596 = vunpack.c.h.b16 %v511
    %v1597 = vunpack.c.l.b16 %v512
    %v1598 = vunpack.c.h.b16 %v512
    %v1599 = vunpack.c.l.b16 %v513
    %v1600 = vunpack.c.h.b16 %v513
    %v1601 = vunpack.c.l.b16 %v514
    %v1602 = vunpack.c.h.b16 %v514
    %v1603 = vunpack.c.l.b16 %v515
    %v1604 = vunpack.c.h.b16 %v515
    %v1605 = vunpack.c.l.b16 %v516
    %v1606 = vunpack.c.h.b16 %v516
    %v1607 = vunpack.c.l.b16 %v517
    %v1608 = vunpack.c.h.b16 %v517
    %v1609 = vunpack.c.l.b16 %v518
    %v1610 = vunpack.c.h.b16 %v518
    %v1611 = vunpack.c.l.b16 %v519
    %v1612 = vunpack.c.h.b16 %v519
    %v1613 = vunpack.c.l.b16 %v520
    %v1614 = vunpack.c.h.b16 %v520
    %v1615 = vunpack.c.l.b16 %v521
    %v1616 = vunpack.c.h.b16 %v521
    %v1617 = vunpack.c.l.b16 %v522
    %v1618 = vunpack.c.h.b16 %v522
    %v1619 = vunpack.c.l.b16 %v523
    %v1620 = vunpack.c.h.b16 %v523
    %v1621 = vunpack.c.l.b16 %v524
    %v1622 = vunpack.c.h.b16 %v524
    %v1623 = vunpack.c.l.b16 %v525
    %v1624 = vunpack.c.h.b16 %v525
    %v1625 = vunpack.c.l.b16 %v526
    %v1626 = vunpack.c.h.b16 %v526
    %v1627 = vunpack.c.l.b16 %v527
    %v1628 = vunpack.c.h.b16 %v527
    %v1629 = vunpack.c.l.b16 %v528
    %v1630 = vunpack.c.h.b16 %v528
    %v1631 = vunpack.c.l.b16 %v529
    %v1632 = vunpack.c.h.b16 %v529
    %v1633 = vunpack.c.l.b16 %v530
    %v1634 = vunpack.c.h.b16 %v530
    %v1635 = vunpack.c.l.b16 %v531
    %v1636 = vunpack.c.h.b16 %v531
    %v1637 = vunpack.c.l.b16 %v532
    %v1638 = vunpack.c.h.b16 %v532
    %v1639 = vunpack.c.l.b16 %v533
    %v1640 = vunpack.c.h.b16 %v533
    %v1641 = vunpack.c.l.b16 %v534
    %v1642 = vunpack.c.h.b16 %v534
    %v1643 = vunpack.c.l.b16 %v535
    %v1644 = vunpack.c.h.b16 %v535
    %v1645 = vunpack.c.l.b16 %v536
    %v1646 = vunpack.c.h.b16 %v536
    %v1647 = vunpack.c.l.b16 %v537
    %v1648 = vunpack.c.h.b16 %v537
    %v1649 = vunpack.c.l.b16 %v538
    %v1650 = vunpack.c.h.b16 %v538
    %v1651 = vunpack.c.l.b16 %v539
    %v1652 = vunpack.c.h.b16 %v539
    %v1653 = vunpack.c.l.b16 %v540
    %v1654 = vunpack.c.h.b16 %v540
    %v1655 = vunpack.c.l.b16 %v541
    %v1656 = vunpack.c.h.b16 %v541
    %v1657 = vunpack.c.l.b16 %v542
    %v1658 = vunpack.c.h.b16 %v542
    %v1659 = vunpack.c.l.b16 %v543
    %v1660 = vunpack.c.h.b16 %v543
    %v1661 = vunpack.c.l.b16 %v544
    %v1662 = vunpack.c.h.b16 %v544
    %v1663 = vunpack.c.l.b16 %v545
    %v1664 = vunpack.c.h.b16 %v545
    %v1665 = vunpack.c.l.b16 %v546
    %v1666 = vunpack.c.h.b16 %v546
    %v1667 = vunpack.c.l.b16 %v547
    %v1668 = vunpack.c.h.b16 %v547
    %v1669 = vunpack.c.l.b16 %v548
    %v1670 = vunpack.c.h.b16 %v548
    %v1671 = vunpack.c.l.b16 %v549
    %v1672 = vunpack.c.h.b16 %v549
    %v1673 = vunpack.c.l.b16 %v550
    %v1674 = vunpack.c.h.b16 %v550
    %v1675 = vunpack.c.l.b16 %v551
    %v1676 = vunpack.c.h.b16 %v551
    %v1677 = vunpack.c.l.b16 %v552
    %v1678 = vunpack.c.h.b16 %v552
    %v1679 = vunpack.c.l.b16 %v553
    %v1680 = vunpack.c.h.b16 %v553
    %v1681 = vunpack.c.l.b16 %v554
    %v1682 = vunpack.c.h.b16 %v554
    %v1683 = vunpack.c.l.b16 %v555
    %v1684 = vunpack.c.h.b16 %v555
    %v1685 = vunpack.c.l.b16 %v556
    %v1686 = vunpack.c.h.b16 %v556
    %v1687 = vunpack.c.l.b16 %v557
    %v1688 = vunpack.c.h.b16 %v557
    %v1689 = vunpack.c.l.b16 %v558
    %v1690 = vunpack.c.h.b16 %v558
    %v1691 = vunpack.c.l.b16 %v559
    %v1692 = vunpack.c.h.b16 %v559
    %v1693 = vunpack.c.l.b16 %v560
    %v1694 = vunpack.c.h.b16 %v560
    %v1695 = vunpack.c.l.b16 %v561
    %v1696 = vunpack.c.h.b16 %v561
    %v1697 = vunpack.c.l.b16 %v562
    %v1698 = vunpack.c.h.b16 %v562
    %v1699 = vunpack.c.l.b16 %v563
    %v1700 = vunpack.c.h.b16 %v563
    %v1701 = vunpack.c.l.b16 %v564
    %v1702 = vunpack.c.h.b16 %v564
    %v1703 = vunpack.c.l.b16 %v565
    %v1704 = vunpack.c.h.b16 %v565
    %v1705 = vunpack.c.l.b16 %v566
    %v1706 = vunpack.c.h.b16 %v566
    %v1707 = vunpack.c.l.b16 %v567
    %v1708 = vunpack.c.h.b16 %v567
    %v1709 = vunpack.c.l.b16 %v568
    %v1710 = vunpack.c.h.b16 %v568
    %v1711 = vunpack.c.l.b16 %v569
    %v1712 = vunpack.c.h.b16 %v569
    %v1713 = vunpack.c.l.b16 %v570
    %v1714 = vunpack.c.h.b16 %v570
    %v1715 = vunpack.c.l.b16 %v571
    %v1716 = vunpack.c.h.b16 %v571
    %v1717 = vunpack.c.l.b16 %v572
    %v1718 = vunpack.c.h.b16 %v572
    %v1719 = vunpack.c.l.b16 %v573
    %v1720 = vunpack.c.h.b16 %v573
    %v1721 = vunpack.c.l.b16 %v574
    %v1722 = vunpack.c.h.b16 %v574
    %v1723 = vunpack.c.l.b16 %v575
    %v1724 = vunpack.c.h.b16 %v575
    %v1725 = vunpack.c.l.b16 %v576
    %v1726 = vunpack.c.h.b16 %v576
    %v1727 = vunpack.c.l.b16 %v577
    %v1728 = vunpack.c.h.b16 %v577
    %v1729 = vunpack.c.l.b16 %v578
    %v1730 = vunpack.c.h.b16 %v578
    %v1731 = vunpack.c.l.b16 %v579
    %v1732 = vunpack.c.h.b16 %v579
    %v1733 = vunpack.c.l.b16 %v580
    %v1734 = vunpack.c.h.b16 %v580
    %v1735 = vunpack.c.l.b16 %v581
    %v1736 = vunpack.c.h.b16 %v581
    %v1737 = vunpack.c.l.b16 %v582
    %v1738 = vunpack.c.h.b16 %v582
    %v1739 = vunpack.c.l.b16 %v583
    %v1740 = vunpack.c.h.b16 %v583
    %v1741 = vunpack.c.l.b16 %v584
    %v1742 = vunpack.c.h.b16 %v584
    %v1743 = vunpack.c.l.b16 %v585
    %v1744 = vunpack.c.h.b16 %v585
    %v1745 = vunpack.c.l.b16 %v586
    %v1746 = vunpack.c.h.b16 %v586
    %v1747 = vunpack.c.l.b16 %v587
    %v1748 = vunpack.c.h.b16 %v587
    %v1749 = vunpack.c.l.b16 %v588
    %v1750 = vunpack.c.h.b16 %v588
    %v1751 = vunpack.c.l.b16 %v589
    %v1752 = vunpack.c.h.b16 %v589
    %v1753 = vunpack.c.l.b16 %v590
    %v1754 = vunpack.c.h.b16 %v590
    %v1755 = vunpack.c.l.b16 %v591
    %v1756 = vunpack.c.h.b16 %v591
    %v1757 = vunpack.c.l.b16 %v592
    %v1758 = vunpack.c.h.b16 %v592
    %v1759 = vunpack.c.l.b16 %v593
    %v1760 = vunpack.c.h.b16 %v593
    %v1761 = vunpack.c.l.b16 %v594
    %v1762 = vunpack.c.h.b16 %v594
    %v1763 = vunpack.c.l.b16 %v595
    %v1764 = vunpack.c.h.b16 %v595
    %v1765 = vunpack.c.l.b16 %v596
    %v1766 = vunpack.c.h.b16 %v596
    %v1767 = vunpack.c.l.b16 %v597
    %v1768 = vunpack.c.h.b16 %v597
    %v1769 = vunpack.c.l.b16 %v598
    %v1770 = vunpack.c.h.b16 %v598
    %v1771 = vunpack.c.l.b16 %v599
    %v1772 = vunpack.c.h.b16 %v599
    %v1773 = vunpack.c.l.b16 %v600
    %v1774 = vunpack.c.h.b16 %v600
    %v1775 = vunpack.c.l.b16 %v601
    %v1776 = vunpack.c.h.b16 %v601
    %v1777 = vunpack.c.l.b16 %v602
    %v1778 = vunpack.c.h.b16 %v602
    %v1779 = vunpack.c.l.b16 %v603
    %v1780 = vunpack.c.h.b16 %v603
    %v1781 = vunpack.c.l.b16 %v604
    %v1782 = vunpack.c.h.b16 %v604
    %v1783 = vunpack.c.l.b16 %v605
    %v1784 = vunpack.c.h.b16 %v605
    %v1785 = vunpack.c.l.b16 %v606
    %v1786 = vunpack.c.h.b16 %v606
    %v1787 = vunpack.c.l.b16 %v607
    %v1788 = vunpack.c.h.b16 %v607
    %v1789 = vunpack.c.l.b16 %v608
    %v1790 = vunpack.c.h.b16 %v608
    %v1791 = vunpack.c.l.b16 %v609
    %v1792 = vunpack.c.h.b16 %v609
    %v1793 = vunpack.c.l.b16 %v610
    %v1794 = vunpack.c.h.b16 %v610
    %v1795 = vunpack.c.l.b16 %v611
    %v1796 = vunpack.c.h.b16 %v611
    %v1797 = vunpack.c.l.b16 %v612
    %v1798 = vunpack.c.h.b16 %v612
    %v1799 = vunpack.c.l.b16 %v613
    %v1800 = vunpack.c.h.b16 %v613
    %v1801 = vunpack.c.l.b16 %v614
    %v1802 = vunpack.c.h.b16 %v614
    %v1803 = vunpack.c.l.b16 %v615
    %v1804 = vunpack.c.h.b16 %v615
    %v1805 = vunpack.c.l.b16 %v616
    %v1806 = vunpack.c.h.b16 %v616
    %v1807 = vunpack.c.l.b16 %v617
    %v1808 = vunpack.c.h.b16 %v617
    %v1809 = vunpack.c.l.b16 %v618
    %v1810 = vunpack.c.h.b16 %v618
    %v1811 = vunpack.c.l.b16 %v619
    %v1812 = vunpack.c.h.b16 %v619
    %v1813 = vunpack.c.l.b16 %v620
    %v1814 = vunpack.c.h.b16 %v620
    %v1815 = vunpack.c.l.b16 %v621
    %v1816 = vunpack.c.h.b16 %v621
    %v1817 = vunpack.c.l.b16 %v622
    %v1818 = vunpack.c.h.b16 %v622
    %v1819 = vunpack.c.l.b16 %v623
    %v1820 = vunpack.c.h.b16 %v623
    %v1821 = vunpack.c.l.b16 %v624
    %v1822 = vunpack.c.h.b16 %v624
    %v1823 = vunpack.c.l.b16 %v625
    %v1824 = vunpack.c.h.b16 %v625
    %v1825 = vunpack.c.l.b16 %v626
    %v1826 = vunpack.c.h.b16 %v626
    %v1827 = vunpack.c.l.b16 %v627
    %v1828 = vunpack.c.h.b16 %v627
    %v1829 = vunpack.c.l.b16 %v628
    %v1830 = vunpack.c.h.b16 %v628
    %v1831 = vunpack.c.l.b16 %v629
    %v1832 = vunpack.c.h.b16 %v629
    %v1833 = vunpack.c.l.b16 %v630
    %v1834 = vunpack.c.h.b16 %v630
    %v1835 = vunpack.c.l.b16 %v631
    %v1836 = vunpack.c.h.b16 %v631
    %v1837 = vunpack.c.l.b16 %v632
    %v1838 = vunpack.c.h.b16 %v632
    %v1839 = vunpack.c.l.b16 %v633
    %v1840 = vunpack.c.h.b16 %v633
    %v1841 = vunpack.c.l.b16 %v634
    %v1842 = vunpack.c.h.b16 %v634
    %v1843 = vunpack.c.l.b16 %v635
    %v1844 = vunpack.c.h.b16 %v635
    %v1845 = vunpack.c.l.b16 %v636
    %v1846 = vunpack.c.h.b16 %v636
    %v1847 = vunpack.c.l.b16 %v637
    %v1848 = vunpack.c.h.b16 %v637
    %v1849 = vunpack.c.l.b16 %v638
    %v1850 = vunpack.c.h.b16 %v638
    %v1851 = vunpack.c.l.b16 %v639
    %v1852 = vunpack.c.h.b16 %v639
    %v1853 = vunpack.c.l.b16 %v640
    %v1854 = vunpack.c.h.b16 %v640
    %v1855 = vunpack.c.l.b16 %v641
    %v1856 = vunpack.c.h.b16 %v641
    %v1857 = vunpack.c.l.b16 %v642
    %v1858 = vunpack.c.h.b16 %v642
    %v1859 = vunpack.c.l.b16 %v643
    %v1860 = vunpack.c.h.b16 %v643
    %v1861 = vunpack.c.l.b16 %v644
    %v1862 = vunpack.c.h.b16 %v644
    %v1863 = vunpack.c.l.b16 %v645
    %v1864 = vunpack.c.h.b16 %v645
    %v1865 = vunpack.c.l.b16 %v646
    %v1866 = vunpack.c.h.b16 %v646
    %v1867 = vunpack.c.l.b16 %v647
    %v1868 = vunpack.c.h.b16 %v647
    %v1869 = vunpack.c.l.b16 %v648
    %v1870 = vunpack.c.h.b16 %v648
    %v1871 = vunpack.c.l.b16 %v649
    %v1872 = vunpack.c.h.b16 %v649
    %v1873 = vunpack.c.l.b16 %v650
    %v1874 = vunpack.c.h.b16 %v650
    %v1875 = vunpack.c.l.b16 %v651
    %v1876 = vunpack.c.h.b16 %v651
    %v1877 = vunpack.c.l.b16 %v652
    %v1878 = vunpack.c.h.b16 %v652
    %v1879 = vunpack.c.l.b16 %v653
    %v1880 = vunpack.c.h.b16 %v653
    %v1881 = vunpack.c.l.b16 %v654
    %v1882 = vunpack.c.h.b16 %v654
    %v1883 = vunpack.c.l.b16 %v655
    %v1884 = vunpack.c.h.b16 %v655
    %v1885 = vunpack.c.l.b16 %v656
    %v1886 = vunpack.c.h.b16 %v656
    %v1887 = vunpack.c.l.b16 %v657
    %v1888 = vunpack.c.h.b16 %v657
    %v1889 = vunpack.c.l.b16 %v658
    %v1890 = vunpack.c.h.b16 %v658
    %v1891 = vunpack.c.l.b16 %v659
    %v1892 = vunpack.c.h.b16 %v659
    %v1893 = vunpack.c.l.b16 %v660
    %v1894 = vunpack.c.h.b16 %v660
    %v1895 = vunpack.c.l.b16 %v661
    %v1896 = vunpack.c.h.b16 %v661
    %v1897 = vunpack.c.l.b16 %v662
    %v1898 = vunpack.c.h.b16 %v662
    %v1899 = vunpack.c.l.b16 %v663
    %v1900 = vunpack.c.h.b16 %v663
    %v1901 = vunpack.c.l.b16 %v664
    %v1902 = vunpack.c.h.b16 %v664
    %v1903 = vunpack.c.l.b16 %v665
    %v1904 = vunpack.c.h.b16 %v665
    %v1905 = vunpack.c.l.b16 %v666
    %v1906 = vunpack.c.h.b16 %v666
    %v1907 = vunpack.c.l.b16 %v667
    %v1908 = vunpack.c.h.b16 %v667
    %v1909 = vunpack.c.l.b16 %v668
    %v1910 = vunpack.c.h.b16 %v668
    %v1911 = vunpack.c.l.b16 %v669
    %v1912 = vunpack.c.h.b16 %v669
    %v1913 = vunpack.c.l.b16 %v670
    %v1914 = vunpack.c.h.b16 %v670
    %v1915 = vunpack.c.l.b16 %v671
    %v1916 = vunpack.c.h.b16 %v671
    %v1917 = vunpack.c.l.b16 %v672
    %v1918 = vunpack.c.h.b16 %v672
    %v1919 = vunpack.c.l.b16 %v673
    %v1920 = vunpack.c.h.b16 %v673
    %v1921 = vunpack.c.l.b16 %v674
    %v1922 = vunpack.c.h.b16 %v674
    %v1923 = vunpack.c.l.b16 %v675
    %v1924 = vunpack.c.h.b16 %v675
    %v1925 = vunpack.c.l.b16 %v676
    %v1926 = vunpack.c.h.b16 %v676
    %v1927 = vunpack.c.l.b16 %v677
    %v1928 = vunpack.c.h.b16 %v677
    %v1929 = vunpack.c.l.b16 %v678
    %v1930 = vunpack.c.h.b16 %v678
    %v1931 = vunpack.c.l.b16 %v679
    %v1932 = vunpack.c.h.b16 %v679
    %v1933 = vunpack.c.l.b16 %v680
    %v1934 = vunpack.c.h.b16 %v680
    %v1935 = vunpack.c.l.b16 %v681
    %v1936 = vunpack.c.h.b16 %v681
    %v1937 = vunpack.c.l.b16 %v682
    %v1938 = vunpack.c.h.b16 %v682
    %v1939 = vunpack.c.l.b16 %v683
    %v1940 = vunpack.c.h.b16 %v683
    %v1941 = vunpack.c.l.b16 %v684
    %v1942 = vunpack.c.h.b16 %v684
    %v1943 = vunpack.c.l.b16 %v685
    %v1944 = vunpack.c.h.b16 %v685
    %v1945 = vunpack.c.l.b16 %v686
    %v1946 = vunpack.c.h.b16 %v686
    %v1947 = vunpack.c.l.b16 %v687
    %v1948 = vunpack.c.h.b16 %v687
    %v1949 = vunpack.c.l.b16 %v688
    %v1950 = vunpack.c.h.b16 %v688
    %v1951 = vunpack.c.l.b16 %v689
    %v1952 = vunpack.c.h.b16 %v689
    %v1953 = vunpack.c.l.b16 %v690
    %v1954 = vunpack.c.h.b16 %v690
    %v1955 = vunpack.c.l.b16 %v691
    %v1956 = vunpack.c.h.b16 %v691
    %v1957 = vunpack.c.l.b16 %v692
    %v1958 = vunpack.c.h.b16 %v692
    %v1959 = vunpack.c.l.b16 %v693
    %v1960 = vunpack.c.h.b16 %v693
    %v1961 = vunpack.c.l.b16 %v694
    %v1962 = vunpack.c.h.b16 %v694
    %v1963 = vunpack.c.l.b16 %v695
    %v1964 = vunpack.c.h.b16 %v695
    %v1965 = vunpack.c.l.b16 %v696
    %v1966 = vunpack.c.h.b16 %v696
    %v1967 = vunpack.c.l.b16 %v697
    %v1968 = vunpack.c.h.b16 %v697
    %v1969 = vunpack.c.l.b16 %v698
    %v1970 = vunpack.c.h.b16 %v698
    %v1971 = vunpack.c.l.b16 %v699
    %v1972 = vunpack.c.h.b16 %v699
    %v1973 = vunpack.c.l.b16 %v700
    %v1974 = vunpack.c.h.b16 %v700
    %v1975 = vunpack.c.l.b16 %v701
    %v1976 = vunpack.c.h.b16 %v701
    %v1977 = vunpack.c.l.b16 %v702
    %v1978 = vunpack.c.h.b16 %v702
    %v1979 = vunpack.c.l.b16 %v703
    %v1980 = vunpack.c.h.b16 %v703
    %v1981 = vunpack.c.l.b16 %v704
    %v1982 = vunpack.c.h.b16 %v704
    %v1983 = vunpack.c.l.b16 %v705
    %v1984 = vunpack.c.h.b16 %v705
    %v1985 = vunpack.c.l.b16 %v706
    %v1986 = vunpack.c.h.b16 %v706
    %v1987 = vunpack.c.l.b16 %v707
    %v1988 = vunpack.c.h.b16 %v707
    %v1989 = vunpack.c.l.b16 %v708
    %v1990 = vunpack.c.h.b16 %v708
    %v1991 = vunpack.c.l.b16 %v709
    %v1992 = vunpack.c.h.b16 %v709
    %v1993 = vunpack.c.l.b16 %v710
    %v1994 = vunpack.c.h.b16 %v710
    %v1995 = vunpack.c.l.b16 %v711
    %v1996 = vunpack.c.h.b16 %v711
    %v1997 = vunpack.c.l.b16 %v712
    %v1998 = vunpack.c.h.b16 %v712
    %v1999 = vunpack.c.l.b16 %v713
    %v2000 = vunpack.c.h.b16 %v713
    %v2001 = vunpack.c.l.b16 %v714
    %v2002 = vunpack.c.h.b16 %v714
    %v2003 = vunpack.c.l.b16 %v715
    %v2004 = vunpack.c.h.b16 %v715
    %v2005 = vunpack.c.l.b16 %v716
    %v2006 = vunpack.c.h.b16 %v716
    %v2007 = vunpack.c.l.b16 %v717
    %v2008 = vunpack.c.h.b16 %v717
    %v2009 = vunpack.c.l.b16 %v718
    %v2010 = vunpack.c.h.b16 %v718
    %v2011 = vunpack.c.l.b16 %v719
    %v2012 = vunpack.c.h.b16 %v719
    %v2013 = vunpack.c.l.b16 %v720
    %v2014 = vunpack.c.h.b16 %v720
    %v2015 = vunpack.c.l.b16 %v721
    %v2016 = vunpack.c.h.b16 %v721
    %v2017 = vunpack.c.l.b16 %v722
    %v2018 = vunpack.c.h.b16 %v722
    %v2019 = vunpack.c.l.b16 %v723
    %v2020 = vunpack.c.h.b16 %v723
    %v2021 = vunpack.c.l.b16 %v724
    %v2022 = vunpack.c.h.b16 %v724
    %v2023 = vunpack.c.l.b16 %v725
    %v2024 = vunpack.c.h.b16 %v725
    %v2025 = vunpack.c.l.b16 %v726
    %v2026 = vunpack.c.h.b16 %v726
    %v2027 = vunpack.c.l.b16 %v727
    %v2028 = vunpack.c.h.b16 %v727
    %v2029 = vunpack.c.l.b16 %v728
    %v2030 = vunpack.c.h.b16 %v728
    %v2031 = vunpack.c.l.b16 %v729
    %v2032 = vunpack.c.h.b16 %v729
    %v2033 = vunpack.c.l.b16 %v730
    %v2034 = vunpack.c.h.b16 %v730
    %v2035 = vunpack.c.l.b16 %v731
    %v2036 = vunpack.c.h.b16 %v731
    %v2037 = vunpack.c.l.b16 %v732
    %v2038 = vunpack.c.h.b16 %v732
    %v2039 = vunpack.c.l.b16 %v733
    %v2040 = vunpack.c.h.b16 %v733
    %v2041 = vunpack.c.l.b16 %v734
    %v2042 = vunpack.c.h.b16 %v734
    %v2043 = vunpack.c.l.b16 %v735
    %v2044 = vunpack.c.h.b16 %v735
    %v2045 = vunpack.c.l.b16 %v736
    %v2046 = vunpack.c.h.b16 %v736
    %v2047 = vunpack.c.l.b16 %v737
    %v2048 = vunpack.c.h.b16 %v737
    %v2049 = vunpack.c.l.b16 %v738
    %v2050 = vunpack.c.h.b16 %v738
    %v2051 = vunpack.c.l.b16 %v739
    %v2052 = vunpack.c.h.b16 %v739
    %v2053 = vunpack.c.l.b16 %v740
    %v2054 = vunpack.c.h.b16 %v740
    %v2055 = vunpack.c.l.b16 %v741
    %v2056 = vunpack.c.h.b16 %v741
    %v2057 = vunpack.c.l.b16 %v742
    %v2058 = vunpack.c.h.b16 %v742
    %v2059 = vunpack.c.l.b16 %v743
    %v2060 = vunpack.c.h.b16 %v743
    %v2061 = vunpack.c.l.b16 %v744
    %v2062 = vunpack.c.h.b16 %v744
    %v2063 = vunpack.c.l.b16 %v745
    %v2064 = vunpack.c.h.b16 %v745
    %v2065 = vunpack.c.l.b16 %v746
    %v2066 = vunpack.c.h.b16 %v746
    %v2067 = vunpack.c.l.b16 %v747
    %v2068 = vunpack.c.h.b16 %v747
    %v2069 = vunpack.c.l.b16 %v748
    %v2070 = vunpack.c.h.b16 %v748
    %v2071 = vunpack.c.l.b16 %v749
    %v2072 = vunpack.c.h.b16 %v749
    %v2073 = vunpack.c.l.b16 %v750
    %v2074 = vunpack.c.h.b16 %v750
    %v2075 = vunpack.c.l.b16 %v751
    %v2076 = vunpack.c.h.b16 %v751
    %v2077 = vunpack.c.l.b16 %v752
    %v2078 = vunpack.c.h.b16 %v752
    %v2079 = vunpack.c.l.b16 %v753
    %v2080 = vunpack.c.h.b16 %v753
    %v2081 = vunpack.c.l.b16 %v754
    %v2082 = vunpack.c.h.b16 %v754
    %v2083 = vunpack.c.l.b16 %v755
    %v2084 = vunpack.c.h.b16 %v755
    %v2085 = vunpack.c.l.b16 %v756
    %v2086 = vunpack.c.h.b16 %v756
    %v2087 = vunpack.c.l.b16 %v757
    %v2088 = vunpack.c.h.b16 %v757
    %v2089 = vunpack.c.l.b16 %v758
    %v2090 = vunpack.c.h.b16 %v758
    %v2091 = vunpack.c.l.b16 %v759
    %v2092 = vunpack.c.h.b16 %v759
    %v2093 = vunpack.c.l.b16 %v760
    %v2094 = vunpack.c.h.b16 %v760
    %v2095 = vunpack.c.l.b16 %v761
    %v2096 = vunpack.c.h.b16 %v761
    %v2097 = vunpack.c.l.b16 %v762
    %v2098 = vunpack.c.h.b16 %v762
    %v2099 = vunpack.c.l.b16 %v763
    %v2100 = vunpack.c.h.b16 %v763
    %v2101 = vunpack.c.l.b16 %v764
    %v2102 = vunpack.c.h.b16 %v764
    %v2103 = vunpack.c.l.b16 %v765
    %v2104 = vunpack.c.h.b16 %v765
    %v2105 = vunpack.c.l.b16 %v766
    %v2106 = vunpack.c.h.b16 %v766
    %v2107 = vunpack.c.l.b16 %v767
    %v2108 = vunpack.c.h.b16 %v767
    %v2109 = vunpack.c.l.b16 %v768
    %v2110 = vunpack.c.h.b16 %v768
    %v2111 = vunpack.c.l.b16 %v769
    %v2112 = vunpack.c.h.b16 %v769
    %v2113 = vunpack.c.l.b16 %v770
    %v2114 = vunpack.c.h.b16 %v770
    %v2115 = vunpack.c.l.b16 %v771
    %v2116 = vunpack.c.h.b16 %v771
    %v2117 = vunpack.c.l.b16 %v772
    %v2118 = vunpack.c.h.b16 %v772
    %v2119 = vunpack.c.l.b16 %v773
    %v2120 = vunpack.c.h.b16 %v773
    %v2121 = vunpack.c.l.b16 %v774
    %v2122 = vunpack.c.h.b16 %v774
    %v2123 = vunpack.c.l.b16 %v775
    %v2124 = vunpack.c.h.b16 %v775
    %v2125 = vunpack.c.l.b16 %v776
    %v2126 = vunpack.c.h.b16 %v776
    %v2127 = vunpack.c.l.b16 %v777
    %v2128 = vunpack.c.h.b16 %v777
    %v2129 = vunpack.c.l.b16 %v778
    %v2130 = vunpack.c.h.b16 %v778
    %v2131 = vunpack.c.l.b16 %v779
    %v2132 = vunpack.c.h.b16 %v779
    %v2133 = vunpack.c.l.b16 %v780
    %v2134 = vunpack.c.h.b16 %v780
    %v2135 = vunpack.c.l.b16 %v781
    %v2136 = vunpack.c.h.b16 %v781
    %v2137 = vunpack.c.l.b16 %v782
    %v2138 = vunpack.c.h.b16 %v782
    %v2139 = vunpack.c.l.b16 %v783
    %v2140 = vunpack.c.h.b16 %v783
    %v2141 = vunpack.c.l.b16 %v784
    %v2142 = vunpack.c.h.b16 %v784
    %v2143 = vunpack.c.l.b16 %v785
    %v2144 = vunpack.c.h.b16 %v785
    %v2145 = vunpack.c.l.b16 %v786
    %v2146 = vunpack.c.h.b16 %v786
    %v2147 = vunpack.c.l.b16 %v787
    %v2148 = vunpack.c.h.b16 %v787
    %v2149 = vunpack.c.l.b16 %v788
    %v2150 = vunpack.c.h.b16 %v788
    %v2151 = vunpack.c.l.b16 %v789
    %v2152 = vunpack.c.h.b16 %v789
    %v2153 = vunpack.c.l.b16 %v790
    %v2154 = vunpack.c.h.b16 %v790
    %v2155 = vunpack.c.l.b16 %v791
    %v2156 = vunpack.c.h.b16 %v791
    %v2157 = vunpack.c.l.b16 %v792
    %v2158 = vunpack.c.h.b16 %v792
    %v2159 = vunpack.c.l.b16 %v793
    %v2160 = vunpack.c.h.b16 %v793
    %v2161 = vunpack.c.l.b16 %v794
    %v2162 = vunpack.c.h.b16 %v794
    %v2163 = vunpack.c.l.b16 %v795
    %v2164 = vunpack.c.h.b16 %v795
    %v2165 = vunpack.c.l.b16 %v796
    %v2166 = vunpack.c.h.b16 %v796
    %v2167 = vunpack.c.l.b16 %v797
    %v2168 = vunpack.c.h.b16 %v797
    %v2169 = vunpack.c.l.b16 %v798
    %v2170 = vunpack.c.h.b16 %v798
    %v2171 = vunpack.c.l.b16 %v799
    %v2172 = vunpack.c.h.b16 %v799
    %v2173 = vunpack.c.l.b16 %v800
    %v2174 = vunpack.c.h.b16 %v800
    %v2175 = vunpack.c.l.b16 %v801
    %v2176 = vunpack.c.h.b16 %v801
    %v2177 = vunpack.c.l.b16 %v802
    %v2178 = vunpack.c.h.b16 %v802
    %v2179 = vunpack.c.l.b16 %v803
    %v2180 = vunpack.c.h.b16 %v803
    %v2181 = vunpack.c.l.b16 %v804
    %v2182 = vunpack.c.h.b16 %v804
    %v2183 = vunpack.c.l.b16 %v805
    %v2184 = vunpack.c.h.b16 %v805
    %v2185 = vunpack.c.l.b16 %v806
    %v2186 = vunpack.c.h.b16 %v806
    %v2187 = vunpack.c.l.b16 %v807
    %v2188 = vunpack.c.h.b16 %v807
    %v2189 = vunpack.c.l.b16 %v808
    %v2190 = vunpack.c.h.b16 %v808
    %v2191 = vunpack.c.l.b16 %v809
    %v2192 = vunpack.c.h.b16 %v809
    %v2193 = vunpack.c.l.b16 %v810
    %v2194 = vunpack.c.h.b16 %v810
    %v2195 = vunpack.c.l.b16 %v811
    %v2196 = vunpack.c.h.b16 %v811
    %v2197 = vunpack.c.l.b16 %v812
    %v2198 = vunpack.c.h.b16 %v812
    %v2199 = vunpack.c.l.b16 %v813
    %v2200 = vunpack.c.h.b16 %v813
    %v2201 = vunpack.c.l.b16 %v814
    %v2202 = vunpack.c.h.b16 %v814
    %v2203 = vunpack.c.l.b16 %v815
    %v2204 = vunpack.c.h.b16 %v815
    %v2205 = vunpack.c.l.b16 %v816
    %v2206 = vunpack.c.h.b16 %v816
    %v2207 = vunpack.c.l.b16 %v817
    %v2208 = vunpack.c.h.b16 %v817
    %v2209 = vunpack.c.l.b16 %v818
    %v2210 = vunpack.c.h.b16 %v818
    %v2211 = vunpack.c.l.b16 %v819
    %v2212 = vunpack.c.h.b16 %v819
    %v2213 = vunpack.c.l.b16 %v820
    %v2214 = vunpack.c.h.b16 %v820
    %v2215 = vunpack.c.l.b16 %v821
    %v2216 = vunpack.c.h.b16 %v821
    %v2217 = vunpack.c.l.b16 %v822
    %v2218 = vunpack.c.h.b16 %v822
    %v2219 = vunpack.c.l.b16 %v823
    %v2220 = vunpack.c.h.b16 %v823
    %v2221 = vunpack.c.l.b16 %v824
    %v2222 = vunpack.c.h.b16 %v824
    %v2223 = vunpack.c.l.b16 %v825
    %v2224 = vunpack.c.h.b16 %v825
    %v2225 = vunpack.c.l.b16 %v826
    %v2226 = vunpack.c.h.b16 %v826
    %v2227 = vunpack.c.l.b16 %v827
    %v2228 = vunpack.c.h.b16 %v827
    %v2229 = vunpack.c.l.b16 %v828
    %v2230 = vunpack.c.h.b16 %v828
    %v2231 = vunpack.c.l.b16 %v829
    %v2232 = vunpack.c.h.b16 %v829
    %v2233 = vunpack.c.l.b16 %v830
    %v2234 = vunpack.c.h.b16 %v830
    %v2235 = vunpack.c.l.b16 %v831
    %v2236 = vunpack.c.h.b16 %v831
    %v2237 = vunpack.c.l.b16 %v832
    %v2238 = vunpack.c.h.b16 %v832
    %v2239 = vunpack.c.l.b16 %v833
    %v2240 = vunpack.c.h.b16 %v833
    %v2241 = vunpack.c.l.b16 %v834
    %v2242 = vunpack.c.h.b16 %v834
    %v2243 = vunpack.c.l.b16 %v835
    %v2244 = vunpack.c.h.b16 %v835
    %v2245 = vunpack.c.l.b16 %v836
    %v2246 = vunpack.c.h.b16 %v836
    %v2247 = vunpack.c.l.b16 %v837
    %v2248 = vunpack.c.h.b16 %v837
    %v2249 = vunpack.c.l.b16 %v838
    %v2250 = vunpack.c.h.b16 %v838
    %v2251 = vunpack.c.l.b16 %v839
    %v2252 = vunpack.c.h.b16 %v839
    %v2253 = vunpack.c.l.b16 %v840
    %v2254 = vunpack.c.h.b16 %v840
    %v2255 = vunpack.c.l.b16 %v841
    %v2256 = vunpack.c.h.b16 %v841
    %v2257 = vunpack.c.l.b16 %v842
    %v2258 = vunpack.c.h.b16 %v842
    %v2259 = vunpack.c.l.b16 %v843
    %v2260 = vunpack.c.h.b16 %v843
    %v2261 = vunpack.c.l.b16 %v844
    %v2262 = vunpack.c.h.b16 %v844
    %v2263 = vunpack.c.l.b16 %v845
    %v2264 = vunpack.c.h.b16 %v845
    %v2265 = vunpack.c.l.b16 %v846
    %v2266 = vunpack.c.h.b16 %v846
    %v2267 = vunpack.c.l.b16 %v847
    %v2268 = vunpack.c.h.b16 %v847
    %v2269 = vunpack.c.l.b16 %v848
    %v2270 = vunpack.c.h.b16 %v848
    %v2271 = vunpack.c.l.b16 %v849
    %v2272 = vunpack.c.h.b16 %v849
    %v2273 = vunpack.c.l.b16 %v850
    %v2274 = vunpack.c.h.b16 %v850
    %v2275 = vunpack.c.l.b16 %v851
    %v2276 = vunpack.c.h.b16 %v851
    %v2277 = vunpack.c.l.b16 %v852
    %v2278 = vunpack.c.h.b16 %v852
    %v2279 = vunpack.c.l.b16 %v853
    %v2280 = vunpack.c.h.b16 %v853
    %v2281 = vunpack.c.l.b16 %v854
    %v2282 = vunpack.c.h.b16 %v854
    %v2283 = vunpack.c.l.b16 %v855
    %v2284 = vunpack.c.h.b16 %v855
    %v2285 = vunpack.c.l.b16 %v856
    %v2286 = vunpack.c.h.b16 %v856
    %v2287 = vunpack.c.l.b16 %v857
    %v2288 = vunpack.c.h.b16 %v857
    %v2289 = vunpack.c.l.b16 %v858
    %v2290 = vunpack.c.h.b16 %v858
    %v2291 = vunpack.c.l.b16 %v859
    %v2292 = vunpack.c.h.b16 %v859
    %v2293 = vunpack.c.l.b16 %v860
    %v2294 = vunpack.c.h.b16 %v860
    %v2295 = vunpack.c.l.b16 %v861
    %v2296 = vunpack.c.h.b16 %v861
    %v2297 = vunpack.c.l.b16 %v862
    %v2298 = vunpack.c.h.b16 %v862
    %v2299 = vunpack.c.l.b16 %v863
    %v2300 = vunpack.c.h.b16 %v863
    %v2301 = vunpack.c.l.b16 %v864
    %v2302 = vunpack.c.h.b16 %v864
    %v2303 = vunpack.c.l.b16 %v865
    %v2304 = vunpack.c.h.b16 %v865
    %v2305 = vunpack.c.l.b16 %v866
    %v2306 = vunpack.c.h.b16 %v866
    %v2307 = vunpack.c.l.b16 %v867
    %v2308 = vunpack.c.h.b16 %v867
    %v2309 = vunpack.c.l.b16 %v868
    %v2310 = vunpack.c.h.b16 %v868
    %v2311 = vunpack.c.l.b16 %v869
    %v2312 = vunpack.c.h.b16 %v869
    %v2313 = vunpack.c.l.b16 %v870
    %v2314 = vunpack.c.h.b16 %v870
    %v2315 = vunpack.c.l.b16 %v871
    %v2316 = vunpack.c.h.b16 %v871
    %v2317 = vunpack.c.l.b16 %v872
    %v2318 = vunpack.c.h.b16 %v872
    %v2319 = vunpack.c.l.b16 %v873
    %v2320 = vunpack.c.h.b16 %v873
    %v2321 = vunpack.c.l.b16 %v874
    %v2322 = vunpack.c.h.b16 %v874
    %v2323 = vunpack.c.l.b16 %v875
    %v2324 = vunpack.c.h.b16 %v875
    %v2325 = vunpack.c.l.b16 %v876
    %v2326 = vunpack.c.h.b16 %v876
    %v2327 = vunpack.c.l.b16 %v877
    %v2328 = vunpack.c.h.b16 %v877
    %v2329 = vunpack.c.l.b16 %v878
    %v2330 = vunpack.c.h.b16 %v878
    %v2331 = vunpack.c.l.b16 %v879
    %v2332 = vunpack.c.h.b16 %v879
    %v2333 = vunpack.c.l.b16 %v880
    %v2334 = vunpack.c.h.b16 %v880
    %v2335 = vunpack.c.l.b16 %v881
    %v2336 = vunpack.c.h.b16 %v881
    %v2337 = vunpack.c.l.b16 %v882
    %v2338 = vunpack.c.h.b16 %v882
    %v2339 = vunpack.c.l.b16 %v883
    %v2340 = vunpack.c.h.b16 %v883
    %v2341 = vunpack.c.l.b16 %v884
    %v2342 = vunpack.c.h.b16 %v884
    %v2343 = vunpack.c.l.b16 %v885
    %v2344 = vunpack.c.h.b16 %v885
    %v2345 = vunpack.c.l.b16 %v886
    %v2346 = vunpack.c.h.b16 %v886
    %v2347 = vunpack.c.l.b16 %v887
    %v2348 = vunpack.c.h.b16 %v887
    %v2349 = vunpack.c.l.b16 %v888
    %v2350 = vunpack.c.h.b16 %v888
    %v2351 = vunpack.c.l.b16 %v889
    %v2352 = vunpack.c.h.b16 %v889
    %v2353 = vunpack.c.l.b16 %v890
    %v2354 = vunpack.c.h.b16 %v890
    %v2355 = vunpack.c.l.b16 %v891
    %v2356 = vunpack.c.h.b16 %v891
    %v2357 = vunpack.c.l.b16 %v892
    %v2358 = vunpack.c.h.b16 %v892
    %v2359 = vunpack.c.l.b16 %v893
    %v2360 = vunpack.c.h.b16 %v893
    %v2361 = vunpack.c.l.b16 %v894
    %v2362 = vunpack.c.h.b16 %v894
    %v2363 = vunpack.c.l.b16 %v895
    %v2364 = vunpack.c.h.b16 %v895
    %v2365 = vunpack.c.l.b16 %v896
    %v2366 = vunpack.c.h.b16 %v896
    %v2367 = vunpack.c.l.b16 %v897
    %v2368 = vunpack.c.h.b16 %v897
    %v2369 = vunpack.c.l.b16 %v898
    %v2370 = vunpack.c.h.b16 %v898
    %v2371 = vunpack.c.l.b16 %v899
    %v2372 = vunpack.c.h.b16 %v899
    %v2373 = vunpack.c.l.b16 %v900
    %v2374 = vunpack.c.h.b16 %v900
    %v2375 = vunpack.c.l.b16 %v901
    %v2376 = vunpack.c.h.b16 %v901
    %v2377 = vunpack.c.l.b16 %v902
    %v2378 = vunpack.c.h.b16 %v902
    %v2379 = vunpack.c.l.b16 %v903
    %v2380 = vunpack.c.h.b16 %v903
    %v2381 = vunpack.c.l.b16 %v904
    %v2382 = vunpack.c.h.b16 %v904
    %v2383 = vunpack.c.l.b16 %v905
    %v2384 = vunpack.c.h.b16 %v905
    %v2385 = vunpack.c.l.b16 %v906
    %v2386 = vunpack.c.h.b16 %v906
    %v2387 = vunpack.c.l.b16 %v907
    %v2388 = vunpack.c.h.b16 %v907
    %v2389 = vunpack.c.l.b16 %v908
    %v2390 = vunpack.c.h.b16 %v908
    %v2391 = vunpack.c.l.b16 %v909
    %v2392 = vunpack.c.h.b16 %v909
    %v2393 = vunpack.c.l.b16 %v910
    %v2394 = vunpack.c.h.b16 %v910
    %v2395 = vunpack.c.l.b16 %v911
    %v2396 = vunpack.c.h.b16 %v911
    %v2397 = vunpack.c.l.b16 %v912
    %v2398 = vunpack.c.h.b16 %v912
    %v2399 = vunpack.c.l.b16 %v913
    %v2400 = vunpack.c.h.b16 %v913
    %v2401 = vunpack.c.l.b16 %v914
    %v2402 = vunpack.c.h.b16 %v914
    %v2403 = vunpack.c.l.b16 %v915
    %v2404 = vunpack.c.h.b16 %v915
    %v2405 = vunpack.c.l.b16 %v916
    %v2406 = vunpack.c.h.b16 %v916
    %v2407 = vunpack.c.l.b16 %v917
    %v2408 = vunpack.c.h.b16 %v917
    %v2409 = vunpack.c.l.b16 %v918
    %v2410 = vunpack.c.h.b16 %v918
    %v2411 = vunpack.c.l.b16 %v919
    %v2412 = vunpack.c.h.b16 %v919
    %v2413 = vunpack.c.l.b16 %v920
    %v2414 = vunpack.c.h.b16 %v920
    %v2415 = vunpack.c.l.b16 %v921
    %v2416 = vunpack.c.h.b16 %v921
    %v2417 = vunpack.c.l.b16 %v922
    %v2418 = vunpack.c.h.b16 %v922
    %v2419 = vunpack.c.l.b16 %v923
    %v2420 = vunpack.c.h.b16 %v923
    %v2421 = vunpack.c.l.b16 %v924
    %v2422 = vunpack.c.h.b16 %v924
    %v2423 = vunpack.c.l.b16 %v925
    %v2424 = vunpack.c.h.b16 %v925
    %v2425 = vunpack.c.l.b16 %v926
    %v2426 = vunpack.c.h.b16 %v926
    %v2427 = vunpack.c.l.b16 %v927
    %v2428 = vunpack.c.h.b16 %v927
    %v2429 = vunpack.c.l.b16 %v928
    %v2430 = vunpack.c.h.b16 %v928
    %v2431 = vunpack.c.l.b16 %v929
    %v2432 = vunpack.c.h.b16 %v929
    %v2433 = vunpack.c.l.b16 %v930
    %v2434 = vunpack.c.h.b16 %v930
    %v2435 = vunpack.c.l.b16 %v931
    %v2436 = vunpack.c.h.b16 %v931
    %v2437 = vunpack.c.l.b16 %v932
    %v2438 = vunpack.c.h.b16 %v932
    %v2439 = vunpack.c.l.b16 %v933
    %v2440 = vunpack.c.h.b16 %v933
    %v2441 = vunpack.c.l.b16 %v934
    %v2442 = vunpack.c.h.b16 %v934
    %v2443 = vunpack.c.l.b16 %v935
    %v2444 = vunpack.c.h.b16 %v935
    %v2445 = vunpack.c.l.b16 %v936
    %v2446 = vunpack.c.h.b16 %v936
    %v2447 = vunpack.c.l.b16 %v937
    %v2448 = vunpack.c.h.b16 %v937
    %v2449 = vunpack.c.l.b16 %v938
    %v2450 = vunpack.c.h.b16 %v938
    %v2451 = vunpack.c.l.b16 %v939
    %v2452 = vunpack.c.h.b16 %v939
    %v2453 = vunpack.c.l.b16 %v940
    %v2454 = vunpack.c.h.b16 %v940
    %v2455 = vunpack.c.l.b16 %v941
    %v2456 = vunpack.c.h.b16 %v941
    %v2457 = vunpack.c.l.b16 %v942
    %v2458 = vunpack.c.h.b16 %v942
    %v2459 = vunpack.c.l.b16 %v943
    %v2460 = vunpack.c.h.b16 %v943
    %v2461 = vunpack.c.l.b16 %v944
    %v2462 = vunpack.c.h.b16 %v944
    %v2463 = vunpack.c.l.b16 %v945
    %v2464 = vunpack.c.h.b16 %v945
    %v2465 = vunpack.c.l.b16 %v946
    %v2466 = vunpack.c.h.b16 %v946
    %v2467 = vunpack.c.l.b16 %v947
    %v2468 = vunpack.c.h.b16 %v947
    %v2469 = vunpack.c.l.b16 %v948
    %v2470 = vunpack.c.h.b16 %v948
    %v2471 = vunpack.c.l.b16 %v949
    %v2472 = vunpack.c.h.b16 %v949
    %v2473 = vunpack.c.l.b16 %v950
    %v2474 = vunpack.c.h.b16 %v950
    %v2475 = vunpack.c.l.b16 %v951
    %v2476 = vunpack.c.h.b16 %v951
    %v2477 = vunpack.c.l.b16 %v952
    %v2478 = vunpack.c.h.b16 %v952
    %v2479 = vunpack.c.l.b16 %v953
    %v2480 = vunpack.c.h.b16 %v953
    %v2481 = vunpack.c.l.b16 %v954
    %v2482 = vunpack.c.h.b16 %v954
    %v2483 = vunpack.c.l.b16 %v955
    %v2484 = vunpack.c.h.b16 %v955
    %v2485 = vunpack.c.l.b16 %v956
    %v2486 = vunpack.c.h.b16 %v956
    %v2487 = vunpack.c.l.b16 %v957
    %v2488 = vunpack.c.h.b16 %v957
    %v2489 = vunpack.c.l.b16 %v958
    %v2490 = vunpack.c.h.b16 %v958
    %v2491 = vunpack.c.l.b16 %v959
    %v2492 = vunpack.c.h.b16 %v959
    %v2493 = vunpack.c.l.b16 %v960
    %v2494 = vunpack.c.h.b16 %v960
    %v2495 = vunpack.c.l.b16 %v961
    %v2496 = vunpack.c.h.b16 %v961
    %v2497 = vunpack.c.l.b16 %v962
    %v2498 = vunpack.c.h.b16 %v962
    %v2499 = vunpack.c.l.b16 %v963
    %v2500 = vunpack.c.h.b16 %v963
    %v2501 = vunpack.c.l.b16 %v964
    %v2502 = vunpack.c.h.b16 %v964
    %v2503 = vunpack.c.l.b16 %v965
    %v2504 = vunpack.c.h.b16 %v965
    %v2505 = vunpack.c.l.b16 %v966
    %v2506 = vunpack.c.h.b16 %v966
    %v2507 = vunpack.c.l.b16 %v967
    %v2508 = vunpack.c.h.b16 %v967
    %v2509 = vunpack.c.l.b16 %v968
    %v2510 = vunpack.c.h.b16 %v968
    %v2511 = vunpack.c.l.b16 %v969
    %v2512 = vunpack.c.h.b16 %v969
    %v2513 = vunpack.c.l.b16 %v970
    %v2514 = vunpack.c.h.b16 %v970
    %v2515 = vunpack.c.l.b16 %v971
    %v2516 = vunpack.c.h.b16 %v971
    %v2517 = vunpack.c.l.b16 %v972
    %v2518 = vunpack.c.h.b16 %v972
    %v2519 = vunpack.c.l.b16 %v973
    %v2520 = vunpack.c.h.b16 %v973
    %v2521 = vunpack.c.l.b16 %v974
    %v2522 = vunpack.c.h.b16 %v974
    %v2523 = vunpack.c.l.b16 %v975
    %v2524 = vunpack.c.h.b16 %v975
    %v2525 = vunpack.c.l.b16 %v976
    %v2526 = vunpack.c.h.b16 %v976
    %v2527 = vunpack.c.l.b16 %v977
    %v2528 = vunpack.c.h.b16 %v977
    %v2529 = vunpack.c.l.b16 %v978
    %v2530 = vunpack.c.h.b16 %v978
    %v2531 = vunpack.c.l.b16 %v979
    %v2532 = vunpack.c.h.b16 %v979
    %v2533 = vunpack.c.l.b16 %v980
    %v2534 = vunpack.c.h.b16 %v980
    %v2535 = vunpack.c.l.b16 %v981
    %v2536 = vunpack.c.h.b16 %v981
    %v2537 = vunpack.c.l.b16 %v982
    %v2538 = vunpack.c.h.b16 %v982
    %v2539 = vunpack.c.l.b16 %v983
    %v2540 = vunpack.c.h.b16 %v983
    %v2541 = vunpack.c.l.b16 %v984
    %v2542 = vunpack.c.h.b16 %v984
    %v2543 = vunpack.c.l.b16 %v985
    %v2544 = vunpack.c.h.b16 %v985
    %v2545 = vunpack.c.l.b16 %v986
    %v2546 = vunpack.c.h.b16 %v986
    %v2547 = vunpack.c.l.b16 %v987
    %v2548 = vunpack.c.h.b16 %v987
    %v2549 = vunpack.c.l.b16 %v988
    %v2550 = vunpack.c.h.b16 %v988
    %v2551 = vunpack.c.l.b16 %v989
    %v2552 = vunpack.c.h.b16 %v989
    %v2553 = vunpack.c.l.b16 %v990
    %v2554 = vunpack.c.h.b16 %v990
    %v2555 = vunpack.c.l.b16 %v991
    %v2556 = vunpack.c.h.b16 %v991
    %v2557 = vunpack.c.l.b16 %v992
    %v2558 = vunpack.c.h.b16 %v992
    %v2559 = vunpack.c.l.b16 %v993
    %v2560 = vunpack.c.h.b16 %v993
    %v2561 = vunpack.c.l.b16 %v994
    %v2562 = vunpack.c.h.b16 %v994
    %v2563 = vunpack.c.l.b16 %v995
    %v2564 = vunpack.c.h.b16 %v995
    %v2565 = vunpack.c.l.b16 %v996
    %v2566 = vunpack.c.h.b16 %v996
    %v2567 = vunpack.c.l.b16 %v997
    %v2568 = vunpack.c.h.b16 %v997
    %v2569 = vunpack.c.l.b16 %v998
    %v2570 = vunpack.c.h.b16 %v998
    %v2571 = vunpack.c.l.b16 %v999
    %v2572 = vunpack.c.h.b16 %v999
    %v2573 = vunpack.c.l.b16 %v1000
    %v2574 = vunpack.c.h.b16 %v1000
    %v2575 = vunpack.c.l.b16 %v1001
    %v2576 = vunpack.c.h.b16 %v1001
    %v2577 = vunpack.c.l.b16 %v1002
    %v2578 = vunpack.c.h.b16 %v1002
    %v2579 = vunpack.c.l.b16 %v1003
    %v2580 = vunpack.c.h.b16 %v1003
    %v2581 = vunpack.c.l.b16 %v1004
    %v2582 = vunpack.c.h.b16 %v1004
    %v2583 = vpack.c.b16 %v1567, %v1559
    %v2584 = vpack.c.b16 %v1568, %v1560
    %v2585 = vpack.c.b16 %v1569, %v1561
    %v2586 = vpack.c.b16 %v1570, %v1562
    %v2587 = vpack.c.b16 %v1571, %v1563
    %v2588 = vpack.c.b16 %v1572, %v1564
    %v2589 = vpack.c.b16 %v1573, %v1565
    %v2590 = vpack.c.b16 %v1574, %v1566
    %v2591 = vpack.c.b16 %v1583, %v1575
    %v2592 = vpack.c.b16 %v1584, %v1576
    %v2593 = vpack.c.b16 %v1585, %v1577
    %v2594 = vpack.c.b16 %v1586, %v1578
    %v2595 = vpack.c.b16 %v1587, %v1579
    %v2596 = vpack.c.b16 %v1588, %v1580
    %v2597 = vpack.c.b16 %v1589, %v1581
    %v2598 = vpack.c.b16 %v1590, %v1582
    %v2599 = vpack.c.b16 %v1599, %v1591
    %v2600 = vpack.c.b16 %v1600, %v1592
    %v2601 = vpack.c.b16 %v1601, %v1593
    %v2602 = vpack.c.b16 %v1602, %v1594
    %v2603 = vpack.c.b16 %v1603, %v1595
    %v2604 = vpack.c.b16 %v1604, %v1596
    %v2605 = vpack.c.b16 %v1605, %v1597
    %v2606 = vpack.c.b16 %v1606, %v1598
    %v2607 = vpack.c.b16 %v1615, %v1607
    %v2608 = vpack.c.b16 %v1616, %v1608
    %v2609 = vpack.c.b16 %v1617, %v1609
    %v2610 = vpack.c.b16 %v1618, %v1610
    %v2611 = vpack.c.b16 %v1619, %v1611
    %v2612 = vpack.c.b16 %v1620, %v1612
    %v2613 = vpack.c.b16 %v1621, %v1613
    %v2614 = vpack.c.b16 %v1622, %v1614
    %v2615 = vpack.c.b16 %v1631, %v1623
    %v2616 = vpack.c.b16 %v1632, %v1624
    %v2617 = vpack.c.b16 %v1633, %v1625
    %v2618 = vpack.c.b16 %v1634, %v1626
    %v2619 = vpack.c.b16 %v1635, %v1627
    %v2620 = vpack.c.b16 %v1636, %v1628
    %v2621 = vpack.c.b16 %v1637, %v1629
    %v2622 = vpack.c.b16 %v1638, %v1630
    %v2623 = vpack.c.b16 %v1647, %v1639
    %v2624 = vpack.c.b16 %v1648, %v1640
    %v2625 = vpack.c.b16 %v1649, %v1641
    %v2626 = vpack.c.b16 %v1650, %v1642
    %v2627 = vpack.c.b16 %v1651, %v1643
    %v2628 = vpack.c.b16 %v1652, %v1644
    %v2629 = vpack.c.b16 %v1653, %v1645
    %v2630 = vpack.c.b16 %v1654, %v1646
    %v2631 = vpack.c.b16 %v1663, %v1655
    %v2632 = vpack.c.b16 %v1664, %v1656
    %v2633 = vpack.c.b16 %v1665, %v1657
    %v2634 = vpack.c.b16 %v1666, %v1658
    %v2635 = vpack.c.b16 %v1667, %v1659
    %v2636 = vpack.c.b16 %v1668, %v1660
    %v2637 = vpack.c.b16 %v1669, %v1661
    %v2638 = vpack.c.b16 %v1670, %v1662
    %v2639 = vpack.c.b16 %v1679, %v1671
    %v2640 = vpack.c.b16 %v1680, %v1672
    %v2641 = vpack.c.b16 %v1681, %v1673
    %v2642 = vpack.c.b16 %v1682, %v1674
    %v2643 = vpack.c.b16 %v1683, %v1675
    %v2644 = vpack.c.b16 %v1684, %v1676
    %v2645 = vpack.c.b16 %v1685, %v1677
    %v2646 = vpack.c.b16 %v1686, %v1678
    %v2647 = vpack.c.b16 %v1695, %v1687
    %v2648 = vpack.c.b16 %v1696, %v1688
    %v2649 = vpack.c.b16 %v1697, %v1689
    %v2650 = vpack.c.b16 %v1698, %v1690
    %v2651 = vpack.c.b16 %v1699, %v1691
    %v2652 = vpack.c.b16 %v1700, %v1692
    %v2653 = vpack.c.b16 %v1701, %v1693
    %v2654 = vpack.c.b16 %v1702, %v1694
    %v2655 = vpack.c.b16 %v1711, %v1703
    %v2656 = vpack.c.b16 %v1712, %v1704
    %v2657 = vpack.c.b16 %v1713, %v1705
    %v2658 = vpack.c.b16 %v1714, %v1706
    %v2659 = vpack.c.b16 %v1715, %v1707
    %v2660 = vpack.c.b16 %v1716, %v1708
    %v2661 = vpack.c.b16 %v1717, %v1709
    %v2662 = vpack.c.b16 %v1718, %v1710
    %v2663 = vpack.c.b16 %v1727, %v1719
    %v2664 = vpack.c.b16 %v1728, %v1720
    %v2665 = vpack.c.b16 %v1729, %v1721
    %v2666 = vpack.c.b16 %v1730, %v1722
    %v2667 = vpack.c.b16 %v1731, %v1723
    %v2668 = vpack.c.b16 %v1732, %v1724
    %v2669 = vpack.c.b16 %v1733, %v1725
    %v2670 = vpack.c.b16 %v1734, %v1726
    %v2671 = vpack.c.b16 %v1743, %v1735
    %v2672 = vpack.c.b16 %v1744, %v1736
    %v2673 = vpack.c.b16 %v1745, %v1737
    %v2674 = vpack.c.b16 %v1746, %v1738
    %v2675 = vpack.c.b16 %v1747, %v1739
    %v2676 = vpack.c.b16 %v1748, %v1740
    %v2677 = vpack.c.b16 %v1749, %v1741
    %v2678 = vpack.c.b16 %v1750, %v1742
    %v2679 = vpack.c.b16 %v1759, %v1751
    %v2680 = vpack.c.b16 %v1760, %v1752
    %v2681 = vpack.c.b16 %v1761, %v1753
    %v2682 = vpack.c.b16 %v1762, %v1754
    %v2683 = vpack.c.b16 %v1763, %v1755
    %v2684 = vpack.c.b16 %v1764, %v1756
    %v2685 = vpack.c.b16 %v1765, %v1757
    %v2686 = vpack.c.b16 %v1766, %v1758
    %v2687 = vpack.c.b16 %v1775, %v1767
    %v2688 = vpack.c.b16 %v1776, %v1768
    %v2689 = vpack.c.b16 %v1777, %v1769
    %v2690 = vpack.c.b16 %v1778, %v1770
    %v2691 = vpack.c.b16 %v1779, %v1771
    %v2692 = vpack.c.b16 %v1780, %v1772
    %v2693 = vpack.c.b16 %v1781, %v1773
    %v2694 = vpack.c.b16 %v1782, %v1774
    %v2695 = vpack.c.b16 %v1791, %v1783
    %v2696 = vpack.c.b16 %v1792, %v1784
    %v2697 = vpack.c.b16 %v1793, %v1785
    %v2698 = vpack.c.b16 %v1794, %v1786
    %v2699 = vpack.c.b16 %v1795, %v1787
    %v2700 = vpack.c.b16 %v1796, %v1788
    %v2701 = vpack.c.b16 %v1797, %v1789
    %v2702 = vpack.c.b16 %v1798, %v1790
    %v2703 = vpack.c.b16 %v1807, %v1799
    %v2704 = vpack.c.b16 %v1808, %v1800
    %v2705 = vpack.c.b16 %v1809, %v1801
    %v2706 = vpack.c.b16 %v1810, %v1802
    %v2707 = vpack.c.b16 %v1811, %v1803
    %v2708 = vpack.c.b16 %v1812, %v1804
    %v2709 = vpack.c.b16 %v1813, %v1805
    %v2710 = vpack.c.b16 %v1814, %v1806
    %v2711 = vpack.c.b16 %v1823, %v1815
    %v2712 = vpack.c.b16 %v1824, %v1816
    %v2713 = vpack.c.b16 %v1825, %v1817
    %v2714 = vpack.c.b16 %v1826, %v1818
    %v2715 = vpack.c.b16 %v1827, %v1819
    %v2716 = vpack.c.b16 %v1828, %v1820
    %v2717 = vpack.c.b16 %v1829, %v1821
    %v2718 = vpack.c.b16 %v1830, %v1822
    %v2719 = vpack.c.b16 %v1839, %v1831
    %v2720 = vpack.c.b16 %v1840, %v1832
    %v2721 = vpack.c.b16 %v1841, %v1833
    %v2722 = vpack.c.b16 %v1842, %v1834
    %v2723 = vpack.c.b16 %v1843, %v1835
    %v2724 = vpack.c.b16 %v1844, %v1836
    %v2725 = vpack.c.b16 %v1845, %v1837
    %v2726 = vpack.c.b16 %v1846, %v1838
    %v2727 = vpack.c.b16 %v1855, %v1847
    %v2728 = vpack.c.b16 %v1856, %v1848
    %v2729 = vpack.c.b16 %v1857, %v1849
    %v2730 = vpack.c.b16 %v1858, %v1850
    %v2731 = vpack.c.b16 %v1859, %v1851
    %v2732 = vpack.c.b16 %v1860, %v1852
    %v2733 = vpack.c.b16 %v1861, %v1853
    %v2734 = vpack.c.b16 %v1862, %v1854
    %v2735 = vpack.c.b16 %v1871, %v1863
    %v2736 = vpack.c.b16 %v1872, %v1864
    %v2737 = vpack.c.b16 %v1873, %v1865
    %v2738 = vpack.c.b16 %v1874, %v1866
    %v2739 = vpack.c.b16 %v1875, %v1867
    %v2740 = vpack.c.b16 %v1876, %v1868
    %v2741 = vpack.c.b16 %v1877, %v1869
    %v2742 = vpack.c.b16 %v1878, %v1870
    %v2743 = vpack.c.b16 %v1887, %v1879
    %v2744 = vpack.c.b16 %v1888, %v1880
    %v2745 = vpack.c.b16 %v1889, %v1881
    %v2746 = vpack.c.b16 %v1890, %v1882
    %v2747 = vpack.c.b16 %v1891, %v1883
    %v2748 = vpack.c.b16 %v1892, %v1884
    %v2749 = vpack.c.b16 %v1893, %v1885
    %v2750 = vpack.c.b16 %v1894, %v1886
    %v2751 = vpack.c.b16 %v1903, %v1895
    %v2752 = vpack.c.b16 %v1904, %v1896
    %v2753 = vpack.c.b16 %v1905, %v1897
    %v2754 = vpack.c.b16 %v1906, %v1898
    %v2755 = vpack.c.b16 %v1907, %v1899
    %v2756 = vpack.c.b16 %v1908, %v1900
    %v2757 = vpack.c.b16 %v1909, %v1901
    %v2758 = vpack.c.b16 %v1910, %v1902
    %v2759 = vpack.c.b16 %v1919, %v1911
    %v2760 = vpack.c.b16 %v1920, %v1912
    %v2761 = vpack.c.b16 %v1921, %v1913
    %v2762 = vpack.c.b16 %v1922, %v1914
    %v2763 = vpack.c.b16 %v1923, %v1915
    %v2764 = vpack.c.b16 %v1924, %v1916
    %v2765 = vpack.c.b16 %v1925, %v1917
    %v2766 = vpack.c.b16 %v1926, %v1918
    %v2767 = vpack.c.b16 %v1935, %v1927
    %v2768 = vpack.c.b16 %v1936, %v1928
    %v2769 = vpack.c.b16 %v1937, %v1929
    %v2770 = vpack.c.b16 %v1938, %v1930
    %v2771 = vpack.c.b16 %v1939, %v1931
    %v2772 = vpack.c.b16 %v1940, %v1932
    %v2773 = vpack.c.b16 %v1941, %v1933
    %v2774 = vpack.c.b16 %v1942, %v1934
    %v2775 = vpack.c.b16 %v1951, %v1943
    %v2776 = vpack.c.b16 %v1952, %v1944
    %v2777 = vpack.c.b16 %v1953, %v1945
    %v2778 = vpack.c.b16 %v1954, %v1946
    %v2779 = vpack.c.b16 %v1955, %v1947
    %v2780 = vpack.c.b16 %v1956, %v1948
    %v2781 = vpack.c.b16 %v1957, %v1949
    %v2782 = vpack.c.b16 %v1958, %v1950
    %v2783 = vpack.c.b16 %v1967, %v1959
    %v2784 = vpack.c.b16 %v1968, %v1960
    %v2785 = vpack.c.b16 %v1969, %v1961
    %v2786 = vpack.c.b16 %v1970, %v1962
    %v2787 = vpack.c.b16 %v1971, %v1963
    %v2788 = vpack.c.b16 %v1972, %v1964
    %v2789 = vpack.c.b16 %v1973, %v1965
    %v2790 = vpack.c.b16 %v1974, %v1966
    %v2791 = vpack.c.b16 %v1983, %v1975
    %v2792 = vpack.c.b16 %v1984, %v1976
    %v2793 = vpack.c.b16 %v1985, %v1977
    %v2794 = vpack.c.b16 %v1986, %v1978
    %v2795 = vpack.c.b16 %v1987, %v1979
    %v2796 = vpack.c.b16 %v1988, %v1980
    %v2797 = vpack.c.b16 %v1989, %v1981
    %v2798 = vpack.c.b16 %v1990, %v1982
    %v2799 = vpack.c.b16 %v1999, %v1991
    %v2800 = vpack.c.b16 %v2000, %v1992
    %v2801 = vpack.c.b16 %v2001, %v1993
    %v2802 = vpack.c.b16 %v2002, %v1994
    %v2803 = vpack.c.b16 %v2003, %v1995
    %v2804 = vpack.c.b16 %v2004, %v1996
    %v2805 = vpack.c.b16 %v2005, %v1997
    %v2806 = vpack.c.b16 %v2006, %v1998
    %v2807 = vpack.c.b16 %v2015, %v2007
    %v2808 = vpack.c.b16 %v2016, %v2008
    %v2809 = vpack.c.b16 %v2017, %v2009
    %v2810 = vpack.c.b16 %v2018, %v2010
    %v2811 = vpack.c.b16 %v2019, %v2011
    %v2812 = vpack.c.b16 %v2020, %v2012
    %v2813 = vpack.c.b16 %v2021, %v2013
    %v2814 = vpack.c.b16 %v2022, %v2014
    %v2815 = vpack.c.b16 %v2031, %v2023
    %v2816 = vpack.c.b16 %v2032, %v2024
    %v2817 = vpack.c.b16 %v2033, %v2025
    %v2818 = vpack.c.b16 %v2034, %v2026
    %v2819 = vpack.c.b16 %v2035, %v2027
    %v2820 = vpack.c.b16 %v2036, %v2028
    %v2821 = vpack.c.b16 %v2037, %v2029
    %v2822 = vpack.c.b16 %v2038, %v2030
    %v2823 = vpack.c.b16 %v2047, %v2039
    %v2824 = vpack.c.b16 %v2048, %v2040
    %v2825 = vpack.c.b16 %v2049, %v2041
    %v2826 = vpack.c.b16 %v2050, %v2042
    %v2827 = vpack.c.b16 %v2051, %v2043
    %v2828 = vpack.c.b16 %v2052, %v2044
    %v2829 = vpack.c.b16 %v2053, %v2045
    %v2830 = vpack.c.b16 %v2054, %v2046
    %v2831 = vpack.c.b16 %v2063, %v2055
    %v2832 = vpack.c.b16 %v2064, %v2056
    %v2833 = vpack.c.b16 %v2065, %v2057
    %v2834 = vpack.c.b16 %v2066, %v2058
    %v2835 = vpack.c.b16 %v2067, %v2059
    %v2836 = vpack.c.b16 %v2068, %v2060
    %v2837 = vpack.c.b16 %v2069, %v2061
    %v2838 = vpack.c.b16 %v2070, %v2062
    %v2839 = vpack.c.b16 %v2079, %v2071
    %v2840 = vpack.c.b16 %v2080, %v2072
    %v2841 = vpack.c.b16 %v2081, %v2073
    %v2842 = vpack.c.b16 %v2082, %v2074
    %v2843 = vpack.c.b16 %v2083, %v2075
    %v2844 = vpack.c.b16 %v2084, %v2076
    %v2845 = vpack.c.b16 %v2085, %v2077
    %v2846 = vpack.c.b16 %v2086, %v2078
    %v2847 = vpack.c.b16 %v2095, %v2087
    %v2848 = vpack.c.b16 %v2096, %v2088
    %v2849 = vpack.c.b16 %v2097, %v2089
    %v2850 = vpack.c.b16 %v2098, %v2090
    %v2851 = vpack.c.b16 %v2099, %v2091
    %v2852 = vpack.c.b16 %v2100, %v2092
    %v2853 = vpack.c.b16 %v2101, %v2093
    %v2854 = vpack.c.b16 %v2102, %v2094
    %v2855 = vpack.c.b16 %v2111, %v2103
    %v2856 = vpack.c.b16 %v2112, %v2104
    %v2857 = vpack.c.b16 %v2113, %v2105
    %v2858 = vpack.c.b16 %v2114, %v2106
    %v2859 = vpack.c.b16 %v2115, %v2107
    %v2860 = vpack.c.b16 %v2116, %v2108
    %v2861 = vpack.c.b16 %v2117, %v2109
    %v2862 = vpack.c.b16 %v2118, %v2110
    %v2863 = vpack.c.b16 %v2127, %v2119
    %v2864 = vpack.c.b16 %v2128, %v2120
    %v2865 = vpack.c.b16 %v2129, %v2121
    %v2866 = vpack.c.b16 %v2130, %v2122
    %v2867 = vpack.c.b16 %v2131, %v2123
    %v2868 = vpack.c.b16 %v2132, %v2124
    %v2869 = vpack.c.b16 %v2133, %v2125
    %v2870 = vpack.c.b16 %v2134, %v2126
    %v2871 = vpack.c.b16 %v2143, %v2135
    %v2872 = vpack.c.b16 %v2144, %v2136
    %v2873 = vpack.c.b16 %v2145, %v2137
    %v2874 = vpack.c.b16 %v2146, %v2138
    %v2875 = vpack.c.b16 %v2147, %v2139
    %v2876 = vpack.c.b16 %v2148, %v2140
    %v2877 = vpack.c.b16 %v2149, %v2141
    %v2878 = vpack.c.b16 %v2150, %v2142
    %v2879 = vpack.c.b16 %v2159, %v2151
    %v2880 = vpack.c.b16 %v2160, %v2152
    %v2881 = vpack.c.b16 %v2161, %v2153
    %v2882 = vpack.c.b16 %v2162, %v2154
    %v2883 = vpack.c.b16 %v2163, %v2155
    %v2884 = vpack.c.b16 %v2164, %v2156
    %v2885 = vpack.c.b16 %v2165, %v2157
    %v2886 = vpack.c.b16 %v2166, %v2158
    %v2887 = vpack.c.b16 %v2175, %v2167
    %v2888 = vpack.c.b16 %v2176, %v2168
    %v2889 = vpack.c.b16 %v2177, %v2169
    %v2890 = vpack.c.b16 %v2178, %v2170
    %v2891 = vpack.c.b16 %v2179, %v2171
    %v2892 = vpack.c.b16 %v2180, %v2172
    %v2893 = vpack.c.b16 %v2181, %v2173
    %v2894 = vpack.c.b16 %v2182, %v2174
    %v2895 = vpack.c.b16 %v2191, %v2183
    %v2896 = vpack.c.b16 %v2192, %v2184
    %v2897 = vpack.c.b16 %v2193, %v2185
    %v2898 = vpack.c.b16 %v2194, %v2186
    %v2899 = vpack.c.b16 %v2195, %v2187
    %v2900 = vpack.c.b16 %v2196, %v2188
    %v2901 = vpack.c.b16 %v2197, %v2189
    %v2902 = vpack.c.b16 %v2198, %v2190
    %v2903 = vpack.c.b16 %v2207, %v2199
    %v2904 = vpack.c.b16 %v2208, %v2200
    %v2905 = vpack.c.b16 %v2209, %v2201
    %v2906 = vpack.c.b16 %v2210, %v2202
    %v2907 = vpack.c.b16 %v2211, %v2203
    %v2908 = vpack.c.b16 %v2212, %v2204
    %v2909 = vpack.c.b16 %v2213, %v2205
    %v2910 = vpack.c.b16 %v2214, %v2206
    %v2911 = vpack.c.b16 %v2223, %v2215
    %v2912 = vpack.c.b16 %v2224, %v2216
    %v2913 = vpack.c.b16 %v2225, %v2217
    %v2914 = vpack.c.b16 %v2226, %v2218
    %v2915 = vpack.c.b16 %v2227, %v2219
    %v2916 = vpack.c.b16 %v2228, %v2220
    %v2917 = vpack.c.b16 %v2229, %v2221
    %v2918 = vpack.c.b16 %v2230, %v2222
    %v2919 = vpack.c.b16 %v2239, %v2231
    %v2920 = vpack.c.b16 %v2240, %v2232
    %v2921 = vpack.c.b16 %v2241, %v2233
    %v2922 = vpack.c.b16 %v2242, %v2234
    %v2923 = vpack.c.b16 %v2243, %v2235
    %v2924 = vpack.c.b16 %v2244, %v2236
    %v2925 = vpack.c.b16 %v2245, %v2237
    %v2926 = vpack.c.b16 %v2246, %v2238
    %v2927 = vpack.c.b16 %v2255, %v2247
    %v2928 = vpack.c.b16 %v2256, %v2248
    %v2929 = vpack.c.b16 %v2257, %v2249
    %v2930 = vpack.c.b16 %v2258, %v2250
    %v2931 = vpack.c.b16 %v2259, %v2251
    %v2932 = vpack.c.b16 %v2260, %v2252
    %v2933 = vpack.c.b16 %v2261, %v2253
    %v2934 = vpack.c.b16 %v2262, %v2254
    %v2935 = vpack.c.b16 %v2271, %v2263
    %v2936 = vpack.c.b16 %v2272, %v2264
    %v2937 = vpack.c.b16 %v2273, %v2265
    %v2938 = vpack.c.b16 %v2274, %v2266
    %v2939 = vpack.c.b16 %v2275, %v2267
    %v2940 = vpack.c.b16 %v2276, %v2268
    %v2941 = vpack.c.b16 %v2277, %v2269
    %v2942 = vpack.c.b16 %v2278, %v2270
    %v2943 = vpack.c.b16 %v2287, %v2279
    %v2944 = vpack.c.b16 %v2288, %v2280
    %v2945 = vpack.c.b16 %v2289, %v2281
    %v2946 = vpack.c.b16 %v2290, %v2282
    %v2947 = vpack.c.b16 %v2291, %v2283
    %v2948 = vpack.c.b16 %v2292, %v2284
    %v2949 = vpack.c.b16 %v2293, %v2285
    %v2950 = vpack.c.b16 %v2294, %v2286
    %v2951 = vpack.c.b16 %v2303, %v2295
    %v2952 = vpack.c.b16 %v2304, %v2296
    %v2953 = vpack.c.b16 %v2305, %v2297
    %v2954 = vpack.c.b16 %v2306, %v2298
    %v2955 = vpack.c.b16 %v2307, %v2299
    %v2956 = vpack.c.b16 %v2308, %v2300
    %v2957 = vpack.c.b16 %v2309, %v2301
    %v2958 = vpack.c.b16 %v2310, %v2302
    %v2959 = vpack.c.b16 %v2319, %v2311
    %v2960 = vpack.c.b16 %v2320, %v2312
    %v2961 = vpack.c.b16 %v2321, %v2313
    %v2962 = vpack.c.b16 %v2322, %v2314
    %v2963 = vpack.c.b16 %v2323, %v2315
    %v2964 = vpack.c.b16 %v2324, %v2316
    %v2965 = vpack.c.b16 %v2325, %v2317
    %v2966 = vpack.c.b16 %v2326, %v2318
    %v2967 = vpack.c.b16 %v2335, %v2327
    %v2968 = vpack.c.b16 %v2336, %v2328
    %v2969 = vpack.c.b16 %v2337, %v2329
    %v2970 = vpack.c.b16 %v2338, %v2330
    %v2971 = vpack.c.b16 %v2339, %v2331
    %v2972 = vpack.c.b16 %v2340, %v2332
    %v2973 = vpack.c.b16 %v2341, %v2333
    %v2974 = vpack.c.b16 %v2342, %v2334
    %v2975 = vpack.c.b16 %v2351, %v2343
    %v2976 = vpack.c.b16 %v2352, %v2344
    %v2977 = vpack.c.b16 %v2353, %v2345
    %v2978 = vpack.c.b16 %v2354, %v2346
    %v2979 = vpack.c.b16 %v2355, %v2347
    %v2980 = vpack.c.b16 %v2356, %v2348
    %v2981 = vpack.c.b16 %v2357, %v2349
    %v2982 = vpack.c.b16 %v2358, %v2350
    %v2983 = vpack.c.b16 %v2367, %v2359
    %v2984 = vpack.c.b16 %v2368, %v2360
    %v2985 = vpack.c.b16 %v2369, %v2361
    %v2986 = vpack.c.b16 %v2370, %v2362
    %v2987 = vpack.c.b16 %v2371, %v2363
    %v2988 = vpack.c.b16 %v2372, %v2364
    %v2989 = vpack.c.b16 %v2373, %v2365
    %v2990 = vpack.c.b16 %v2374, %v2366
    %v2991 = vpack.c.b16 %v2383, %v2375
    %v2992 = vpack.c.b16 %v2384, %v2376
    %v2993 = vpack.c.b16 %v2385, %v2377
    %v2994 = vpack.c.b16 %v2386, %v2378
    %v2995 = vpack.c.b16 %v2387, %v2379
    %v2996 = vpack.c.b16 %v2388, %v2380
    %v2997 = vpack.c.b16 %v2389, %v2381
    %v2998 = vpack.c.b16 %v2390, %v2382
    %v2999 = vpack.c.b16 %v2399, %v2391
    %v3000 = vpack.c.b16 %v2400, %v2392
    %v3001 = vpack.c.b16 %v2401, %v2393
    %v3002 = vpack.c.b16 %v2402, %v2394
    %v3003 = vpack.c.b16 %v2403, %v2395
    %v3004 = vpack.c.b16 %v2404, %v2396
    %v3005 = vpack.c.b16 %v2405, %v2397
    %v3006 = vpack.c.b16 %v2406, %v2398
    %v3007 = vpack.c.b16 %v2415, %v2407
    %v3008 = vpack.c.b16 %v2416, %v2408
    %v3009 = vpack.c.b16 %v2417, %v2409
    %v3010 = vpack.c.b16 %v2418, %v2410
    %v3011 = vpack.c.b16 %v2419, %v2411
    %v3012 = vpack.c.b16 %v2420, %v2412
    %v3013 = vpack.c.b16 %v2421, %v2413
    %v3014 = vpack.c.b16 %v2422, %v2414
    %v3015 = vpack.c.b16 %v2431, %v2423
    %v3016 = vpack.c.b16 %v2432, %v2424
    %v3017 = vpack.c.b16 %v2433, %v2425
    %v3018 = vpack.c.b16 %v2434, %v2426
    %v3019 = vpack.c.b16 %v2435, %v2427
    %v3020 = vpack.c.b16 %v2436, %v2428
    %v3021 = vpack.c.b16 %v2437, %v2429
    %v3022 = vpack.c.b16 %v2438, %v2430
    %v3023 = vpack.c.b16 %v2447, %v2439
    %v3024 = vpack.c.b16 %v2448, %v2440
    %v3025 = vpack.c.b16 %v2449, %v2441
    %v3026 = vpack.c.b16 %v2450, %v2442
    %v3027 = vpack.c.b16 %v2451, %v2443
    %v3028 = vpack.c.b16 %v2452, %v2444
    %v3029 = vpack.c.b16 %v2453, %v2445
    %v3030 = vpack.c.b16 %v2454, %v2446
    %v3031 = vpack.c.b16 %v2463, %v2455
    %v3032 = vpack.c.b16 %v2464, %v2456
    %v3033 = vpack.c.b16 %v2465, %v2457
    %v3034 = vpack.c.b16 %v2466, %v2458
    %v3035 = vpack.c.b16 %v2467, %v2459
    %v3036 = vpack.c.b16 %v2468, %v2460
    %v3037 = vpack.c.b16 %v2469, %v2461
    %v3038 = vpack.c.b16 %v2470, %v2462
    %v3039 = vpack.c.b16 %v2479, %v2471
    %v3040 = vpack.c.b16 %v2480, %v2472
    %v3041 = vpack.c.b16 %v2481, %v2473
    %v3042 = vpack.c.b16 %v2482, %v2474
    %v3043 = vpack.c.b16 %v2483, %v2475
    %v3044 = vpack.c.b16 %v2484, %v2476
    %v3045 = vpack.c.b16 %v2485, %v2477
    %v3046 = vpack.c.b16 %v2486, %v2478
    %v3047 = vpack.c.b16 %v2495, %v2487
    %v3048 = vpack.c.b16 %v2496, %v2488
    %v3049 = vpack.c.b16 %v2497, %v2489
    %v3050 = vpack.c.b16 %v2498, %v2490
    %v3051 = vpack.c.b16 %v2499, %v2491
    %v3052 = vpack.c.b16 %v2500, %v2492
    %v3053 = vpack.c.b16 %v2501, %v2493
    %v3054 = vpack.c.b16 %v2502, %v2494
    %v3055 = vpack.c.b16 %v2511, %v2503
    %v3056 = vpack.c.b16 %v2512, %v2504
    %v3057 = vpack.c.b16 %v2513, %v2505
    %v3058 = vpack.c.b16 %v2514, %v2506
    %v3059 = vpack.c.b16 %v2515, %v2507
    %v3060 = vpack.c.b16 %v2516, %v2508
    %v3061 = vpack.c.b16 %v2517, %v2509
    %v3062 = vpack.c.b16 %v2518, %v2510
    %v3063 = vpack.c.b16 %v2527, %v2519
    %v3064 = vpack.c.b16 %v2528, %v2520
    %v3065 = vpack.c.b16 %v2529, %v2521
    %v3066 = vpack.c.b16 %v2530, %v2522
    %v3067 = vpack.c.b16 %v2531, %v2523
    %v3068 = vpack.c.b16 %v2532, %v2524
    %v3069 = vpack.c.b16 %v2533, %v2525
    %v3070 = vpack.c.b16 %v2534, %v2526
    %v3071 = vpack.c.b16 %v2543, %v2535
    %v3072 = vpack.c.b16 %v2544, %v2536
    %v3073 = vpack.c.b16 %v2545, %v2537
    %v3074 = vpack.c.b16 %v2546, %v2538
    %v3075 = vpack.c.b16 %v2547, %v2539
    %v3076 = vpack.c.b16 %v2548, %v2540
    %v3077 = vpack.c.b16 %v2549, %v2541
    %v3078 = vpack.c.b16 %v2550, %v2542
    %v3079 = vpack.c.b16 %v2559, %v2551
    %v3080 = vpack.c.b16 %v2560, %v2552
    %v3081 = vpack.c.b16 %v2561, %v2553
    %v3082 = vpack.c.b16 %v2562, %v2554
    %v3083 = vpack.c.b16 %v2563, %v2555
    %v3084 = vpack.c.b16 %v2564, %v2556
    %v3085 = vpack.c.b16 %v2565, %v2557
    %v3086 = vpack.c.b16 %v2566, %v2558
    %v3087 = vpack.c.b16 %v2575, %v2567
    %v3088 = vpack.c.b16 %v2576, %v2568
    %v3089 = vpack.c.b16 %v2577, %v2569
    %v3090 = vpack.c.b16 %v2578, %v2570
    %v3091 = vpack.c.b16 %v2579, %v2571
    %v3092 = vpack.c.b16 %v2580, %v2572
    %v3093 = vpack.c.b16 %v2581, %v2573
    %v3094 = vpack.c.b16 %v2582, %v2574
    %3607 = vmatprep.subr.bf16.mxu0 %v2584
    %3608 = vmatpush1.bf16.msra.mxu0 %v2583
    %3609 = vmatprep.subr.bf16.mxu0 %v2592
    %3610 = vmatpush1.bf16.msra.mxu0 %v2591
    %3611 = vmatprep.subr.bf16.mxu0 %v2600
    %3612 = vmatpush1.bf16.msra.mxu0 %v2599
    %3613 = vmatprep.subr.bf16.mxu0 %v2608
    %3614 = vmatpush1.bf16.msra.mxu0 %v2607
    %3615 = vmatprep.subr.bf16.mxu0 %v2616
    %3616 = vmatpush1.bf16.msra.mxu0 %v2615
    %3617 = vmatprep.subr.bf16.mxu0 %v2624
    %3618 = vmatpush1.bf16.msra.mxu0 %v2623
    %3619 = vmatprep.subr.bf16.mxu0 %v2632
    %3620 = vmatpush1.bf16.msra.mxu0 %v2631
    %3621 = vmatprep.subr.bf16.mxu0 %v2640
    %3622 = vmatpush1.bf16.msra.mxu0 %v2639
    %3623 = vmatprep.subr.bf16.mxu0 %v2648
    %3624 = vmatpush1.bf16.msra.mxu0 %v2647
    %3625 = vmatprep.subr.bf16.mxu0 %v2656
    %3626 = vmatpush1.bf16.msra.mxu0 %v2655
    %3627 = vmatprep.subr.bf16.mxu0 %v2664
    %3628 = vmatpush1.bf16.msra.mxu0 %v2663
    %3629 = vmatprep.subr.bf16.mxu0 %v2672
    %3630 = vmatpush1.bf16.msra.mxu0 %v2671
    %3631 = vmatprep.subr.bf16.mxu0 %v2680
    %3632 = vmatpush1.bf16.msra.mxu0 %v2679
    %3633 = vmatprep.subr.bf16.mxu0 %v2688
    %3634 = vmatpush1.bf16.msra.mxu0 %v2687
    %3635 = vmatprep.subr.bf16.mxu0 %v2696
    %3636 = vmatpush1.bf16.msra.mxu0 %v2695
    %3637 = vmatprep.subr.bf16.mxu0 %v2704
    %3638 = vmatpush1.bf16.msra.mxu0 %v2703
    %3639 = vmatprep.mubr.bf16.mxu0 %v486
    %3640 = vmatmul.mubr.bf16.gmra.mrb[0].mxu0 %v485
    %v3641 = vpop.f32.mrb[0].mxu0
    %v3642 = vadd.f32 %v1010, %v3641
    %v3643 = vpop.f32.mrb[0].mxu0
    %v3644 = vadd.f32 %v1014, %v3643
    %v3645 = vpop.f32.mrb[0].mxu0
    %v3646 = vadd.f32 %v1010, %v3645
    %v3647 = vpop.f32.mrb[0].mxu0
    %v3648 = vadd.f32 %v1014, %v3647
    %3649 = vdwg.mxu0
    %3650 = vmatprep.subr.bf16.mxu0 %v2712
    %3651 = vmatpush1.bf16.msra.mxu0 %v2711
    %3652 = vmatprep.subr.bf16.mxu0 %v2720
    %3653 = vmatpush1.bf16.msra.mxu0 %v2719
    %3654 = vmatprep.subr.bf16.mxu0 %v2728
    %3655 = vmatpush1.bf16.msra.mxu0 %v2727
    %3656 = vmatprep.subr.bf16.mxu0 %v2736
    %3657 = vmatpush1.bf16.msra.mxu0 %v2735
    %3658 = vmatprep.subr.bf16.mxu0 %v2744
    %3659 = vmatpush1.bf16.msra.mxu0 %v2743
    %3660 = vmatprep.subr.bf16.mxu0 %v2752
    %3661 = vmatpush1.bf16.msra.mxu0 %v2751
    %3662 = vmatprep.subr.bf16.mxu0 %v2760
    %3663 = vmatpush1.bf16.msra.mxu0 %v2759
    %3664 = vmatprep.subr.bf16.mxu0 %v2768
    %3665 = vmatpush1.bf16.msra.mxu0 %v2767
    %3666 = vmatprep.subr.bf16.mxu0 %v2776
    %3667 = vmatpush1.bf16.msra.mxu0 %v2775
    %3668 = vmatprep.subr.bf16.mxu0 %v2784
    %3669 = vmatpush1.bf16.msra.mxu0 %v2783
    %3670 = vmatprep.subr.bf16.mxu0 %v2792
    %3671 = vmatpush1.bf16.msra.mxu0 %v2791
    %3672 = vmatprep.subr.bf16.mxu0 %v2800
    %3673 = vmatpush1.bf16.msra.mxu0 %v2799
    %3674 = vmatprep.subr.bf16.mxu0 %v2808
    %3675 = vmatpush1.bf16.msra.mxu0 %v2807
    %3676 = vmatprep.subr.bf16.mxu0 %v2816
    %3677 = vmatpush1.bf16.msra.mxu0 %v2815
    %3678 = vmatprep.subr.bf16.mxu0 %v2824
    %3679 = vmatpush1.bf16.msra.mxu0 %v2823
    %3680 = vmatprep.subr.bf16.mxu0 %v2832
    %3681 = vmatpush1.bf16.msra.mxu0 %v2831
    %3682 = vmatprep.mubr.bf16.mxu0 %v488
    %3683 = vmatmul.mubr.bf16.gmra.mrb[0].mxu0 %v487
    %v3684 = vpop.f32.mrb[0].mxu0
    %v3685 = vadd.f32 %v3642, %v3684
    %v3686 = vpop.f32.mrb[0].mxu0
    %v3687 = vadd.f32 %v3644, %v3686
    %v3688 = vpop.f32.mrb[0].mxu0
    %v3689 = vadd.f32 %v3646, %v3688
    %v3690 = vpop.f32.mrb[0].mxu0
    %v3691 = vadd.f32 %v3648, %v3690
    %3692 = vdwg.mxu0
    %3693 = vmatprep.subr.bf16.mxu0 %v2840
    %3694 = vmatpush1.bf16.msra.mxu0 %v2839
    %3695 = vmatprep.subr.bf16.mxu0 %v2848
    %3696 = vmatpush1.bf16.msra.mxu0 %v2847
    %3697 = vmatprep.subr.bf16.mxu0 %v2856
    %3698 = vmatpush1.bf16.msra.mxu0 %v2855
    %3699 = vmatprep.subr.bf16.mxu0 %v2864
    %3700 = vmatpush1.bf16.msra.mxu0 %v2863
    %3701 = vmatprep.subr.bf16.mxu0 %v2872
    %3702 = vmatpush1.bf16.msra.mxu0 %v2871
    %3703 = vmatprep.subr.bf16.mxu0 %v2880
    %3704 = vmatpush1.bf16.msra.mxu0 %v2879
    %3705 = vmatprep.subr.bf16.mxu0 %v2888
    %3706 = vmatpush1.bf16.msra.mxu0 %v2887
    %3707 = vmatprep.subr.bf16.mxu0 %v2896
    %3708 = vmatpush1.bf16.msra.mxu0 %v2895
    %3709 = vmatprep.subr.bf16.mxu0 %v2904
    %3710 = vmatpush1.bf16.msra.mxu0 %v2903
    %3711 = vmatprep.subr.bf16.mxu0 %v2912
    %3712 = vmatpush1.bf16.msra.mxu0 %v2911
    %3713 = vmatprep.subr.bf16.mxu0 %v2920
    %3714 = vmatpush1.bf16.msra.mxu0 %v2919
    %3715 = vmatprep.subr.bf16.mxu0 %v2928
    %3716 = vmatpush1.bf16.msra.mxu0 %v2927
    %3717 = vmatprep.subr.bf16.mxu0 %v2936
    %3718 = vmatpush1.bf16.msra.mxu0 %v2935
    %3719 = vmatprep.subr.bf16.mxu0 %v2944
    %3720 = vmatpush1.bf16.msra.mxu0 %v2943
    %3721 = vmatprep.subr.bf16.mxu0 %v2952
    %3722 = vmatpush1.bf16.msra.mxu0 %v2951
    %3723 = vmatprep.subr.bf16.mxu0 %v2960
    %3724 = vmatpush1.bf16.msra.mxu0 %v2959
    %3725 = vmatprep.mubr.bf16.mxu0 %v490
    %3726 = vmatmul.mubr.bf16.gmra.mrb[0].mxu0 %v489
    %v3727 = vpop.f32.mrb[0].mxu0
    %v3728 = vadd.f32 %v3685, %v3727
    %v3729 = vpop.f32.mrb[0].mxu0
    %v3730 = vadd.f32 %v3687, %v3729
    %v3731 = vpop.f32.mrb[0].mxu0
    %v3732 = vadd.f32 %v3689, %v3731
    %v3733 = vpop.f32.mrb[0].mxu0
    %v3734 = vadd.f32 %v3691, %v3733
    %3735 = vdwg.mxu0
    %3736 = vmatprep.subr.bf16.mxu0 %v2968
    %3737 = vmatpush1.bf16.msra.mxu0 %v2967
    %3738 = vmatprep.subr.bf16.mxu0 %v2976
    %3739 = vmatpush1.bf16.msra.mxu0 %v2975
    %3740 = vmatprep.subr.bf16.mxu0 %v2984
    %3741 = vmatpush1.bf16.msra.mxu0 %v2983
    %3742 = vmatprep.subr.bf16.mxu0 %v2992
    %3743 = vmatpush1.bf16.msra.mxu0 %v2991
    %3744 = vmatprep.subr.bf16.mxu0 %v3000
    %3745 = vmatpush1.bf16.msra.mxu0 %v2999
    %3746 = vmatprep.subr.bf16.mxu0 %v3008
    %3747 = vmatpush1.bf16.msra.mxu0 %v3007
    %3748 = vmatprep.subr.bf16.mxu0 %v3016
    %3749 = vmatpush1.bf16.msra.mxu0 %v3015
    %3750 = vmatprep.subr.bf16.mxu0 %v3024
    %3751 = vmatpush1.bf16.msra.mxu0 %v3023
    %3752 = vmatprep.subr.bf16.mxu0 %v3032
    %3753 = vmatpush1.bf16.msra.mxu0 %v3031
    %3754 = vmatprep.subr.bf16.mxu0 %v3040
    %3755 = vmatpush1.bf16.msra.mxu0 %v3039
    %3756 = vmatprep.subr.bf16.mxu0 %v3048
    %3757 = vmatpush1.bf16.msra.mxu0 %v3047
    %3758 = vmatprep.subr.bf16.mxu0 %v3056
    %3759 = vmatpush1.bf16.msra.mxu0 %v3055
    %3760 = vmatprep.subr.bf16.mxu0 %v3064
    %3761 = vmatpush1.bf16.msra.mxu0 %v3063
    %3762 = vmatprep.subr.bf16.mxu0 %v3072
    %3763 = vmatpush1.bf16.msra.mxu0 %v3071
    %3764 = vmatprep.subr.bf16.mxu0 %v3080
    %3765 = vmatpush1.bf16.msra.mxu0 %v3079
    %3766 = vmatprep.subr.bf16.mxu0 %v3088
    %3767 = vmatpush1.bf16.msra.mxu0 %v3087
    %3768 = vmatprep.mubr.bf16.mxu0 %v492
    %3769 = vmatmul.mubr.bf16.gmra.mrb[0].mxu0 %v491
    %v3770 = vpop.f32.mrb[0].mxu0
    %v3771 = vadd.f32 %v3728, %v3770
    %v3772 = vpop.f32.mrb[0].mxu0
    %v3773 = vadd.f32 %v3730, %v3772
    %v3774 = vpop.f32.mrb[0].mxu0
    %v3775 = vadd.f32 %v3732, %v3774
    %v3776 = vpop.f32.mrb[0].mxu0
    %v3777 = vadd.f32 %v3734, %v3776
    %3778 = vdwg.mxu0
    %3779 = vmatprep.subr.bf16.mxu0 %v2586
    %3780 = vmatpush1.bf16.msra.mxu0 %v2585
    %3781 = vmatprep.subr.bf16.mxu0 %v2594
    %3782 = vmatpush1.bf16.msra.mxu0 %v2593
    %3783 = vmatprep.subr.bf16.mxu0 %v2602
    %3784 = vmatpush1.bf16.msra.mxu0 %v2601
    %3785 = vmatprep.subr.bf16.mxu0 %v2610
    %3786 = vmatpush1.bf16.msra.mxu0 %v2609
    %3787 = vmatprep.subr.bf16.mxu0 %v2618
    %3788 = vmatpush1.bf16.msra.mxu0 %v2617
    %3789 = vmatprep.subr.bf16.mxu0 %v2626
    %3790 = vmatpush1.bf16.msra.mxu0 %v2625
    %3791 = vmatprep.subr.bf16.mxu0 %v2634
    %3792 = vmatpush1.bf16.msra.mxu0 %v2633
    %3793 = vmatprep.subr.bf16.mxu0 %v2642
    %3794 = vmatpush1.bf16.msra.mxu0 %v2641
    %3795 = vmatprep.subr.bf16.mxu0 %v2650
    %3796 = vmatpush1.bf16.msra.mxu0 %v2649
    %3797 = vmatprep.subr.bf16.mxu0 %v2658
    %3798 = vmatpush1.bf16.msra.mxu0 %v2657
    %3799 = vmatprep.subr.bf16.mxu0 %v2666
    %3800 = vmatpush1.bf16.msra.mxu0 %v2665
    %3801 = vmatprep.subr.bf16.mxu0 %v2674
    %3802 = vmatpush1.bf16.msra.mxu0 %v2673
    %3803 = vmatprep.subr.bf16.mxu0 %v2682
    %3804 = vmatpush1.bf16.msra.mxu0 %v2681
    %3805 = vmatprep.subr.bf16.mxu0 %v2690
    %3806 = vmatpush1.bf16.msra.mxu0 %v2689
    %3807 = vmatprep.subr.bf16.mxu0 %v2698
    %3808 = vmatpush1.bf16.msra.mxu0 %v2697
    %3809 = vmatprep.subr.bf16.mxu0 %v2706
    %3810 = vmatpush1.bf16.msra.mxu0 %v2705
    %3811 = vmatprep.mubr.bf16.mxu0 %v486
    %3812 = vmatmul.mubr.bf16.gmra.mrb[0].mxu0 %v485
    %v3813 = vpop.f32.mrb[0].mxu0
    %v3814 = vadd.f32 %v1018, %v3813
    %v3815 = vpop.f32.mrb[0].mxu0
    %v3816 = vadd.f32 %v1022, %v3815
    %v3817 = vpop.f32.mrb[0].mxu0
    %v3818 = vadd.f32 %v1018, %v3817
    %v3819 = vpop.f32.mrb[0].mxu0
    %v3820 = vadd.f32 %v1022, %v3819
    %3821 = vdwg.mxu0
    %3822 = vmatprep.subr.bf16.mxu0 %v2714
    %3823 = vmatpush1.bf16.msra.mxu0 %v2713
    %3824 = vmatprep.subr.bf16.mxu0 %v2722
    %3825 = vmatpush1.bf16.msra.mxu0 %v2721
    %3826 = vmatprep.subr.bf16.mxu0 %v2730
    %3827 = vmatpush1.bf16.msra.mxu0 %v2729
    %3828 = vmatprep.subr.bf16.mxu0 %v2738
    %3829 = vmatpush1.bf16.msra.mxu0 %v2737
    %3830 = vmatprep.subr.bf16.mxu0 %v2746
    %3831 = vmatpush1.bf16.msra.mxu0 %v2745
    %3832 = vmatprep.subr.bf16.mxu0 %v2754
    %3833 = vmatpush1.bf16.msra.mxu0 %v2753
    %3834 = vmatprep.subr.bf16.mxu0 %v2762
    %3835 = vmatpush1.bf16.msra.mxu0 %v2761
    %3836 = vmatprep.subr.bf16.mxu0 %v2770
    %3837 = vmatpush1.bf16.msra.mxu0 %v2769
    %3838 = vmatprep.subr.bf16.mxu0 %v2778
    %3839 = vmatpush1.bf16.msra.mxu0 %v2777
    %3840 = vmatprep.subr.bf16.mxu0 %v2786
    %3841 = vmatpush1.bf16.msra.mxu0 %v2785
    %3842 = vmatprep.subr.bf16.mxu0 %v2794
    %3843 = vmatpush1.bf16.msra.mxu0 %v2793
    %3844 = vmatprep.subr.bf16.mxu0 %v2802
    %3845 = vmatpush1.bf16.msra.mxu0 %v2801
    %3846 = vmatprep.subr.bf16.mxu0 %v2810
    %3847 = vmatpush1.bf16.msra.mxu0 %v2809
    %3848 = vmatprep.subr.bf16.mxu0 %v2818
    %3849 = vmatpush1.bf16.msra.mxu0 %v2817
    %3850 = vmatprep.subr.bf16.mxu0 %v2826
    %3851 = vmatpush1.bf16.msra.mxu0 %v2825
    %3852 = vmatprep.subr.bf16.mxu0 %v2834
    %3853 = vmatpush1.bf16.msra.mxu0 %v2833
    %3854 = vmatprep.mubr.bf16.mxu0 %v488
    %3855 = vmatmul.mubr.bf16.gmra.mrb[0].mxu0 %v487
    %v3856 = vpop.f32.mrb[0].mxu0
    %v3857 = vadd.f32 %v3814, %v3856
    %v3858 = vpop.f32.mrb[0].mxu0
    %v3859 = vadd.f32 %v3816, %v3858
    %v3860 = vpop.f32.mrb[0].mxu0
    %v3861 = vadd.f32 %v3818, %v3860
    %v3862 = vpop.f32.mrb[0].mxu0
    %v3863 = vadd.f32 %v3820, %v3862
    %3864 = vdwg.mxu0
    %3865 = vmatprep.subr.bf16.mxu0 %v2842
    %3866 = vmatpush1.bf16.msra.mxu0 %v2841
    %3867 = vmatprep.subr.bf16.mxu0 %v2850
    %3868 = vmatpush1.bf16.msra.mxu0 %v2849
    %3869 = vmatprep.subr.bf16.mxu0 %v2858
    %3870 = vmatpush1.bf16.msra.mxu0 %v2857
    %3871 = vmatprep.subr.bf16.mxu0 %v2866
    %3872 = vmatpush1.bf16.msra.mxu0 %v2865
    %3873 = vmatprep.subr.bf16.mxu0 %v2874
    %3874 = vmatpush1.bf16.msra.mxu0 %v2873
    %3875 = vmatprep.subr.bf16.mxu0 %v2882
    %3876 = vmatpush1.bf16.msra.mxu0 %v2881
    %3877 = vmatprep.subr.bf16.mxu0 %v2890
    %3878 = vmatpush1.bf16.msra.mxu0 %v2889
    %3879 = vmatprep.subr.bf16.mxu0 %v2898
    %3880 = vmatpush1.bf16.msra.mxu0 %v2897
    %3881 = vmatprep.subr.bf16.mxu0 %v2906
    %3882 = vmatpush1.bf16.msra.mxu0 %v2905
    %3883 = vmatprep.subr.bf16.mxu0 %v2914
    %3884 = vmatpush1.bf16.msra.mxu0 %v2913
    %3885 = vmatprep.subr.bf16.mxu0 %v2922
    %3886 = vmatpush1.bf16.msra.mxu0 %v2921
    %3887 = vmatprep.subr.bf16.mxu0 %v2930
    %3888 = vmatpush1.bf16.msra.mxu0 %v2929
    %3889 = vmatprep.subr.bf16.mxu0 %v2938
    %3890 = vmatpush1.bf16.msra.mxu0 %v2937
    %3891 = vmatprep.subr.bf16.mxu0 %v2946
    %3892 = vmatpush1.bf16.msra.mxu0 %v2945
    %3893 = vmatprep.subr.bf16.mxu0 %v2954
    %3894 = vmatpush1.bf16.msra.mxu0 %v2953
    %3895 = vmatprep.subr.bf16.mxu0 %v2962
    %3896 = vmatpush1.bf16.msra.mxu0 %v2961
    %3897 = vmatprep.mubr.bf16.mxu0 %v490
    %3898 = vmatmul.mubr.bf16.gmra.mrb[0].mxu0 %v489
    %v3899 = vpop.f32.mrb[0].mxu0
    %v3900 = vadd.f32 %v3857, %v3899
    %v3901 = vpop.f32.mrb[0].mxu0
    %v3902 = vadd.f32 %v3859, %v3901
    %v3903 = vpop.f32.mrb[0].mxu0
    %v3904 = vadd.f32 %v3861, %v3903
    %v3905 = vpop.f32.mrb[0].mxu0
    %v3906 = vadd.f32 %v3863, %v3905
    %3907 = vdwg.mxu0
    %3908 = vmatprep.subr.bf16.mxu0 %v2970
    %3909 = vmatpush1.bf16.msra.mxu0 %v2969
    %3910 = vmatprep.subr.bf16.mxu0 %v2978
    %3911 = vmatpush1.bf16.msra.mxu0 %v2977
    %3912 = vmatprep.subr.bf16.mxu0 %v2986
    %3913 = vmatpush1.bf16.msra.mxu0 %v2985
    %3914 = vmatprep.subr.bf16.mxu0 %v2994
    %3915 = vmatpush1.bf16.msra.mxu0 %v2993
    %3916 = vmatprep.subr.bf16.mxu0 %v3002
    %3917 = vmatpush1.bf16.msra.mxu0 %v3001
    %3918 = vmatprep.subr.bf16.mxu0 %v3010
    %3919 = vmatpush1.bf16.msra.mxu0 %v3009
    %3920 = vmatprep.subr.bf16.mxu0 %v3018
    %3921 = vmatpush1.bf16.msra.mxu0 %v3017
    %3922 = vmatprep.subr.bf16.mxu0 %v3026
    %3923 = vmatpush1.bf16.msra.mxu0 %v3025
    %3924 = vmatprep.subr.bf16.mxu0 %v3034
    %3925 = vmatpush1.bf16.msra.mxu0 %v3033
    %3926 = vmatprep.subr.bf16.mxu0 %v3042
    %3927 = vmatpush1.bf16.msra.mxu0 %v3041
    %3928 = vmatprep.subr.bf16.mxu0 %v3050
    %3929 = vmatpush1.bf16.msra.mxu0 %v3049
    %3930 = vmatprep.subr.bf16.mxu0 %v3058
    %3931 = vmatpush1.bf16.msra.mxu0 %v3057
    %3932 = vmatprep.subr.bf16.mxu0 %v3066
    %3933 = vmatpush1.bf16.msra.mxu0 %v3065
    %3934 = vmatprep.subr.bf16.mxu0 %v3074
    %3935 = vmatpush1.bf16.msra.mxu0 %v3073
    %3936 = vmatprep.subr.bf16.mxu0 %v3082
    %3937 = vmatpush1.bf16.msra.mxu0 %v3081
    %3938 = vmatprep.subr.bf16.mxu0 %v3090
    %3939 = vmatpush1.bf16.msra.mxu0 %v3089
    %3940 = vmatprep.mubr.bf16.mxu0 %v492
    %3941 = vmatmul.mubr.bf16.gmra.mrb[0].mxu0 %v491
    %v3942 = vpop.f32.mrb[0].mxu0
    %v3943 = vadd.f32 %v3900, %v3942
    %v3944 = vpop.f32.mrb[0].mxu0
    %v3945 = vadd.f32 %v3902, %v3944
    %v3946 = vpop.f32.mrb[0].mxu0
    %v3947 = vadd.f32 %v3904, %v3946
    %v3948 = vpop.f32.mrb[0].mxu0
    %v3949 = vadd.f32 %v3906, %v3948
    %3950 = vdwg.mxu0
    %3951 = vmatprep.subr.bf16.mxu0 %v2588
    %3952 = vmatpush1.bf16.msra.mxu0 %v2587
    %3953 = vmatprep.subr.bf16.mxu0 %v2596
    %3954 = vmatpush1.bf16.msra.mxu0 %v2595
    %3955 = vmatprep.subr.bf16.mxu0 %v2604
    %3956 = vmatpush1.bf16.msra.mxu0 %v2603
    %3957 = vmatprep.subr.bf16.mxu0 %v2612
    %3958 = vmatpush1.bf16.msra.mxu0 %v2611
    %3959 = vmatprep.subr.bf16.mxu0 %v2620
    %3960 = vmatpush1.bf16.msra.mxu0 %v2619
    %3961 = vmatprep.subr.bf16.mxu0 %v2628
    %3962 = vmatpush1.bf16.msra.mxu0 %v2627
    %3963 = vmatprep.subr.bf16.mxu0 %v2636
    %3964 = vmatpush1.bf16.msra.mxu0 %v2635
    %3965 = vmatprep.subr.bf16.mxu0 %v2644
    %3966 = vmatpush1.bf16.msra.mxu0 %v2643
    %3967 = vmatprep.subr.bf16.mxu0 %v2652
    %3968 = vmatpush1.bf16.msra.mxu0 %v2651
    %3969 = vmatprep.subr.bf16.mxu0 %v2660
    %3970 = vmatpush1.bf16.msra.mxu0 %v2659
    %3971 = vmatprep.subr.bf16.mxu0 %v2668
    %3972 = vmatpush1.bf16.msra.mxu0 %v2667
    %3973 = vmatprep.subr.bf16.mxu0 %v2676
    %3974 = vmatpush1.bf16.msra.mxu0 %v2675
    %3975 = vmatprep.subr.bf16.mxu0 %v2684
    %3976 = vmatpush1.bf16.msra.mxu0 %v2683
    %3977 = vmatprep.subr.bf16.mxu0 %v2692
    %3978 = vmatpush1.bf16.msra.mxu0 %v2691
    %3979 = vmatprep.subr.bf16.mxu0 %v2700
    %3980 = vmatpush1.bf16.msra.mxu0 %v2699
    %3981 = vmatprep.subr.bf16.mxu0 %v2708
    %3982 = vmatpush1.bf16.msra.mxu0 %v2707
    %3983 = vmatprep.mubr.bf16.mxu0 %v486
    %3984 = vmatmul.mubr.bf16.gmra.mrb[0].mxu0 %v485
    %v3985 = vpop.f32.mrb[0].mxu0
    %v3986 = vadd.f32 %v1026, %v3985
    %v3987 = vpop.f32.mrb[0].mxu0
    %v3988 = vadd.f32 %v1030, %v3987
    %v3989 = vpop.f32.mrb[0].mxu0
    %v3990 = vadd.f32 %v1026, %v3989
    %v3991 = vpop.f32.mrb[0].mxu0
    %v3992 = vadd.f32 %v1030, %v3991
    %3993 = vdwg.mxu0
    %3994 = vmatprep.subr.bf16.mxu0 %v2716
    %3995 = vmatpush1.bf16.msra.mxu0 %v2715
    %3996 = vmatprep.subr.bf16.mxu0 %v2724
    %3997 = vmatpush1.bf16.msra.mxu0 %v2723
    %3998 = vmatprep.subr.bf16.mxu0 %v2732
    %3999 = vmatpush1.bf16.msra.mxu0 %v2731
    %4000 = vmatprep.subr.bf16.mxu0 %v2740
    %4001 = vmatpush1.bf16.msra.mxu0 %v2739
    %4002 = vmatprep.subr.bf16.mxu0 %v2748
    %4003 = vmatpush1.bf16.msra.mxu0 %v2747
    %4004 = vmatprep.subr.bf16.mxu0 %v2756
    %4005 = vmatpush1.bf16.msra.mxu0 %v2755
    %4006 = vmatprep.subr.bf16.mxu0 %v2764
    %4007 = vmatpush1.bf16.msra.mxu0 %v2763
    %4008 = vmatprep.subr.bf16.mxu0 %v2772
    %4009 = vmatpush1.bf16.msra.mxu0 %v2771
    %4010 = vmatprep.subr.bf16.mxu0 %v2780
    %4011 = vmatpush1.bf16.msra.mxu0 %v2779
    %4012 = vmatprep.subr.bf16.mxu0 %v2788
    %4013 = vmatpush1.bf16.msra.mxu0 %v2787
    %4014 = vmatprep.subr.bf16.mxu0 %v2796
    %4015 = vmatpush1.bf16.msra.mxu0 %v2795
    %4016 = vmatprep.subr.bf16.mxu0 %v2804
    %4017 = vmatpush1.bf16.msra.mxu0 %v2803
    %4018 = vmatprep.subr.bf16.mxu0 %v2812
    %4019 = vmatpush1.bf16.msra.mxu0 %v2811
    %4020 = vmatprep.subr.bf16.mxu0 %v2820
    %4021 = vmatpush1.bf16.msra.mxu0 %v2819
    %4022 = vmatprep.subr.bf16.mxu0 %v2828
    %4023 = vmatpush1.bf16.msra.mxu0 %v2827
    %4024 = vmatprep.subr.bf16.mxu0 %v2836
    %4025 = vmatpush1.bf16.msra.mxu0 %v2835
    %4026 = vmatprep.mubr.bf16.mxu0 %v488
    %4027 = vmatmul.mubr.bf16.gmra.mrb[0].mxu0 %v487
    %v4028 = vpop.f32.mrb[0].mxu0
    %v4029 = vadd.f32 %v3986, %v4028
    %v4030 = vpop.f32.mrb[0].mxu0
    %v4031 = vadd.f32 %v3988, %v4030
    %v4032 = vpop.f32.mrb[0].mxu0
    %v4033 = vadd.f32 %v3990, %v4032
    %v4034 = vpop.f32.mrb[0].mxu0
    %v4035 = vadd.f32 %v3992, %v4034
    %4036 = vdwg.mxu0
    %4037 = vmatprep.subr.bf16.mxu0 %v2844
    %4038 = vmatpush1.bf16.msra.mxu0 %v2843
    %4039 = vmatprep.subr.bf16.mxu0 %v2852
    %4040 = vmatpush1.bf16.msra.mxu0 %v2851
    %4041 = vmatprep.subr.bf16.mxu0 %v2860
    %4042 = vmatpush1.bf16.msra.mxu0 %v2859
    %4043 = vmatprep.subr.bf16.mxu0 %v2868
    %4044 = vmatpush1.bf16.msra.mxu0 %v2867
    %4045 = vmatprep.subr.bf16.mxu0 %v2876
    %4046 = vmatpush1.bf16.msra.mxu0 %v2875
    %4047 = vmatprep.subr.bf16.mxu0 %v2884
    %4048 = vmatpush1.bf16.msra.mxu0 %v2883
    %4049 = vmatprep.subr.bf16.mxu0 %v2892
    %4050 = vmatpush1.bf16.msra.mxu0 %v2891
    %4051 = vmatprep.subr.bf16.mxu0 %v2900
    %4052 = vmatpush1.bf16.msra.mxu0 %v2899
    %4053 = vmatprep.subr.bf16.mxu0 %v2908
    %4054 = vmatpush1.bf16.msra.mxu0 %v2907
    %4055 = vmatprep.subr.bf16.mxu0 %v2916
    %4056 = vmatpush1.bf16.msra.mxu0 %v2915
    %4057 = vmatprep.subr.bf16.mxu0 %v2924
    %4058 = vmatpush1.bf16.msra.mxu0 %v2923
    %4059 = vmatprep.subr.bf16.mxu0 %v2932
    %4060 = vmatpush1.bf16.msra.mxu0 %v2931
    %4061 = vmatprep.subr.bf16.mxu0 %v2940
    %4062 = vmatpush1.bf16.msra.mxu0 %v2939
    %4063 = vmatprep.subr.bf16.mxu0 %v2948
    %4064 = vmatpush1.bf16.msra.mxu0 %v2947
    %4065 = vmatprep.subr.bf16.mxu0 %v2956
    %4066 = vmatpush1.bf16.msra.mxu0 %v2955
    %4067 = vmatprep.subr.bf16.mxu0 %v2964
    %4068 = vmatpush1.bf16.msra.mxu0 %v2963
    %4069 = vmatprep.mubr.bf16.mxu0 %v490
    %4070 = vmatmul.mubr.bf16.gmra.mrb[0].mxu0 %v489
    %v4071 = vpop.f32.mrb[0].mxu0
    %v4072 = vadd.f32 %v4029, %v4071
    %v4073 = vpop.f32.mrb[0].mxu0
    %v4074 = vadd.f32 %v4031, %v4073
    %v4075 = vpop.f32.mrb[0].mxu0
    %v4076 = vadd.f32 %v4033, %v4075
    %v4077 = vpop.f32.mrb[0].mxu0
    %v4078 = vadd.f32 %v4035, %v4077
    %4079 = vdwg.mxu0
    %4080 = vmatprep.subr.bf16.mxu0 %v2972
    %4081 = vmatpush1.bf16.msra.mxu0 %v2971
    %4082 = vmatprep.subr.bf16.mxu0 %v2980
    %4083 = vmatpush1.bf16.msra.mxu0 %v2979
    %4084 = vmatprep.subr.bf16.mxu0 %v2988
    %4085 = vmatpush1.bf16.msra.mxu0 %v2987
    %4086 = vmatprep.subr.bf16.mxu0 %v2996
    %4087 = vmatpush1.bf16.msra.mxu0 %v2995
    %4088 = vmatprep.subr.bf16.mxu0 %v3004
    %4089 = vmatpush1.bf16.msra.mxu0 %v3003
    %4090 = vmatprep.subr.bf16.mxu0 %v3012
    %4091 = vmatpush1.bf16.msra.mxu0 %v3011
    %4092 = vmatprep.subr.bf16.mxu0 %v3020
    %4093 = vmatpush1.bf16.msra.mxu0 %v3019
    %4094 = vmatprep.subr.bf16.mxu0 %v3028
    %4095 = vmatpush1.bf16.msra.mxu0 %v3027
    %4096 = vmatprep.subr.bf16.mxu0 %v3036
    %4097 = vmatpush1.bf16.msra.mxu0 %v3035
    %4098 = vmatprep.subr.bf16.mxu0 %v3044
    %4099 = vmatpush1.bf16.msra.mxu0 %v3043
    %4100 = vmatprep.subr.bf16.mxu0 %v3052
    %4101 = vmatpush1.bf16.msra.mxu0 %v3051
    %4102 = vmatprep.subr.bf16.mxu0 %v3060
    %4103 = vmatpush1.bf16.msra.mxu0 %v3059
    %4104 = vmatprep.subr.bf16.mxu0 %v3068
    %4105 = vmatpush1.bf16.msra.mxu0 %v3067
    %4106 = vmatprep.subr.bf16.mxu0 %v3076
    %4107 = vmatpush1.bf16.msra.mxu0 %v3075
    %4108 = vmatprep.subr.bf16.mxu0 %v3084
    %4109 = vmatpush1.bf16.msra.mxu0 %v3083
    %4110 = vmatprep.subr.bf16.mxu0 %v3092
    %4111 = vmatpush1.bf16.msra.mxu0 %v3091
    %4112 = vmatprep.mubr.bf16.mxu0 %v492
    %4113 = vmatmul.mubr.bf16.gmra.mrb[0].mxu0 %v491
    %v4114 = vpop.f32.mrb[0].mxu0
    %v4115 = vadd.f32 %v4072, %v4114
    %v4116 = vpop.f32.mrb[0].mxu0
    %v4117 = vadd.f32 %v4074, %v4116
    %v4118 = vpop.f32.mrb[0].mxu0
    %v4119 = vadd.f32 %v4076, %v4118
    %v4120 = vpop.f32.mrb[0].mxu0
    %v4121 = vadd.f32 %v4078, %v4120
    %4122 = vdwg.mxu0
    %4123 = vmatprep.subr.bf16.mxu0 %v2590
    %4124 = vmatpush1.bf16.msra.mxu0 %v2589
    %4125 = vmatprep.subr.bf16.mxu0 %v2598
    %4126 = vmatpush1.bf16.msra.mxu0 %v2597
    %4127 = vmatprep.subr.bf16.mxu0 %v2606
    %4128 = vmatpush1.bf16.msra.mxu0 %v2605
    %4129 = vmatprep.subr.bf16.mxu0 %v2614
    %4130 = vmatpush1.bf16.msra.mxu0 %v2613
    %4131 = vmatprep.subr.bf16.mxu0 %v2622
    %4132 = vmatpush1.bf16.msra.mxu0 %v2621
    %4133 = vmatprep.subr.bf16.mxu0 %v2630
    %4134 = vmatpush1.bf16.msra.mxu0 %v2629
    %4135 = vmatprep.subr.bf16.mxu0 %v2638
    %4136 = vmatpush1.bf16.msra.mxu0 %v2637
    %4137 = vmatprep.subr.bf16.mxu0 %v2646
    %4138 = vmatpush1.bf16.msra.mxu0 %v2645
    %4139 = vmatprep.subr.bf16.mxu0 %v2654
    %4140 = vmatpush1.bf16.msra.mxu0 %v2653
    %4141 = vmatprep.subr.bf16.mxu0 %v2662
    %4142 = vmatpush1.bf16.msra.mxu0 %v2661
    %4143 = vmatprep.subr.bf16.mxu0 %v2670
    %4144 = vmatpush1.bf16.msra.mxu0 %v2669
    %4145 = vmatprep.subr.bf16.mxu0 %v2678
    %4146 = vmatpush1.bf16.msra.mxu0 %v2677
    %4147 = vmatprep.subr.bf16.mxu0 %v2686
    %4148 = vmatpush1.bf16.msra.mxu0 %v2685
    %4149 = vmatprep.subr.bf16.mxu0 %v2694
    %4150 = vmatpush1.bf16.msra.mxu0 %v2693
    %4151 = vmatprep.subr.bf16.mxu0 %v2702
    %4152 = vmatpush1.bf16.msra.mxu0 %v2701
    %4153 = vmatprep.subr.bf16.mxu0 %v2710
    %4154 = vmatpush1.bf16.msra.mxu0 %v2709
    %4155 = vmatprep.mubr.bf16.mxu0 %v486
    %4156 = vmatmul.mubr.bf16.gmra.mrb[0].mxu0 %v485
    %v4157 = vpop.f32.mrb[0].mxu0
    %v4158 = vadd.f32 %v1034, %v4157
    %v4159 = vpop.f32.mrb[0].mxu0
    %v4160 = vadd.f32 %v1038, %v4159
    %v4161 = vpop.f32.mrb[0].mxu0
    %v4162 = vadd.f32 %v1034, %v4161
    %v4163 = vpop.f32.mrb[0].mxu0
    %v4164 = vadd.f32 %v1038, %v4163
    %4165 = vdwg.mxu0
    %4166 = vmatprep.subr.bf16.mxu0 %v2718
    %4167 = vmatpush1.bf16.msra.mxu0 %v2717
    %4168 = vmatprep.subr.bf16.mxu0 %v2726
    %4169 = vmatpush1.bf16.msra.mxu0 %v2725
    %4170 = vmatprep.subr.bf16.mxu0 %v2734
    %4171 = vmatpush1.bf16.msra.mxu0 %v2733
    %4172 = vmatprep.subr.bf16.mxu0 %v2742
    %4173 = vmatpush1.bf16.msra.mxu0 %v2741
    %4174 = vmatprep.subr.bf16.mxu0 %v2750
    %4175 = vmatpush1.bf16.msra.mxu0 %v2749
    %4176 = vmatprep.subr.bf16.mxu0 %v2758
    %4177 = vmatpush1.bf16.msra.mxu0 %v2757
    %4178 = vmatprep.subr.bf16.mxu0 %v2766
    %4179 = vmatpush1.bf16.msra.mxu0 %v2765
    %4180 = vmatprep.subr.bf16.mxu0 %v2774
    %4181 = vmatpush1.bf16.msra.mxu0 %v2773
    %4182 = vmatprep.subr.bf16.mxu0 %v2782
    %4183 = vmatpush1.bf16.msra.mxu0 %v2781
    %4184 = vmatprep.subr.bf16.mxu0 %v2790
    %4185 = vmatpush1.bf16.msra.mxu0 %v2789
    %4186 = vmatprep.subr.bf16.mxu0 %v2798
    %4187 = vmatpush1.bf16.msra.mxu0 %v2797
    %4188 = vmatprep.subr.bf16.mxu0 %v2806
    %4189 = vmatpush1.bf16.msra.mxu0 %v2805
    %4190 = vmatprep.subr.bf16.mxu0 %v2814
    %4191 = vmatpush1.bf16.msra.mxu0 %v2813
    %4192 = vmatprep.subr.bf16.mxu0 %v2822
    %4193 = vmatpush1.bf16.msra.mxu0 %v2821
    %4194 = vmatprep.subr.bf16.mxu0 %v2830
    %4195 = vmatpush1.bf16.msra.mxu0 %v2829
    %4196 = vmatprep.subr.bf16.mxu0 %v2838
    %4197 = vmatpush1.bf16.msra.mxu0 %v2837
    %4198 = vmatprep.mubr.bf16.mxu0 %v488
    %4199 = vmatmul.mubr.bf16.gmra.mrb[0].mxu0 %v487
    %v4200 = vpop.f32.mrb[0].mxu0
    %v4201 = vadd.f32 %v4158, %v4200
    %v4202 = vpop.f32.mrb[0].mxu0
    %v4203 = vadd.f32 %v4160, %v4202
    %v4204 = vpop.f32.mrb[0].mxu0
    %v4205 = vadd.f32 %v4162, %v4204
    %v4206 = vpop.f32.mrb[0].mxu0
    %v4207 = vadd.f32 %v4164, %v4206
    %4208 = vdwg.mxu0
    %4209 = vmatprep.subr.bf16.mxu0 %v2846
    %4210 = vmatpush1.bf16.msra.mxu0 %v2845
    %4211 = vmatprep.subr.bf16.mxu0 %v2854
    %4212 = vmatpush1.bf16.msra.mxu0 %v2853
    %4213 = vmatprep.subr.bf16.mxu0 %v2862
    %4214 = vmatpush1.bf16.msra.mxu0 %v2861
    %4215 = vmatprep.subr.bf16.mxu0 %v2870
    %4216 = vmatpush1.bf16.msra.mxu0 %v2869
    %4217 = vmatprep.subr.bf16.mxu0 %v2878
    %4218 = vmatpush1.bf16.msra.mxu0 %v2877
    %4219 = vmatprep.subr.bf16.mxu0 %v2886
    %4220 = vmatpush1.bf16.msra.mxu0 %v2885
    %4221 = vmatprep.subr.bf16.mxu0 %v2894
    %4222 = vmatpush1.bf16.msra.mxu0 %v2893
    %4223 = vmatprep.subr.bf16.mxu0 %v2902
    %4224 = vmatpush1.bf16.msra.mxu0 %v2901
    %4225 = vmatprep.subr.bf16.mxu0 %v2910
    %4226 = vmatpush1.bf16.msra.mxu0 %v2909
    %4227 = vmatprep.subr.bf16.mxu0 %v2918
    %4228 = vmatpush1.bf16.msra.mxu0 %v2917
    %4229 = vmatprep.subr.bf16.mxu0 %v2926
    %4230 = vmatpush1.bf16.msra.mxu0 %v2925
    %4231 = vmatprep.subr.bf16.mxu0 %v2934
    %4232 = vmatpush1.bf16.msra.mxu0 %v2933
    %4233 = vmatprep.subr.bf16.mxu0 %v2942
    %4234 = vmatpush1.bf16.msra.mxu0 %v2941
    %4235 = vmatprep.subr.bf16.mxu0 %v2950
    %4236 = vmatpush1.bf16.msra.mxu0 %v2949
    %4237 = vmatprep.subr.bf16.mxu0 %v2958
    %4238 = vmatpush1.bf16.msra.mxu0 %v2957
    %4239 = vmatprep.subr.bf16.mxu0 %v2966
    %4240 = vmatpush1.bf16.msra.mxu0 %v2965
    %4241 = vmatprep.mubr.bf16.mxu0 %v490
    %4242 = vmatmul.mubr.bf16.gmra.mrb[0].mxu0 %v489
    %v4243 = vpop.f32.mrb[0].mxu0
    %v4244 = vadd.f32 %v4201, %v4243
    %v4245 = vpop.f32.mrb[0].mxu0
    %v4246 = vadd.f32 %v4203, %v4245
    %v4247 = vpop.f32.mrb[0].mxu0
    %v4248 = vadd.f32 %v4205, %v4247
    %v4249 = vpop.f32.mrb[0].mxu0
    %v4250 = vadd.f32 %v4207, %v4249
    %4251 = vdwg.mxu0
    %4252 = vmatprep.subr.bf16.mxu0 %v2974
    %4253 = vmatpush1.bf16.msra.mxu0 %v2973
    %4254 = vmatprep.subr.bf16.mxu0 %v2982
    %4255 = vmatpush1.bf16.msra.mxu0 %v2981
    %4256 = vmatprep.subr.bf16.mxu0 %v2990
    %4257 = vmatpush1.bf16.msra.mxu0 %v2989
    %4258 = vmatprep.subr.bf16.mxu0 %v2998
    %4259 = vmatpush1.bf16.msra.mxu0 %v2997
    %4260 = vmatprep.subr.bf16.mxu0 %v3006
    %4261 = vmatpush1.bf16.msra.mxu0 %v3005
    %4262 = vmatprep.subr.bf16.mxu0 %v3014
    %4263 = vmatpush1.bf16.msra.mxu0 %v3013
    %4264 = vmatprep.subr.bf16.mxu0 %v3022
    %4265 = vmatpush1.bf16.msra.mxu0 %v3021
    %4266 = vmatprep.subr.bf16.mxu0 %v3030
    %4267 = vmatpush1.bf16.msra.mxu0 %v3029
    %4268 = vmatprep.subr.bf16.mxu0 %v3038
    %4269 = vmatpush1.bf16.msra.mxu0 %v3037
    %4270 = vmatprep.subr.bf16.mxu0 %v3046
    %4271 = vmatpush1.bf16.msra.mxu0 %v3045
    %4272 = vmatprep.subr.bf16.mxu0 %v3054
    %4273 = vmatpush1.bf16.msra.mxu0 %v3053
    %4274 = vmatprep.subr.bf16.mxu0 %v3062
    %4275 = vmatpush1.bf16.msra.mxu0 %v3061
    %4276 = vmatprep.subr.bf16.mxu0 %v3070
    %4277 = vmatpush1.bf16.msra.mxu0 %v3069
    %4278 = vmatprep.subr.bf16.mxu0 %v3078
    %4279 = vmatpush1.bf16.msra.mxu0 %v3077
    %4280 = vmatprep.subr.bf16.mxu0 %v3086
    %4281 = vmatpush1.bf16.msra.mxu0 %v3085
    %4282 = vmatprep.subr.bf16.mxu0 %v3094
    %4283 = vmatpush1.bf16.msra.mxu0 %v3093
    %4284 = vmatprep.mubr.bf16.mxu0 %v492
    %4285 = vmatmul.mubr.bf16.gmra.mrb[0].mxu0 %v491
    %v4286 = vpop.f32.mrb[0].mxu0
    %v4287 = vadd.f32 %v4244, %v4286
    %v4288 = vpop.f32.mrb[0].mxu0
    %v4289 = vadd.f32 %v4246, %v4288
    %v4290 = vpop.f32.mrb[0].mxu0
    %v4291 = vadd.f32 %v4248, %v4290
    %v4292 = vpop.f32.mrb[0].mxu0
    %v4293 = vadd.f32 %v4250, %v4292
    %4294 = vdwg.mxu0
    %vm4295 = vcmp.ge.f32.partialorder %v3771, 0.0
    %vm4296 = vcmp.ge.f32.partialorder %v3773, 0.0
    %vm4297 = vcmp.ge.f32.partialorder %v3943, 0.0
    %vm4298 = vcmp.ge.f32.partialorder %v3945, 0.0
    %vm4299 = vcmp.ge.f32.partialorder %v4115, 0.0
    %vm4300 = vcmp.ge.f32.partialorder %v4117, 0.0
    %vm4301 = vcmp.ge.f32.partialorder %v4287, 0.0
    %vm4302 = vcmp.ge.f32.partialorder %v4289, 0.0
    %vm4303 = vcmp.ge.f32.partialorder %v3775, 0.0
    %vm4304 = vcmp.ge.f32.partialorder %v3777, 0.0
    %vm4305 = vcmp.ge.f32.partialorder %v3947, 0.0
    %vm4306 = vcmp.ge.f32.partialorder %v3949, 0.0
    %vm4307 = vcmp.ge.f32.partialorder %v4119, 0.0
    %vm4308 = vcmp.ge.f32.partialorder %v4121, 0.0
    %vm4309 = vcmp.ge.f32.partialorder %v4291, 0.0
    %vm4310 = vcmp.ge.f32.partialorder %v4293, 0.0
    %v4311 = vmul.f32 %v3771, 0.01
    %v4312 = vmul.f32 %v3773, 0.01
    %v4313 = vmul.f32 %v3943, 0.01
    %v4314 = vmul.f32 %v3945, 0.01
    %v4315 = vmul.f32 %v4115, 0.01
    %v4316 = vmul.f32 %v4117, 0.01
    %v4317 = vmul.f32 %v4287, 0.01
    %v4318 = vmul.f32 %v4289, 0.01
    %v4319 = vmul.f32 %v3775, 0.01
    %v4320 = vmul.f32 %v3777, 0.01
    %v4321 = vmul.f32 %v3947, 0.01
    %v4322 = vmul.f32 %v3949, 0.01
    %v4323 = vmul.f32 %v4119, 0.01
    %v4324 = vmul.f32 %v4121, 0.01
    %v4325 = vmul.f32 %v4291, 0.01
    %v4326 = vmul.f32 %v4293, 0.01
    %v4327 = vsel %vm4295, %v3771, %v4311
    %v4328 = vsel %vm4296, %v3773, %v4312
    %v4329 = vsel %vm4297, %v3943, %v4313
    %v4330 = vsel %vm4298, %v3945, %v4314
    %v4331 = vsel %vm4299, %v4115, %v4315
    %v4332 = vsel %vm4300, %v4117, %v4316
    %v4333 = vsel %vm4301, %v4287, %v4317
    %v4334 = vsel %vm4302, %v4289, %v4318
    %v4335 = vsel %vm4303, %v3775, %v4319
    %v4336 = vsel %vm4304, %v3777, %v4320
    %v4337 = vsel %vm4305, %v3947, %v4321
    %v4338 = vsel %vm4306, %v3949, %v4322
    %v4339 = vsel %vm4307, %v4119, %v4323
    %v4340 = vsel %vm4308, %v4121, %v4324
    %v4341 = vsel %vm4309, %v4291, %v4325
    %v4342 = vsel %vm4310, %v4293, %v4326
    %v4343 = vpack.c.bf16 %v4335, %v4327
    %v4344 = vpack.c.bf16 %v4336, %v4328
    %v4345 = vpack.c.bf16 %v4337, %v4329
    %v4346 = vpack.c.bf16 %v4338, %v4330
    %v4347 = vpack.c.bf16 %v4339, %v4331
    %v4348 = vpack.c.bf16 %v4340, %v4332
    %v4349 = vpack.c.bf16 %v4341, %v4333
    %v4350 = vpack.c.bf16 %v4342, %v4334
    %v4351 = vld [vmem:[#allocation11] sm:$0xff]
    %v4352 = vld [vmem:[#allocation11 + $0x8] sm:$0xff]
    %v4353 = vld [vmem:[#allocation11 + $0x10] sm:$0xff]
    %v4354 = vld [vmem:[#allocation11 + $0x18] sm:$0xff]
    %v4355 = vld [vmem:[#allocation11 + $0x20] sm:$0xff]
    %v4356 = vld [vmem:[#allocation11 + $0x28] sm:$0xff]
    %v4357 = vld [vmem:[#allocation11 + $0x30] sm:$0xff]
    %v4358 = vld [vmem:[#allocation11 + $0x38] sm:$0xff]
    %v4359 = vld [vmem:[#allocation11 + $0x40] sm:$0xff]
    %v4360 = vld [vmem:[#allocation11 + $0x48] sm:$0xff]
    %v4361 = vld [vmem:[#allocation11 + $0x50] sm:$0xff]
    %v4362 = vld [vmem:[#allocation11 + $0x58] sm:$0xff]
    %v4363 = vld [vmem:[#allocation11 + $0x60] sm:$0xff]
    %v4364 = vld [vmem:[#allocation11 + $0x68] sm:$0xff]
    %v4365 = vld [vmem:[#allocation11 + $0x70] sm:$0xff]
    %v4366 = vld [vmem:[#allocation11 + $0x78] sm:$0xff]
    %v4367 = vld [vmem:[#allocation11 + $0x80] sm:$0xff]
    %v4368 = vld [vmem:[#allocation11 + $0x88] sm:$0xff]
    %v4369 = vld [vmem:[#allocation11 + $0x90] sm:$0xff]
    %v4370 = vld [vmem:[#allocation11 + $0x98] sm:$0xff]
    %v4371 = vld [vmem:[#allocation11 + $0xa0] sm:$0xff]
    %v4372 = vld [vmem:[#allocation11 + $0xa8] sm:$0xff]
    %v4373 = vld [vmem:[#allocation11 + $0xb0] sm:$0xff]
    %v4374 = vld [vmem:[#allocation11 + $0xb8] sm:$0xff]
    %v4375 = vld [vmem:[#allocation11 + $0xc0] sm:$0xff]
    %v4376 = vld [vmem:[#allocation11 + $0xc8] sm:$0xff]
    %v4377 = vld [vmem:[#allocation11 + $0xd0] sm:$0xff]
    %v4378 = vld [vmem:[#allocation11 + $0xd8] sm:$0xff]
    %v4379 = vld [vmem:[#allocation11 + $0xe0] sm:$0xff]
    %v4380 = vld [vmem:[#allocation11 + $0xe8] sm:$0xff]
    %v4381 = vld [vmem:[#allocation11 + $0xf0] sm:$0xff]
    %v4382 = vld [vmem:[#allocation11 + $0xf8] sm:$0xff]
    %v4383 = vld [vmem:[#allocation11 + $0x100] sm:$0xff]
    %v4384 = vld [vmem:[#allocation11 + $0x108] sm:$0xff]
    %v4385 = vld [vmem:[#allocation11 + $0x110] sm:$0xff]
    %v4386 = vld [vmem:[#allocation11 + $0x118] sm:$0xff]
    %v4387 = vld [vmem:[#allocation11 + $0x120] sm:$0xff]
    %v4388 = vld [vmem:[#allocation11 + $0x128] sm:$0xff]
    %v4389 = vld [vmem:[#allocation11 + $0x130] sm:$0xff]
    %v4390 = vld [vmem:[#allocation11 + $0x138] sm:$0xff]
    %v4391 = vld [vmem:[#allocation11 + $0x140] sm:$0xff]
    %v4392 = vld [vmem:[#allocation11 + $0x148] sm:$0xff]
    %v4393 = vld [vmem:[#allocation11 + $0x150] sm:$0xff]
    %v4394 = vld [vmem:[#allocation11 + $0x158] sm:$0xff]
    %v4395 = vld [vmem:[#allocation11 + $0x160] sm:$0xff]
    %v4396 = vld [vmem:[#allocation11 + $0x168] sm:$0xff]
    %v4397 = vld [vmem:[#allocation11 + $0x170] sm:$0xff]
    %v4398 = vld [vmem:[#allocation11 + $0x178] sm:$0xff]
    %v4399 = vld [vmem:[#allocation11 + $0x180] sm:$0xff]
    %v4400 = vld [vmem:[#allocation11 + $0x188] sm:$0xff]
    %v4401 = vld [vmem:[#allocation11 + $0x190] sm:$0xff]
    %v4402 = vld [vmem:[#allocation11 + $0x198] sm:$0xff]
    %v4403 = vld [vmem:[#allocation11 + $0x1a0] sm:$0xff]
    %v4404 = vld [vmem:[#allocation11 + $0x1a8] sm:$0xff]
    %v4405 = vld [vmem:[#allocation11 + $0x1b0] sm:$0xff]
    %v4406 = vld [vmem:[#allocation11 + $0x1b8] sm:$0xff]
    %v4407 = vld [vmem:[#allocation11 + $0x1c0] sm:$0xff]
    %v4408 = vld [vmem:[#allocation11 + $0x1c8] sm:$0xff]
    %v4409 = vld [vmem:[#allocation11 + $0x1d0] sm:$0xff]
    %v4410 = vld [vmem:[#allocation11 + $0x1d8] sm:$0xff]
    %v4411 = vld [vmem:[#allocation11 + $0x1e0] sm:$0xff]
    %v4412 = vld [vmem:[#allocation11 + $0x1e8] sm:$0xff]
    %v4413 = vld [vmem:[#allocation11 + $0x1f0] sm:$0xff]
    %v4414 = vld [vmem:[#allocation11 + $0x1f8] sm:$0xff]
    %v4415 = vld [vmem:[#allocation11 + $0x200] sm:$0xff]
    %v4416 = vld [vmem:[#allocation11 + $0x208] sm:$0xff]
    %v4417 = vld [vmem:[#allocation11 + $0x210] sm:$0xff]
    %v4418 = vld [vmem:[#allocation11 + $0x218] sm:$0xff]
    %v4419 = vld [vmem:[#allocation11 + $0x220] sm:$0xff]
    %v4420 = vld [vmem:[#allocation11 + $0x228] sm:$0xff]
    %v4421 = vld [vmem:[#allocation11 + $0x230] sm:$0xff]
    %v4422 = vld [vmem:[#allocation11 + $0x238] sm:$0xff]
    %v4423 = vld [vmem:[#allocation11 + $0x240] sm:$0xff]
    %v4424 = vld [vmem:[#allocation11 + $0x248] sm:$0xff]
    %v4425 = vld [vmem:[#allocation11 + $0x250] sm:$0xff]
    %v4426 = vld [vmem:[#allocation11 + $0x258] sm:$0xff]
    %v4427 = vld [vmem:[#allocation11 + $0x260] sm:$0xff]
    %v4428 = vld [vmem:[#allocation11 + $0x268] sm:$0xff]
    %v4429 = vld [vmem:[#allocation11 + $0x270] sm:$0xff]
    %v4430 = vld [vmem:[#allocation11 + $0x278] sm:$0xff]
    %v4431 = vld [vmem:[#allocation11 + $0x280] sm:$0xff]
    %v4432 = vld [vmem:[#allocation11 + $0x288] sm:$0xff]
    %v4433 = vld [vmem:[#allocation11 + $0x290] sm:$0xff]
    %v4434 = vld [vmem:[#allocation11 + $0x298] sm:$0xff]
    %v4435 = vld [vmem:[#allocation11 + $0x2a0] sm:$0xff]
    %v4436 = vld [vmem:[#allocation11 + $0x2a8] sm:$0xff]
    %v4437 = vld [vmem:[#allocation11 + $0x2b0] sm:$0xff]
    %v4438 = vld [vmem:[#allocation11 + $0x2b8] sm:$0xff]
    %v4439 = vld [vmem:[#allocation11 + $0x2c0] sm:$0xff]
    %v4440 = vld [vmem:[#allocation11 + $0x2c8] sm:$0xff]
    %v4441 = vld [vmem:[#allocation11 + $0x2d0] sm:$0xff]
    %v4442 = vld [vmem:[#allocation11 + $0x2d8] sm:$0xff]
    %v4443 = vld [vmem:[#allocation11 + $0x2e0] sm:$0xff]
    %v4444 = vld [vmem:[#allocation11 + $0x2e8] sm:$0xff]
    %v4445 = vld [vmem:[#allocation11 + $0x2f0] sm:$0xff]
    %v4446 = vld [vmem:[#allocation11 + $0x2f8] sm:$0xff]
    %v4447 = vld [vmem:[#allocation11 + $0x300] sm:$0xff]
    %v4448 = vld [vmem:[#allocation11 + $0x308] sm:$0xff]
    %v4449 = vld [vmem:[#allocation11 + $0x310] sm:$0xff]
    %v4450 = vld [vmem:[#allocation11 + $0x318] sm:$0xff]
    %v4451 = vld [vmem:[#allocation11 + $0x320] sm:$0xff]
    %v4452 = vld [vmem:[#allocation11 + $0x328] sm:$0xff]
    %v4453 = vld [vmem:[#allocation11 + $0x330] sm:$0xff]
    %v4454 = vld [vmem:[#allocation11 + $0x338] sm:$0xff]
    %v4455 = vld [vmem:[#allocation11 + $0x340] sm:$0xff]
    %v4456 = vld [vmem:[#allocation11 + $0x348] sm:$0xff]
    %v4457 = vld [vmem:[#allocation11 + $0x350] sm:$0xff]
    %v4458 = vld [vmem:[#allocation11 + $0x358] sm:$0xff]
    %v4459 = vld [vmem:[#allocation11 + $0x360] sm:$0xff]
    %v4460 = vld [vmem:[#allocation11 + $0x368] sm:$0xff]
    %v4461 = vld [vmem:[#allocation11 + $0x370] sm:$0xff]
    %v4462 = vld [vmem:[#allocation11 + $0x378] sm:$0xff]
    %v4463 = vld [vmem:[#allocation11 + $0x380] sm:$0xff]
    %v4464 = vld [vmem:[#allocation11 + $0x388] sm:$0xff]
    %v4465 = vld [vmem:[#allocation11 + $0x390] sm:$0xff]
    %v4466 = vld [vmem:[#allocation11 + $0x398] sm:$0xff]
    %v4467 = vld [vmem:[#allocation11 + $0x3a0] sm:$0xff]
    %v4468 = vld [vmem:[#allocation11 + $0x3a8] sm:$0xff]
    %v4469 = vld [vmem:[#allocation11 + $0x3b0] sm:$0xff]
    %v4470 = vld [vmem:[#allocation11 + $0x3b8] sm:$0xff]
    %v4471 = vld [vmem:[#allocation11 + $0x3c0] sm:$0xff]
    %v4472 = vld [vmem:[#allocation11 + $0x3c8] sm:$0xff]
    %v4473 = vld [vmem:[#allocation11 + $0x3d0] sm:$0xff]
    %v4474 = vld [vmem:[#allocation11 + $0x3d8] sm:$0xff]
    %v4475 = vld [vmem:[#allocation11 + $0x3e0] sm:$0xff]
    %v4476 = vld [vmem:[#allocation11 + $0x3e8] sm:$0xff]
    %v4477 = vld [vmem:[#allocation11 + $0x3f0] sm:$0xff]
    %v4478 = vld [vmem:[#allocation11 + $0x3f8] sm:$0xff]
    %v4479 = vld [vmem:[#allocation11 + $0x400] sm:$0xff]
    %v4480 = vld [vmem:[#allocation11 + $0x408] sm:$0xff]
    %v4481 = vld [vmem:[#allocation11 + $0x410] sm:$0xff]
    %v4482 = vld [vmem:[#allocation11 + $0x418] sm:$0xff]
    %v4483 = vld [vmem:[#allocation11 + $0x420] sm:$0xff]
    %v4484 = vld [vmem:[#allocation11 + $0x428] sm:$0xff]
    %v4485 = vld [vmem:[#allocation11 + $0x430] sm:$0xff]
    %v4486 = vld [vmem:[#allocation11 + $0x438] sm:$0xff]
    %v4487 = vld [vmem:[#allocation11 + $0x440] sm:$0xff]
    %v4488 = vld [vmem:[#allocation11 + $0x448] sm:$0xff]
    %v4489 = vld [vmem:[#allocation11 + $0x450] sm:$0xff]
    %v4490 = vld [vmem:[#allocation11 + $0x458] sm:$0xff]
    %v4491 = vld [vmem:[#allocation11 + $0x460] sm:$0xff]
    %v4492 = vld [vmem:[#allocation11 + $0x468] sm:$0xff]
    %v4493 = vld [vmem:[#allocation11 + $0x470] sm:$0xff]
    %v4494 = vld [vmem:[#allocation11 + $0x478] sm:$0xff]
    %v4495 = vld [vmem:[#allocation11 + $0x480] sm:$0xff]
    %v4496 = vld [vmem:[#allocation11 + $0x488] sm:$0xff]
    %v4497 = vld [vmem:[#allocation11 + $0x490] sm:$0xff]
    %v4498 = vld [vmem:[#allocation11 + $0x498] sm:$0xff]
    %v4499 = vld [vmem:[#allocation11 + $0x4a0] sm:$0xff]
    %v4500 = vld [vmem:[#allocation11 + $0x4a8] sm:$0xff]
    %v4501 = vld [vmem:[#allocation11 + $0x4b0] sm:$0xff]
    %v4502 = vld [vmem:[#allocation11 + $0x4b8] sm:$0xff]
    %v4503 = vld [vmem:[#allocation11 + $0x4c0] sm:$0xff]
    %v4504 = vld [vmem:[#allocation11 + $0x4c8] sm:$0xff]
    %v4505 = vld [vmem:[#allocation11 + $0x4d0] sm:$0xff]
    %v4506 = vld [vmem:[#allocation11 + $0x4d8] sm:$0xff]
    %v4507 = vld [vmem:[#allocation11 + $0x4e0] sm:$0xff]
    %v4508 = vld [vmem:[#allocation11 + $0x4e8] sm:$0xff]
    %v4509 = vld [vmem:[#allocation11 + $0x4f0] sm:$0xff]
    %v4510 = vld [vmem:[#allocation11 + $0x4f8] sm:$0xff]
    %v4511 = vld [vmem:[#allocation11 + $0x500] sm:$0xff]
    %v4512 = vld [vmem:[#allocation11 + $0x508] sm:$0xff]
    %v4513 = vld [vmem:[#allocation11 + $0x510] sm:$0xff]
    %v4514 = vld [vmem:[#allocation11 + $0x518] sm:$0xff]
    %v4515 = vld [vmem:[#allocation11 + $0x520] sm:$0xff]
    %v4516 = vld [vmem:[#allocation11 + $0x528] sm:$0xff]
    %v4517 = vld [vmem:[#allocation11 + $0x530] sm:$0xff]
    %v4518 = vld [vmem:[#allocation11 + $0x538] sm:$0xff]
    %v4519 = vld [vmem:[#allocation11 + $0x540] sm:$0xff]
    %v4520 = vld [vmem:[#allocation11 + $0x548] sm:$0xff]
    %v4521 = vld [vmem:[#allocation11 + $0x550] sm:$0xff]
    %v4522 = vld [vmem:[#allocation11 + $0x558] sm:$0xff]
    %v4523 = vld [vmem:[#allocation11 + $0x560] sm:$0xff]
    %v4524 = vld [vmem:[#allocation11 + $0x568] sm:$0xff]
    %v4525 = vld [vmem:[#allocation11 + $0x570] sm:$0xff]
    %v4526 = vld [vmem:[#allocation11 + $0x578] sm:$0xff]
    %v4527 = vld [vmem:[#allocation11 + $0x580] sm:$0xff]
    %v4528 = vld [vmem:[#allocation11 + $0x588] sm:$0xff]
    %v4529 = vld [vmem:[#allocation11 + $0x590] sm:$0xff]
    %v4530 = vld [vmem:[#allocation11 + $0x598] sm:$0xff]
    %v4531 = vld [vmem:[#allocation11 + $0x5a0] sm:$0xff]
    %v4532 = vld [vmem:[#allocation11 + $0x5a8] sm:$0xff]
    %v4533 = vld [vmem:[#allocation11 + $0x5b0] sm:$0xff]
    %v4534 = vld [vmem:[#allocation11 + $0x5b8] sm:$0xff]
    %v4535 = vld [vmem:[#allocation11 + $0x5c0] sm:$0xff]
    %v4536 = vld [vmem:[#allocation11 + $0x5c8] sm:$0xff]
    %v4537 = vld [vmem:[#allocation11 + $0x5d0] sm:$0xff]
    %v4538 = vld [vmem:[#allocation11 + $0x5d8] sm:$0xff]
    %v4539 = vld [vmem:[#allocation11 + $0x5e0] sm:$0xff]
    %v4540 = vld [vmem:[#allocation11 + $0x5e8] sm:$0xff]
    %v4541 = vld [vmem:[#allocation11 + $0x5f0] sm:$0xff]
    %v4542 = vld [vmem:[#allocation11 + $0x5f8] sm:$0xff]
    %v4543 = vld [vmem:[#allocation11 + $0x600] sm:$0xff]
    %v4544 = vld [vmem:[#allocation11 + $0x608] sm:$0xff]
    %v4545 = vld [vmem:[#allocation11 + $0x610] sm:$0xff]
    %v4546 = vld [vmem:[#allocation11 + $0x618] sm:$0xff]
    %v4547 = vld [vmem:[#allocation11 + $0x620] sm:$0xff]
    %v4548 = vld [vmem:[#allocation11 + $0x628] sm:$0xff]
    %v4549 = vld [vmem:[#allocation11 + $0x630] sm:$0xff]
    %v4550 = vld [vmem:[#allocation11 + $0x638] sm:$0xff]
    %v4551 = vld [vmem:[#allocation11 + $0x640] sm:$0xff]
    %v4552 = vld [vmem:[#allocation11 + $0x648] sm:$0xff]
    %v4553 = vld [vmem:[#allocation11 + $0x650] sm:$0xff]
    %v4554 = vld [vmem:[#allocation11 + $0x658] sm:$0xff]
    %v4555 = vld [vmem:[#allocation11 + $0x660] sm:$0xff]
    %v4556 = vld [vmem:[#allocation11 + $0x668] sm:$0xff]
    %v4557 = vld [vmem:[#allocation11 + $0x670] sm:$0xff]
    %v4558 = vld [vmem:[#allocation11 + $0x678] sm:$0xff]
    %v4559 = vld [vmem:[#allocation11 + $0x680] sm:$0xff]
    %v4560 = vld [vmem:[#allocation11 + $0x688] sm:$0xff]
    %v4561 = vld [vmem:[#allocation11 + $0x690] sm:$0xff]
    %v4562 = vld [vmem:[#allocation11 + $0x698] sm:$0xff]
    %v4563 = vld [vmem:[#allocation11 + $0x6a0] sm:$0xff]
    %v4564 = vld [vmem:[#allocation11 + $0x6a8] sm:$0xff]
    %v4565 = vld [vmem:[#allocation11 + $0x6b0] sm:$0xff]
    %v4566 = vld [vmem:[#allocation11 + $0x6b8] sm:$0xff]
    %v4567 = vld [vmem:[#allocation11 + $0x6c0] sm:$0xff]
    %v4568 = vld [vmem:[#allocation11 + $0x6c8] sm:$0xff]
    %v4569 = vld [vmem:[#allocation11 + $0x6d0] sm:$0xff]
    %v4570 = vld [vmem:[#allocation11 + $0x6d8] sm:$0xff]
    %v4571 = vld [vmem:[#allocation11 + $0x6e0] sm:$0xff]
    %v4572 = vld [vmem:[#allocation11 + $0x6e8] sm:$0xff]
    %v4573 = vld [vmem:[#allocation11 + $0x6f0] sm:$0xff]
    %v4574 = vld [vmem:[#allocation11 + $0x6f8] sm:$0xff]
    %v4575 = vld [vmem:[#allocation11 + $0x700] sm:$0xff]
    %v4576 = vld [vmem:[#allocation11 + $0x708] sm:$0xff]
    %v4577 = vld [vmem:[#allocation11 + $0x710] sm:$0xff]
    %v4578 = vld [vmem:[#allocation11 + $0x718] sm:$0xff]
    %v4579 = vld [vmem:[#allocation11 + $0x720] sm:$0xff]
    %v4580 = vld [vmem:[#allocation11 + $0x728] sm:$0xff]
    %v4581 = vld [vmem:[#allocation11 + $0x730] sm:$0xff]
    %v4582 = vld [vmem:[#allocation11 + $0x738] sm:$0xff]
    %v4583 = vld [vmem:[#allocation11 + $0x740] sm:$0xff]
    %v4584 = vld [vmem:[#allocation11 + $0x748] sm:$0xff]
    %v4585 = vld [vmem:[#allocation11 + $0x750] sm:$0xff]
    %v4586 = vld [vmem:[#allocation11 + $0x758] sm:$0xff]
    %v4587 = vld [vmem:[#allocation11 + $0x760] sm:$0xff]
    %v4588 = vld [vmem:[#allocation11 + $0x768] sm:$0xff]
    %v4589 = vld [vmem:[#allocation11 + $0x770] sm:$0xff]
    %v4590 = vld [vmem:[#allocation11 + $0x778] sm:$0xff]
    %v4591 = vld [vmem:[#allocation11 + $0x780] sm:$0xff]
    %v4592 = vld [vmem:[#allocation11 + $0x788] sm:$0xff]
    %v4593 = vld [vmem:[#allocation11 + $0x790] sm:$0xff]
    %v4594 = vld [vmem:[#allocation11 + $0x798] sm:$0xff]
    %v4595 = vld [vmem:[#allocation11 + $0x7a0] sm:$0xff]
    %v4596 = vld [vmem:[#allocation11 + $0x7a8] sm:$0xff]
    %v4597 = vld [vmem:[#allocation11 + $0x7b0] sm:$0xff]
    %v4598 = vld [vmem:[#allocation11 + $0x7b8] sm:$0xff]
    %v4599 = vld [vmem:[#allocation11 + $0x7c0] sm:$0xff]
    %v4600 = vld [vmem:[#allocation11 + $0x7c8] sm:$0xff]
    %v4601 = vld [vmem:[#allocation11 + $0x7d0] sm:$0xff]
    %v4602 = vld [vmem:[#allocation11 + $0x7d8] sm:$0xff]
    %v4603 = vld [vmem:[#allocation11 + $0x7e0] sm:$0xff]
    %v4604 = vld [vmem:[#allocation11 + $0x7e8] sm:$0xff]
    %v4605 = vld [vmem:[#allocation11 + $0x7f0] sm:$0xff]
    %v4606 = vld [vmem:[#allocation11 + $0x7f8] sm:$0xff]
    %v4607 = vld [vmem:[#allocation11 + $0x800] sm:$0xff]
    %v4608 = vld [vmem:[#allocation11 + $0x808] sm:$0xff]
    %v4609 = vld [vmem:[#allocation11 + $0x810] sm:$0xff]
    %v4610 = vld [vmem:[#allocation11 + $0x818] sm:$0xff]
    %v4611 = vld [vmem:[#allocation11 + $0x820] sm:$0xff]
    %v4612 = vld [vmem:[#allocation11 + $0x828] sm:$0xff]
    %v4613 = vld [vmem:[#allocation11 + $0x830] sm:$0xff]
    %v4614 = vld [vmem:[#allocation11 + $0x838] sm:$0xff]
    %v4615 = vld [vmem:[#allocation11 + $0x840] sm:$0xff]
    %v4616 = vld [vmem:[#allocation11 + $0x848] sm:$0xff]
    %v4617 = vld [vmem:[#allocation11 + $0x850] sm:$0xff]
    %v4618 = vld [vmem:[#allocation11 + $0x858] sm:$0xff]
    %v4619 = vld [vmem:[#allocation11 + $0x860] sm:$0xff]
    %v4620 = vld [vmem:[#allocation11 + $0x868] sm:$0xff]
    %v4621 = vld [vmem:[#allocation11 + $0x870] sm:$0xff]
    %v4622 = vld [vmem:[#allocation11 + $0x878] sm:$0xff]
    %v4623 = vld [vmem:[#allocation11 + $0x880] sm:$0xff]
    %v4624 = vld [vmem:[#allocation11 + $0x888] sm:$0xff]
    %v4625 = vld [vmem:[#allocation11 + $0x890] sm:$0xff]
    %v4626 = vld [vmem:[#allocation11 + $0x898] sm:$0xff]
    %v4627 = vld [vmem:[#allocation11 + $0x8a0] sm:$0xff]
    %v4628 = vld [vmem:[#allocation11 + $0x8a8] sm:$0xff]
    %v4629 = vld [vmem:[#allocation11 + $0x8b0] sm:$0xff]
    %v4630 = vld [vmem:[#allocation11 + $0x8b8] sm:$0xff]
    %v4631 = vld [vmem:[#allocation11 + $0x8c0] sm:$0xff]
    %v4632 = vld [vmem:[#allocation11 + $0x8c8] sm:$0xff]
    %v4633 = vld [vmem:[#allocation11 + $0x8d0] sm:$0xff]
    %v4634 = vld [vmem:[#allocation11 + $0x8d8] sm:$0xff]
    %v4635 = vld [vmem:[#allocation11 + $0x8e0] sm:$0xff]
    %v4636 = vld [vmem:[#allocation11 + $0x8e8] sm:$0xff]
    %v4637 = vld [vmem:[#allocation11 + $0x8f0] sm:$0xff]
    %v4638 = vld [vmem:[#allocation11 + $0x8f8] sm:$0xff]
    %v4639 = vld [vmem:[#allocation11 + $0x900] sm:$0xff]
    %v4640 = vld [vmem:[#allocation11 + $0x908] sm:$0xff]
    %v4641 = vld [vmem:[#allocation11 + $0x910] sm:$0xff]
    %v4642 = vld [vmem:[#allocation11 + $0x918] sm:$0xff]
    %v4643 = vld [vmem:[#allocation11 + $0x920] sm:$0xff]
    %v4644 = vld [vmem:[#allocation11 + $0x928] sm:$0xff]
    %v4645 = vld [vmem:[#allocation11 + $0x930] sm:$0xff]
    %v4646 = vld [vmem:[#allocation11 + $0x938] sm:$0xff]
    %v4647 = vld [vmem:[#allocation11 + $0x940] sm:$0xff]
    %v4648 = vld [vmem:[#allocation11 + $0x948] sm:$0xff]
    %v4649 = vld [vmem:[#allocation11 + $0x950] sm:$0xff]
    %v4650 = vld [vmem:[#allocation11 + $0x958] sm:$0xff]
    %v4651 = vld [vmem:[#allocation11 + $0x960] sm:$0xff]
    %v4652 = vld [vmem:[#allocation11 + $0x968] sm:$0xff]
    %v4653 = vld [vmem:[#allocation11 + $0x970] sm:$0xff]
    %v4654 = vld [vmem:[#allocation11 + $0x978] sm:$0xff]
    %v4655 = vld [vmem:[#allocation11 + $0x980] sm:$0xff]
    %v4656 = vld [vmem:[#allocation11 + $0x988] sm:$0xff]
    %v4657 = vld [vmem:[#allocation11 + $0x990] sm:$0xff]
    %v4658 = vld [vmem:[#allocation11 + $0x998] sm:$0xff]
    %v4659 = vld [vmem:[#allocation11 + $0x9a0] sm:$0xff]
    %v4660 = vld [vmem:[#allocation11 + $0x9a8] sm:$0xff]
    %v4661 = vld [vmem:[#allocation11 + $0x9b0] sm:$0xff]
    %v4662 = vld [vmem:[#allocation11 + $0x9b8] sm:$0xff]
    %v4663 = vld [vmem:[#allocation11 + $0x9c0] sm:$0xff]
    %v4664 = vld [vmem:[#allocation11 + $0x9c8] sm:$0xff]
    %v4665 = vld [vmem:[#allocation11 + $0x9d0] sm:$0xff]
    %v4666 = vld [vmem:[#allocation11 + $0x9d8] sm:$0xff]
    %v4667 = vld [vmem:[#allocation11 + $0x9e0] sm:$0xff]
    %v4668 = vld [vmem:[#allocation11 + $0x9e8] sm:$0xff]
    %v4669 = vld [vmem:[#allocation11 + $0x9f0] sm:$0xff]
    %v4670 = vld [vmem:[#allocation11 + $0x9f8] sm:$0xff]
    %v4671 = vld [vmem:[#allocation11 + $0xa00] sm:$0xff]
    %v4672 = vld [vmem:[#allocation11 + $0xa08] sm:$0xff]
    %v4673 = vld [vmem:[#allocation11 + $0xa10] sm:$0xff]
    %v4674 = vld [vmem:[#allocation11 + $0xa18] sm:$0xff]
    %v4675 = vld [vmem:[#allocation11 + $0xa20] sm:$0xff]
    %v4676 = vld [vmem:[#allocation11 + $0xa28] sm:$0xff]
    %v4677 = vld [vmem:[#allocation11 + $0xa30] sm:$0xff]
    %v4678 = vld [vmem:[#allocation11 + $0xa38] sm:$0xff]
    %v4679 = vld [vmem:[#allocation11 + $0xa40] sm:$0xff]
    %v4680 = vld [vmem:[#allocation11 + $0xa48] sm:$0xff]
    %v4681 = vld [vmem:[#allocation11 + $0xa50] sm:$0xff]
    %v4682 = vld [vmem:[#allocation11 + $0xa58] sm:$0xff]
    %v4683 = vld [vmem:[#allocation11 + $0xa60] sm:$0xff]
    %v4684 = vld [vmem:[#allocation11 + $0xa68] sm:$0xff]
    %v4685 = vld [vmem:[#allocation11 + $0xa70] sm:$0xff]
    %v4686 = vld [vmem:[#allocation11 + $0xa78] sm:$0xff]
    %v4687 = vld [vmem:[#allocation11 + $0xa80] sm:$0xff]
    %v4688 = vld [vmem:[#allocation11 + $0xa88] sm:$0xff]
    %v4689 = vld [vmem:[#allocation11 + $0xa90] sm:$0xff]
    %v4690 = vld [vmem:[#allocation11 + $0xa98] sm:$0xff]
    %v4691 = vld [vmem:[#allocation11 + $0xaa0] sm:$0xff]
    %v4692 = vld [vmem:[#allocation11 + $0xaa8] sm:$0xff]
    %v4693 = vld [vmem:[#allocation11 + $0xab0] sm:$0xff]
    %v4694 = vld [vmem:[#allocation11 + $0xab8] sm:$0xff]
    %v4695 = vld [vmem:[#allocation11 + $0xac0] sm:$0xff]
    %v4696 = vld [vmem:[#allocation11 + $0xac8] sm:$0xff]
    %v4697 = vld [vmem:[#allocation11 + $0xad0] sm:$0xff]
    %v4698 = vld [vmem:[#allocation11 + $0xad8] sm:$0xff]
    %v4699 = vld [vmem:[#allocation11 + $0xae0] sm:$0xff]
    %v4700 = vld [vmem:[#allocation11 + $0xae8] sm:$0xff]
    %v4701 = vld [vmem:[#allocation11 + $0xaf0] sm:$0xff]
    %v4702 = vld [vmem:[#allocation11 + $0xaf8] sm:$0xff]
    %v4703 = vld [vmem:[#allocation11 + $0xb00] sm:$0xff]
    %v4704 = vld [vmem:[#allocation11 + $0xb08] sm:$0xff]
    %v4705 = vld [vmem:[#allocation11 + $0xb10] sm:$0xff]
    %v4706 = vld [vmem:[#allocation11 + $0xb18] sm:$0xff]
    %v4707 = vld [vmem:[#allocation11 + $0xb20] sm:$0xff]
    %v4708 = vld [vmem:[#allocation11 + $0xb28] sm:$0xff]
    %v4709 = vld [vmem:[#allocation11 + $0xb30] sm:$0xff]
    %v4710 = vld [vmem:[#allocation11 + $0xb38] sm:$0xff]
    %v4711 = vld [vmem:[#allocation11 + $0xb40] sm:$0xff]
    %v4712 = vld [vmem:[#allocation11 + $0xb48] sm:$0xff]
    %v4713 = vld [vmem:[#allocation11 + $0xb50] sm:$0xff]
    %v4714 = vld [vmem:[#allocation11 + $0xb58] sm:$0xff]
    %v4715 = vld [vmem:[#allocation11 + $0xb60] sm:$0xff]
    %v4716 = vld [vmem:[#allocation11 + $0xb68] sm:$0xff]
    %v4717 = vld [vmem:[#allocation11 + $0xb70] sm:$0xff]
    %v4718 = vld [vmem:[#allocation11 + $0xb78] sm:$0xff]
    %v4719 = vld [vmem:[#allocation11 + $0xb80] sm:$0xff]
    %v4720 = vld [vmem:[#allocation11 + $0xb88] sm:$0xff]
    %v4721 = vld [vmem:[#allocation11 + $0xb90] sm:$0xff]
    %v4722 = vld [vmem:[#allocation11 + $0xb98] sm:$0xff]
    %v4723 = vld [vmem:[#allocation11 + $0xba0] sm:$0xff]
    %v4724 = vld [vmem:[#allocation11 + $0xba8] sm:$0xff]
    %v4725 = vld [vmem:[#allocation11 + $0xbb0] sm:$0xff]
    %v4726 = vld [vmem:[#allocation11 + $0xbb8] sm:$0xff]
    %v4727 = vld [vmem:[#allocation11 + $0xbc0] sm:$0xff]
    %v4728 = vld [vmem:[#allocation11 + $0xbc8] sm:$0xff]
    %v4729 = vld [vmem:[#allocation11 + $0xbd0] sm:$0xff]
    %v4730 = vld [vmem:[#allocation11 + $0xbd8] sm:$0xff]
    %v4731 = vld [vmem:[#allocation11 + $0xbe0] sm:$0xff]
    %v4732 = vld [vmem:[#allocation11 + $0xbe8] sm:$0xff]
    %v4733 = vld [vmem:[#allocation11 + $0xbf0] sm:$0xff]
    %v4734 = vld [vmem:[#allocation11 + $0xbf8] sm:$0xff]
    %v4735 = vld [vmem:[#allocation11 + $0xc00] sm:$0xff]
    %v4736 = vld [vmem:[#allocation11 + $0xc08] sm:$0xff]
    %v4737 = vld [vmem:[#allocation11 + $0xc10] sm:$0xff]
    %v4738 = vld [vmem:[#allocation11 + $0xc18] sm:$0xff]
    %v4739 = vld [vmem:[#allocation11 + $0xc20] sm:$0xff]
    %v4740 = vld [vmem:[#allocation11 + $0xc28] sm:$0xff]
    %v4741 = vld [vmem:[#allocation11 + $0xc30] sm:$0xff]
    %v4742 = vld [vmem:[#allocation11 + $0xc38] sm:$0xff]
    %v4743 = vld [vmem:[#allocation11 + $0xc40] sm:$0xff]
    %v4744 = vld [vmem:[#allocation11 + $0xc48] sm:$0xff]
    %v4745 = vld [vmem:[#allocation11 + $0xc50] sm:$0xff]
    %v4746 = vld [vmem:[#allocation11 + $0xc58] sm:$0xff]
    %v4747 = vld [vmem:[#allocation11 + $0xc60] sm:$0xff]
    %v4748 = vld [vmem:[#allocation11 + $0xc68] sm:$0xff]
    %v4749 = vld [vmem:[#allocation11 + $0xc70] sm:$0xff]
    %v4750 = vld [vmem:[#allocation11 + $0xc78] sm:$0xff]
    %v4751 = vld [vmem:[#allocation11 + $0xc80] sm:$0xff]
    %v4752 = vld [vmem:[#allocation11 + $0xc88] sm:$0xff]
    %v4753 = vld [vmem:[#allocation11 + $0xc90] sm:$0xff]
    %v4754 = vld [vmem:[#allocation11 + $0xc98] sm:$0xff]
    %v4755 = vld [vmem:[#allocation11 + $0xca0] sm:$0xff]
    %v4756 = vld [vmem:[#allocation11 + $0xca8] sm:$0xff]
    %v4757 = vld [vmem:[#allocation11 + $0xcb0] sm:$0xff]
    %v4758 = vld [vmem:[#allocation11 + $0xcb8] sm:$0xff]
    %v4759 = vld [vmem:[#allocation11 + $0xcc0] sm:$0xff]
    %v4760 = vld [vmem:[#allocation11 + $0xcc8] sm:$0xff]
    %v4761 = vld [vmem:[#allocation11 + $0xcd0] sm:$0xff]
    %v4762 = vld [vmem:[#allocation11 + $0xcd8] sm:$0xff]
    %v4763 = vld [vmem:[#allocation11 + $0xce0] sm:$0xff]
    %v4764 = vld [vmem:[#allocation11 + $0xce8] sm:$0xff]
    %v4765 = vld [vmem:[#allocation11 + $0xcf0] sm:$0xff]
    %v4766 = vld [vmem:[#allocation11 + $0xcf8] sm:$0xff]
    %v4767 = vld [vmem:[#allocation11 + $0xd00] sm:$0xff]
    %v4768 = vld [vmem:[#allocation11 + $0xd08] sm:$0xff]
    %v4769 = vld [vmem:[#allocation11 + $0xd10] sm:$0xff]
    %v4770 = vld [vmem:[#allocation11 + $0xd18] sm:$0xff]
    %v4771 = vld [vmem:[#allocation11 + $0xd20] sm:$0xff]
    %v4772 = vld [vmem:[#allocation11 + $0xd28] sm:$0xff]
    %v4773 = vld [vmem:[#allocation11 + $0xd30] sm:$0xff]
    %v4774 = vld [vmem:[#allocation11 + $0xd38] sm:$0xff]
    %v4775 = vld [vmem:[#allocation11 + $0xd40] sm:$0xff]
    %v4776 = vld [vmem:[#allocation11 + $0xd48] sm:$0xff]
    %v4777 = vld [vmem:[#allocation11 + $0xd50] sm:$0xff]
    %v4778 = vld [vmem:[#allocation11 + $0xd58] sm:$0xff]
    %v4779 = vld [vmem:[#allocation11 + $0xd60] sm:$0xff]
    %v4780 = vld [vmem:[#allocation11 + $0xd68] sm:$0xff]
    %v4781 = vld [vmem:[#allocation11 + $0xd70] sm:$0xff]
    %v4782 = vld [vmem:[#allocation11 + $0xd78] sm:$0xff]
    %v4783 = vld [vmem:[#allocation11 + $0xd80] sm:$0xff]
    %v4784 = vld [vmem:[#allocation11 + $0xd88] sm:$0xff]
    %v4785 = vld [vmem:[#allocation11 + $0xd90] sm:$0xff]
    %v4786 = vld [vmem:[#allocation11 + $0xd98] sm:$0xff]
    %v4787 = vld [vmem:[#allocation11 + $0xda0] sm:$0xff]
    %v4788 = vld [vmem:[#allocation11 + $0xda8] sm:$0xff]
    %v4789 = vld [vmem:[#allocation11 + $0xdb0] sm:$0xff]
    %v4790 = vld [vmem:[#allocation11 + $0xdb8] sm:$0xff]
    %v4791 = vld [vmem:[#allocation11 + $0xdc0] sm:$0xff]
    %v4792 = vld [vmem:[#allocation11 + $0xdc8] sm:$0xff]
    %v4793 = vld [vmem:[#allocation11 + $0xdd0] sm:$0xff]
    %v4794 = vld [vmem:[#allocation11 + $0xdd8] sm:$0xff]
    %v4795 = vld [vmem:[#allocation11 + $0xde0] sm:$0xff]
    %v4796 = vld [vmem:[#allocation11 + $0xde8] sm:$0xff]
    %v4797 = vld [vmem:[#allocation11 + $0xdf0] sm:$0xff]
    %v4798 = vld [vmem:[#allocation11 + $0xdf8] sm:$0xff]
    %v4799 = vld [vmem:[#allocation11 + $0xe00] sm:$0xff]
    %v4800 = vld [vmem:[#allocation11 + $0xe08] sm:$0xff]
    %v4801 = vld [vmem:[#allocation11 + $0xe10] sm:$0xff]
    %v4802 = vld [vmem:[#allocation11 + $0xe18] sm:$0xff]
    %v4803 = vld [vmem:[#allocation11 + $0xe20] sm:$0xff]
    %v4804 = vld [vmem:[#allocation11 + $0xe28] sm:$0xff]
    %v4805 = vld [vmem:[#allocation11 + $0xe30] sm:$0xff]
    %v4806 = vld [vmem:[#allocation11 + $0xe38] sm:$0xff]
    %v4807 = vld [vmem:[#allocation11 + $0xe40] sm:$0xff]
    %v4808 = vld [vmem:[#allocation11 + $0xe48] sm:$0xff]
    %v4809 = vld [vmem:[#allocation11 + $0xe50] sm:$0xff]
    %v4810 = vld [vmem:[#allocation11 + $0xe58] sm:$0xff]
    %v4811 = vld [vmem:[#allocation11 + $0xe60] sm:$0xff]
    %v4812 = vld [vmem:[#allocation11 + $0xe68] sm:$0xff]
    %v4813 = vld [vmem:[#allocation11 + $0xe70] sm:$0xff]
    %v4814 = vld [vmem:[#allocation11 + $0xe78] sm:$0xff]
    %v4815 = vld [vmem:[#allocation11 + $0xe80] sm:$0xff]
    %v4816 = vld [vmem:[#allocation11 + $0xe88] sm:$0xff]
    %v4817 = vld [vmem:[#allocation11 + $0xe90] sm:$0xff]
    %v4818 = vld [vmem:[#allocation11 + $0xe98] sm:$0xff]
    %v4819 = vld [vmem:[#allocation11 + $0xea0] sm:$0xff]
    %v4820 = vld [vmem:[#allocation11 + $0xea8] sm:$0xff]
    %v4821 = vld [vmem:[#allocation11 + $0xeb0] sm:$0xff]
    %v4822 = vld [vmem:[#allocation11 + $0xeb8] sm:$0xff]
    %v4823 = vld [vmem:[#allocation11 + $0xec0] sm:$0xff]
    %v4824 = vld [vmem:[#allocation11 + $0xec8] sm:$0xff]
    %v4825 = vld [vmem:[#allocation11 + $0xed0] sm:$0xff]
    %v4826 = vld [vmem:[#allocation11 + $0xed8] sm:$0xff]
    %v4827 = vld [vmem:[#allocation11 + $0xee0] sm:$0xff]
    %v4828 = vld [vmem:[#allocation11 + $0xee8] sm:$0xff]
    %v4829 = vld [vmem:[#allocation11 + $0xef0] sm:$0xff]
    %v4830 = vld [vmem:[#allocation11 + $0xef8] sm:$0xff]
    %v4831 = vld [vmem:[#allocation11 + $0xf00] sm:$0xff]
    %v4832 = vld [vmem:[#allocation11 + $0xf08] sm:$0xff]
    %v4833 = vld [vmem:[#allocation11 + $0xf10] sm:$0xff]
    %v4834 = vld [vmem:[#allocation11 + $0xf18] sm:$0xff]
    %v4835 = vld [vmem:[#allocation11 + $0xf20] sm:$0xff]
    %v4836 = vld [vmem:[#allocation11 + $0xf28] sm:$0xff]
    %v4837 = vld [vmem:[#allocation11 + $0xf30] sm:$0xff]
    %v4838 = vld [vmem:[#allocation11 + $0xf38] sm:$0xff]
    %v4839 = vld [vmem:[#allocation11 + $0xf40] sm:$0xff]
    %v4840 = vld [vmem:[#allocation11 + $0xf48] sm:$0xff]
    %v4841 = vld [vmem:[#allocation11 + $0xf50] sm:$0xff]
    %v4842 = vld [vmem:[#allocation11 + $0xf58] sm:$0xff]
    %v4843 = vld [vmem:[#allocation11 + $0xf60] sm:$0xff]
    %v4844 = vld [vmem:[#allocation11 + $0xf68] sm:$0xff]
    %v4845 = vld [vmem:[#allocation11 + $0xf70] sm:$0xff]
    %v4846 = vld [vmem:[#allocation11 + $0xf78] sm:$0xff]
    %v4847 = vld [vmem:[#allocation11 + $0xf80] sm:$0xff]
    %v4848 = vld [vmem:[#allocation11 + $0xf88] sm:$0xff]
    %v4849 = vld [vmem:[#allocation11 + $0xf90] sm:$0xff]
    %v4850 = vld [vmem:[#allocation11 + $0xf98] sm:$0xff]
    %v4851 = vld [vmem:[#allocation11 + $0xfa0] sm:$0xff]
    %v4852 = vld [vmem:[#allocation11 + $0xfa8] sm:$0xff]
    %v4853 = vld [vmem:[#allocation11 + $0xfb0] sm:$0xff]
    %v4854 = vld [vmem:[#allocation11 + $0xfb8] sm:$0xff]
    %v4855 = vld [vmem:[#allocation11 + $0xfc0] sm:$0xff]
    %v4856 = vld [vmem:[#allocation11 + $0xfc8] sm:$0xff]
    %v4857 = vld [vmem:[#allocation11 + $0xfd0] sm:$0xff]
    %v4858 = vld [vmem:[#allocation11 + $0xfd8] sm:$0xff]
    %v4859 = vld [vmem:[#allocation11 + $0xfe0] sm:$0xff]
    %v4860 = vld [vmem:[#allocation11 + $0xfe8] sm:$0xff]
    %v4861 = vld [vmem:[#allocation11 + $0xff0] sm:$0xff]
    %v4862 = vld [vmem:[#allocation11 + $0xff8] sm:$0xff]
    %v4863 = vld [vmem:[#allocation11 + $0x1000] sm:$0xff]
    %v4864 = vld [vmem:[#allocation11 + $0x1008] sm:$0xff]
    %v4865 = vld [vmem:[#allocation11 + $0x1010] sm:$0xff]
    %v4866 = vld [vmem:[#allocation11 + $0x1018] sm:$0xff]
    %v4867 = vld [vmem:[#allocation11 + $0x1020] sm:$0xff]
    %v4868 = vld [vmem:[#allocation11 + $0x1028] sm:$0xff]
    %v4869 = vld [vmem:[#allocation11 + $0x1030] sm:$0xff]
    %v4870 = vld [vmem:[#allocation11 + $0x1038] sm:$0xff]
    %v4871 = vld [vmem:[#allocation11 + $0x1040] sm:$0xff]
    %v4872 = vld [vmem:[#allocation11 + $0x1048] sm:$0xff]
    %v4873 = vld [vmem:[#allocation11 + $0x1050] sm:$0xff]
    %v4874 = vld [vmem:[#allocation11 + $0x1058] sm:$0xff]
    %v4875 = vld [vmem:[#allocation11 + $0x1060] sm:$0xff]
    %v4876 = vld [vmem:[#allocation11 + $0x1068] sm:$0xff]
    %v4877 = vld [vmem:[#allocation11 + $0x1070] sm:$0xff]
    %v4878 = vld [vmem:[#allocation11 + $0x1078] sm:$0xff]
    %v4879 = vld [vmem:[#allocation11 + $0x1080] sm:$0xff]
    %v4880 = vld [vmem:[#allocation11 + $0x1088] sm:$0xff]
    %v4881 = vld [vmem:[#allocation11 + $0x1090] sm:$0xff]
    %v4882 = vld [vmem:[#allocation11 + $0x1098] sm:$0xff]
    %v4883 = vld [vmem:[#allocation11 + $0x10a0] sm:$0xff]
    %v4884 = vld [vmem:[#allocation11 + $0x10a8] sm:$0xff]
    %v4885 = vld [vmem:[#allocation11 + $0x10b0] sm:$0xff]
    %v4886 = vld [vmem:[#allocation11 + $0x10b8] sm:$0xff]
    %v4887 = vld [vmem:[#allocation11 + $0x10c0] sm:$0xff]
    %v4888 = vld [vmem:[#allocation11 + $0x10c8] sm:$0xff]
    %v4889 = vld [vmem:[#allocation11 + $0x10d0] sm:$0xff]
    %v4890 = vld [vmem:[#allocation11 + $0x10d8] sm:$0xff]
    %v4891 = vld [vmem:[#allocation11 + $0x10e0] sm:$0xff]
    %v4892 = vld [vmem:[#allocation11 + $0x10e8] sm:$0xff]
    %v4893 = vld [vmem:[#allocation11 + $0x10f0] sm:$0xff]
    %v4894 = vld [vmem:[#allocation11 + $0x10f8] sm:$0xff]
    %v4895 = vld [vmem:[#allocation11 + $0x1100] sm:$0xff]
    %v4896 = vld [vmem:[#allocation11 + $0x1108] sm:$0xff]
    %v4897 = vld [vmem:[#allocation11 + $0x1110] sm:$0xff]
    %v4898 = vld [vmem:[#allocation11 + $0x1118] sm:$0xff]
    %v4899 = vld [vmem:[#allocation11 + $0x1120] sm:$0xff]
    %v4900 = vld [vmem:[#allocation11 + $0x1128] sm:$0xff]
    %v4901 = vld [vmem:[#allocation11 + $0x1130] sm:$0xff]
    %v4902 = vld [vmem:[#allocation11 + $0x1138] sm:$0xff]
    %v4903 = vld [vmem:[#allocation11 + $0x1140] sm:$0xff]
    %v4904 = vld [vmem:[#allocation11 + $0x1148] sm:$0xff]
    %v4905 = vld [vmem:[#allocation11 + $0x1150] sm:$0xff]
    %v4906 = vld [vmem:[#allocation11 + $0x1158] sm:$0xff]
    %v4907 = vld [vmem:[#allocation11 + $0x1160] sm:$0xff]
    %v4908 = vld [vmem:[#allocation11 + $0x1168] sm:$0xff]
    %v4909 = vld [vmem:[#allocation11 + $0x1170] sm:$0xff]
    %v4910 = vld [vmem:[#allocation11 + $0x1178] sm:$0xff]
    %v4911 = vld [vmem:[#allocation11 + $0x1180] sm:$0xff]
    %v4912 = vld [vmem:[#allocation11 + $0x1188] sm:$0xff]
    %v4913 = vld [vmem:[#allocation11 + $0x1190] sm:$0xff]
    %v4914 = vld [vmem:[#allocation11 + $0x1198] sm:$0xff]
    %v4915 = vld [vmem:[#allocation11 + $0x11a0] sm:$0xff]
    %v4916 = vld [vmem:[#allocation11 + $0x11a8] sm:$0xff]
    %v4917 = vld [vmem:[#allocation11 + $0x11b0] sm:$0xff]
    %v4918 = vld [vmem:[#allocation11 + $0x11b8] sm:$0xff]
    %v4919 = vld [vmem:[#allocation11 + $0x11c0] sm:$0xff]
    %v4920 = vld [vmem:[#allocation11 + $0x11c8] sm:$0xff]
    %v4921 = vld [vmem:[#allocation11 + $0x11d0] sm:$0xff]
    %v4922 = vld [vmem:[#allocation11 + $0x11d8] sm:$0xff]
    %v4923 = vld [vmem:[#allocation11 + $0x11e0] sm:$0xff]
    %v4924 = vld [vmem:[#allocation11 + $0x11e8] sm:$0xff]
    %v4925 = vld [vmem:[#allocation11 + $0x11f0] sm:$0xff]
    %v4926 = vld [vmem:[#allocation11 + $0x11f8] sm:$0xff]
    %v4927 = vld [vmem:[#allocation11 + $0x1200] sm:$0xff]
    %v4928 = vld [vmem:[#allocation11 + $0x1208] sm:$0xff]
    %v4929 = vld [vmem:[#allocation11 + $0x1210] sm:$0xff]
    %v4930 = vld [vmem:[#allocation11 + $0x1218] sm:$0xff]
    %v4931 = vld [vmem:[#allocation11 + $0x1220] sm:$0xff]
    %v4932 = vld [vmem:[#allocation11 + $0x1228] sm:$0xff]
    %v4933 = vld [vmem:[#allocation11 + $0x1230] sm:$0xff]
    %v4934 = vld [vmem:[#allocation11 + $0x1238] sm:$0xff]
    %v4935 = vld [vmem:[#allocation11 + $0x1240] sm:$0xff]
    %v4936 = vld [vmem:[#allocation11 + $0x1248] sm:$0xff]
    %v4937 = vld [vmem:[#allocation11 + $0x1250] sm:$0xff]
    %v4938 = vld [vmem:[#allocation11 + $0x1258] sm:$0xff]
    %v4939 = vld [vmem:[#allocation11 + $0x1260] sm:$0xff]
    %v4940 = vld [vmem:[#allocation11 + $0x1268] sm:$0xff]
    %v4941 = vld [vmem:[#allocation11 + $0x1270] sm:$0xff]
    %v4942 = vld [vmem:[#allocation11 + $0x1278] sm:$0xff]
    %v4943 = vld [vmem:[#allocation11 + $0x1280] sm:$0xff]
    %v4944 = vld [vmem:[#allocation11 + $0x1288] sm:$0xff]
    %v4945 = vld [vmem:[#allocation11 + $0x1290] sm:$0xff]
    %v4946 = vld [vmem:[#allocation11 + $0x1298] sm:$0xff]
    %v4947 = vld [vmem:[#allocation11 + $0x12a0] sm:$0xff]
    %v4948 = vld [vmem:[#allocation11 + $0x12a8] sm:$0xff]
    %v4949 = vld [vmem:[#allocation11 + $0x12b0] sm:$0xff]
    %v4950 = vld [vmem:[#allocation11 + $0x12b8] sm:$0xff]
    %v4951 = vld [vmem:[#allocation11 + $0x12c0] sm:$0xff]
    %v4952 = vld [vmem:[#allocation11 + $0x12c8] sm:$0xff]
    %v4953 = vld [vmem:[#allocation11 + $0x12d0] sm:$0xff]
    %v4954 = vld [vmem:[#allocation11 + $0x12d8] sm:$0xff]
    %v4955 = vld [vmem:[#allocation11 + $0x12e0] sm:$0xff]
    %v4956 = vld [vmem:[#allocation11 + $0x12e8] sm:$0xff]
    %v4957 = vld [vmem:[#allocation11 + $0x12f0] sm:$0xff]
    %v4958 = vld [vmem:[#allocation11 + $0x12f8] sm:$0xff]
    %v4959 = vld [vmem:[#allocation11 + $0x1300] sm:$0xff]
    %v4960 = vld [vmem:[#allocation11 + $0x1308] sm:$0xff]
    %v4961 = vld [vmem:[#allocation11 + $0x1310] sm:$0xff]
    %v4962 = vld [vmem:[#allocation11 + $0x1318] sm:$0xff]
    %v4963 = vld [vmem:[#allocation11 + $0x1320] sm:$0xff]
    %v4964 = vld [vmem:[#allocation11 + $0x1328] sm:$0xff]
    %v4965 = vld [vmem:[#allocation11 + $0x1330] sm:$0xff]
    %v4966 = vld [vmem:[#allocation11 + $0x1338] sm:$0xff]
    %v4967 = vld [vmem:[#allocation11 + $0x1340] sm:$0xff]
    %v4968 = vld [vmem:[#allocation11 + $0x1348] sm:$0xff]
    %v4969 = vld [vmem:[#allocation11 + $0x1350] sm:$0xff]
    %v4970 = vld [vmem:[#allocation11 + $0x1358] sm:$0xff]
    %v4971 = vld [vmem:[#allocation11 + $0x1360] sm:$0xff]
    %v4972 = vld [vmem:[#allocation11 + $0x1368] sm:$0xff]
    %v4973 = vld [vmem:[#allocation11 + $0x1370] sm:$0xff]
    %v4974 = vld [vmem:[#allocation11 + $0x1378] sm:$0xff]
    %v4975 = vld [vmem:[#allocation11 + $0x1380] sm:$0xff]
    %v4976 = vld [vmem:[#allocation11 + $0x1388] sm:$0xff]
    %v4977 = vld [vmem:[#allocation11 + $0x1390] sm:$0xff]
    %v4978 = vld [vmem:[#allocation11 + $0x1398] sm:$0xff]
    %v4979 = vld [vmem:[#allocation11 + $0x13a0] sm:$0xff]
    %v4980 = vld [vmem:[#allocation11 + $0x13a8] sm:$0xff]
    %v4981 = vld [vmem:[#allocation11 + $0x13b0] sm:$0xff]
    %v4982 = vld [vmem:[#allocation11 + $0x13b8] sm:$0xff]
    %v4983 = vld [vmem:[#allocation11 + $0x13c0] sm:$0xff]
    %v4984 = vld [vmem:[#allocation11 + $0x13c8] sm:$0xff]
    %v4985 = vld [vmem:[#allocation11 + $0x13d0] sm:$0xff]
    %v4986 = vld [vmem:[#allocation11 + $0x13d8] sm:$0xff]
    %v4987 = vld [vmem:[#allocation11 + $0x13e0] sm:$0xff]
    %v4988 = vld [vmem:[#allocation11 + $0x13e8] sm:$0xff]
    %v4989 = vld [vmem:[#allocation11 + $0x13f0] sm:$0xff]
    %v4990 = vld [vmem:[#allocation11 + $0x13f8] sm:$0xff]
    %v4991 = vld [vmem:[#allocation11 + $0x1400] sm:$0xff]
    %v4992 = vld [vmem:[#allocation11 + $0x1408] sm:$0xff]
    %v4993 = vld [vmem:[#allocation11 + $0x1410] sm:$0xff]
    %v4994 = vld [vmem:[#allocation11 + $0x1418] sm:$0xff]
    %v4995 = vld [vmem:[#allocation11 + $0x1420] sm:$0xff]
    %v4996 = vld [vmem:[#allocation11 + $0x1428] sm:$0xff]
    %v4997 = vld [vmem:[#allocation11 + $0x1430] sm:$0xff]
    %v4998 = vld [vmem:[#allocation11 + $0x1438] sm:$0xff]
    %v4999 = vld [vmem:[#allocation11 + $0x1440] sm:$0xff]
    %v5000 = vld [vmem:[#allocation11 + $0x1448] sm:$0xff]
    %v5001 = vld [vmem:[#allocation11 + $0x1450] sm:$0xff]
    %v5002 = vld [vmem:[#allocation11 + $0x1458] sm:$0xff]
    %v5003 = vld [vmem:[#allocation11 + $0x1460] sm:$0xff]
    %v5004 = vld [vmem:[#allocation11 + $0x1468] sm:$0xff]
    %v5005 = vld [vmem:[#allocation11 + $0x1470] sm:$0xff]
    %v5006 = vld [vmem:[#allocation11 + $0x1478] sm:$0xff]
    %v5007 = vld [vmem:[#allocation11 + $0x1480] sm:$0xff]
    %v5008 = vld [vmem:[#allocation11 + $0x1488] sm:$0xff]
    %v5009 = vld [vmem:[#allocation11 + $0x1490] sm:$0xff]
    %v5010 = vld [vmem:[#allocation11 + $0x1498] sm:$0xff]
    %v5011 = vld [vmem:[#allocation11 + $0x14a0] sm:$0xff]
    %v5012 = vld [vmem:[#allocation11 + $0x14a8] sm:$0xff]
    %v5013 = vld [vmem:[#allocation11 + $0x14b0] sm:$0xff]
    %v5014 = vld [vmem:[#allocation11 + $0x14b8] sm:$0xff]
    %v5015 = vld [vmem:[#allocation11 + $0x14c0] sm:$0xff]
    %v5016 = vld [vmem:[#allocation11 + $0x14c8] sm:$0xff]
    %v5017 = vld [vmem:[#allocation11 + $0x14d0] sm:$0xff]
    %v5018 = vld [vmem:[#allocation11 + $0x14d8] sm:$0xff]
    %v5019 = vld [vmem:[#allocation11 + $0x14e0] sm:$0xff]
    %v5020 = vld [vmem:[#allocation11 + $0x14e8] sm:$0xff]
    %v5021 = vld [vmem:[#allocation11 + $0x14f0] sm:$0xff]
    %v5022 = vld [vmem:[#allocation11 + $0x14f8] sm:$0xff]
    %v5023 = vld [vmem:[#allocation11 + $0x1500] sm:$0xff]
    %v5024 = vld [vmem:[#allocation11 + $0x1508] sm:$0xff]
    %v5025 = vld [vmem:[#allocation11 + $0x1510] sm:$0xff]
    %v5026 = vld [vmem:[#allocation11 + $0x1518] sm:$0xff]
    %v5027 = vld [vmem:[#allocation11 + $0x1520] sm:$0xff]
    %v5028 = vld [vmem:[#allocation11 + $0x1528] sm:$0xff]
    %v5029 = vld [vmem:[#allocation11 + $0x1530] sm:$0xff]
    %v5030 = vld [vmem:[#allocation11 + $0x1538] sm:$0xff]
    %v5031 = vld [vmem:[#allocation11 + $0x1540] sm:$0xff]
    %v5032 = vld [vmem:[#allocation11 + $0x1548] sm:$0xff]
    %v5033 = vld [vmem:[#allocation11 + $0x1550] sm:$0xff]
    %v5034 = vld [vmem:[#allocation11 + $0x1558] sm:$0xff]
    %v5035 = vld [vmem:[#allocation11 + $0x1560] sm:$0xff]
    %v5036 = vld [vmem:[#allocation11 + $0x1568] sm:$0xff]
    %v5037 = vld [vmem:[#allocation11 + $0x1570] sm:$0xff]
    %v5038 = vld [vmem:[#allocation11 + $0x1578] sm:$0xff]
    %v5039 = vld [vmem:[#allocation11 + $0x1580] sm:$0xff]
    %v5040 = vld [vmem:[#allocation11 + $0x1588] sm:$0xff]
    %v5041 = vld [vmem:[#allocation11 + $0x1590] sm:$0xff]
    %v5042 = vld [vmem:[#allocation11 + $0x1598] sm:$0xff]
    %v5043 = vld [vmem:[#allocation11 + $0x15a0] sm:$0xff]
    %v5044 = vld [vmem:[#allocation11 + $0x15a8] sm:$0xff]
    %v5045 = vld [vmem:[#allocation11 + $0x15b0] sm:$0xff]
    %v5046 = vld [vmem:[#allocation11 + $0x15b8] sm:$0xff]
    %v5047 = vld [vmem:[#allocation11 + $0x15c0] sm:$0xff]
    %v5048 = vld [vmem:[#allocation11 + $0x15c8] sm:$0xff]
    %v5049 = vld [vmem:[#allocation11 + $0x15d0] sm:$0xff]
    %v5050 = vld [vmem:[#allocation11 + $0x15d8] sm:$0xff]
    %v5051 = vld [vmem:[#allocation11 + $0x15e0] sm:$0xff]
    %v5052 = vld [vmem:[#allocation11 + $0x15e8] sm:$0xff]
    %v5053 = vld [vmem:[#allocation11 + $0x15f0] sm:$0xff]
    %v5054 = vld [vmem:[#allocation11 + $0x15f8] sm:$0xff]
    %v5055 = vld [vmem:[#allocation11 + $0x1600] sm:$0xff]
    %v5056 = vld [vmem:[#allocation11 + $0x1608] sm:$0xff]
    %v5057 = vld [vmem:[#allocation11 + $0x1610] sm:$0xff]
    %v5058 = vld [vmem:[#allocation11 + $0x1618] sm:$0xff]
    %v5059 = vld [vmem:[#allocation11 + $0x1620] sm:$0xff]
    %v5060 = vld [vmem:[#allocation11 + $0x1628] sm:$0xff]
    %v5061 = vld [vmem:[#allocation11 + $0x1630] sm:$0xff]
    %v5062 = vld [vmem:[#allocation11 + $0x1638] sm:$0xff]
    %v5063 = vld [vmem:[#allocation11 + $0x1640] sm:$0xff]
    %v5064 = vld [vmem:[#allocation11 + $0x1648] sm:$0xff]
    %v5065 = vld [vmem:[#allocation11 + $0x1650] sm:$0xff]
    %v5066 = vld [vmem:[#allocation11 + $0x1658] sm:$0xff]
    %v5067 = vld [vmem:[#allocation11 + $0x1660] sm:$0xff]
    %v5068 = vld [vmem:[#allocation11 + $0x1668] sm:$0xff]
    %v5069 = vld [vmem:[#allocation11 + $0x1670] sm:$0xff]
    %v5070 = vld [vmem:[#allocation11 + $0x1678] sm:$0xff]
    %v5071 = vld [vmem:[#allocation11 + $0x1680] sm:$0xff]
    %v5072 = vld [vmem:[#allocation11 + $0x1688] sm:$0xff]
    %v5073 = vld [vmem:[#allocation11 + $0x1690] sm:$0xff]
    %v5074 = vld [vmem:[#allocation11 + $0x1698] sm:$0xff]
    %v5075 = vld [vmem:[#allocation11 + $0x16a0] sm:$0xff]
    %v5076 = vld [vmem:[#allocation11 + $0x16a8] sm:$0xff]
    %v5077 = vld [vmem:[#allocation11 + $0x16b0] sm:$0xff]
    %v5078 = vld [vmem:[#allocation11 + $0x16b8] sm:$0xff]
    %v5079 = vld [vmem:[#allocation11 + $0x16c0] sm:$0xff]
    %v5080 = vld [vmem:[#allocation11 + $0x16c8] sm:$0xff]
    %v5081 = vld [vmem:[#allocation11 + $0x16d0] sm:$0xff]
    %v5082 = vld [vmem:[#allocation11 + $0x16d8] sm:$0xff]
    %v5083 = vld [vmem:[#allocation11 + $0x16e0] sm:$0xff]
    %v5084 = vld [vmem:[#allocation11 + $0x16e8] sm:$0xff]
    %v5085 = vld [vmem:[#allocation11 + $0x16f0] sm:$0xff]
    %v5086 = vld [vmem:[#allocation11 + $0x16f8] sm:$0xff]
    %v5087 = vld [vmem:[#allocation11 + $0x1700] sm:$0xff]
    %v5088 = vld [vmem:[#allocation11 + $0x1708] sm:$0xff]
    %v5089 = vld [vmem:[#allocation11 + $0x1710] sm:$0xff]
    %v5090 = vld [vmem:[#allocation11 + $0x1718] sm:$0xff]
    %v5091 = vld [vmem:[#allocation11 + $0x1720] sm:$0xff]
    %v5092 = vld [vmem:[#allocation11 + $0x1728] sm:$0xff]
    %v5093 = vld [vmem:[#allocation11 + $0x1730] sm:$0xff]
    %v5094 = vld [vmem:[#allocation11 + $0x1738] sm:$0xff]
    %v5095 = vld [vmem:[#allocation11 + $0x1740] sm:$0xff]
    %v5096 = vld [vmem:[#allocation11 + $0x1748] sm:$0xff]
    %v5097 = vld [vmem:[#allocation11 + $0x1750] sm:$0xff]
    %v5098 = vld [vmem:[#allocation11 + $0x1758] sm:$0xff]
    %v5099 = vld [vmem:[#allocation11 + $0x1760] sm:$0xff]
    %v5100 = vld [vmem:[#allocation11 + $0x1768] sm:$0xff]
    %v5101 = vld [vmem:[#allocation11 + $0x1770] sm:$0xff]
    %v5102 = vld [vmem:[#allocation11 + $0x1778] sm:$0xff]
    %v5103 = vld [vmem:[#allocation11 + $0x1780] sm:$0xff]
    %v5104 = vld [vmem:[#allocation11 + $0x1788] sm:$0xff]
    %v5105 = vld [vmem:[#allocation11 + $0x1790] sm:$0xff]
    %v5106 = vld [vmem:[#allocation11 + $0x1798] sm:$0xff]
    %v5107 = vld [vmem:[#allocation11 + $0x17a0] sm:$0xff]
    %v5108 = vld [vmem:[#allocation11 + $0x17a8] sm:$0xff]
    %v5109 = vld [vmem:[#allocation11 + $0x17b0] sm:$0xff]
    %v5110 = vld [vmem:[#allocation11 + $0x17b8] sm:$0xff]
    %v5111 = vld [vmem:[#allocation11 + $0x17c0] sm:$0xff]
    %v5112 = vld [vmem:[#allocation11 + $0x17c8] sm:$0xff]
    %v5113 = vld [vmem:[#allocation11 + $0x17d0] sm:$0xff]
    %v5114 = vld [vmem:[#allocation11 + $0x17d8] sm:$0xff]
    %v5115 = vld [vmem:[#allocation11 + $0x17e0] sm:$0xff]
    %v5116 = vld [vmem:[#allocation11 + $0x17e8] sm:$0xff]
    %v5117 = vld [vmem:[#allocation11 + $0x17f0] sm:$0xff]
    %v5118 = vld [vmem:[#allocation11 + $0x17f8] sm:$0xff]
    %v5119 = vld [vmem:[#allocation11 + $0x1800] sm:$0xff]
    %v5120 = vld [vmem:[#allocation11 + $0x1808] sm:$0xff]
    %v5121 = vld [vmem:[#allocation11 + $0x1810] sm:$0xff]
    %v5122 = vld [vmem:[#allocation11 + $0x1818] sm:$0xff]
    %v5123 = vld [vmem:[#allocation11 + $0x1820] sm:$0xff]
    %v5124 = vld [vmem:[#allocation11 + $0x1828] sm:$0xff]
    %v5125 = vld [vmem:[#allocation11 + $0x1830] sm:$0xff]
    %v5126 = vld [vmem:[#allocation11 + $0x1838] sm:$0xff]
    %v5127 = vld [vmem:[#allocation11 + $0x1840] sm:$0xff]
    %v5128 = vld [vmem:[#allocation11 + $0x1848] sm:$0xff]
    %v5129 = vld [vmem:[#allocation11 + $0x1850] sm:$0xff]
    %v5130 = vld [vmem:[#allocation11 + $0x1858] sm:$0xff]
    %v5131 = vld [vmem:[#allocation11 + $0x1860] sm:$0xff]
    %v5132 = vld [vmem:[#allocation11 + $0x1868] sm:$0xff]
    %v5133 = vld [vmem:[#allocation11 + $0x1870] sm:$0xff]
    %v5134 = vld [vmem:[#allocation11 + $0x1878] sm:$0xff]
    %v5135 = vld [vmem:[#allocation11 + $0x1880] sm:$0xff]
    %v5136 = vld [vmem:[#allocation11 + $0x1888] sm:$0xff]
    %v5137 = vld [vmem:[#allocation11 + $0x1890] sm:$0xff]
    %v5138 = vld [vmem:[#allocation11 + $0x1898] sm:$0xff]
    %v5139 = vld [vmem:[#allocation11 + $0x18a0] sm:$0xff]
    %v5140 = vld [vmem:[#allocation11 + $0x18a8] sm:$0xff]
    %v5141 = vld [vmem:[#allocation11 + $0x18b0] sm:$0xff]
    %v5142 = vld [vmem:[#allocation11 + $0x18b8] sm:$0xff]
    %v5143 = vld [vmem:[#allocation11 + $0x18c0] sm:$0xff]
    %v5144 = vld [vmem:[#allocation11 + $0x18c8] sm:$0xff]
    %v5145 = vld [vmem:[#allocation11 + $0x18d0] sm:$0xff]
    %v5146 = vld [vmem:[#allocation11 + $0x18d8] sm:$0xff]
    %v5147 = vld [vmem:[#allocation11 + $0x18e0] sm:$0xff]
    %v5148 = vld [vmem:[#allocation11 + $0x18e8] sm:$0xff]
    %v5149 = vld [vmem:[#allocation11 + $0x18f0] sm:$0xff]
    %v5150 = vld [vmem:[#allocation11 + $0x18f8] sm:$0xff]
    %v5151 = vld [vmem:[#allocation11 + $0x1900] sm:$0xff]
    %v5152 = vld [vmem:[#allocation11 + $0x1908] sm:$0xff]
    %v5153 = vld [vmem:[#allocation11 + $0x1910] sm:$0xff]
    %v5154 = vld [vmem:[#allocation11 + $0x1918] sm:$0xff]
    %v5155 = vld [vmem:[#allocation11 + $0x1920] sm:$0xff]
    %v5156 = vld [vmem:[#allocation11 + $0x1928] sm:$0xff]
    %v5157 = vld [vmem:[#allocation11 + $0x1930] sm:$0xff]
    %v5158 = vld [vmem:[#allocation11 + $0x1938] sm:$0xff]
    %v5159 = vld [vmem:[#allocation11 + $0x1940] sm:$0xff]
    %v5160 = vld [vmem:[#allocation11 + $0x1948] sm:$0xff]
    %v5161 = vld [vmem:[#allocation11 + $0x1950] sm:$0xff]
    %v5162 = vld [vmem:[#allocation11 + $0x1958] sm:$0xff]
    %v5163 = vld [vmem:[#allocation11 + $0x1960] sm:$0xff]
    %v5164 = vld [vmem:[#allocation11 + $0x1968] sm:$0xff]
    %v5165 = vld [vmem:[#allocation11 + $0x1970] sm:$0xff]
    %v5166 = vld [vmem:[#allocation11 + $0x1978] sm:$0xff]
    %v5167 = vld [vmem:[#allocation11 + $0x1980] sm:$0xff]
    %v5168 = vld [vmem:[#allocation11 + $0x1988] sm:$0xff]
    %v5169 = vld [vmem:[#allocation11 + $0x1990] sm:$0xff]
    %v5170 = vld [vmem:[#allocation11 + $0x1998] sm:$0xff]
    %v5171 = vld [vmem:[#allocation11 + $0x19a0] sm:$0xff]
    %v5172 = vld [vmem:[#allocation11 + $0x19a8] sm:$0xff]
    %v5173 = vld [vmem:[#allocation11 + $0x19b0] sm:$0xff]
    %v5174 = vld [vmem:[#allocation11 + $0x19b8] sm:$0xff]
    %v5175 = vld [vmem:[#allocation11 + $0x19c0] sm:$0xff]
    %v5176 = vld [vmem:[#allocation11 + $0x19c8] sm:$0xff]
    %v5177 = vld [vmem:[#allocation11 + $0x19d0] sm:$0xff]
    %v5178 = vld [vmem:[#allocation11 + $0x19d8] sm:$0xff]
    %v5179 = vld [vmem:[#allocation11 + $0x19e0] sm:$0xff]
    %v5180 = vld [vmem:[#allocation11 + $0x19e8] sm:$0xff]
    %v5181 = vld [vmem:[#allocation11 + $0x19f0] sm:$0xff]
    %v5182 = vld [vmem:[#allocation11 + $0x19f8] sm:$0xff]
    %v5183 = vld [vmem:[#allocation11 + $0x1a00] sm:$0xff]
    %v5184 = vld [vmem:[#allocation11 + $0x1a08] sm:$0xff]
    %v5185 = vld [vmem:[#allocation11 + $0x1a10] sm:$0xff]
    %v5186 = vld [vmem:[#allocation11 + $0x1a18] sm:$0xff]
    %v5187 = vld [vmem:[#allocation11 + $0x1a20] sm:$0xff]
    %v5188 = vld [vmem:[#allocation11 + $0x1a28] sm:$0xff]
    %v5189 = vld [vmem:[#allocation11 + $0x1a30] sm:$0xff]
    %v5190 = vld [vmem:[#allocation11 + $0x1a38] sm:$0xff]
    %v5191 = vld [vmem:[#allocation11 + $0x1a40] sm:$0xff]
    %v5192 = vld [vmem:[#allocation11 + $0x1a48] sm:$0xff]
    %v5193 = vld [vmem:[#allocation11 + $0x1a50] sm:$0xff]
    %v5194 = vld [vmem:[#allocation11 + $0x1a58] sm:$0xff]
    %v5195 = vld [vmem:[#allocation11 + $0x1a60] sm:$0xff]
    %v5196 = vld [vmem:[#allocation11 + $0x1a68] sm:$0xff]
    %v5197 = vld [vmem:[#allocation11 + $0x1a70] sm:$0xff]
    %v5198 = vld [vmem:[#allocation11 + $0x1a78] sm:$0xff]
    %v5199 = vld [vmem:[#allocation11 + $0x1a80] sm:$0xff]
    %v5200 = vld [vmem:[#allocation11 + $0x1a88] sm:$0xff]
    %v5201 = vld [vmem:[#allocation11 + $0x1a90] sm:$0xff]
    %v5202 = vld [vmem:[#allocation11 + $0x1a98] sm:$0xff]
    %v5203 = vld [vmem:[#allocation11 + $0x1aa0] sm:$0xff]
    %v5204 = vld [vmem:[#allocation11 + $0x1aa8] sm:$0xff]
    %v5205 = vld [vmem:[#allocation11 + $0x1ab0] sm:$0xff]
    %v5206 = vld [vmem:[#allocation11 + $0x1ab8] sm:$0xff]
    %v5207 = vld [vmem:[#allocation11 + $0x1ac0] sm:$0xff]
    %v5208 = vld [vmem:[#allocation11 + $0x1ac8] sm:$0xff]
    %v5209 = vld [vmem:[#allocation11 + $0x1ad0] sm:$0xff]
    %v5210 = vld [vmem:[#allocation11 + $0x1ad8] sm:$0xff]
    %v5211 = vld [vmem:[#allocation11 + $0x1ae0] sm:$0xff]
    %v5212 = vld [vmem:[#allocation11 + $0x1ae8] sm:$0xff]
    %v5213 = vld [vmem:[#allocation11 + $0x1af0] sm:$0xff]
    %v5214 = vld [vmem:[#allocation11 + $0x1af8] sm:$0xff]
    %v5215 = vld [vmem:[#allocation11 + $0x1b00] sm:$0xff]
    %v5216 = vld [vmem:[#allocation11 + $0x1b08] sm:$0xff]
    %v5217 = vld [vmem:[#allocation11 + $0x1b10] sm:$0xff]
    %v5218 = vld [vmem:[#allocation11 + $0x1b18] sm:$0xff]
    %v5219 = vld [vmem:[#allocation11 + $0x1b20] sm:$0xff]
    %v5220 = vld [vmem:[#allocation11 + $0x1b28] sm:$0xff]
    %v5221 = vld [vmem:[#allocation11 + $0x1b30] sm:$0xff]
    %v5222 = vld [vmem:[#allocation11 + $0x1b38] sm:$0xff]
    %v5223 = vld [vmem:[#allocation11 + $0x1b40] sm:$0xff]
    %v5224 = vld [vmem:[#allocation11 + $0x1b48] sm:$0xff]
    %v5225 = vld [vmem:[#allocation11 + $0x1b50] sm:$0xff]
    %v5226 = vld [vmem:[#allocation11 + $0x1b58] sm:$0xff]
    %v5227 = vld [vmem:[#allocation11 + $0x1b60] sm:$0xff]
    %v5228 = vld [vmem:[#allocation11 + $0x1b68] sm:$0xff]
    %v5229 = vld [vmem:[#allocation11 + $0x1b70] sm:$0xff]
    %v5230 = vld [vmem:[#allocation11 + $0x1b78] sm:$0xff]
    %v5231 = vld [vmem:[#allocation11 + $0x1b80] sm:$0xff]
    %v5232 = vld [vmem:[#allocation11 + $0x1b88] sm:$0xff]
    %v5233 = vld [vmem:[#allocation11 + $0x1b90] sm:$0xff]
    %v5234 = vld [vmem:[#allocation11 + $0x1b98] sm:$0xff]
    %v5235 = vld [vmem:[#allocation11 + $0x1ba0] sm:$0xff]
    %v5236 = vld [vmem:[#allocation11 + $0x1ba8] sm:$0xff]
    %v5237 = vld [vmem:[#allocation11 + $0x1bb0] sm:$0xff]
    %v5238 = vld [vmem:[#allocation11 + $0x1bb8] sm:$0xff]
    %v5239 = vld [vmem:[#allocation11 + $0x1bc0] sm:$0xff]
    %v5240 = vld [vmem:[#allocation11 + $0x1bc8] sm:$0xff]
    %v5241 = vld [vmem:[#allocation11 + $0x1bd0] sm:$0xff]
    %v5242 = vld [vmem:[#allocation11 + $0x1bd8] sm:$0xff]
    %v5243 = vld [vmem:[#allocation11 + $0x1be0] sm:$0xff]
    %v5244 = vld [vmem:[#allocation11 + $0x1be8] sm:$0xff]
    %v5245 = vld [vmem:[#allocation11 + $0x1bf0] sm:$0xff]
    %v5246 = vld [vmem:[#allocation11 + $0x1bf8] sm:$0xff]
    %v5247 = vld [vmem:[#allocation11 + $0x1c00] sm:$0xff]
    %v5248 = vld [vmem:[#allocation11 + $0x1c08] sm:$0xff]
    %v5249 = vld [vmem:[#allocation11 + $0x1c10] sm:$0xff]
    %v5250 = vld [vmem:[#allocation11 + $0x1c18] sm:$0xff]
    %v5251 = vld [vmem:[#allocation11 + $0x1c20] sm:$0xff]
    %v5252 = vld [vmem:[#allocation11 + $0x1c28] sm:$0xff]
    %v5253 = vld [vmem:[#allocation11 + $0x1c30] sm:$0xff]
    %v5254 = vld [vmem:[#allocation11 + $0x1c38] sm:$0xff]
    %v5255 = vld [vmem:[#allocation11 + $0x1c40] sm:$0xff]
    %v5256 = vld [vmem:[#allocation11 + $0x1c48] sm:$0xff]
    %v5257 = vld [vmem:[#allocation11 + $0x1c50] sm:$0xff]
    %v5258 = vld [vmem:[#allocation11 + $0x1c58] sm:$0xff]
    %v5259 = vld [vmem:[#allocation11 + $0x1c60] sm:$0xff]
    %v5260 = vld [vmem:[#allocation11 + $0x1c68] sm:$0xff]
    %v5261 = vld [vmem:[#allocation11 + $0x1c70] sm:$0xff]
    %v5262 = vld [vmem:[#allocation11 + $0x1c78] sm:$0xff]
    %v5263 = vld [vmem:[#allocation11 + $0x1c80] sm:$0xff]
    %v5264 = vld [vmem:[#allocation11 + $0x1c88] sm:$0xff]
    %v5265 = vld [vmem:[#allocation11 + $0x1c90] sm:$0xff]
    %v5266 = vld [vmem:[#allocation11 + $0x1c98] sm:$0xff]
    %v5267 = vld [vmem:[#allocation11 + $0x1ca0] sm:$0xff]
    %v5268 = vld [vmem:[#allocation11 + $0x1ca8] sm:$0xff]
    %v5269 = vld [vmem:[#allocation11 + $0x1cb0] sm:$0xff]
    %v5270 = vld [vmem:[#allocation11 + $0x1cb8] sm:$0xff]
    %v5271 = vld [vmem:[#allocation11 + $0x1cc0] sm:$0xff]
    %v5272 = vld [vmem:[#allocation11 + $0x1cc8] sm:$0xff]
    %v5273 = vld [vmem:[#allocation11 + $0x1cd0] sm:$0xff]
    %v5274 = vld [vmem:[#allocation11 + $0x1cd8] sm:$0xff]
    %v5275 = vld [vmem:[#allocation11 + $0x1ce0] sm:$0xff]
    %v5276 = vld [vmem:[#allocation11 + $0x1ce8] sm:$0xff]
    %v5277 = vld [vmem:[#allocation11 + $0x1cf0] sm:$0xff]
    %v5278 = vld [vmem:[#allocation11 + $0x1cf8] sm:$0xff]
    %v5279 = vld [vmem:[#allocation11 + $0x1d00] sm:$0xff]
    %v5280 = vld [vmem:[#allocation11 + $0x1d08] sm:$0xff]
    %v5281 = vld [vmem:[#allocation11 + $0x1d10] sm:$0xff]
    %v5282 = vld [vmem:[#allocation11 + $0x1d18] sm:$0xff]
    %v5283 = vld [vmem:[#allocation11 + $0x1d20] sm:$0xff]
    %v5284 = vld [vmem:[#allocation11 + $0x1d28] sm:$0xff]
    %v5285 = vld [vmem:[#allocation11 + $0x1d30] sm:$0xff]
    %v5286 = vld [vmem:[#allocation11 + $0x1d38] sm:$0xff]
    %v5287 = vld [vmem:[#allocation11 + $0x1d40] sm:$0xff]
    %v5288 = vld [vmem:[#allocation11 + $0x1d48] sm:$0xff]
    %v5289 = vld [vmem:[#allocation11 + $0x1d50] sm:$0xff]
    %v5290 = vld [vmem:[#allocation11 + $0x1d58] sm:$0xff]
    %v5291 = vld [vmem:[#allocation11 + $0x1d60] sm:$0xff]
    %v5292 = vld [vmem:[#allocation11 + $0x1d68] sm:$0xff]
    %v5293 = vld [vmem:[#allocation11 + $0x1d70] sm:$0xff]
    %v5294 = vld [vmem:[#allocation11 + $0x1d78] sm:$0xff]
    %v5295 = vld [vmem:[#allocation11 + $0x1d80] sm:$0xff]
    %v5296 = vld [vmem:[#allocation11 + $0x1d88] sm:$0xff]
    %v5297 = vld [vmem:[#allocation11 + $0x1d90] sm:$0xff]
    %v5298 = vld [vmem:[#allocation11 + $0x1d98] sm:$0xff]
    %v5299 = vld [vmem:[#allocation11 + $0x1da0] sm:$0xff]
    %v5300 = vld [vmem:[#allocation11 + $0x1da8] sm:$0xff]
    %v5301 = vld [vmem:[#allocation11 + $0x1db0] sm:$0xff]
    %v5302 = vld [vmem:[#allocation11 + $0x1db8] sm:$0xff]
    %v5303 = vld [vmem:[#allocation11 + $0x1dc0] sm:$0xff]
    %v5304 = vld [vmem:[#allocation11 + $0x1dc8] sm:$0xff]
    %v5305 = vld [vmem:[#allocation11 + $0x1dd0] sm:$0xff]
    %v5306 = vld [vmem:[#allocation11 + $0x1dd8] sm:$0xff]
    %v5307 = vld [vmem:[#allocation11 + $0x1de0] sm:$0xff]
    %v5308 = vld [vmem:[#allocation11 + $0x1de8] sm:$0xff]
    %v5309 = vld [vmem:[#allocation11 + $0x1df0] sm:$0xff]
    %v5310 = vld [vmem:[#allocation11 + $0x1df8] sm:$0xff]
    %v5311 = vld [vmem:[#allocation11 + $0x1e00] sm:$0xff]
    %v5312 = vld [vmem:[#allocation11 + $0x1e08] sm:$0xff]
    %v5313 = vld [vmem:[#allocation11 + $0x1e10] sm:$0xff]
    %v5314 = vld [vmem:[#allocation11 + $0x1e18] sm:$0xff]
    %v5315 = vld [vmem:[#allocation11 + $0x1e20] sm:$0xff]
    %v5316 = vld [vmem:[#allocation11 + $0x1e28] sm:$0xff]
    %v5317 = vld [vmem:[#allocation11 + $0x1e30] sm:$0xff]
    %v5318 = vld [vmem:[#allocation11 + $0x1e38] sm:$0xff]
    %v5319 = vld [vmem:[#allocation11 + $0x1e40] sm:$0xff]
    %v5320 = vld [vmem:[#allocation11 + $0x1e48] sm:$0xff]
    %v5321 = vld [vmem:[#allocation11 + $0x1e50] sm:$0xff]
    %v5322 = vld [vmem:[#allocation11 + $0x1e58] sm:$0xff]
    %v5323 = vld [vmem:[#allocation11 + $0x1e60] sm:$0xff]
    %v5324 = vld [vmem:[#allocation11 + $0x1e68] sm:$0xff]
    %v5325 = vld [vmem:[#allocation11 + $0x1e70] sm:$0xff]
    %v5326 = vld [vmem:[#allocation11 + $0x1e78] sm:$0xff]
    %v5327 = vld [vmem:[#allocation11 + $0x1e80] sm:$0xff]
    %v5328 = vld [vmem:[#allocation11 + $0x1e88] sm:$0xff]
    %v5329 = vld [vmem:[#allocation11 + $0x1e90] sm:$0xff]
    %v5330 = vld [vmem:[#allocation11 + $0x1e98] sm:$0xff]
    %v5331 = vld [vmem:[#allocation11 + $0x1ea0] sm:$0xff]
    %v5332 = vld [vmem:[#allocation11 + $0x1ea8] sm:$0xff]
    %v5333 = vld [vmem:[#allocation11 + $0x1eb0] sm:$0xff]
    %v5334 = vld [vmem:[#allocation11 + $0x1eb8] sm:$0xff]
    %v5335 = vld [vmem:[#allocation11 + $0x1ec0] sm:$0xff]
    %v5336 = vld [vmem:[#allocation11 + $0x1ec8] sm:$0xff]
    %v5337 = vld [vmem:[#allocation11 + $0x1ed0] sm:$0xff]
    %v5338 = vld [vmem:[#allocation11 + $0x1ed8] sm:$0xff]
    %v5339 = vld [vmem:[#allocation11 + $0x1ee0] sm:$0xff]
    %v5340 = vld [vmem:[#allocation11 + $0x1ee8] sm:$0xff]
    %v5341 = vld [vmem:[#allocation11 + $0x1ef0] sm:$0xff]
    %v5342 = vld [vmem:[#allocation11 + $0x1ef8] sm:$0xff]
    %v5343 = vld [vmem:[#allocation11 + $0x1f00] sm:$0xff]
    %v5344 = vld [vmem:[#allocation11 + $0x1f08] sm:$0xff]
    %v5345 = vld [vmem:[#allocation11 + $0x1f10] sm:$0xff]
    %v5346 = vld [vmem:[#allocation11 + $0x1f18] sm:$0xff]
    %v5347 = vld [vmem:[#allocation11 + $0x1f20] sm:$0xff]
    %v5348 = vld [vmem:[#allocation11 + $0x1f28] sm:$0xff]
    %v5349 = vld [vmem:[#allocation11 + $0x1f30] sm:$0xff]
    %v5350 = vld [vmem:[#allocation11 + $0x1f38] sm:$0xff]
    %v5351 = vld [vmem:[#allocation11 + $0x1f40] sm:$0xff]
    %v5352 = vld [vmem:[#allocation11 + $0x1f48] sm:$0xff]
    %v5353 = vld [vmem:[#allocation11 + $0x1f50] sm:$0xff]
    %v5354 = vld [vmem:[#allocation11 + $0x1f58] sm:$0xff]
    %v5355 = vld [vmem:[#allocation11 + $0x1f60] sm:$0xff]
    %v5356 = vld [vmem:[#allocation11 + $0x1f68] sm:$0xff]
    %v5357 = vld [vmem:[#allocation11 + $0x1f70] sm:$0xff]
    %v5358 = vld [vmem:[#allocation11 + $0x1f78] sm:$0xff]
    %v5359 = vld [vmem:[#allocation11 + $0x1f80] sm:$0xff]
    %v5360 = vld [vmem:[#allocation11 + $0x1f88] sm:$0xff]
    %v5361 = vld [vmem:[#allocation11 + $0x1f90] sm:$0xff]
    %v5362 = vld [vmem:[#allocation11 + $0x1f98] sm:$0xff]
    %v5363 = vld [vmem:[#allocation11 + $0x1fa0] sm:$0xff]
    %v5364 = vld [vmem:[#allocation11 + $0x1fa8] sm:$0xff]
    %v5365 = vld [vmem:[#allocation11 + $0x1fb0] sm:$0xff]
    %v5366 = vld [vmem:[#allocation11 + $0x1fb8] sm:$0xff]
    %v5367 = vld [vmem:[#allocation11 + $0x1fc0] sm:$0xff]
    %v5368 = vld [vmem:[#allocation11 + $0x1fc8] sm:$0xff]
    %v5369 = vld [vmem:[#allocation11 + $0x1fd0] sm:$0xff]
    %v5370 = vld [vmem:[#allocation11 + $0x1fd8] sm:$0xff]
    %v5371 = vld [vmem:[#allocation11 + $0x1fe0] sm:$0xff]
    %v5372 = vld [vmem:[#allocation11 + $0x1fe8] sm:$0xff]
    %v5373 = vld [vmem:[#allocation11 + $0x1ff0] sm:$0xff]
    %v5374 = vld [vmem:[#allocation11 + $0x1ff8] sm:$0xff]
    %v5375 = vld [vmem:[#allocation13] sm:$0xff]
    %v5376 = vld [vmem:[#allocation13 + $0x8] sm:$0xff]
    %v5379 = vlaneseq
    %v5380 = vshrl.u32 %v5379, 7
    %v5381 = vsub.s32 0, %v5380
    %v5382 = vrot.slane %v5375, %v5381
    %v5383 = vlaneseq
    %v5384 = vshrl.u32 %v5383, 7
    %v5385 = vsub.s32 1, %v5384
    %v5386 = vrot.slane %v5375, %v5385
    %v5387 = vlaneseq
    %v5388 = vshrl.u32 %v5387, 7
    %v5389 = vsub.s32 2, %v5388
    %v5390 = vrot.slane %v5375, %v5389
    %v5391 = vlaneseq
    %v5392 = vshrl.u32 %v5391, 7
    %v5393 = vsub.s32 3, %v5392
    %v5394 = vrot.slane %v5375, %v5393
    %v5395 = vlaneseq
    %v5396 = vshrl.u32 %v5395, 7
    %v5397 = vsub.s32 4, %v5396
    %v5398 = vrot.slane %v5375, %v5397
    %v5399 = vlaneseq
    %v5400 = vshrl.u32 %v5399, 7
    %v5401 = vsub.s32 5, %v5400
    %v5402 = vrot.slane %v5375, %v5401
    %v5403 = vlaneseq
    %v5404 = vshrl.u32 %v5403, 7
    %v5405 = vsub.s32 6, %v5404
    %v5406 = vrot.slane %v5375, %v5405
    %v5407 = vlaneseq
    %v5408 = vshrl.u32 %v5407, 7
    %v5409 = vsub.s32 7, %v5408
    %v5410 = vrot.slane %v5375, %v5409
    %v5411 = vlaneseq
    %v5412 = vshrl.u32 %v5411, 7
    %v5413 = vsub.s32 0, %v5412
    %v5414 = vrot.slane %v5376, %v5413
    %v5415 = vlaneseq
    %v5416 = vshrl.u32 %v5415, 7
    %v5417 = vsub.s32 1, %v5416
    %v5418 = vrot.slane %v5376, %v5417
    %v5419 = vlaneseq
    %v5420 = vshrl.u32 %v5419, 7
    %v5421 = vsub.s32 2, %v5420
    %v5422 = vrot.slane %v5376, %v5421
    %v5423 = vlaneseq
    %v5424 = vshrl.u32 %v5423, 7
    %v5425 = vsub.s32 3, %v5424
    %v5426 = vrot.slane %v5376, %v5425
    %v5427 = vlaneseq
    %v5428 = vshrl.u32 %v5427, 7
    %v5429 = vsub.s32 4, %v5428
    %v5430 = vrot.slane %v5376, %v5429
    %v5431 = vlaneseq
    %v5432 = vshrl.u32 %v5431, 7
    %v5433 = vsub.s32 5, %v5432
    %v5434 = vrot.slane %v5376, %v5433
    %v5435 = vlaneseq
    %v5436 = vshrl.u32 %v5435, 7
    %v5437 = vsub.s32 6, %v5436
    %v5438 = vrot.slane %v5376, %v5437
    %v5439 = vlaneseq
    %v5440 = vshrl.u32 %v5439, 7
    %v5441 = vsub.s32 7, %v5440
    %v5442 = vrot.slane %v5376, %v5441
    %v6483 = vunpack.c.l.b16 %v4351
    %v6484 = vunpack.c.h.b16 %v4351
    %v6485 = vunpack.c.l.b16 %v4352
    %v6486 = vunpack.c.h.b16 %v4352
    %v6487 = vunpack.c.l.b16 %v4353
    %v6488 = vunpack.c.h.b16 %v4353
    %v6489 = vunpack.c.l.b16 %v4354
    %v6490 = vunpack.c.h.b16 %v4354
    %v6491 = vunpack.c.l.b16 %v4355
    %v6492 = vunpack.c.h.b16 %v4355
    %v6493 = vunpack.c.l.b16 %v4356
    %v6494 = vunpack.c.h.b16 %v4356
    %v6495 = vunpack.c.l.b16 %v4357
    %v6496 = vunpack.c.h.b16 %v4357
    %v6497 = vunpack.c.l.b16 %v4358
    %v6498 = vunpack.c.h.b16 %v4358
    %v6499 = vunpack.c.l.b16 %v4359
    %v6500 = vunpack.c.h.b16 %v4359
    %v6501 = vunpack.c.l.b16 %v4360
    %v6502 = vunpack.c.h.b16 %v4360
    %v6503 = vunpack.c.l.b16 %v4361
    %v6504 = vunpack.c.h.b16 %v4361
    %v6505 = vunpack.c.l.b16 %v4362
    %v6506 = vunpack.c.h.b16 %v4362
    %v6507 = vunpack.c.l.b16 %v4363
    %v6508 = vunpack.c.h.b16 %v4363
    %v6509 = vunpack.c.l.b16 %v4364
    %v6510 = vunpack.c.h.b16 %v4364
    %v6511 = vunpack.c.l.b16 %v4365
    %v6512 = vunpack.c.h.b16 %v4365
    %v6513 = vunpack.c.l.b16 %v4366
    %v6514 = vunpack.c.h.b16 %v4366
    %v6515 = vunpack.c.l.b16 %v4367
    %v6516 = vunpack.c.h.b16 %v4367
    %v6517 = vunpack.c.l.b16 %v4368
    %v6518 = vunpack.c.h.b16 %v4368
    %v6519 = vunpack.c.l.b16 %v4369
    %v6520 = vunpack.c.h.b16 %v4369
    %v6521 = vunpack.c.l.b16 %v4370
    %v6522 = vunpack.c.h.b16 %v4370
    %v6523 = vunpack.c.l.b16 %v4371
    %v6524 = vunpack.c.h.b16 %v4371
    %v6525 = vunpack.c.l.b16 %v4372
    %v6526 = vunpack.c.h.b16 %v4372
    %v6527 = vunpack.c.l.b16 %v4373
    %v6528 = vunpack.c.h.b16 %v4373
    %v6529 = vunpack.c.l.b16 %v4374
    %v6530 = vunpack.c.h.b16 %v4374
    %v6531 = vunpack.c.l.b16 %v4375
    %v6532 = vunpack.c.h.b16 %v4375
    %v6533 = vunpack.c.l.b16 %v4376
    %v6534 = vunpack.c.h.b16 %v4376
    %v6535 = vunpack.c.l.b16 %v4377
    %v6536 = vunpack.c.h.b16 %v4377
    %v6537 = vunpack.c.l.b16 %v4378
    %v6538 = vunpack.c.h.b16 %v4378
    %v6539 = vunpack.c.l.b16 %v4379
    %v6540 = vunpack.c.h.b16 %v4379
    %v6541 = vunpack.c.l.b16 %v4380
    %v6542 = vunpack.c.h.b16 %v4380
    %v6543 = vunpack.c.l.b16 %v4381
    %v6544 = vunpack.c.h.b16 %v4381
    %v6545 = vunpack.c.l.b16 %v4382
    %v6546 = vunpack.c.h.b16 %v4382
    %v6547 = vunpack.c.l.b16 %v4383
    %v6548 = vunpack.c.h.b16 %v4383
    %v6549 = vunpack.c.l.b16 %v4384
    %v6550 = vunpack.c.h.b16 %v4384
    %v6551 = vunpack.c.l.b16 %v4385
    %v6552 = vunpack.c.h.b16 %v4385
    %v6553 = vunpack.c.l.b16 %v4386
    %v6554 = vunpack.c.h.b16 %v4386
    %v6555 = vunpack.c.l.b16 %v4387
    %v6556 = vunpack.c.h.b16 %v4387
    %v6557 = vunpack.c.l.b16 %v4388
    %v6558 = vunpack.c.h.b16 %v4388
    %v6559 = vunpack.c.l.b16 %v4389
    %v6560 = vunpack.c.h.b16 %v4389
    %v6561 = vunpack.c.l.b16 %v4390
    %v6562 = vunpack.c.h.b16 %v4390
    %v6563 = vunpack.c.l.b16 %v4391
    %v6564 = vunpack.c.h.b16 %v4391
    %v6565 = vunpack.c.l.b16 %v4392
    %v6566 = vunpack.c.h.b16 %v4392
    %v6567 = vunpack.c.l.b16 %v4393
    %v6568 = vunpack.c.h.b16 %v4393
    %v6569 = vunpack.c.l.b16 %v4394
    %v6570 = vunpack.c.h.b16 %v4394
    %v6571 = vunpack.c.l.b16 %v4395
    %v6572 = vunpack.c.h.b16 %v4395
    %v6573 = vunpack.c.l.b16 %v4396
    %v6574 = vunpack.c.h.b16 %v4396
    %v6575 = vunpack.c.l.b16 %v4397
    %v6576 = vunpack.c.h.b16 %v4397
    %v6577 = vunpack.c.l.b16 %v4398
    %v6578 = vunpack.c.h.b16 %v4398
    %v6579 = vunpack.c.l.b16 %v4399
    %v6580 = vunpack.c.h.b16 %v4399
    %v6581 = vunpack.c.l.b16 %v4400
    %v6582 = vunpack.c.h.b16 %v4400
    %v6583 = vunpack.c.l.b16 %v4401
    %v6584 = vunpack.c.h.b16 %v4401
    %v6585 = vunpack.c.l.b16 %v4402
    %v6586 = vunpack.c.h.b16 %v4402
    %v6587 = vunpack.c.l.b16 %v4403
    %v6588 = vunpack.c.h.b16 %v4403
    %v6589 = vunpack.c.l.b16 %v4404
    %v6590 = vunpack.c.h.b16 %v4404
    %v6591 = vunpack.c.l.b16 %v4405
    %v6592 = vunpack.c.h.b16 %v4405
    %v6593 = vunpack.c.l.b16 %v4406
    %v6594 = vunpack.c.h.b16 %v4406
    %v6595 = vunpack.c.l.b16 %v4407
    %v6596 = vunpack.c.h.b16 %v4407
    %v6597 = vunpack.c.l.b16 %v4408
    %v6598 = vunpack.c.h.b16 %v4408
    %v6599 = vunpack.c.l.b16 %v4409
    %v6600 = vunpack.c.h.b16 %v4409
    %v6601 = vunpack.c.l.b16 %v4410
    %v6602 = vunpack.c.h.b16 %v4410
    %v6603 = vunpack.c.l.b16 %v4411
    %v6604 = vunpack.c.h.b16 %v4411
    %v6605 = vunpack.c.l.b16 %v4412
    %v6606 = vunpack.c.h.b16 %v4412
    %v6607 = vunpack.c.l.b16 %v4413
    %v6608 = vunpack.c.h.b16 %v4413
    %v6609 = vunpack.c.l.b16 %v4414
    %v6610 = vunpack.c.h.b16 %v4414
    %v6611 = vunpack.c.l.b16 %v4415
    %v6612 = vunpack.c.h.b16 %v4415
    %v6613 = vunpack.c.l.b16 %v4416
    %v6614 = vunpack.c.h.b16 %v4416
    %v6615 = vunpack.c.l.b16 %v4417
    %v6616 = vunpack.c.h.b16 %v4417
    %v6617 = vunpack.c.l.b16 %v4418
    %v6618 = vunpack.c.h.b16 %v4418
    %v6619 = vunpack.c.l.b16 %v4419
    %v6620 = vunpack.c.h.b16 %v4419
    %v6621 = vunpack.c.l.b16 %v4420
    %v6622 = vunpack.c.h.b16 %v4420
    %v6623 = vunpack.c.l.b16 %v4421
    %v6624 = vunpack.c.h.b16 %v4421
    %v6625 = vunpack.c.l.b16 %v4422
    %v6626 = vunpack.c.h.b16 %v4422
    %v6627 = vunpack.c.l.b16 %v4423
    %v6628 = vunpack.c.h.b16 %v4423
    %v6629 = vunpack.c.l.b16 %v4424
    %v6630 = vunpack.c.h.b16 %v4424
    %v6631 = vunpack.c.l.b16 %v4425
    %v6632 = vunpack.c.h.b16 %v4425
    %v6633 = vunpack.c.l.b16 %v4426
    %v6634 = vunpack.c.h.b16 %v4426
    %v6635 = vunpack.c.l.b16 %v4427
    %v6636 = vunpack.c.h.b16 %v4427
    %v6637 = vunpack.c.l.b16 %v4428
    %v6638 = vunpack.c.h.b16 %v4428
    %v6639 = vunpack.c.l.b16 %v4429
    %v6640 = vunpack.c.h.b16 %v4429
    %v6641 = vunpack.c.l.b16 %v4430
    %v6642 = vunpack.c.h.b16 %v4430
    %v6643 = vunpack.c.l.b16 %v4431
    %v6644 = vunpack.c.h.b16 %v4431
    %v6645 = vunpack.c.l.b16 %v4432
    %v6646 = vunpack.c.h.b16 %v4432
    %v6647 = vunpack.c.l.b16 %v4433
    %v6648 = vunpack.c.h.b16 %v4433
    %v6649 = vunpack.c.l.b16 %v4434
    %v6650 = vunpack.c.h.b16 %v4434
    %v6651 = vunpack.c.l.b16 %v4435
    %v6652 = vunpack.c.h.b16 %v4435
    %v6653 = vunpack.c.l.b16 %v4436
    %v6654 = vunpack.c.h.b16 %v4436
    %v6655 = vunpack.c.l.b16 %v4437
    %v6656 = vunpack.c.h.b16 %v4437
    %v6657 = vunpack.c.l.b16 %v4438
    %v6658 = vunpack.c.h.b16 %v4438
    %v6659 = vunpack.c.l.b16 %v4439
    %v6660 = vunpack.c.h.b16 %v4439
    %v6661 = vunpack.c.l.b16 %v4440
    %v6662 = vunpack.c.h.b16 %v4440
    %v6663 = vunpack.c.l.b16 %v4441
    %v6664 = vunpack.c.h.b16 %v4441
    %v6665 = vunpack.c.l.b16 %v4442
    %v6666 = vunpack.c.h.b16 %v4442
    %v6667 = vunpack.c.l.b16 %v4443
    %v6668 = vunpack.c.h.b16 %v4443
    %v6669 = vunpack.c.l.b16 %v4444
    %v6670 = vunpack.c.h.b16 %v4444
    %v6671 = vunpack.c.l.b16 %v4445
    %v6672 = vunpack.c.h.b16 %v4445
    %v6673 = vunpack.c.l.b16 %v4446
    %v6674 = vunpack.c.h.b16 %v4446
    %v6675 = vunpack.c.l.b16 %v4447
    %v6676 = vunpack.c.h.b16 %v4447
    %v6677 = vunpack.c.l.b16 %v4448
    %v6678 = vunpack.c.h.b16 %v4448
    %v6679 = vunpack.c.l.b16 %v4449
    %v6680 = vunpack.c.h.b16 %v4449
    %v6681 = vunpack.c.l.b16 %v4450
    %v6682 = vunpack.c.h.b16 %v4450
    %v6683 = vunpack.c.l.b16 %v4451
    %v6684 = vunpack.c.h.b16 %v4451
    %v6685 = vunpack.c.l.b16 %v4452
    %v6686 = vunpack.c.h.b16 %v4452
    %v6687 = vunpack.c.l.b16 %v4453
    %v6688 = vunpack.c.h.b16 %v4453
    %v6689 = vunpack.c.l.b16 %v4454
    %v6690 = vunpack.c.h.b16 %v4454
    %v6691 = vunpack.c.l.b16 %v4455
    %v6692 = vunpack.c.h.b16 %v4455
    %v6693 = vunpack.c.l.b16 %v4456
    %v6694 = vunpack.c.h.b16 %v4456
    %v6695 = vunpack.c.l.b16 %v4457
    %v6696 = vunpack.c.h.b16 %v4457
    %v6697 = vunpack.c.l.b16 %v4458
    %v6698 = vunpack.c.h.b16 %v4458
    %v6699 = vunpack.c.l.b16 %v4459
    %v6700 = vunpack.c.h.b16 %v4459
    %v6701 = vunpack.c.l.b16 %v4460
    %v6702 = vunpack.c.h.b16 %v4460
    %v6703 = vunpack.c.l.b16 %v4461
    %v6704 = vunpack.c.h.b16 %v4461
    %v6705 = vunpack.c.l.b16 %v4462
    %v6706 = vunpack.c.h.b16 %v4462
    %v6707 = vunpack.c.l.b16 %v4463
    %v6708 = vunpack.c.h.b16 %v4463
    %v6709 = vunpack.c.l.b16 %v4464
    %v6710 = vunpack.c.h.b16 %v4464
    %v6711 = vunpack.c.l.b16 %v4465
    %v6712 = vunpack.c.h.b16 %v4465
    %v6713 = vunpack.c.l.b16 %v4466
    %v6714 = vunpack.c.h.b16 %v4466
    %v6715 = vunpack.c.l.b16 %v4467
    %v6716 = vunpack.c.h.b16 %v4467
    %v6717 = vunpack.c.l.b16 %v4468
    %v6718 = vunpack.c.h.b16 %v4468
    %v6719 = vunpack.c.l.b16 %v4469
    %v6720 = vunpack.c.h.b16 %v4469
    %v6721 = vunpack.c.l.b16 %v4470
    %v6722 = vunpack.c.h.b16 %v4470
    %v6723 = vunpack.c.l.b16 %v4471
    %v6724 = vunpack.c.h.b16 %v4471
    %v6725 = vunpack.c.l.b16 %v4472
    %v6726 = vunpack.c.h.b16 %v4472
    %v6727 = vunpack.c.l.b16 %v4473
    %v6728 = vunpack.c.h.b16 %v4473
    %v6729 = vunpack.c.l.b16 %v4474
    %v6730 = vunpack.c.h.b16 %v4474
    %v6731 = vunpack.c.l.b16 %v4475
    %v6732 = vunpack.c.h.b16 %v4475
    %v6733 = vunpack.c.l.b16 %v4476
    %v6734 = vunpack.c.h.b16 %v4476
    %v6735 = vunpack.c.l.b16 %v4477
    %v6736 = vunpack.c.h.b16 %v4477
    %v6737 = vunpack.c.l.b16 %v4478
    %v6738 = vunpack.c.h.b16 %v4478
    %v6739 = vunpack.c.l.b16 %v4479
    %v6740 = vunpack.c.h.b16 %v4479
    %v6741 = vunpack.c.l.b16 %v4480
    %v6742 = vunpack.c.h.b16 %v4480
    %v6743 = vunpack.c.l.b16 %v4481
    %v6744 = vunpack.c.h.b16 %v4481
    %v6745 = vunpack.c.l.b16 %v4482
    %v6746 = vunpack.c.h.b16 %v4482
    %v6747 = vunpack.c.l.b16 %v4483
    %v6748 = vunpack.c.h.b16 %v4483
    %v6749 = vunpack.c.l.b16 %v4484
    %v6750 = vunpack.c.h.b16 %v4484
    %v6751 = vunpack.c.l.b16 %v4485
    %v6752 = vunpack.c.h.b16 %v4485
    %v6753 = vunpack.c.l.b16 %v4486
    %v6754 = vunpack.c.h.b16 %v4486
    %v6755 = vunpack.c.l.b16 %v4487
    %v6756 = vunpack.c.h.b16 %v4487
    %v6757 = vunpack.c.l.b16 %v4488
    %v6758 = vunpack.c.h.b16 %v4488
    %v6759 = vunpack.c.l.b16 %v4489
    %v6760 = vunpack.c.h.b16 %v4489
    %v6761 = vunpack.c.l.b16 %v4490
    %v6762 = vunpack.c.h.b16 %v4490
    %v6763 = vunpack.c.l.b16 %v4491
    %v6764 = vunpack.c.h.b16 %v4491
    %v6765 = vunpack.c.l.b16 %v4492
    %v6766 = vunpack.c.h.b16 %v4492
    %v6767 = vunpack.c.l.b16 %v4493
    %v6768 = vunpack.c.h.b16 %v4493
    %v6769 = vunpack.c.l.b16 %v4494
    %v6770 = vunpack.c.h.b16 %v4494
    %v6771 = vunpack.c.l.b16 %v4495
    %v6772 = vunpack.c.h.b16 %v4495
    %v6773 = vunpack.c.l.b16 %v4496
    %v6774 = vunpack.c.h.b16 %v4496
    %v6775 = vunpack.c.l.b16 %v4497
    %v6776 = vunpack.c.h.b16 %v4497
    %v6777 = vunpack.c.l.b16 %v4498
    %v6778 = vunpack.c.h.b16 %v4498
    %v6779 = vunpack.c.l.b16 %v4499
    %v6780 = vunpack.c.h.b16 %v4499
    %v6781 = vunpack.c.l.b16 %v4500
    %v6782 = vunpack.c.h.b16 %v4500
    %v6783 = vunpack.c.l.b16 %v4501
    %v6784 = vunpack.c.h.b16 %v4501
    %v6785 = vunpack.c.l.b16 %v4502
    %v6786 = vunpack.c.h.b16 %v4502
    %v6787 = vunpack.c.l.b16 %v4503
    %v6788 = vunpack.c.h.b16 %v4503
    %v6789 = vunpack.c.l.b16 %v4504
    %v6790 = vunpack.c.h.b16 %v4504
    %v6791 = vunpack.c.l.b16 %v4505
    %v6792 = vunpack.c.h.b16 %v4505
    %v6793 = vunpack.c.l.b16 %v4506
    %v6794 = vunpack.c.h.b16 %v4506
    %v6795 = vunpack.c.l.b16 %v4507
    %v6796 = vunpack.c.h.b16 %v4507
    %v6797 = vunpack.c.l.b16 %v4508
    %v6798 = vunpack.c.h.b16 %v4508
    %v6799 = vunpack.c.l.b16 %v4509
    %v6800 = vunpack.c.h.b16 %v4509
    %v6801 = vunpack.c.l.b16 %v4510
    %v6802 = vunpack.c.h.b16 %v4510
    %v6803 = vunpack.c.l.b16 %v4511
    %v6804 = vunpack.c.h.b16 %v4511
    %v6805 = vunpack.c.l.b16 %v4512
    %v6806 = vunpack.c.h.b16 %v4512
    %v6807 = vunpack.c.l.b16 %v4513
    %v6808 = vunpack.c.h.b16 %v4513
    %v6809 = vunpack.c.l.b16 %v4514
    %v6810 = vunpack.c.h.b16 %v4514
    %v6811 = vunpack.c.l.b16 %v4515
    %v6812 = vunpack.c.h.b16 %v4515
    %v6813 = vunpack.c.l.b16 %v4516
    %v6814 = vunpack.c.h.b16 %v4516
    %v6815 = vunpack.c.l.b16 %v4517
    %v6816 = vunpack.c.h.b16 %v4517
    %v6817 = vunpack.c.l.b16 %v4518
    %v6818 = vunpack.c.h.b16 %v4518
    %v6819 = vunpack.c.l.b16 %v4519
    %v6820 = vunpack.c.h.b16 %v4519
    %v6821 = vunpack.c.l.b16 %v4520
    %v6822 = vunpack.c.h.b16 %v4520
    %v6823 = vunpack.c.l.b16 %v4521
    %v6824 = vunpack.c.h.b16 %v4521
    %v6825 = vunpack.c.l.b16 %v4522
    %v6826 = vunpack.c.h.b16 %v4522
    %v6827 = vunpack.c.l.b16 %v4523
    %v6828 = vunpack.c.h.b16 %v4523
    %v6829 = vunpack.c.l.b16 %v4524
    %v6830 = vunpack.c.h.b16 %v4524
    %v6831 = vunpack.c.l.b16 %v4525
    %v6832 = vunpack.c.h.b16 %v4525
    %v6833 = vunpack.c.l.b16 %v4526
    %v6834 = vunpack.c.h.b16 %v4526
    %v6835 = vunpack.c.l.b16 %v4527
    %v6836 = vunpack.c.h.b16 %v4527
    %v6837 = vunpack.c.l.b16 %v4528
    %v6838 = vunpack.c.h.b16 %v4528
    %v6839 = vunpack.c.l.b16 %v4529
    %v6840 = vunpack.c.h.b16 %v4529
    %v6841 = vunpack.c.l.b16 %v4530
    %v6842 = vunpack.c.h.b16 %v4530
    %v6843 = vunpack.c.l.b16 %v4531
    %v6844 = vunpack.c.h.b16 %v4531
    %v6845 = vunpack.c.l.b16 %v4532
    %v6846 = vunpack.c.h.b16 %v4532
    %v6847 = vunpack.c.l.b16 %v4533
    %v6848 = vunpack.c.h.b16 %v4533
    %v6849 = vunpack.c.l.b16 %v4534
    %v6850 = vunpack.c.h.b16 %v4534
    %v6851 = vunpack.c.l.b16 %v4535
    %v6852 = vunpack.c.h.b16 %v4535
    %v6853 = vunpack.c.l.b16 %v4536
    %v6854 = vunpack.c.h.b16 %v4536
    %v6855 = vunpack.c.l.b16 %v4537
    %v6856 = vunpack.c.h.b16 %v4537
    %v6857 = vunpack.c.l.b16 %v4538
    %v6858 = vunpack.c.h.b16 %v4538
    %v6859 = vunpack.c.l.b16 %v4539
    %v6860 = vunpack.c.h.b16 %v4539
    %v6861 = vunpack.c.l.b16 %v4540
    %v6862 = vunpack.c.h.b16 %v4540
    %v6863 = vunpack.c.l.b16 %v4541
    %v6864 = vunpack.c.h.b16 %v4541
    %v6865 = vunpack.c.l.b16 %v4542
    %v6866 = vunpack.c.h.b16 %v4542
    %v6867 = vunpack.c.l.b16 %v4543
    %v6868 = vunpack.c.h.b16 %v4543
    %v6869 = vunpack.c.l.b16 %v4544
    %v6870 = vunpack.c.h.b16 %v4544
    %v6871 = vunpack.c.l.b16 %v4545
    %v6872 = vunpack.c.h.b16 %v4545
    %v6873 = vunpack.c.l.b16 %v4546
    %v6874 = vunpack.c.h.b16 %v4546
    %v6875 = vunpack.c.l.b16 %v4547
    %v6876 = vunpack.c.h.b16 %v4547
    %v6877 = vunpack.c.l.b16 %v4548
    %v6878 = vunpack.c.h.b16 %v4548
    %v6879 = vunpack.c.l.b16 %v4549
    %v6880 = vunpack.c.h.b16 %v4549
    %v6881 = vunpack.c.l.b16 %v4550
    %v6882 = vunpack.c.h.b16 %v4550
    %v6883 = vunpack.c.l.b16 %v4551
    %v6884 = vunpack.c.h.b16 %v4551
    %v6885 = vunpack.c.l.b16 %v4552
    %v6886 = vunpack.c.h.b16 %v4552
    %v6887 = vunpack.c.l.b16 %v4553
    %v6888 = vunpack.c.h.b16 %v4553
    %v6889 = vunpack.c.l.b16 %v4554
    %v6890 = vunpack.c.h.b16 %v4554
    %v6891 = vunpack.c.l.b16 %v4555
    %v6892 = vunpack.c.h.b16 %v4555
    %v6893 = vunpack.c.l.b16 %v4556
    %v6894 = vunpack.c.h.b16 %v4556
    %v6895 = vunpack.c.l.b16 %v4557
    %v6896 = vunpack.c.h.b16 %v4557
    %v6897 = vunpack.c.l.b16 %v4558
    %v6898 = vunpack.c.h.b16 %v4558
    %v6899 = vunpack.c.l.b16 %v4559
    %v6900 = vunpack.c.h.b16 %v4559
    %v6901 = vunpack.c.l.b16 %v4560
    %v6902 = vunpack.c.h.b16 %v4560
    %v6903 = vunpack.c.l.b16 %v4561
    %v6904 = vunpack.c.h.b16 %v4561
    %v6905 = vunpack.c.l.b16 %v4562
    %v6906 = vunpack.c.h.b16 %v4562
    %v6907 = vunpack.c.l.b16 %v4563
    %v6908 = vunpack.c.h.b16 %v4563
    %v6909 = vunpack.c.l.b16 %v4564
    %v6910 = vunpack.c.h.b16 %v4564
    %v6911 = vunpack.c.l.b16 %v4565
    %v6912 = vunpack.c.h.b16 %v4565
    %v6913 = vunpack.c.l.b16 %v4566
    %v6914 = vunpack.c.h.b16 %v4566
    %v6915 = vunpack.c.l.b16 %v4567
    %v6916 = vunpack.c.h.b16 %v4567
    %v6917 = vunpack.c.l.b16 %v4568
    %v6918 = vunpack.c.h.b16 %v4568
    %v6919 = vunpack.c.l.b16 %v4569
    %v6920 = vunpack.c.h.b16 %v4569
    %v6921 = vunpack.c.l.b16 %v4570
    %v6922 = vunpack.c.h.b16 %v4570
    %v6923 = vunpack.c.l.b16 %v4571
    %v6924 = vunpack.c.h.b16 %v4571
    %v6925 = vunpack.c.l.b16 %v4572
    %v6926 = vunpack.c.h.b16 %v4572
    %v6927 = vunpack.c.l.b16 %v4573
    %v6928 = vunpack.c.h.b16 %v4573
    %v6929 = vunpack.c.l.b16 %v4574
    %v6930 = vunpack.c.h.b16 %v4574
    %v6931 = vunpack.c.l.b16 %v4575
    %v6932 = vunpack.c.h.b16 %v4575
    %v6933 = vunpack.c.l.b16 %v4576
    %v6934 = vunpack.c.h.b16 %v4576
    %v6935 = vunpack.c.l.b16 %v4577
    %v6936 = vunpack.c.h.b16 %v4577
    %v6937 = vunpack.c.l.b16 %v4578
    %v6938 = vunpack.c.h.b16 %v4578
    %v6939 = vunpack.c.l.b16 %v4579
    %v6940 = vunpack.c.h.b16 %v4579
    %v6941 = vunpack.c.l.b16 %v4580
    %v6942 = vunpack.c.h.b16 %v4580
    %v6943 = vunpack.c.l.b16 %v4581
    %v6944 = vunpack.c.h.b16 %v4581
    %v6945 = vunpack.c.l.b16 %v4582
    %v6946 = vunpack.c.h.b16 %v4582
    %v6947 = vunpack.c.l.b16 %v4583
    %v6948 = vunpack.c.h.b16 %v4583
    %v6949 = vunpack.c.l.b16 %v4584
    %v6950 = vunpack.c.h.b16 %v4584
    %v6951 = vunpack.c.l.b16 %v4585
    %v6952 = vunpack.c.h.b16 %v4585
    %v6953 = vunpack.c.l.b16 %v4586
    %v6954 = vunpack.c.h.b16 %v4586
    %v6955 = vunpack.c.l.b16 %v4587
    %v6956 = vunpack.c.h.b16 %v4587
    %v6957 = vunpack.c.l.b16 %v4588
    %v6958 = vunpack.c.h.b16 %v4588
    %v6959 = vunpack.c.l.b16 %v4589
    %v6960 = vunpack.c.h.b16 %v4589
    %v6961 = vunpack.c.l.b16 %v4590
    %v6962 = vunpack.c.h.b16 %v4590
    %v6963 = vunpack.c.l.b16 %v4591
    %v6964 = vunpack.c.h.b16 %v4591
    %v6965 = vunpack.c.l.b16 %v4592
    %v6966 = vunpack.c.h.b16 %v4592
    %v6967 = vunpack.c.l.b16 %v4593
    %v6968 = vunpack.c.h.b16 %v4593
    %v6969 = vunpack.c.l.b16 %v4594
    %v6970 = vunpack.c.h.b16 %v4594
    %v6971 = vunpack.c.l.b16 %v4595
    %v6972 = vunpack.c.h.b16 %v4595
    %v6973 = vunpack.c.l.b16 %v4596
    %v6974 = vunpack.c.h.b16 %v4596
    %v6975 = vunpack.c.l.b16 %v4597
    %v6976 = vunpack.c.h.b16 %v4597
    %v6977 = vunpack.c.l.b16 %v4598
    %v6978 = vunpack.c.h.b16 %v4598
    %v6979 = vunpack.c.l.b16 %v4599
    %v6980 = vunpack.c.h.b16 %v4599
    %v6981 = vunpack.c.l.b16 %v4600
    %v6982 = vunpack.c.h.b16 %v4600
    %v6983 = vunpack.c.l.b16 %v4601
    %v6984 = vunpack.c.h.b16 %v4601
    %v6985 = vunpack.c.l.b16 %v4602
    %v6986 = vunpack.c.h.b16 %v4602
    %v6987 = vunpack.c.l.b16 %v4603
    %v6988 = vunpack.c.h.b16 %v4603
    %v6989 = vunpack.c.l.b16 %v4604
    %v6990 = vunpack.c.h.b16 %v4604
    %v6991 = vunpack.c.l.b16 %v4605
    %v6992 = vunpack.c.h.b16 %v4605
    %v6993 = vunpack.c.l.b16 %v4606
    %v6994 = vunpack.c.h.b16 %v4606
    %v6995 = vunpack.c.l.b16 %v4607
    %v6996 = vunpack.c.h.b16 %v4607
    %v6997 = vunpack.c.l.b16 %v4608
    %v6998 = vunpack.c.h.b16 %v4608
    %v6999 = vunpack.c.l.b16 %v4609
    %v7000 = vunpack.c.h.b16 %v4609
    %v7001 = vunpack.c.l.b16 %v4610
    %v7002 = vunpack.c.h.b16 %v4610
    %v7003 = vunpack.c.l.b16 %v4611
    %v7004 = vunpack.c.h.b16 %v4611
    %v7005 = vunpack.c.l.b16 %v4612
    %v7006 = vunpack.c.h.b16 %v4612
    %v7007 = vunpack.c.l.b16 %v4613
    %v7008 = vunpack.c.h.b16 %v4613
    %v7009 = vunpack.c.l.b16 %v4614
    %v7010 = vunpack.c.h.b16 %v4614
    %v7011 = vunpack.c.l.b16 %v4615
    %v7012 = vunpack.c.h.b16 %v4615
    %v7013 = vunpack.c.l.b16 %v4616
    %v7014 = vunpack.c.h.b16 %v4616
    %v7015 = vunpack.c.l.b16 %v4617
    %v7016 = vunpack.c.h.b16 %v4617
    %v7017 = vunpack.c.l.b16 %v4618
    %v7018 = vunpack.c.h.b16 %v4618
    %v7019 = vunpack.c.l.b16 %v4619
    %v7020 = vunpack.c.h.b16 %v4619
    %v7021 = vunpack.c.l.b16 %v4620
    %v7022 = vunpack.c.h.b16 %v4620
    %v7023 = vunpack.c.l.b16 %v4621
    %v7024 = vunpack.c.h.b16 %v4621
    %v7025 = vunpack.c.l.b16 %v4622
    %v7026 = vunpack.c.h.b16 %v4622
    %v7027 = vunpack.c.l.b16 %v4623
    %v7028 = vunpack.c.h.b16 %v4623
    %v7029 = vunpack.c.l.b16 %v4624
    %v7030 = vunpack.c.h.b16 %v4624
    %v7031 = vunpack.c.l.b16 %v4625
    %v7032 = vunpack.c.h.b16 %v4625
    %v7033 = vunpack.c.l.b16 %v4626
    %v7034 = vunpack.c.h.b16 %v4626
    %v7035 = vunpack.c.l.b16 %v4627
    %v7036 = vunpack.c.h.b16 %v4627
    %v7037 = vunpack.c.l.b16 %v4628
    %v7038 = vunpack.c.h.b16 %v4628
    %v7039 = vunpack.c.l.b16 %v4629
    %v7040 = vunpack.c.h.b16 %v4629
    %v7041 = vunpack.c.l.b16 %v4630
    %v7042 = vunpack.c.h.b16 %v4630
    %v7043 = vunpack.c.l.b16 %v4631
    %v7044 = vunpack.c.h.b16 %v4631
    %v7045 = vunpack.c.l.b16 %v4632
    %v7046 = vunpack.c.h.b16 %v4632
    %v7047 = vunpack.c.l.b16 %v4633
    %v7048 = vunpack.c.h.b16 %v4633
    %v7049 = vunpack.c.l.b16 %v4634
    %v7050 = vunpack.c.h.b16 %v4634
    %v7051 = vunpack.c.l.b16 %v4635
    %v7052 = vunpack.c.h.b16 %v4635
    %v7053 = vunpack.c.l.b16 %v4636
    %v7054 = vunpack.c.h.b16 %v4636
    %v7055 = vunpack.c.l.b16 %v4637
    %v7056 = vunpack.c.h.b16 %v4637
    %v7057 = vunpack.c.l.b16 %v4638
    %v7058 = vunpack.c.h.b16 %v4638
    %v7059 = vunpack.c.l.b16 %v4639
    %v7060 = vunpack.c.h.b16 %v4639
    %v7061 = vunpack.c.l.b16 %v4640
    %v7062 = vunpack.c.h.b16 %v4640
    %v7063 = vunpack.c.l.b16 %v4641
    %v7064 = vunpack.c.h.b16 %v4641
    %v7065 = vunpack.c.l.b16 %v4642
    %v7066 = vunpack.c.h.b16 %v4642
    %v7067 = vunpack.c.l.b16 %v4643
    %v7068 = vunpack.c.h.b16 %v4643
    %v7069 = vunpack.c.l.b16 %v4644
    %v7070 = vunpack.c.h.b16 %v4644
    %v7071 = vunpack.c.l.b16 %v4645
    %v7072 = vunpack.c.h.b16 %v4645
    %v7073 = vunpack.c.l.b16 %v4646
    %v7074 = vunpack.c.h.b16 %v4646
    %v7075 = vunpack.c.l.b16 %v4647
    %v7076 = vunpack.c.h.b16 %v4647
    %v7077 = vunpack.c.l.b16 %v4648
    %v7078 = vunpack.c.h.b16 %v4648
    %v7079 = vunpack.c.l.b16 %v4649
    %v7080 = vunpack.c.h.b16 %v4649
    %v7081 = vunpack.c.l.b16 %v4650
    %v7082 = vunpack.c.h.b16 %v4650
    %v7083 = vunpack.c.l.b16 %v4651
    %v7084 = vunpack.c.h.b16 %v4651
    %v7085 = vunpack.c.l.b16 %v4652
    %v7086 = vunpack.c.h.b16 %v4652
    %v7087 = vunpack.c.l.b16 %v4653
    %v7088 = vunpack.c.h.b16 %v4653
    %v7089 = vunpack.c.l.b16 %v4654
    %v7090 = vunpack.c.h.b16 %v4654
    %v7091 = vunpack.c.l.b16 %v4655
    %v7092 = vunpack.c.h.b16 %v4655
    %v7093 = vunpack.c.l.b16 %v4656
    %v7094 = vunpack.c.h.b16 %v4656
    %v7095 = vunpack.c.l.b16 %v4657
    %v7096 = vunpack.c.h.b16 %v4657
    %v7097 = vunpack.c.l.b16 %v4658
    %v7098 = vunpack.c.h.b16 %v4658
    %v7099 = vunpack.c.l.b16 %v4659
    %v7100 = vunpack.c.h.b16 %v4659
    %v7101 = vunpack.c.l.b16 %v4660
    %v7102 = vunpack.c.h.b16 %v4660
    %v7103 = vunpack.c.l.b16 %v4661
    %v7104 = vunpack.c.h.b16 %v4661
    %v7105 = vunpack.c.l.b16 %v4662
    %v7106 = vunpack.c.h.b16 %v4662
    %v7107 = vunpack.c.l.b16 %v4663
    %v7108 = vunpack.c.h.b16 %v4663
    %v7109 = vunpack.c.l.b16 %v4664
    %v7110 = vunpack.c.h.b16 %v4664
    %v7111 = vunpack.c.l.b16 %v4665
    %v7112 = vunpack.c.h.b16 %v4665
    %v7113 = vunpack.c.l.b16 %v4666
    %v7114 = vunpack.c.h.b16 %v4666
    %v7115 = vunpack.c.l.b16 %v4667
    %v7116 = vunpack.c.h.b16 %v4667
    %v7117 = vunpack.c.l.b16 %v4668
    %v7118 = vunpack.c.h.b16 %v4668
    %v7119 = vunpack.c.l.b16 %v4669
    %v7120 = vunpack.c.h.b16 %v4669
    %v7121 = vunpack.c.l.b16 %v4670
    %v7122 = vunpack.c.h.b16 %v4670
    %v7123 = vunpack.c.l.b16 %v4671
    %v7124 = vunpack.c.h.b16 %v4671
    %v7125 = vunpack.c.l.b16 %v4672
    %v7126 = vunpack.c.h.b16 %v4672
    %v7127 = vunpack.c.l.b16 %v4673
    %v7128 = vunpack.c.h.b16 %v4673
    %v7129 = vunpack.c.l.b16 %v4674
    %v7130 = vunpack.c.h.b16 %v4674
    %v7131 = vunpack.c.l.b16 %v4675
    %v7132 = vunpack.c.h.b16 %v4675
    %v7133 = vunpack.c.l.b16 %v4676
    %v7134 = vunpack.c.h.b16 %v4676
    %v7135 = vunpack.c.l.b16 %v4677
    %v7136 = vunpack.c.h.b16 %v4677
    %v7137 = vunpack.c.l.b16 %v4678
    %v7138 = vunpack.c.h.b16 %v4678
    %v7139 = vunpack.c.l.b16 %v4679
    %v7140 = vunpack.c.h.b16 %v4679
    %v7141 = vunpack.c.l.b16 %v4680
    %v7142 = vunpack.c.h.b16 %v4680
    %v7143 = vunpack.c.l.b16 %v4681
    %v7144 = vunpack.c.h.b16 %v4681
    %v7145 = vunpack.c.l.b16 %v4682
    %v7146 = vunpack.c.h.b16 %v4682
    %v7147 = vunpack.c.l.b16 %v4683
    %v7148 = vunpack.c.h.b16 %v4683
    %v7149 = vunpack.c.l.b16 %v4684
    %v7150 = vunpack.c.h.b16 %v4684
    %v7151 = vunpack.c.l.b16 %v4685
    %v7152 = vunpack.c.h.b16 %v4685
    %v7153 = vunpack.c.l.b16 %v4686
    %v7154 = vunpack.c.h.b16 %v4686
    %v7155 = vunpack.c.l.b16 %v4687
    %v7156 = vunpack.c.h.b16 %v4687
    %v7157 = vunpack.c.l.b16 %v4688
    %v7158 = vunpack.c.h.b16 %v4688
    %v7159 = vunpack.c.l.b16 %v4689
    %v7160 = vunpack.c.h.b16 %v4689
    %v7161 = vunpack.c.l.b16 %v4690
    %v7162 = vunpack.c.h.b16 %v4690
    %v7163 = vunpack.c.l.b16 %v4691
    %v7164 = vunpack.c.h.b16 %v4691
    %v7165 = vunpack.c.l.b16 %v4692
    %v7166 = vunpack.c.h.b16 %v4692
    %v7167 = vunpack.c.l.b16 %v4693
    %v7168 = vunpack.c.h.b16 %v4693
    %v7169 = vunpack.c.l.b16 %v4694
    %v7170 = vunpack.c.h.b16 %v4694
    %v7171 = vunpack.c.l.b16 %v4695
    %v7172 = vunpack.c.h.b16 %v4695
    %v7173 = vunpack.c.l.b16 %v4696
    %v7174 = vunpack.c.h.b16 %v4696
    %v7175 = vunpack.c.l.b16 %v4697
    %v7176 = vunpack.c.h.b16 %v4697
    %v7177 = vunpack.c.l.b16 %v4698
    %v7178 = vunpack.c.h.b16 %v4698
    %v7179 = vunpack.c.l.b16 %v4699
    %v7180 = vunpack.c.h.b16 %v4699
    %v7181 = vunpack.c.l.b16 %v4700
    %v7182 = vunpack.c.h.b16 %v4700
    %v7183 = vunpack.c.l.b16 %v4701
    %v7184 = vunpack.c.h.b16 %v4701
    %v7185 = vunpack.c.l.b16 %v4702
    %v7186 = vunpack.c.h.b16 %v4702
    %v7187 = vunpack.c.l.b16 %v4703
    %v7188 = vunpack.c.h.b16 %v4703
    %v7189 = vunpack.c.l.b16 %v4704
    %v7190 = vunpack.c.h.b16 %v4704
    %v7191 = vunpack.c.l.b16 %v4705
    %v7192 = vunpack.c.h.b16 %v4705
    %v7193 = vunpack.c.l.b16 %v4706
    %v7194 = vunpack.c.h.b16 %v4706
    %v7195 = vunpack.c.l.b16 %v4707
    %v7196 = vunpack.c.h.b16 %v4707
    %v7197 = vunpack.c.l.b16 %v4708
    %v7198 = vunpack.c.h.b16 %v4708
    %v7199 = vunpack.c.l.b16 %v4709
    %v7200 = vunpack.c.h.b16 %v4709
    %v7201 = vunpack.c.l.b16 %v4710
    %v7202 = vunpack.c.h.b16 %v4710
    %v7203 = vunpack.c.l.b16 %v4711
    %v7204 = vunpack.c.h.b16 %v4711
    %v7205 = vunpack.c.l.b16 %v4712
    %v7206 = vunpack.c.h.b16 %v4712
    %v7207 = vunpack.c.l.b16 %v4713
    %v7208 = vunpack.c.h.b16 %v4713
    %v7209 = vunpack.c.l.b16 %v4714
    %v7210 = vunpack.c.h.b16 %v4714
    %v7211 = vunpack.c.l.b16 %v4715
    %v7212 = vunpack.c.h.b16 %v4715
    %v7213 = vunpack.c.l.b16 %v4716
    %v7214 = vunpack.c.h.b16 %v4716
    %v7215 = vunpack.c.l.b16 %v4717
    %v7216 = vunpack.c.h.b16 %v4717
    %v7217 = vunpack.c.l.b16 %v4718
    %v7218 = vunpack.c.h.b16 %v4718
    %v7219 = vunpack.c.l.b16 %v4719
    %v7220 = vunpack.c.h.b16 %v4719
    %v7221 = vunpack.c.l.b16 %v4720
    %v7222 = vunpack.c.h.b16 %v4720
    %v7223 = vunpack.c.l.b16 %v4721
    %v7224 = vunpack.c.h.b16 %v4721
    %v7225 = vunpack.c.l.b16 %v4722
    %v7226 = vunpack.c.h.b16 %v4722
    %v7227 = vunpack.c.l.b16 %v4723
    %v7228 = vunpack.c.h.b16 %v4723
    %v7229 = vunpack.c.l.b16 %v4724
    %v7230 = vunpack.c.h.b16 %v4724
    %v7231 = vunpack.c.l.b16 %v4725
    %v7232 = vunpack.c.h.b16 %v4725
    %v7233 = vunpack.c.l.b16 %v4726
    %v7234 = vunpack.c.h.b16 %v4726
    %v7235 = vunpack.c.l.b16 %v4727
    %v7236 = vunpack.c.h.b16 %v4727
    %v7237 = vunpack.c.l.b16 %v4728
    %v7238 = vunpack.c.h.b16 %v4728
    %v7239 = vunpack.c.l.b16 %v4729
    %v7240 = vunpack.c.h.b16 %v4729
    %v7241 = vunpack.c.l.b16 %v4730
    %v7242 = vunpack.c.h.b16 %v4730
    %v7243 = vunpack.c.l.b16 %v4731
    %v7244 = vunpack.c.h.b16 %v4731
    %v7245 = vunpack.c.l.b16 %v4732
    %v7246 = vunpack.c.h.b16 %v4732
    %v7247 = vunpack.c.l.b16 %v4733
    %v7248 = vunpack.c.h.b16 %v4733
    %v7249 = vunpack.c.l.b16 %v4734
    %v7250 = vunpack.c.h.b16 %v4734
    %v7251 = vunpack.c.l.b16 %v4735
    %v7252 = vunpack.c.h.b16 %v4735
    %v7253 = vunpack.c.l.b16 %v4736
    %v7254 = vunpack.c.h.b16 %v4736
    %v7255 = vunpack.c.l.b16 %v4737
    %v7256 = vunpack.c.h.b16 %v4737
    %v7257 = vunpack.c.l.b16 %v4738
    %v7258 = vunpack.c.h.b16 %v4738
    %v7259 = vunpack.c.l.b16 %v4739
    %v7260 = vunpack.c.h.b16 %v4739
    %v7261 = vunpack.c.l.b16 %v4740
    %v7262 = vunpack.c.h.b16 %v4740
    %v7263 = vunpack.c.l.b16 %v4741
    %v7264 = vunpack.c.h.b16 %v4741
    %v7265 = vunpack.c.l.b16 %v4742
    %v7266 = vunpack.c.h.b16 %v4742
    %v7267 = vunpack.c.l.b16 %v4743
    %v7268 = vunpack.c.h.b16 %v4743
    %v7269 = vunpack.c.l.b16 %v4744
    %v7270 = vunpack.c.h.b16 %v4744
    %v7271 = vunpack.c.l.b16 %v4745
    %v7272 = vunpack.c.h.b16 %v4745
    %v7273 = vunpack.c.l.b16 %v4746
    %v7274 = vunpack.c.h.b16 %v4746
    %v7275 = vunpack.c.l.b16 %v4747
    %v7276 = vunpack.c.h.b16 %v4747
    %v7277 = vunpack.c.l.b16 %v4748
    %v7278 = vunpack.c.h.b16 %v4748
    %v7279 = vunpack.c.l.b16 %v4749
    %v7280 = vunpack.c.h.b16 %v4749
    %v7281 = vunpack.c.l.b16 %v4750
    %v7282 = vunpack.c.h.b16 %v4750
    %v7283 = vunpack.c.l.b16 %v4751
    %v7284 = vunpack.c.h.b16 %v4751
    %v7285 = vunpack.c.l.b16 %v4752
    %v7286 = vunpack.c.h.b16 %v4752
    %v7287 = vunpack.c.l.b16 %v4753
    %v7288 = vunpack.c.h.b16 %v4753
    %v7289 = vunpack.c.l.b16 %v4754
    %v7290 = vunpack.c.h.b16 %v4754
    %v7291 = vunpack.c.l.b16 %v4755
    %v7292 = vunpack.c.h.b16 %v4755
    %v7293 = vunpack.c.l.b16 %v4756
    %v7294 = vunpack.c.h.b16 %v4756
    %v7295 = vunpack.c.l.b16 %v4757
    %v7296 = vunpack.c.h.b16 %v4757
    %v7297 = vunpack.c.l.b16 %v4758
    %v7298 = vunpack.c.h.b16 %v4758
    %v7299 = vunpack.c.l.b16 %v4759
    %v7300 = vunpack.c.h.b16 %v4759
    %v7301 = vunpack.c.l.b16 %v4760
    %v7302 = vunpack.c.h.b16 %v4760
    %v7303 = vunpack.c.l.b16 %v4761
    %v7304 = vunpack.c.h.b16 %v4761
    %v7305 = vunpack.c.l.b16 %v4762
    %v7306 = vunpack.c.h.b16 %v4762
    %v7307 = vunpack.c.l.b16 %v4763
    %v7308 = vunpack.c.h.b16 %v4763
    %v7309 = vunpack.c.l.b16 %v4764
    %v7310 = vunpack.c.h.b16 %v4764
    %v7311 = vunpack.c.l.b16 %v4765
    %v7312 = vunpack.c.h.b16 %v4765
    %v7313 = vunpack.c.l.b16 %v4766
    %v7314 = vunpack.c.h.b16 %v4766
    %v7315 = vunpack.c.l.b16 %v4767
    %v7316 = vunpack.c.h.b16 %v4767
    %v7317 = vunpack.c.l.b16 %v4768
    %v7318 = vunpack.c.h.b16 %v4768
    %v7319 = vunpack.c.l.b16 %v4769
    %v7320 = vunpack.c.h.b16 %v4769
    %v7321 = vunpack.c.l.b16 %v4770
    %v7322 = vunpack.c.h.b16 %v4770
    %v7323 = vunpack.c.l.b16 %v4771
    %v7324 = vunpack.c.h.b16 %v4771
    %v7325 = vunpack.c.l.b16 %v4772
    %v7326 = vunpack.c.h.b16 %v4772
    %v7327 = vunpack.c.l.b16 %v4773
    %v7328 = vunpack.c.h.b16 %v4773
    %v7329 = vunpack.c.l.b16 %v4774
    %v7330 = vunpack.c.h.b16 %v4774
    %v7331 = vunpack.c.l.b16 %v4775
    %v7332 = vunpack.c.h.b16 %v4775
    %v7333 = vunpack.c.l.b16 %v4776
    %v7334 = vunpack.c.h.b16 %v4776
    %v7335 = vunpack.c.l.b16 %v4777
    %v7336 = vunpack.c.h.b16 %v4777
    %v7337 = vunpack.c.l.b16 %v4778
    %v7338 = vunpack.c.h.b16 %v4778
    %v7339 = vunpack.c.l.b16 %v4779
    %v7340 = vunpack.c.h.b16 %v4779
    %v7341 = vunpack.c.l.b16 %v4780
    %v7342 = vunpack.c.h.b16 %v4780
    %v7343 = vunpack.c.l.b16 %v4781
    %v7344 = vunpack.c.h.b16 %v4781
    %v7345 = vunpack.c.l.b16 %v4782
    %v7346 = vunpack.c.h.b16 %v4782
    %v7347 = vunpack.c.l.b16 %v4783
    %v7348 = vunpack.c.h.b16 %v4783
    %v7349 = vunpack.c.l.b16 %v4784
    %v7350 = vunpack.c.h.b16 %v4784
    %v7351 = vunpack.c.l.b16 %v4785
    %v7352 = vunpack.c.h.b16 %v4785
    %v7353 = vunpack.c.l.b16 %v4786
    %v7354 = vunpack.c.h.b16 %v4786
    %v7355 = vunpack.c.l.b16 %v4787
    %v7356 = vunpack.c.h.b16 %v4787
    %v7357 = vunpack.c.l.b16 %v4788
    %v7358 = vunpack.c.h.b16 %v4788
    %v7359 = vunpack.c.l.b16 %v4789
    %v7360 = vunpack.c.h.b16 %v4789
    %v7361 = vunpack.c.l.b16 %v4790
    %v7362 = vunpack.c.h.b16 %v4790
    %v7363 = vunpack.c.l.b16 %v4791
    %v7364 = vunpack.c.h.b16 %v4791
    %v7365 = vunpack.c.l.b16 %v4792
    %v7366 = vunpack.c.h.b16 %v4792
    %v7367 = vunpack.c.l.b16 %v4793
    %v7368 = vunpack.c.h.b16 %v4793
    %v7369 = vunpack.c.l.b16 %v4794
    %v7370 = vunpack.c.h.b16 %v4794
    %v7371 = vunpack.c.l.b16 %v4795
    %v7372 = vunpack.c.h.b16 %v4795
    %v7373 = vunpack.c.l.b16 %v4796
    %v7374 = vunpack.c.h.b16 %v4796
    %v7375 = vunpack.c.l.b16 %v4797
    %v7376 = vunpack.c.h.b16 %v4797
    %v7377 = vunpack.c.l.b16 %v4798
    %v7378 = vunpack.c.h.b16 %v4798
    %v7379 = vunpack.c.l.b16 %v4799
    %v7380 = vunpack.c.h.b16 %v4799
    %v7381 = vunpack.c.l.b16 %v4800
    %v7382 = vunpack.c.h.b16 %v4800
    %v7383 = vunpack.c.l.b16 %v4801
    %v7384 = vunpack.c.h.b16 %v4801
    %v7385 = vunpack.c.l.b16 %v4802
    %v7386 = vunpack.c.h.b16 %v4802
    %v7387 = vunpack.c.l.b16 %v4803
    %v7388 = vunpack.c.h.b16 %v4803
    %v7389 = vunpack.c.l.b16 %v4804
    %v7390 = vunpack.c.h.b16 %v4804
    %v7391 = vunpack.c.l.b16 %v4805
    %v7392 = vunpack.c.h.b16 %v4805
    %v7393 = vunpack.c.l.b16 %v4806
    %v7394 = vunpack.c.h.b16 %v4806
    %v7395 = vunpack.c.l.b16 %v4807
    %v7396 = vunpack.c.h.b16 %v4807
    %v7397 = vunpack.c.l.b16 %v4808
    %v7398 = vunpack.c.h.b16 %v4808
    %v7399 = vunpack.c.l.b16 %v4809
    %v7400 = vunpack.c.h.b16 %v4809
    %v7401 = vunpack.c.l.b16 %v4810
    %v7402 = vunpack.c.h.b16 %v4810
    %v7403 = vunpack.c.l.b16 %v4811
    %v7404 = vunpack.c.h.b16 %v4811
    %v7405 = vunpack.c.l.b16 %v4812
    %v7406 = vunpack.c.h.b16 %v4812
    %v7407 = vunpack.c.l.b16 %v4813
    %v7408 = vunpack.c.h.b16 %v4813
    %v7409 = vunpack.c.l.b16 %v4814
    %v7410 = vunpack.c.h.b16 %v4814
    %v7411 = vunpack.c.l.b16 %v4815
    %v7412 = vunpack.c.h.b16 %v4815
    %v7413 = vunpack.c.l.b16 %v4816
    %v7414 = vunpack.c.h.b16 %v4816
    %v7415 = vunpack.c.l.b16 %v4817
    %v7416 = vunpack.c.h.b16 %v4817
    %v7417 = vunpack.c.l.b16 %v4818
    %v7418 = vunpack.c.h.b16 %v4818
    %v7419 = vunpack.c.l.b16 %v4819
    %v7420 = vunpack.c.h.b16 %v4819
    %v7421 = vunpack.c.l.b16 %v4820
    %v7422 = vunpack.c.h.b16 %v4820
    %v7423 = vunpack.c.l.b16 %v4821
    %v7424 = vunpack.c.h.b16 %v4821
    %v7425 = vunpack.c.l.b16 %v4822
    %v7426 = vunpack.c.h.b16 %v4822
    %v7427 = vunpack.c.l.b16 %v4823
    %v7428 = vunpack.c.h.b16 %v4823
    %v7429 = vunpack.c.l.b16 %v4824
    %v7430 = vunpack.c.h.b16 %v4824
    %v7431 = vunpack.c.l.b16 %v4825
    %v7432 = vunpack.c.h.b16 %v4825
    %v7433 = vunpack.c.l.b16 %v4826
    %v7434 = vunpack.c.h.b16 %v4826
    %v7435 = vunpack.c.l.b16 %v4827
    %v7436 = vunpack.c.h.b16 %v4827
    %v7437 = vunpack.c.l.b16 %v4828
    %v7438 = vunpack.c.h.b16 %v4828
    %v7439 = vunpack.c.l.b16 %v4829
    %v7440 = vunpack.c.h.b16 %v4829
    %v7441 = vunpack.c.l.b16 %v4830
    %v7442 = vunpack.c.h.b16 %v4830
    %v7443 = vunpack.c.l.b16 %v4831
    %v7444 = vunpack.c.h.b16 %v4831
    %v7445 = vunpack.c.l.b16 %v4832
    %v7446 = vunpack.c.h.b16 %v4832
    %v7447 = vunpack.c.l.b16 %v4833
    %v7448 = vunpack.c.h.b16 %v4833
    %v7449 = vunpack.c.l.b16 %v4834
    %v7450 = vunpack.c.h.b16 %v4834
    %v7451 = vunpack.c.l.b16 %v4835
    %v7452 = vunpack.c.h.b16 %v4835
    %v7453 = vunpack.c.l.b16 %v4836
    %v7454 = vunpack.c.h.b16 %v4836
    %v7455 = vunpack.c.l.b16 %v4837
    %v7456 = vunpack.c.h.b16 %v4837
    %v7457 = vunpack.c.l.b16 %v4838
    %v7458 = vunpack.c.h.b16 %v4838
    %v7459 = vunpack.c.l.b16 %v4839
    %v7460 = vunpack.c.h.b16 %v4839
    %v7461 = vunpack.c.l.b16 %v4840
    %v7462 = vunpack.c.h.b16 %v4840
    %v7463 = vunpack.c.l.b16 %v4841
    %v7464 = vunpack.c.h.b16 %v4841
    %v7465 = vunpack.c.l.b16 %v4842
    %v7466 = vunpack.c.h.b16 %v4842
    %v7467 = vunpack.c.l.b16 %v4843
    %v7468 = vunpack.c.h.b16 %v4843
    %v7469 = vunpack.c.l.b16 %v4844
    %v7470 = vunpack.c.h.b16 %v4844
    %v7471 = vunpack.c.l.b16 %v4845
    %v7472 = vunpack.c.h.b16 %v4845
    %v7473 = vunpack.c.l.b16 %v4846
    %v7474 = vunpack.c.h.b16 %v4846
    %v7475 = vunpack.c.l.b16 %v4847
    %v7476 = vunpack.c.h.b16 %v4847
    %v7477 = vunpack.c.l.b16 %v4848
    %v7478 = vunpack.c.h.b16 %v4848
    %v7479 = vunpack.c.l.b16 %v4849
    %v7480 = vunpack.c.h.b16 %v4849
    %v7481 = vunpack.c.l.b16 %v4850
    %v7482 = vunpack.c.h.b16 %v4850
    %v7483 = vunpack.c.l.b16 %v4851
    %v7484 = vunpack.c.h.b16 %v4851
    %v7485 = vunpack.c.l.b16 %v4852
    %v7486 = vunpack.c.h.b16 %v4852
    %v7487 = vunpack.c.l.b16 %v4853
    %v7488 = vunpack.c.h.b16 %v4853
    %v7489 = vunpack.c.l.b16 %v4854
    %v7490 = vunpack.c.h.b16 %v4854
    %v7491 = vunpack.c.l.b16 %v4855
    %v7492 = vunpack.c.h.b16 %v4855
    %v7493 = vunpack.c.l.b16 %v4856
    %v7494 = vunpack.c.h.b16 %v4856
    %v7495 = vunpack.c.l.b16 %v4857
    %v7496 = vunpack.c.h.b16 %v4857
    %v7497 = vunpack.c.l.b16 %v4858
    %v7498 = vunpack.c.h.b16 %v4858
    %v7499 = vunpack.c.l.b16 %v4859
    %v7500 = vunpack.c.h.b16 %v4859
    %v7501 = vunpack.c.l.b16 %v4860
    %v7502 = vunpack.c.h.b16 %v4860
    %v7503 = vunpack.c.l.b16 %v4861
    %v7504 = vunpack.c.h.b16 %v4861
    %v7505 = vunpack.c.l.b16 %v4862
    %v7506 = vunpack.c.h.b16 %v4862
    %v7507 = vunpack.c.l.b16 %v4863
    %v7508 = vunpack.c.h.b16 %v4863
    %v7509 = vunpack.c.l.b16 %v4864
    %v7510 = vunpack.c.h.b16 %v4864
    %v7511 = vunpack.c.l.b16 %v4865
    %v7512 = vunpack.c.h.b16 %v4865
    %v7513 = vunpack.c.l.b16 %v4866
    %v7514 = vunpack.c.h.b16 %v4866
    %v7515 = vunpack.c.l.b16 %v4867
    %v7516 = vunpack.c.h.b16 %v4867
    %v7517 = vunpack.c.l.b16 %v4868
    %v7518 = vunpack.c.h.b16 %v4868
    %v7519 = vunpack.c.l.b16 %v4869
    %v7520 = vunpack.c.h.b16 %v4869
    %v7521 = vunpack.c.l.b16 %v4870
    %v7522 = vunpack.c.h.b16 %v4870
    %v7523 = vunpack.c.l.b16 %v4871
    %v7524 = vunpack.c.h.b16 %v4871
    %v7525 = vunpack.c.l.b16 %v4872
    %v7526 = vunpack.c.h.b16 %v4872
    %v7527 = vunpack.c.l.b16 %v4873
    %v7528 = vunpack.c.h.b16 %v4873
    %v7529 = vunpack.c.l.b16 %v4874
    %v7530 = vunpack.c.h.b16 %v4874
    %v7531 = vunpack.c.l.b16 %v4875
    %v7532 = vunpack.c.h.b16 %v4875
    %v7533 = vunpack.c.l.b16 %v4876
    %v7534 = vunpack.c.h.b16 %v4876
    %v7535 = vunpack.c.l.b16 %v4877
    %v7536 = vunpack.c.h.b16 %v4877
    %v7537 = vunpack.c.l.b16 %v4878
    %v7538 = vunpack.c.h.b16 %v4878
    %v7539 = vunpack.c.l.b16 %v4879
    %v7540 = vunpack.c.h.b16 %v4879
    %v7541 = vunpack.c.l.b16 %v4880
    %v7542 = vunpack.c.h.b16 %v4880
    %v7543 = vunpack.c.l.b16 %v4881
    %v7544 = vunpack.c.h.b16 %v4881
    %v7545 = vunpack.c.l.b16 %v4882
    %v7546 = vunpack.c.h.b16 %v4882
    %v7547 = vunpack.c.l.b16 %v4883
    %v7548 = vunpack.c.h.b16 %v4883
    %v7549 = vunpack.c.l.b16 %v4884
    %v7550 = vunpack.c.h.b16 %v4884
    %v7551 = vunpack.c.l.b16 %v4885
    %v7552 = vunpack.c.h.b16 %v4885
    %v7553 = vunpack.c.l.b16 %v4886
    %v7554 = vunpack.c.h.b16 %v4886
    %v7555 = vunpack.c.l.b16 %v4887
    %v7556 = vunpack.c.h.b16 %v4887
    %v7557 = vunpack.c.l.b16 %v4888
    %v7558 = vunpack.c.h.b16 %v4888
    %v7559 = vunpack.c.l.b16 %v4889
    %v7560 = vunpack.c.h.b16 %v4889
    %v7561 = vunpack.c.l.b16 %v4890
    %v7562 = vunpack.c.h.b16 %v4890
    %v7563 = vunpack.c.l.b16 %v4891
    %v7564 = vunpack.c.h.b16 %v4891
    %v7565 = vunpack.c.l.b16 %v4892
    %v7566 = vunpack.c.h.b16 %v4892
    %v7567 = vunpack.c.l.b16 %v4893
    %v7568 = vunpack.c.h.b16 %v4893
    %v7569 = vunpack.c.l.b16 %v4894
    %v7570 = vunpack.c.h.b16 %v4894
    %v7571 = vunpack.c.l.b16 %v4895
    %v7572 = vunpack.c.h.b16 %v4895
    %v7573 = vunpack.c.l.b16 %v4896
    %v7574 = vunpack.c.h.b16 %v4896
    %v7575 = vunpack.c.l.b16 %v4897
    %v7576 = vunpack.c.h.b16 %v4897
    %v7577 = vunpack.c.l.b16 %v4898
    %v7578 = vunpack.c.h.b16 %v4898
    %v7579 = vunpack.c.l.b16 %v4899
    %v7580 = vunpack.c.h.b16 %v4899
    %v7581 = vunpack.c.l.b16 %v4900
    %v7582 = vunpack.c.h.b16 %v4900
    %v7583 = vunpack.c.l.b16 %v4901
    %v7584 = vunpack.c.h.b16 %v4901
    %v7585 = vunpack.c.l.b16 %v4902
    %v7586 = vunpack.c.h.b16 %v4902
    %v7587 = vunpack.c.l.b16 %v4903
    %v7588 = vunpack.c.h.b16 %v4903
    %v7589 = vunpack.c.l.b16 %v4904
    %v7590 = vunpack.c.h.b16 %v4904
    %v7591 = vunpack.c.l.b16 %v4905
    %v7592 = vunpack.c.h.b16 %v4905
    %v7593 = vunpack.c.l.b16 %v4906
    %v7594 = vunpack.c.h.b16 %v4906
    %v7595 = vunpack.c.l.b16 %v4907
    %v7596 = vunpack.c.h.b16 %v4907
    %v7597 = vunpack.c.l.b16 %v4908
    %v7598 = vunpack.c.h.b16 %v4908
    %v7599 = vunpack.c.l.b16 %v4909
    %v7600 = vunpack.c.h.b16 %v4909
    %v7601 = vunpack.c.l.b16 %v4910
    %v7602 = vunpack.c.h.b16 %v4910
    %v7603 = vunpack.c.l.b16 %v4911
    %v7604 = vunpack.c.h.b16 %v4911
    %v7605 = vunpack.c.l.b16 %v4912
    %v7606 = vunpack.c.h.b16 %v4912
    %v7607 = vunpack.c.l.b16 %v4913
    %v7608 = vunpack.c.h.b16 %v4913
    %v7609 = vunpack.c.l.b16 %v4914
    %v7610 = vunpack.c.h.b16 %v4914
    %v7611 = vunpack.c.l.b16 %v4915
    %v7612 = vunpack.c.h.b16 %v4915
    %v7613 = vunpack.c.l.b16 %v4916
    %v7614 = vunpack.c.h.b16 %v4916
    %v7615 = vunpack.c.l.b16 %v4917
    %v7616 = vunpack.c.h.b16 %v4917
    %v7617 = vunpack.c.l.b16 %v4918
    %v7618 = vunpack.c.h.b16 %v4918
    %v7619 = vunpack.c.l.b16 %v4919
    %v7620 = vunpack.c.h.b16 %v4919
    %v7621 = vunpack.c.l.b16 %v4920
    %v7622 = vunpack.c.h.b16 %v4920
    %v7623 = vunpack.c.l.b16 %v4921
    %v7624 = vunpack.c.h.b16 %v4921
    %v7625 = vunpack.c.l.b16 %v4922
    %v7626 = vunpack.c.h.b16 %v4922
    %v7627 = vunpack.c.l.b16 %v4923
    %v7628 = vunpack.c.h.b16 %v4923
    %v7629 = vunpack.c.l.b16 %v4924
    %v7630 = vunpack.c.h.b16 %v4924
    %v7631 = vunpack.c.l.b16 %v4925
    %v7632 = vunpack.c.h.b16 %v4925
    %v7633 = vunpack.c.l.b16 %v4926
    %v7634 = vunpack.c.h.b16 %v4926
    %v7635 = vunpack.c.l.b16 %v4927
    %v7636 = vunpack.c.h.b16 %v4927
    %v7637 = vunpack.c.l.b16 %v4928
    %v7638 = vunpack.c.h.b16 %v4928
    %v7639 = vunpack.c.l.b16 %v4929
    %v7640 = vunpack.c.h.b16 %v4929
    %v7641 = vunpack.c.l.b16 %v4930
    %v7642 = vunpack.c.h.b16 %v4930
    %v7643 = vunpack.c.l.b16 %v4931
    %v7644 = vunpack.c.h.b16 %v4931
    %v7645 = vunpack.c.l.b16 %v4932
    %v7646 = vunpack.c.h.b16 %v4932
    %v7647 = vunpack.c.l.b16 %v4933
    %v7648 = vunpack.c.h.b16 %v4933
    %v7649 = vunpack.c.l.b16 %v4934
    %v7650 = vunpack.c.h.b16 %v4934
    %v7651 = vunpack.c.l.b16 %v4935
    %v7652 = vunpack.c.h.b16 %v4935
    %v7653 = vunpack.c.l.b16 %v4936
    %v7654 = vunpack.c.h.b16 %v4936
    %v7655 = vunpack.c.l.b16 %v4937
    %v7656 = vunpack.c.h.b16 %v4937
    %v7657 = vunpack.c.l.b16 %v4938
    %v7658 = vunpack.c.h.b16 %v4938
    %v7659 = vunpack.c.l.b16 %v4939
    %v7660 = vunpack.c.h.b16 %v4939
    %v7661 = vunpack.c.l.b16 %v4940
    %v7662 = vunpack.c.h.b16 %v4940
    %v7663 = vunpack.c.l.b16 %v4941
    %v7664 = vunpack.c.h.b16 %v4941
    %v7665 = vunpack.c.l.b16 %v4942
    %v7666 = vunpack.c.h.b16 %v4942
    %v7667 = vunpack.c.l.b16 %v4943
    %v7668 = vunpack.c.h.b16 %v4943
    %v7669 = vunpack.c.l.b16 %v4944
    %v7670 = vunpack.c.h.b16 %v4944
    %v7671 = vunpack.c.l.b16 %v4945
    %v7672 = vunpack.c.h.b16 %v4945
    %v7673 = vunpack.c.l.b16 %v4946
    %v7674 = vunpack.c.h.b16 %v4946
    %v7675 = vunpack.c.l.b16 %v4947
    %v7676 = vunpack.c.h.b16 %v4947
    %v7677 = vunpack.c.l.b16 %v4948
    %v7678 = vunpack.c.h.b16 %v4948
    %v7679 = vunpack.c.l.b16 %v4949
    %v7680 = vunpack.c.h.b16 %v4949
    %v7681 = vunpack.c.l.b16 %v4950
    %v7682 = vunpack.c.h.b16 %v4950
    %v7683 = vunpack.c.l.b16 %v4951
    %v7684 = vunpack.c.h.b16 %v4951
    %v7685 = vunpack.c.l.b16 %v4952
    %v7686 = vunpack.c.h.b16 %v4952
    %v7687 = vunpack.c.l.b16 %v4953
    %v7688 = vunpack.c.h.b16 %v4953
    %v7689 = vunpack.c.l.b16 %v4954
    %v7690 = vunpack.c.h.b16 %v4954
    %v7691 = vunpack.c.l.b16 %v4955
    %v7692 = vunpack.c.h.b16 %v4955
    %v7693 = vunpack.c.l.b16 %v4956
    %v7694 = vunpack.c.h.b16 %v4956
    %v7695 = vunpack.c.l.b16 %v4957
    %v7696 = vunpack.c.h.b16 %v4957
    %v7697 = vunpack.c.l.b16 %v4958
    %v7698 = vunpack.c.h.b16 %v4958
    %v7699 = vunpack.c.l.b16 %v4959
    %v7700 = vunpack.c.h.b16 %v4959
    %v7701 = vunpack.c.l.b16 %v4960
    %v7702 = vunpack.c.h.b16 %v4960
    %v7703 = vunpack.c.l.b16 %v4961
    %v7704 = vunpack.c.h.b16 %v4961
    %v7705 = vunpack.c.l.b16 %v4962
    %v7706 = vunpack.c.h.b16 %v4962
    %v7707 = vunpack.c.l.b16 %v4963
    %v7708 = vunpack.c.h.b16 %v4963
    %v7709 = vunpack.c.l.b16 %v4964
    %v7710 = vunpack.c.h.b16 %v4964
    %v7711 = vunpack.c.l.b16 %v4965
    %v7712 = vunpack.c.h.b16 %v4965
    %v7713 = vunpack.c.l.b16 %v4966
    %v7714 = vunpack.c.h.b16 %v4966
    %v7715 = vunpack.c.l.b16 %v4967
    %v7716 = vunpack.c.h.b16 %v4967
    %v7717 = vunpack.c.l.b16 %v4968
    %v7718 = vunpack.c.h.b16 %v4968
    %v7719 = vunpack.c.l.b16 %v4969
    %v7720 = vunpack.c.h.b16 %v4969
    %v7721 = vunpack.c.l.b16 %v4970
    %v7722 = vunpack.c.h.b16 %v4970
    %v7723 = vunpack.c.l.b16 %v4971
    %v7724 = vunpack.c.h.b16 %v4971
    %v7725 = vunpack.c.l.b16 %v4972
    %v7726 = vunpack.c.h.b16 %v4972
    %v7727 = vunpack.c.l.b16 %v4973
    %v7728 = vunpack.c.h.b16 %v4973
    %v7729 = vunpack.c.l.b16 %v4974
    %v7730 = vunpack.c.h.b16 %v4974
    %v7731 = vunpack.c.l.b16 %v4975
    %v7732 = vunpack.c.h.b16 %v4975
    %v7733 = vunpack.c.l.b16 %v4976
    %v7734 = vunpack.c.h.b16 %v4976
    %v7735 = vunpack.c.l.b16 %v4977
    %v7736 = vunpack.c.h.b16 %v4977
    %v7737 = vunpack.c.l.b16 %v4978
    %v7738 = vunpack.c.h.b16 %v4978
    %v7739 = vunpack.c.l.b16 %v4979
    %v7740 = vunpack.c.h.b16 %v4979
    %v7741 = vunpack.c.l.b16 %v4980
    %v7742 = vunpack.c.h.b16 %v4980
    %v7743 = vunpack.c.l.b16 %v4981
    %v7744 = vunpack.c.h.b16 %v4981
    %v7745 = vunpack.c.l.b16 %v4982
    %v7746 = vunpack.c.h.b16 %v4982
    %v7747 = vunpack.c.l.b16 %v4983
    %v7748 = vunpack.c.h.b16 %v4983
    %v7749 = vunpack.c.l.b16 %v4984
    %v7750 = vunpack.c.h.b16 %v4984
    %v7751 = vunpack.c.l.b16 %v4985
    %v7752 = vunpack.c.h.b16 %v4985
    %v7753 = vunpack.c.l.b16 %v4986
    %v7754 = vunpack.c.h.b16 %v4986
    %v7755 = vunpack.c.l.b16 %v4987
    %v7756 = vunpack.c.h.b16 %v4987
    %v7757 = vunpack.c.l.b16 %v4988
    %v7758 = vunpack.c.h.b16 %v4988
    %v7759 = vunpack.c.l.b16 %v4989
    %v7760 = vunpack.c.h.b16 %v4989
    %v7761 = vunpack.c.l.b16 %v4990
    %v7762 = vunpack.c.h.b16 %v4990
    %v7763 = vunpack.c.l.b16 %v4991
    %v7764 = vunpack.c.h.b16 %v4991
    %v7765 = vunpack.c.l.b16 %v4992
    %v7766 = vunpack.c.h.b16 %v4992
    %v7767 = vunpack.c.l.b16 %v4993
    %v7768 = vunpack.c.h.b16 %v4993
    %v7769 = vunpack.c.l.b16 %v4994
    %v7770 = vunpack.c.h.b16 %v4994
    %v7771 = vunpack.c.l.b16 %v4995
    %v7772 = vunpack.c.h.b16 %v4995
    %v7773 = vunpack.c.l.b16 %v4996
    %v7774 = vunpack.c.h.b16 %v4996
    %v7775 = vunpack.c.l.b16 %v4997
    %v7776 = vunpack.c.h.b16 %v4997
    %v7777 = vunpack.c.l.b16 %v4998
    %v7778 = vunpack.c.h.b16 %v4998
    %v7779 = vunpack.c.l.b16 %v4999
    %v7780 = vunpack.c.h.b16 %v4999
    %v7781 = vunpack.c.l.b16 %v5000
    %v7782 = vunpack.c.h.b16 %v5000
    %v7783 = vunpack.c.l.b16 %v5001
    %v7784 = vunpack.c.h.b16 %v5001
    %v7785 = vunpack.c.l.b16 %v5002
    %v7786 = vunpack.c.h.b16 %v5002
    %v7787 = vunpack.c.l.b16 %v5003
    %v7788 = vunpack.c.h.b16 %v5003
    %v7789 = vunpack.c.l.b16 %v5004
    %v7790 = vunpack.c.h.b16 %v5004
    %v7791 = vunpack.c.l.b16 %v5005
    %v7792 = vunpack.c.h.b16 %v5005
    %v7793 = vunpack.c.l.b16 %v5006
    %v7794 = vunpack.c.h.b16 %v5006
    %v7795 = vunpack.c.l.b16 %v5007
    %v7796 = vunpack.c.h.b16 %v5007
    %v7797 = vunpack.c.l.b16 %v5008
    %v7798 = vunpack.c.h.b16 %v5008
    %v7799 = vunpack.c.l.b16 %v5009
    %v7800 = vunpack.c.h.b16 %v5009
    %v7801 = vunpack.c.l.b16 %v5010
    %v7802 = vunpack.c.h.b16 %v5010
    %v7803 = vunpack.c.l.b16 %v5011
    %v7804 = vunpack.c.h.b16 %v5011
    %v7805 = vunpack.c.l.b16 %v5012
    %v7806 = vunpack.c.h.b16 %v5012
    %v7807 = vunpack.c.l.b16 %v5013
    %v7808 = vunpack.c.h.b16 %v5013
    %v7809 = vunpack.c.l.b16 %v5014
    %v7810 = vunpack.c.h.b16 %v5014
    %v7811 = vunpack.c.l.b16 %v5015
    %v7812 = vunpack.c.h.b16 %v5015
    %v7813 = vunpack.c.l.b16 %v5016
    %v7814 = vunpack.c.h.b16 %v5016
    %v7815 = vunpack.c.l.b16 %v5017
    %v7816 = vunpack.c.h.b16 %v5017
    %v7817 = vunpack.c.l.b16 %v5018
    %v7818 = vunpack.c.h.b16 %v5018
    %v7819 = vunpack.c.l.b16 %v5019
    %v7820 = vunpack.c.h.b16 %v5019
    %v7821 = vunpack.c.l.b16 %v5020
    %v7822 = vunpack.c.h.b16 %v5020
    %v7823 = vunpack.c.l.b16 %v5021
    %v7824 = vunpack.c.h.b16 %v5021
    %v7825 = vunpack.c.l.b16 %v5022
    %v7826 = vunpack.c.h.b16 %v5022
    %v7827 = vunpack.c.l.b16 %v5023
    %v7828 = vunpack.c.h.b16 %v5023
    %v7829 = vunpack.c.l.b16 %v5024
    %v7830 = vunpack.c.h.b16 %v5024
    %v7831 = vunpack.c.l.b16 %v5025
    %v7832 = vunpack.c.h.b16 %v5025
    %v7833 = vunpack.c.l.b16 %v5026
    %v7834 = vunpack.c.h.b16 %v5026
    %v7835 = vunpack.c.l.b16 %v5027
    %v7836 = vunpack.c.h.b16 %v5027
    %v7837 = vunpack.c.l.b16 %v5028
    %v7838 = vunpack.c.h.b16 %v5028
    %v7839 = vunpack.c.l.b16 %v5029
    %v7840 = vunpack.c.h.b16 %v5029
    %v7841 = vunpack.c.l.b16 %v5030
    %v7842 = vunpack.c.h.b16 %v5030
    %v7843 = vunpack.c.l.b16 %v5031
    %v7844 = vunpack.c.h.b16 %v5031
    %v7845 = vunpack.c.l.b16 %v5032
    %v7846 = vunpack.c.h.b16 %v5032
    %v7847 = vunpack.c.l.b16 %v5033
    %v7848 = vunpack.c.h.b16 %v5033
    %v7849 = vunpack.c.l.b16 %v5034
    %v7850 = vunpack.c.h.b16 %v5034
    %v7851 = vunpack.c.l.b16 %v5035
    %v7852 = vunpack.c.h.b16 %v5035
    %v7853 = vunpack.c.l.b16 %v5036
    %v7854 = vunpack.c.h.b16 %v5036
    %v7855 = vunpack.c.l.b16 %v5037
    %v7856 = vunpack.c.h.b16 %v5037
    %v7857 = vunpack.c.l.b16 %v5038
    %v7858 = vunpack.c.h.b16 %v5038
    %v7859 = vunpack.c.l.b16 %v5039
    %v7860 = vunpack.c.h.b16 %v5039
    %v7861 = vunpack.c.l.b16 %v5040
    %v7862 = vunpack.c.h.b16 %v5040
    %v7863 = vunpack.c.l.b16 %v5041
    %v7864 = vunpack.c.h.b16 %v5041
    %v7865 = vunpack.c.l.b16 %v5042
    %v7866 = vunpack.c.h.b16 %v5042
    %v7867 = vunpack.c.l.b16 %v5043
    %v7868 = vunpack.c.h.b16 %v5043
    %v7869 = vunpack.c.l.b16 %v5044
    %v7870 = vunpack.c.h.b16 %v5044
    %v7871 = vunpack.c.l.b16 %v5045
    %v7872 = vunpack.c.h.b16 %v5045
    %v7873 = vunpack.c.l.b16 %v5046
    %v7874 = vunpack.c.h.b16 %v5046
    %v7875 = vunpack.c.l.b16 %v5047
    %v7876 = vunpack.c.h.b16 %v5047
    %v7877 = vunpack.c.l.b16 %v5048
    %v7878 = vunpack.c.h.b16 %v5048
    %v7879 = vunpack.c.l.b16 %v5049
    %v7880 = vunpack.c.h.b16 %v5049
    %v7881 = vunpack.c.l.b16 %v5050
    %v7882 = vunpack.c.h.b16 %v5050
    %v7883 = vunpack.c.l.b16 %v5051
    %v7884 = vunpack.c.h.b16 %v5051
    %v7885 = vunpack.c.l.b16 %v5052
    %v7886 = vunpack.c.h.b16 %v5052
    %v7887 = vunpack.c.l.b16 %v5053
    %v7888 = vunpack.c.h.b16 %v5053
    %v7889 = vunpack.c.l.b16 %v5054
    %v7890 = vunpack.c.h.b16 %v5054
    %v7891 = vunpack.c.l.b16 %v5055
    %v7892 = vunpack.c.h.b16 %v5055
    %v7893 = vunpack.c.l.b16 %v5056
    %v7894 = vunpack.c.h.b16 %v5056
    %v7895 = vunpack.c.l.b16 %v5057
    %v7896 = vunpack.c.h.b16 %v5057
    %v7897 = vunpack.c.l.b16 %v5058
    %v7898 = vunpack.c.h.b16 %v5058
    %v7899 = vunpack.c.l.b16 %v5059
    %v7900 = vunpack.c.h.b16 %v5059
    %v7901 = vunpack.c.l.b16 %v5060
    %v7902 = vunpack.c.h.b16 %v5060
    %v7903 = vunpack.c.l.b16 %v5061
    %v7904 = vunpack.c.h.b16 %v5061
    %v7905 = vunpack.c.l.b16 %v5062
    %v7906 = vunpack.c.h.b16 %v5062
    %v7907 = vunpack.c.l.b16 %v5063
    %v7908 = vunpack.c.h.b16 %v5063
    %v7909 = vunpack.c.l.b16 %v5064
    %v7910 = vunpack.c.h.b16 %v5064
    %v7911 = vunpack.c.l.b16 %v5065
    %v7912 = vunpack.c.h.b16 %v5065
    %v7913 = vunpack.c.l.b16 %v5066
    %v7914 = vunpack.c.h.b16 %v5066
    %v7915 = vunpack.c.l.b16 %v5067
    %v7916 = vunpack.c.h.b16 %v5067
    %v7917 = vunpack.c.l.b16 %v5068
    %v7918 = vunpack.c.h.b16 %v5068
    %v7919 = vunpack.c.l.b16 %v5069
    %v7920 = vunpack.c.h.b16 %v5069
    %v7921 = vunpack.c.l.b16 %v5070
    %v7922 = vunpack.c.h.b16 %v5070
    %v7923 = vunpack.c.l.b16 %v5071
    %v7924 = vunpack.c.h.b16 %v5071
    %v7925 = vunpack.c.l.b16 %v5072
    %v7926 = vunpack.c.h.b16 %v5072
    %v7927 = vunpack.c.l.b16 %v5073
    %v7928 = vunpack.c.h.b16 %v5073
    %v7929 = vunpack.c.l.b16 %v5074
    %v7930 = vunpack.c.h.b16 %v5074
    %v7931 = vunpack.c.l.b16 %v5075
    %v7932 = vunpack.c.h.b16 %v5075
    %v7933 = vunpack.c.l.b16 %v5076
    %v7934 = vunpack.c.h.b16 %v5076
    %v7935 = vunpack.c.l.b16 %v5077
    %v7936 = vunpack.c.h.b16 %v5077
    %v7937 = vunpack.c.l.b16 %v5078
    %v7938 = vunpack.c.h.b16 %v5078
    %v7939 = vunpack.c.l.b16 %v5079
    %v7940 = vunpack.c.h.b16 %v5079
    %v7941 = vunpack.c.l.b16 %v5080
    %v7942 = vunpack.c.h.b16 %v5080
    %v7943 = vunpack.c.l.b16 %v5081
    %v7944 = vunpack.c.h.b16 %v5081
    %v7945 = vunpack.c.l.b16 %v5082
    %v7946 = vunpack.c.h.b16 %v5082
    %v7947 = vunpack.c.l.b16 %v5083
    %v7948 = vunpack.c.h.b16 %v5083
    %v7949 = vunpack.c.l.b16 %v5084
    %v7950 = vunpack.c.h.b16 %v5084
    %v7951 = vunpack.c.l.b16 %v5085
    %v7952 = vunpack.c.h.b16 %v5085
    %v7953 = vunpack.c.l.b16 %v5086
    %v7954 = vunpack.c.h.b16 %v5086
    %v7955 = vunpack.c.l.b16 %v5087
    %v7956 = vunpack.c.h.b16 %v5087
    %v7957 = vunpack.c.l.b16 %v5088
    %v7958 = vunpack.c.h.b16 %v5088
    %v7959 = vunpack.c.l.b16 %v5089
    %v7960 = vunpack.c.h.b16 %v5089
    %v7961 = vunpack.c.l.b16 %v5090
    %v7962 = vunpack.c.h.b16 %v5090
    %v7963 = vunpack.c.l.b16 %v5091
    %v7964 = vunpack.c.h.b16 %v5091
    %v7965 = vunpack.c.l.b16 %v5092
    %v7966 = vunpack.c.h.b16 %v5092
    %v7967 = vunpack.c.l.b16 %v5093
    %v7968 = vunpack.c.h.b16 %v5093
    %v7969 = vunpack.c.l.b16 %v5094
    %v7970 = vunpack.c.h.b16 %v5094
    %v7971 = vunpack.c.l.b16 %v5095
    %v7972 = vunpack.c.h.b16 %v5095
    %v7973 = vunpack.c.l.b16 %v5096
    %v7974 = vunpack.c.h.b16 %v5096
    %v7975 = vunpack.c.l.b16 %v5097
    %v7976 = vunpack.c.h.b16 %v5097
    %v7977 = vunpack.c.l.b16 %v5098
    %v7978 = vunpack.c.h.b16 %v5098
    %v7979 = vunpack.c.l.b16 %v5099
    %v7980 = vunpack.c.h.b16 %v5099
    %v7981 = vunpack.c.l.b16 %v5100
    %v7982 = vunpack.c.h.b16 %v5100
    %v7983 = vunpack.c.l.b16 %v5101
    %v7984 = vunpack.c.h.b16 %v5101
    %v7985 = vunpack.c.l.b16 %v5102
    %v7986 = vunpack.c.h.b16 %v5102
    %v7987 = vunpack.c.l.b16 %v5103
    %v7988 = vunpack.c.h.b16 %v5103
    %v7989 = vunpack.c.l.b16 %v5104
    %v7990 = vunpack.c.h.b16 %v5104
    %v7991 = vunpack.c.l.b16 %v5105
    %v7992 = vunpack.c.h.b16 %v5105
    %v7993 = vunpack.c.l.b16 %v5106
    %v7994 = vunpack.c.h.b16 %v5106
    %v7995 = vunpack.c.l.b16 %v5107
    %v7996 = vunpack.c.h.b16 %v5107
    %v7997 = vunpack.c.l.b16 %v5108
    %v7998 = vunpack.c.h.b16 %v5108
    %v7999 = vunpack.c.l.b16 %v5109
    %v8000 = vunpack.c.h.b16 %v5109
    %v8001 = vunpack.c.l.b16 %v5110
    %v8002 = vunpack.c.h.b16 %v5110
    %v8003 = vunpack.c.l.b16 %v5111
    %v8004 = vunpack.c.h.b16 %v5111
    %v8005 = vunpack.c.l.b16 %v5112
    %v8006 = vunpack.c.h.b16 %v5112
    %v8007 = vunpack.c.l.b16 %v5113
    %v8008 = vunpack.c.h.b16 %v5113
    %v8009 = vunpack.c.l.b16 %v5114
    %v8010 = vunpack.c.h.b16 %v5114
    %v8011 = vunpack.c.l.b16 %v5115
    %v8012 = vunpack.c.h.b16 %v5115
    %v8013 = vunpack.c.l.b16 %v5116
    %v8014 = vunpack.c.h.b16 %v5116
    %v8015 = vunpack.c.l.b16 %v5117
    %v8016 = vunpack.c.h.b16 %v5117
    %v8017 = vunpack.c.l.b16 %v5118
    %v8018 = vunpack.c.h.b16 %v5118
    %v8019 = vunpack.c.l.b16 %v5119
    %v8020 = vunpack.c.h.b16 %v5119
    %v8021 = vunpack.c.l.b16 %v5120
    %v8022 = vunpack.c.h.b16 %v5120
    %v8023 = vunpack.c.l.b16 %v5121
    %v8024 = vunpack.c.h.b16 %v5121
    %v8025 = vunpack.c.l.b16 %v5122
    %v8026 = vunpack.c.h.b16 %v5122
    %v8027 = vunpack.c.l.b16 %v5123
    %v8028 = vunpack.c.h.b16 %v5123
    %v8029 = vunpack.c.l.b16 %v5124
    %v8030 = vunpack.c.h.b16 %v5124
    %v8031 = vunpack.c.l.b16 %v5125
    %v8032 = vunpack.c.h.b16 %v5125
    %v8033 = vunpack.c.l.b16 %v5126
    %v8034 = vunpack.c.h.b16 %v5126
    %v8035 = vunpack.c.l.b16 %v5127
    %v8036 = vunpack.c.h.b16 %v5127
    %v8037 = vunpack.c.l.b16 %v5128
    %v8038 = vunpack.c.h.b16 %v5128
    %v8039 = vunpack.c.l.b16 %v5129
    %v8040 = vunpack.c.h.b16 %v5129
    %v8041 = vunpack.c.l.b16 %v5130
    %v8042 = vunpack.c.h.b16 %v5130
    %v8043 = vunpack.c.l.b16 %v5131
    %v8044 = vunpack.c.h.b16 %v5131
    %v8045 = vunpack.c.l.b16 %v5132
    %v8046 = vunpack.c.h.b16 %v5132
    %v8047 = vunpack.c.l.b16 %v5133
    %v8048 = vunpack.c.h.b16 %v5133
    %v8049 = vunpack.c.l.b16 %v5134
    %v8050 = vunpack.c.h.b16 %v5134
    %v8051 = vunpack.c.l.b16 %v5135
    %v8052 = vunpack.c.h.b16 %v5135
    %v8053 = vunpack.c.l.b16 %v5136
    %v8054 = vunpack.c.h.b16 %v5136
    %v8055 = vunpack.c.l.b16 %v5137
    %v8056 = vunpack.c.h.b16 %v5137
    %v8057 = vunpack.c.l.b16 %v5138
    %v8058 = vunpack.c.h.b16 %v5138
    %v8059 = vunpack.c.l.b16 %v5139
    %v8060 = vunpack.c.h.b16 %v5139
    %v8061 = vunpack.c.l.b16 %v5140
    %v8062 = vunpack.c.h.b16 %v5140
    %v8063 = vunpack.c.l.b16 %v5141
    %v8064 = vunpack.c.h.b16 %v5141
    %v8065 = vunpack.c.l.b16 %v5142
    %v8066 = vunpack.c.h.b16 %v5142
    %v8067 = vunpack.c.l.b16 %v5143
    %v8068 = vunpack.c.h.b16 %v5143
    %v8069 = vunpack.c.l.b16 %v5144
    %v8070 = vunpack.c.h.b16 %v5144
    %v8071 = vunpack.c.l.b16 %v5145
    %v8072 = vunpack.c.h.b16 %v5145
    %v8073 = vunpack.c.l.b16 %v5146
    %v8074 = vunpack.c.h.b16 %v5146
    %v8075 = vunpack.c.l.b16 %v5147
    %v8076 = vunpack.c.h.b16 %v5147
    %v8077 = vunpack.c.l.b16 %v5148
    %v8078 = vunpack.c.h.b16 %v5148
    %v8079 = vunpack.c.l.b16 %v5149
    %v8080 = vunpack.c.h.b16 %v5149
    %v8081 = vunpack.c.l.b16 %v5150
    %v8082 = vunpack.c.h.b16 %v5150
    %v8083 = vunpack.c.l.b16 %v5151
    %v8084 = vunpack.c.h.b16 %v5151
    %v8085 = vunpack.c.l.b16 %v5152
    %v8086 = vunpack.c.h.b16 %v5152
    %v8087 = vunpack.c.l.b16 %v5153
    %v8088 = vunpack.c.h.b16 %v5153
    %v8089 = vunpack.c.l.b16 %v5154
    %v8090 = vunpack.c.h.b16 %v5154
    %v8091 = vunpack.c.l.b16 %v5155
    %v8092 = vunpack.c.h.b16 %v5155
    %v8093 = vunpack.c.l.b16 %v5156
    %v8094 = vunpack.c.h.b16 %v5156
    %v8095 = vunpack.c.l.b16 %v5157
    %v8096 = vunpack.c.h.b16 %v5157
    %v8097 = vunpack.c.l.b16 %v5158
    %v8098 = vunpack.c.h.b16 %v5158
    %v8099 = vunpack.c.l.b16 %v5159
    %v8100 = vunpack.c.h.b16 %v5159
    %v8101 = vunpack.c.l.b16 %v5160
    %v8102 = vunpack.c.h.b16 %v5160
    %v8103 = vunpack.c.l.b16 %v5161
    %v8104 = vunpack.c.h.b16 %v5161
    %v8105 = vunpack.c.l.b16 %v5162
    %v8106 = vunpack.c.h.b16 %v5162
    %v8107 = vunpack.c.l.b16 %v5163
    %v8108 = vunpack.c.h.b16 %v5163
    %v8109 = vunpack.c.l.b16 %v5164
    %v8110 = vunpack.c.h.b16 %v5164
    %v8111 = vunpack.c.l.b16 %v5165
    %v8112 = vunpack.c.h.b16 %v5165
    %v8113 = vunpack.c.l.b16 %v5166
    %v8114 = vunpack.c.h.b16 %v5166
    %v8115 = vunpack.c.l.b16 %v5167
    %v8116 = vunpack.c.h.b16 %v5167
    %v8117 = vunpack.c.l.b16 %v5168
    %v8118 = vunpack.c.h.b16 %v5168
    %v8119 = vunpack.c.l.b16 %v5169
    %v8120 = vunpack.c.h.b16 %v5169
    %v8121 = vunpack.c.l.b16 %v5170
    %v8122 = vunpack.c.h.b16 %v5170
    %v8123 = vunpack.c.l.b16 %v5171
    %v8124 = vunpack.c.h.b16 %v5171
    %v8125 = vunpack.c.l.b16 %v5172
    %v8126 = vunpack.c.h.b16 %v5172
    %v8127 = vunpack.c.l.b16 %v5173
    %v8128 = vunpack.c.h.b16 %v5173
    %v8129 = vunpack.c.l.b16 %v5174
    %v8130 = vunpack.c.h.b16 %v5174
    %v8131 = vunpack.c.l.b16 %v5175
    %v8132 = vunpack.c.h.b16 %v5175
    %v8133 = vunpack.c.l.b16 %v5176
    %v8134 = vunpack.c.h.b16 %v5176
    %v8135 = vunpack.c.l.b16 %v5177
    %v8136 = vunpack.c.h.b16 %v5177
    %v8137 = vunpack.c.l.b16 %v5178
    %v8138 = vunpack.c.h.b16 %v5178
    %v8139 = vunpack.c.l.b16 %v5179
    %v8140 = vunpack.c.h.b16 %v5179
    %v8141 = vunpack.c.l.b16 %v5180
    %v8142 = vunpack.c.h.b16 %v5180
    %v8143 = vunpack.c.l.b16 %v5181
    %v8144 = vunpack.c.h.b16 %v5181
    %v8145 = vunpack.c.l.b16 %v5182
    %v8146 = vunpack.c.h.b16 %v5182
    %v8147 = vunpack.c.l.b16 %v5183
    %v8148 = vunpack.c.h.b16 %v5183
    %v8149 = vunpack.c.l.b16 %v5184
    %v8150 = vunpack.c.h.b16 %v5184
    %v8151 = vunpack.c.l.b16 %v5185
    %v8152 = vunpack.c.h.b16 %v5185
    %v8153 = vunpack.c.l.b16 %v5186
    %v8154 = vunpack.c.h.b16 %v5186
    %v8155 = vunpack.c.l.b16 %v5187
    %v8156 = vunpack.c.h.b16 %v5187
    %v8157 = vunpack.c.l.b16 %v5188
    %v8158 = vunpack.c.h.b16 %v5188
    %v8159 = vunpack.c.l.b16 %v5189
    %v8160 = vunpack.c.h.b16 %v5189
    %v8161 = vunpack.c.l.b16 %v5190
    %v8162 = vunpack.c.h.b16 %v5190
    %v8163 = vunpack.c.l.b16 %v5191
    %v8164 = vunpack.c.h.b16 %v5191
    %v8165 = vunpack.c.l.b16 %v5192
    %v8166 = vunpack.c.h.b16 %v5192
    %v8167 = vunpack.c.l.b16 %v5193
    %v8168 = vunpack.c.h.b16 %v5193
    %v8169 = vunpack.c.l.b16 %v5194
    %v8170 = vunpack.c.h.b16 %v5194
    %v8171 = vunpack.c.l.b16 %v5195
    %v8172 = vunpack.c.h.b16 %v5195
    %v8173 = vunpack.c.l.b16 %v5196
    %v8174 = vunpack.c.h.b16 %v5196
    %v8175 = vunpack.c.l.b16 %v5197
    %v8176 = vunpack.c.h.b16 %v5197
    %v8177 = vunpack.c.l.b16 %v5198
    %v8178 = vunpack.c.h.b16 %v5198
    %v8179 = vunpack.c.l.b16 %v5199
    %v8180 = vunpack.c.h.b16 %v5199
    %v8181 = vunpack.c.l.b16 %v5200
    %v8182 = vunpack.c.h.b16 %v5200
    %v8183 = vunpack.c.l.b16 %v5201
    %v8184 = vunpack.c.h.b16 %v5201
    %v8185 = vunpack.c.l.b16 %v5202
    %v8186 = vunpack.c.h.b16 %v5202
    %v8187 = vunpack.c.l.b16 %v5203
    %v8188 = vunpack.c.h.b16 %v5203
    %v8189 = vunpack.c.l.b16 %v5204
    %v8190 = vunpack.c.h.b16 %v5204
    %v8191 = vunpack.c.l.b16 %v5205
    %v8192 = vunpack.c.h.b16 %v5205
    %v8193 = vunpack.c.l.b16 %v5206
    %v8194 = vunpack.c.h.b16 %v5206
    %v8195 = vunpack.c.l.b16 %v5207
    %v8196 = vunpack.c.h.b16 %v5207
    %v8197 = vunpack.c.l.b16 %v5208
    %v8198 = vunpack.c.h.b16 %v5208
    %v8199 = vunpack.c.l.b16 %v5209
    %v8200 = vunpack.c.h.b16 %v5209
    %v8201 = vunpack.c.l.b16 %v5210
    %v8202 = vunpack.c.h.b16 %v5210
    %v8203 = vunpack.c.l.b16 %v5211
    %v8204 = vunpack.c.h.b16 %v5211
    %v8205 = vunpack.c.l.b16 %v5212
    %v8206 = vunpack.c.h.b16 %v5212
    %v8207 = vunpack.c.l.b16 %v5213
    %v8208 = vunpack.c.h.b16 %v5213
    %v8209 = vunpack.c.l.b16 %v5214
    %v8210 = vunpack.c.h.b16 %v5214
    %v8211 = vunpack.c.l.b16 %v5215
    %v8212 = vunpack.c.h.b16 %v5215
    %v8213 = vunpack.c.l.b16 %v5216
    %v8214 = vunpack.c.h.b16 %v5216
    %v8215 = vunpack.c.l.b16 %v5217
    %v8216 = vunpack.c.h.b16 %v5217
    %v8217 = vunpack.c.l.b16 %v5218
    %v8218 = vunpack.c.h.b16 %v5218
    %v8219 = vunpack.c.l.b16 %v5219
    %v8220 = vunpack.c.h.b16 %v5219
    %v8221 = vunpack.c.l.b16 %v5220
    %v8222 = vunpack.c.h.b16 %v5220
    %v8223 = vunpack.c.l.b16 %v5221
    %v8224 = vunpack.c.h.b16 %v5221
    %v8225 = vunpack.c.l.b16 %v5222
    %v8226 = vunpack.c.h.b16 %v5222
    %v8227 = vunpack.c.l.b16 %v5223
    %v8228 = vunpack.c.h.b16 %v5223
    %v8229 = vunpack.c.l.b16 %v5224
    %v8230 = vunpack.c.h.b16 %v5224
    %v8231 = vunpack.c.l.b16 %v5225
    %v8232 = vunpack.c.h.b16 %v5225
    %v8233 = vunpack.c.l.b16 %v5226
    %v8234 = vunpack.c.h.b16 %v5226
    %v8235 = vunpack.c.l.b16 %v5227
    %v8236 = vunpack.c.h.b16 %v5227
    %v8237 = vunpack.c.l.b16 %v5228
    %v8238 = vunpack.c.h.b16 %v5228
    %v8239 = vunpack.c.l.b16 %v5229
    %v8240 = vunpack.c.h.b16 %v5229
    %v8241 = vunpack.c.l.b16 %v5230
    %v8242 = vunpack.c.h.b16 %v5230
    %v8243 = vunpack.c.l.b16 %v5231
    %v8244 = vunpack.c.h.b16 %v5231
    %v8245 = vunpack.c.l.b16 %v5232
    %v8246 = vunpack.c.h.b16 %v5232
    %v8247 = vunpack.c.l.b16 %v5233
    %v8248 = vunpack.c.h.b16 %v5233
    %v8249 = vunpack.c.l.b16 %v5234
    %v8250 = vunpack.c.h.b16 %v5234
    %v8251 = vunpack.c.l.b16 %v5235
    %v8252 = vunpack.c.h.b16 %v5235
    %v8253 = vunpack.c.l.b16 %v5236
    %v8254 = vunpack.c.h.b16 %v5236
    %v8255 = vunpack.c.l.b16 %v5237
    %v8256 = vunpack.c.h.b16 %v5237
    %v8257 = vunpack.c.l.b16 %v5238
    %v8258 = vunpack.c.h.b16 %v5238
    %v8259 = vunpack.c.l.b16 %v5239
    %v8260 = vunpack.c.h.b16 %v5239
    %v8261 = vunpack.c.l.b16 %v5240
    %v8262 = vunpack.c.h.b16 %v5240
    %v8263 = vunpack.c.l.b16 %v5241
    %v8264 = vunpack.c.h.b16 %v5241
    %v8265 = vunpack.c.l.b16 %v5242
    %v8266 = vunpack.c.h.b16 %v5242
    %v8267 = vunpack.c.l.b16 %v5243
    %v8268 = vunpack.c.h.b16 %v5243
    %v8269 = vunpack.c.l.b16 %v5244
    %v8270 = vunpack.c.h.b16 %v5244
    %v8271 = vunpack.c.l.b16 %v5245
    %v8272 = vunpack.c.h.b16 %v5245
    %v8273 = vunpack.c.l.b16 %v5246
    %v8274 = vunpack.c.h.b16 %v5246
    %v8275 = vunpack.c.l.b16 %v5247
    %v8276 = vunpack.c.h.b16 %v5247
    %v8277 = vunpack.c.l.b16 %v5248
    %v8278 = vunpack.c.h.b16 %v5248
    %v8279 = vunpack.c.l.b16 %v5249
    %v8280 = vunpack.c.h.b16 %v5249
    %v8281 = vunpack.c.l.b16 %v5250
    %v8282 = vunpack.c.h.b16 %v5250
    %v8283 = vunpack.c.l.b16 %v5251
    %v8284 = vunpack.c.h.b16 %v5251
    %v8285 = vunpack.c.l.b16 %v5252
    %v8286 = vunpack.c.h.b16 %v5252
    %v8287 = vunpack.c.l.b16 %v5253
    %v8288 = vunpack.c.h.b16 %v5253
    %v8289 = vunpack.c.l.b16 %v5254
    %v8290 = vunpack.c.h.b16 %v5254
    %v8291 = vunpack.c.l.b16 %v5255
    %v8292 = vunpack.c.h.b16 %v5255
    %v8293 = vunpack.c.l.b16 %v5256
    %v8294 = vunpack.c.h.b16 %v5256
    %v8295 = vunpack.c.l.b16 %v5257
    %v8296 = vunpack.c.h.b16 %v5257
    %v8297 = vunpack.c.l.b16 %v5258
    %v8298 = vunpack.c.h.b16 %v5258
    %v8299 = vunpack.c.l.b16 %v5259
    %v8300 = vunpack.c.h.b16 %v5259
    %v8301 = vunpack.c.l.b16 %v5260
    %v8302 = vunpack.c.h.b16 %v5260
    %v8303 = vunpack.c.l.b16 %v5261
    %v8304 = vunpack.c.h.b16 %v5261
    %v8305 = vunpack.c.l.b16 %v5262
    %v8306 = vunpack.c.h.b16 %v5262
    %v8307 = vunpack.c.l.b16 %v5263
    %v8308 = vunpack.c.h.b16 %v5263
    %v8309 = vunpack.c.l.b16 %v5264
    %v8310 = vunpack.c.h.b16 %v5264
    %v8311 = vunpack.c.l.b16 %v5265
    %v8312 = vunpack.c.h.b16 %v5265
    %v8313 = vunpack.c.l.b16 %v5266
    %v8314 = vunpack.c.h.b16 %v5266
    %v8315 = vunpack.c.l.b16 %v5267
    %v8316 = vunpack.c.h.b16 %v5267
    %v8317 = vunpack.c.l.b16 %v5268
    %v8318 = vunpack.c.h.b16 %v5268
    %v8319 = vunpack.c.l.b16 %v5269
    %v8320 = vunpack.c.h.b16 %v5269
    %v8321 = vunpack.c.l.b16 %v5270
    %v8322 = vunpack.c.h.b16 %v5270
    %v8323 = vunpack.c.l.b16 %v5271
    %v8324 = vunpack.c.h.b16 %v5271
    %v8325 = vunpack.c.l.b16 %v5272
    %v8326 = vunpack.c.h.b16 %v5272
    %v8327 = vunpack.c.l.b16 %v5273
    %v8328 = vunpack.c.h.b16 %v5273
    %v8329 = vunpack.c.l.b16 %v5274
    %v8330 = vunpack.c.h.b16 %v5274
    %v8331 = vunpack.c.l.b16 %v5275
    %v8332 = vunpack.c.h.b16 %v5275
    %v8333 = vunpack.c.l.b16 %v5276
    %v8334 = vunpack.c.h.b16 %v5276
    %v8335 = vunpack.c.l.b16 %v5277
    %v8336 = vunpack.c.h.b16 %v5277
    %v8337 = vunpack.c.l.b16 %v5278
    %v8338 = vunpack.c.h.b16 %v5278
    %v8339 = vunpack.c.l.b16 %v5279
    %v8340 = vunpack.c.h.b16 %v5279
    %v8341 = vunpack.c.l.b16 %v5280
    %v8342 = vunpack.c.h.b16 %v5280
    %v8343 = vunpack.c.l.b16 %v5281
    %v8344 = vunpack.c.h.b16 %v5281
    %v8345 = vunpack.c.l.b16 %v5282
    %v8346 = vunpack.c.h.b16 %v5282
    %v8347 = vunpack.c.l.b16 %v5283
    %v8348 = vunpack.c.h.b16 %v5283
    %v8349 = vunpack.c.l.b16 %v5284
    %v8350 = vunpack.c.h.b16 %v5284
    %v8351 = vunpack.c.l.b16 %v5285
    %v8352 = vunpack.c.h.b16 %v5285
    %v8353 = vunpack.c.l.b16 %v5286
    %v8354 = vunpack.c.h.b16 %v5286
    %v8355 = vunpack.c.l.b16 %v5287
    %v8356 = vunpack.c.h.b16 %v5287
    %v8357 = vunpack.c.l.b16 %v5288
    %v8358 = vunpack.c.h.b16 %v5288
    %v8359 = vunpack.c.l.b16 %v5289
    %v8360 = vunpack.c.h.b16 %v5289
    %v8361 = vunpack.c.l.b16 %v5290
    %v8362 = vunpack.c.h.b16 %v5290
    %v8363 = vunpack.c.l.b16 %v5291
    %v8364 = vunpack.c.h.b16 %v5291
    %v8365 = vunpack.c.l.b16 %v5292
    %v8366 = vunpack.c.h.b16 %v5292
    %v8367 = vunpack.c.l.b16 %v5293
    %v8368 = vunpack.c.h.b16 %v5293
    %v8369 = vunpack.c.l.b16 %v5294
    %v8370 = vunpack.c.h.b16 %v5294
    %v8371 = vunpack.c.l.b16 %v5295
    %v8372 = vunpack.c.h.b16 %v5295
    %v8373 = vunpack.c.l.b16 %v5296
    %v8374 = vunpack.c.h.b16 %v5296
    %v8375 = vunpack.c.l.b16 %v5297
    %v8376 = vunpack.c.h.b16 %v5297
    %v8377 = vunpack.c.l.b16 %v5298
    %v8378 = vunpack.c.h.b16 %v5298
    %v8379 = vunpack.c.l.b16 %v5299
    %v8380 = vunpack.c.h.b16 %v5299
    %v8381 = vunpack.c.l.b16 %v5300
    %v8382 = vunpack.c.h.b16 %v5300
    %v8383 = vunpack.c.l.b16 %v5301
    %v8384 = vunpack.c.h.b16 %v5301
    %v8385 = vunpack.c.l.b16 %v5302
    %v8386 = vunpack.c.h.b16 %v5302
    %v8387 = vunpack.c.l.b16 %v5303
    %v8388 = vunpack.c.h.b16 %v5303
    %v8389 = vunpack.c.l.b16 %v5304
    %v8390 = vunpack.c.h.b16 %v5304
    %v8391 = vunpack.c.l.b16 %v5305
    %v8392 = vunpack.c.h.b16 %v5305
    %v8393 = vunpack.c.l.b16 %v5306
    %v8394 = vunpack.c.h.b16 %v5306
    %v8395 = vunpack.c.l.b16 %v5307
    %v8396 = vunpack.c.h.b16 %v5307
    %v8397 = vunpack.c.l.b16 %v5308
    %v8398 = vunpack.c.h.b16 %v5308
    %v8399 = vunpack.c.l.b16 %v5309
    %v8400 = vunpack.c.h.b16 %v5309
    %v8401 = vunpack.c.l.b16 %v5310
    %v8402 = vunpack.c.h.b16 %v5310
    %v8403 = vunpack.c.l.b16 %v5311
    %v8404 = vunpack.c.h.b16 %v5311
    %v8405 = vunpack.c.l.b16 %v5312
    %v8406 = vunpack.c.h.b16 %v5312
    %v8407 = vunpack.c.l.b16 %v5313
    %v8408 = vunpack.c.h.b16 %v5313
    %v8409 = vunpack.c.l.b16 %v5314
    %v8410 = vunpack.c.h.b16 %v5314
    %v8411 = vunpack.c.l.b16 %v5315
    %v8412 = vunpack.c.h.b16 %v5315
    %v8413 = vunpack.c.l.b16 %v5316
    %v8414 = vunpack.c.h.b16 %v5316
    %v8415 = vunpack.c.l.b16 %v5317
    %v8416 = vunpack.c.h.b16 %v5317
    %v8417 = vunpack.c.l.b16 %v5318
    %v8418 = vunpack.c.h.b16 %v5318
    %v8419 = vunpack.c.l.b16 %v5319
    %v8420 = vunpack.c.h.b16 %v5319
    %v8421 = vunpack.c.l.b16 %v5320
    %v8422 = vunpack.c.h.b16 %v5320
    %v8423 = vunpack.c.l.b16 %v5321
    %v8424 = vunpack.c.h.b16 %v5321
    %v8425 = vunpack.c.l.b16 %v5322
    %v8426 = vunpack.c.h.b16 %v5322
    %v8427 = vunpack.c.l.b16 %v5323
    %v8428 = vunpack.c.h.b16 %v5323
    %v8429 = vunpack.c.l.b16 %v5324
    %v8430 = vunpack.c.h.b16 %v5324
    %v8431 = vunpack.c.l.b16 %v5325
    %v8432 = vunpack.c.h.b16 %v5325
    %v8433 = vunpack.c.l.b16 %v5326
    %v8434 = vunpack.c.h.b16 %v5326
    %v8435 = vunpack.c.l.b16 %v5327
    %v8436 = vunpack.c.h.b16 %v5327
    %v8437 = vunpack.c.l.b16 %v5328
    %v8438 = vunpack.c.h.b16 %v5328
    %v8439 = vunpack.c.l.b16 %v5329
    %v8440 = vunpack.c.h.b16 %v5329
    %v8441 = vunpack.c.l.b16 %v5330
    %v8442 = vunpack.c.h.b16 %v5330
    %v8443 = vunpack.c.l.b16 %v5331
    %v8444 = vunpack.c.h.b16 %v5331
    %v8445 = vunpack.c.l.b16 %v5332
    %v8446 = vunpack.c.h.b16 %v5332
    %v8447 = vunpack.c.l.b16 %v5333
    %v8448 = vunpack.c.h.b16 %v5333
    %v8449 = vunpack.c.l.b16 %v5334
    %v8450 = vunpack.c.h.b16 %v5334
    %v8451 = vunpack.c.l.b16 %v5335
    %v8452 = vunpack.c.h.b16 %v5335
    %v8453 = vunpack.c.l.b16 %v5336
    %v8454 = vunpack.c.h.b16 %v5336
    %v8455 = vunpack.c.l.b16 %v5337
    %v8456 = vunpack.c.h.b16 %v5337
    %v8457 = vunpack.c.l.b16 %v5338
    %v8458 = vunpack.c.h.b16 %v5338
    %v8459 = vunpack.c.l.b16 %v5339
    %v8460 = vunpack.c.h.b16 %v5339
    %v8461 = vunpack.c.l.b16 %v5340
    %v8462 = vunpack.c.h.b16 %v5340
    %v8463 = vunpack.c.l.b16 %v5341
    %v8464 = vunpack.c.h.b16 %v5341
    %v8465 = vunpack.c.l.b16 %v5342
    %v8466 = vunpack.c.h.b16 %v5342
    %v8467 = vunpack.c.l.b16 %v5343
    %v8468 = vunpack.c.h.b16 %v5343
    %v8469 = vunpack.c.l.b16 %v5344
    %v8470 = vunpack.c.h.b16 %v5344
    %v8471 = vunpack.c.l.b16 %v5345
    %v8472 = vunpack.c.h.b16 %v5345
    %v8473 = vunpack.c.l.b16 %v5346
    %v8474 = vunpack.c.h.b16 %v5346
    %v8475 = vunpack.c.l.b16 %v5347
    %v8476 = vunpack.c.h.b16 %v5347
    %v8477 = vunpack.c.l.b16 %v5348
    %v8478 = vunpack.c.h.b16 %v5348
    %v8479 = vunpack.c.l.b16 %v5349
    %v8480 = vunpack.c.h.b16 %v5349
    %v8481 = vunpack.c.l.b16 %v5350
    %v8482 = vunpack.c.h.b16 %v5350
    %v8483 = vunpack.c.l.b16 %v5351
    %v8484 = vunpack.c.h.b16 %v5351
    %v8485 = vunpack.c.l.b16 %v5352
    %v8486 = vunpack.c.h.b16 %v5352
    %v8487 = vunpack.c.l.b16 %v5353
    %v8488 = vunpack.c.h.b16 %v5353
    %v8489 = vunpack.c.l.b16 %v5354
    %v8490 = vunpack.c.h.b16 %v5354
    %v8491 = vunpack.c.l.b16 %v5355
    %v8492 = vunpack.c.h.b16 %v5355
    %v8493 = vunpack.c.l.b16 %v5356
    %v8494 = vunpack.c.h.b16 %v5356
    %v8495 = vunpack.c.l.b16 %v5357
    %v8496 = vunpack.c.h.b16 %v5357
    %v8497 = vunpack.c.l.b16 %v5358
    %v8498 = vunpack.c.h.b16 %v5358
    %v8499 = vunpack.c.l.b16 %v5359
    %v8500 = vunpack.c.h.b16 %v5359
    %v8501 = vunpack.c.l.b16 %v5360
    %v8502 = vunpack.c.h.b16 %v5360
    %v8503 = vunpack.c.l.b16 %v5361
    %v8504 = vunpack.c.h.b16 %v5361
    %v8505 = vunpack.c.l.b16 %v5362
    %v8506 = vunpack.c.h.b16 %v5362
    %v8507 = vunpack.c.l.b16 %v5363
    %v8508 = vunpack.c.h.b16 %v5363
    %v8509 = vunpack.c.l.b16 %v5364
    %v8510 = vunpack.c.h.b16 %v5364
    %v8511 = vunpack.c.l.b16 %v5365
    %v8512 = vunpack.c.h.b16 %v5365
    %v8513 = vunpack.c.l.b16 %v5366
    %v8514 = vunpack.c.h.b16 %v5366
    %v8515 = vunpack.c.l.b16 %v5367
    %v8516 = vunpack.c.h.b16 %v5367
    %v8517 = vunpack.c.l.b16 %v5368
    %v8518 = vunpack.c.h.b16 %v5368
    %v8519 = vunpack.c.l.b16 %v5369
    %v8520 = vunpack.c.h.b16 %v5369
    %v8521 = vunpack.c.l.b16 %v5370
    %v8522 = vunpack.c.h.b16 %v5370
    %v8523 = vunpack.c.l.b16 %v5371
    %v8524 = vunpack.c.h.b16 %v5371
    %v8525 = vunpack.c.l.b16 %v5372
    %v8526 = vunpack.c.h.b16 %v5372
    %v8527 = vunpack.c.l.b16 %v5373
    %v8528 = vunpack.c.h.b16 %v5373
    %v8529 = vunpack.c.l.b16 %v5374
    %v8530 = vunpack.c.h.b16 %v5374
    %v8531 = vpack.c.b16 %v6499, %v6483
    %v8532 = vpack.c.b16 %v6500, %v6484
    %v8533 = vpack.c.b16 %v6501, %v6485
    %v8534 = vpack.c.b16 %v6502, %v6486
    %v8535 = vpack.c.b16 %v6503, %v6487
    %v8536 = vpack.c.b16 %v6504, %v6488
    %v8537 = vpack.c.b16 %v6505, %v6489
    %v8538 = vpack.c.b16 %v6506, %v6490
    %v8539 = vpack.c.b16 %v6507, %v6491
    %v8540 = vpack.c.b16 %v6508, %v6492
    %v8541 = vpack.c.b16 %v6509, %v6493
    %v8542 = vpack.c.b16 %v6510, %v6494
    %v8543 = vpack.c.b16 %v6511, %v6495
    %v8544 = vpack.c.b16 %v6512, %v6496
    %v8545 = vpack.c.b16 %v6513, %v6497
    %v8546 = vpack.c.b16 %v6514, %v6498
    %v8547 = vpack.c.b16 %v6531, %v6515
    %v8548 = vpack.c.b16 %v6532, %v6516
    %v8549 = vpack.c.b16 %v6533, %v6517
    %v8550 = vpack.c.b16 %v6534, %v6518
    %v8551 = vpack.c.b16 %v6535, %v6519
    %v8552 = vpack.c.b16 %v6536, %v6520
    %v8553 = vpack.c.b16 %v6537, %v6521
    %v8554 = vpack.c.b16 %v6538, %v6522
    %v8555 = vpack.c.b16 %v6539, %v6523
    %v8556 = vpack.c.b16 %v6540, %v6524
    %v8557 = vpack.c.b16 %v6541, %v6525
    %v8558 = vpack.c.b16 %v6542, %v6526
    %v8559 = vpack.c.b16 %v6543, %v6527
    %v8560 = vpack.c.b16 %v6544, %v6528
    %v8561 = vpack.c.b16 %v6545, %v6529
    %v8562 = vpack.c.b16 %v6546, %v6530
    %v8563 = vpack.c.b16 %v6563, %v6547
    %v8564 = vpack.c.b16 %v6564, %v6548
    %v8565 = vpack.c.b16 %v6565, %v6549
    %v8566 = vpack.c.b16 %v6566, %v6550
    %v8567 = vpack.c.b16 %v6567, %v6551
    %v8568 = vpack.c.b16 %v6568, %v6552
    %v8569 = vpack.c.b16 %v6569, %v6553
    %v8570 = vpack.c.b16 %v6570, %v6554
    %v8571 = vpack.c.b16 %v6571, %v6555
    %v8572 = vpack.c.b16 %v6572, %v6556
    %v8573 = vpack.c.b16 %v6573, %v6557
    %v8574 = vpack.c.b16 %v6574, %v6558
    %v8575 = vpack.c.b16 %v6575, %v6559
    %v8576 = vpack.c.b16 %v6576, %v6560
    %v8577 = vpack.c.b16 %v6577, %v6561
    %v8578 = vpack.c.b16 %v6578, %v6562
    %v8579 = vpack.c.b16 %v6595, %v6579
    %v8580 = vpack.c.b16 %v6596, %v6580
    %v8581 = vpack.c.b16 %v6597, %v6581
    %v8582 = vpack.c.b16 %v6598, %v6582
    %v8583 = vpack.c.b16 %v6599, %v6583
    %v8584 = vpack.c.b16 %v6600, %v6584
    %v8585 = vpack.c.b16 %v6601, %v6585
    %v8586 = vpack.c.b16 %v6602, %v6586
    %v8587 = vpack.c.b16 %v6603, %v6587
    %v8588 = vpack.c.b16 %v6604, %v6588
    %v8589 = vpack.c.b16 %v6605, %v6589
    %v8590 = vpack.c.b16 %v6606, %v6590
    %v8591 = vpack.c.b16 %v6607, %v6591
    %v8592 = vpack.c.b16 %v6608, %v6592
    %v8593 = vpack.c.b16 %v6609, %v6593
    %v8594 = vpack.c.b16 %v6610, %v6594
    %v8595 = vpack.c.b16 %v6627, %v6611
    %v8596 = vpack.c.b16 %v6628, %v6612
    %v8597 = vpack.c.b16 %v6629, %v6613
    %v8598 = vpack.c.b16 %v6630, %v6614
    %v8599 = vpack.c.b16 %v6631, %v6615
    %v8600 = vpack.c.b16 %v6632, %v6616
    %v8601 = vpack.c.b16 %v6633, %v6617
    %v8602 = vpack.c.b16 %v6634, %v6618
    %v8603 = vpack.c.b16 %v6635, %v6619
    %v8604 = vpack.c.b16 %v6636, %v6620
    %v8605 = vpack.c.b16 %v6637, %v6621
    %v8606 = vpack.c.b16 %v6638, %v6622
    %v8607 = vpack.c.b16 %v6639, %v6623
    %v8608 = vpack.c.b16 %v6640, %v6624
    %v8609 = vpack.c.b16 %v6641, %v6625
    %v8610 = vpack.c.b16 %v6642, %v6626
    %v8611 = vpack.c.b16 %v6659, %v6643
    %v8612 = vpack.c.b16 %v6660, %v6644
    %v8613 = vpack.c.b16 %v6661, %v6645
    %v8614 = vpack.c.b16 %v6662, %v6646
    %v8615 = vpack.c.b16 %v6663, %v6647
    %v8616 = vpack.c.b16 %v6664, %v6648
    %v8617 = vpack.c.b16 %v6665, %v6649
    %v8618 = vpack.c.b16 %v6666, %v6650
    %v8619 = vpack.c.b16 %v6667, %v6651
    %v8620 = vpack.c.b16 %v6668, %v6652
    %v8621 = vpack.c.b16 %v6669, %v6653
    %v8622 = vpack.c.b16 %v6670, %v6654
    %v8623 = vpack.c.b16 %v6671, %v6655
    %v8624 = vpack.c.b16 %v6672, %v6656
    %v8625 = vpack.c.b16 %v6673, %v6657
    %v8626 = vpack.c.b16 %v6674, %v6658
    %v8627 = vpack.c.b16 %v6691, %v6675
    %v8628 = vpack.c.b16 %v6692, %v6676
    %v8629 = vpack.c.b16 %v6693, %v6677
    %v8630 = vpack.c.b16 %v6694, %v6678
    %v8631 = vpack.c.b16 %v6695, %v6679
    %v8632 = vpack.c.b16 %v6696, %v6680
    %v8633 = vpack.c.b16 %v6697, %v6681
    %v8634 = vpack.c.b16 %v6698, %v6682
    %v8635 = vpack.c.b16 %v6699, %v6683
    %v8636 = vpack.c.b16 %v6700, %v6684
    %v8637 = vpack.c.b16 %v6701, %v6685
    %v8638 = vpack.c.b16 %v6702, %v6686
    %v8639 = vpack.c.b16 %v6703, %v6687
    %v8640 = vpack.c.b16 %v6704, %v6688
    %v8641 = vpack.c.b16 %v6705, %v6689
    %v8642 = vpack.c.b16 %v6706, %v6690
    %v8643 = vpack.c.b16 %v6723, %v6707
    %v8644 = vpack.c.b16 %v6724, %v6708
    %v8645 = vpack.c.b16 %v6725, %v6709
    %v8646 = vpack.c.b16 %v6726, %v6710
    %v8647 = vpack.c.b16 %v6727, %v6711
    %v8648 = vpack.c.b16 %v6728, %v6712
    %v8649 = vpack.c.b16 %v6729, %v6713
    %v8650 = vpack.c.b16 %v6730, %v6714
    %v8651 = vpack.c.b16 %v6731, %v6715
    %v8652 = vpack.c.b16 %v6732, %v6716
    %v8653 = vpack.c.b16 %v6733, %v6717
    %v8654 = vpack.c.b16 %v6734, %v6718
    %v8655 = vpack.c.b16 %v6735, %v6719
    %v8656 = vpack.c.b16 %v6736, %v6720
    %v8657 = vpack.c.b16 %v6737, %v6721
    %v8658 = vpack.c.b16 %v6738, %v6722
    %v8659 = vpack.c.b16 %v6755, %v6739
    %v8660 = vpack.c.b16 %v6756, %v6740
    %v8661 = vpack.c.b16 %v6757, %v6741
    %v8662 = vpack.c.b16 %v6758, %v6742
    %v8663 = vpack.c.b16 %v6759, %v6743
    %v8664 = vpack.c.b16 %v6760, %v6744
    %v8665 = vpack.c.b16 %v6761, %v6745
    %v8666 = vpack.c.b16 %v6762, %v6746
    %v8667 = vpack.c.b16 %v6763, %v6747
    %v8668 = vpack.c.b16 %v6764, %v6748
    %v8669 = vpack.c.b16 %v6765, %v6749
    %v8670 = vpack.c.b16 %v6766, %v6750
    %v8671 = vpack.c.b16 %v6767, %v6751
    %v8672 = vpack.c.b16 %v6768, %v6752
    %v8673 = vpack.c.b16 %v6769, %v6753
    %v8674 = vpack.c.b16 %v6770, %v6754
    %v8675 = vpack.c.b16 %v6787, %v6771
    %v8676 = vpack.c.b16 %v6788, %v6772
    %v8677 = vpack.c.b16 %v6789, %v6773
    %v8678 = vpack.c.b16 %v6790, %v6774
    %v8679 = vpack.c.b16 %v6791, %v6775
    %v8680 = vpack.c.b16 %v6792, %v6776
    %v8681 = vpack.c.b16 %v6793, %v6777
    %v8682 = vpack.c.b16 %v6794, %v6778
    %v8683 = vpack.c.b16 %v6795, %v6779
    %v8684 = vpack.c.b16 %v6796, %v6780
    %v8685 = vpack.c.b16 %v6797, %v6781
    %v8686 = vpack.c.b16 %v6798, %v6782
    %v8687 = vpack.c.b16 %v6799, %v6783
    %v8688 = vpack.c.b16 %v6800, %v6784
    %v8689 = vpack.c.b16 %v6801, %v6785
    %v8690 = vpack.c.b16 %v6802, %v6786
    %v8691 = vpack.c.b16 %v6819, %v6803
    %v8692 = vpack.c.b16 %v6820, %v6804
    %v8693 = vpack.c.b16 %v6821, %v6805
    %v8694 = vpack.c.b16 %v6822, %v6806
    %v8695 = vpack.c.b16 %v6823, %v6807
    %v8696 = vpack.c.b16 %v6824, %v6808
    %v8697 = vpack.c.b16 %v6825, %v6809
    %v8698 = vpack.c.b16 %v6826, %v6810
    %v8699 = vpack.c.b16 %v6827, %v6811
    %v8700 = vpack.c.b16 %v6828, %v6812
    %v8701 = vpack.c.b16 %v6829, %v6813
    %v8702 = vpack.c.b16 %v6830, %v6814
    %v8703 = vpack.c.b16 %v6831, %v6815
    %v8704 = vpack.c.b16 %v6832, %v6816
    %v8705 = vpack.c.b16 %v6833, %v6817
    %v8706 = vpack.c.b16 %v6834, %v6818
    %v8707 = vpack.c.b16 %v6851, %v6835
    %v8708 = vpack.c.b16 %v6852, %v6836
    %v8709 = vpack.c.b16 %v6853, %v6837
    %v8710 = vpack.c.b16 %v6854, %v6838
    %v8711 = vpack.c.b16 %v6855, %v6839
    %v8712 = vpack.c.b16 %v6856, %v6840
    %v8713 = vpack.c.b16 %v6857, %v6841
    %v8714 = vpack.c.b16 %v6858, %v6842
    %v8715 = vpack.c.b16 %v6859, %v6843
    %v8716 = vpack.c.b16 %v6860, %v6844
    %v8717 = vpack.c.b16 %v6861, %v6845
    %v8718 = vpack.c.b16 %v6862, %v6846
    %v8719 = vpack.c.b16 %v6863, %v6847
    %v8720 = vpack.c.b16 %v6864, %v6848
    %v8721 = vpack.c.b16 %v6865, %v6849
    %v8722 = vpack.c.b16 %v6866, %v6850
    %v8723 = vpack.c.b16 %v6883, %v6867
    %v8724 = vpack.c.b16 %v6884, %v6868
    %v8725 = vpack.c.b16 %v6885, %v6869
    %v8726 = vpack.c.b16 %v6886, %v6870
    %v8727 = vpack.c.b16 %v6887, %v6871
    %v8728 = vpack.c.b16 %v6888, %v6872
    %v8729 = vpack.c.b16 %v6889, %v6873
    %v8730 = vpack.c.b16 %v6890, %v6874
    %v8731 = vpack.c.b16 %v6891, %v6875
    %v8732 = vpack.c.b16 %v6892, %v6876
    %v8733 = vpack.c.b16 %v6893, %v6877
    %v8734 = vpack.c.b16 %v6894, %v6878
    %v8735 = vpack.c.b16 %v6895, %v6879
    %v8736 = vpack.c.b16 %v6896, %v6880
    %v8737 = vpack.c.b16 %v6897, %v6881
    %v8738 = vpack.c.b16 %v6898, %v6882
    %v8739 = vpack.c.b16 %v6915, %v6899
    %v8740 = vpack.c.b16 %v6916, %v6900
    %v8741 = vpack.c.b16 %v6917, %v6901
    %v8742 = vpack.c.b16 %v6918, %v6902
    %v8743 = vpack.c.b16 %v6919, %v6903
    %v8744 = vpack.c.b16 %v6920, %v6904
    %v8745 = vpack.c.b16 %v6921, %v6905
    %v8746 = vpack.c.b16 %v6922, %v6906
    %v8747 = vpack.c.b16 %v6923, %v6907
    %v8748 = vpack.c.b16 %v6924, %v6908
    %v8749 = vpack.c.b16 %v6925, %v6909
    %v8750 = vpack.c.b16 %v6926, %v6910
    %v8751 = vpack.c.b16 %v6927, %v6911
    %v8752 = vpack.c.b16 %v6928, %v6912
    %v8753 = vpack.c.b16 %v6929, %v6913
    %v8754 = vpack.c.b16 %v6930, %v6914
    %v8755 = vpack.c.b16 %v6947, %v6931
    %v8756 = vpack.c.b16 %v6948, %v6932
    %v8757 = vpack.c.b16 %v6949, %v6933
    %v8758 = vpack.c.b16 %v6950, %v6934
    %v8759 = vpack.c.b16 %v6951, %v6935
    %v8760 = vpack.c.b16 %v6952, %v6936
    %v8761 = vpack.c.b16 %v6953, %v6937
    %v8762 = vpack.c.b16 %v6954, %v6938
    %v8763 = vpack.c.b16 %v6955, %v6939
    %v8764 = vpack.c.b16 %v6956, %v6940
    %v8765 = vpack.c.b16 %v6957, %v6941
    %v8766 = vpack.c.b16 %v6958, %v6942
    %v8767 = vpack.c.b16 %v6959, %v6943
    %v8768 = vpack.c.b16 %v6960, %v6944
    %v8769 = vpack.c.b16 %v6961, %v6945
    %v8770 = vpack.c.b16 %v6962, %v6946
    %v8771 = vpack.c.b16 %v6979, %v6963
    %v8772 = vpack.c.b16 %v6980, %v6964
    %v8773 = vpack.c.b16 %v6981, %v6965
    %v8774 = vpack.c.b16 %v6982, %v6966
    %v8775 = vpack.c.b16 %v6983, %v6967
    %v8776 = vpack.c.b16 %v6984, %v6968
    %v8777 = vpack.c.b16 %v6985, %v6969
    %v8778 = vpack.c.b16 %v6986, %v6970
    %v8779 = vpack.c.b16 %v6987, %v6971
    %v8780 = vpack.c.b16 %v6988, %v6972
    %v8781 = vpack.c.b16 %v6989, %v6973
    %v8782 = vpack.c.b16 %v6990, %v6974
    %v8783 = vpack.c.b16 %v6991, %v6975
    %v8784 = vpack.c.b16 %v6992, %v6976
    %v8785 = vpack.c.b16 %v6993, %v6977
    %v8786 = vpack.c.b16 %v6994, %v6978
    %v8787 = vpack.c.b16 %v7011, %v6995
    %v8788 = vpack.c.b16 %v7012, %v6996
    %v8789 = vpack.c.b16 %v7013, %v6997
    %v8790 = vpack.c.b16 %v7014, %v6998
    %v8791 = vpack.c.b16 %v7015, %v6999
    %v8792 = vpack.c.b16 %v7016, %v7000
    %v8793 = vpack.c.b16 %v7017, %v7001
    %v8794 = vpack.c.b16 %v7018, %v7002
    %v8795 = vpack.c.b16 %v7019, %v7003
    %v8796 = vpack.c.b16 %v7020, %v7004
    %v8797 = vpack.c.b16 %v7021, %v7005
    %v8798 = vpack.c.b16 %v7022, %v7006
    %v8799 = vpack.c.b16 %v7023, %v7007
    %v8800 = vpack.c.b16 %v7024, %v7008
    %v8801 = vpack.c.b16 %v7025, %v7009
    %v8802 = vpack.c.b16 %v7026, %v7010
    %v8803 = vpack.c.b16 %v7043, %v7027
    %v8804 = vpack.c.b16 %v7044, %v7028
    %v8805 = vpack.c.b16 %v7045, %v7029
    %v8806 = vpack.c.b16 %v7046, %v7030
    %v8807 = vpack.c.b16 %v7047, %v7031
    %v8808 = vpack.c.b16 %v7048, %v7032
    %v8809 = vpack.c.b16 %v7049, %v7033
    %v8810 = vpack.c.b16 %v7050, %v7034
    %v8811 = vpack.c.b16 %v7051, %v7035
    %v8812 = vpack.c.b16 %v7052, %v7036
    %v8813 = vpack.c.b16 %v7053, %v7037
    %v8814 = vpack.c.b16 %v7054, %v7038
    %v8815 = vpack.c.b16 %v7055, %v7039
    %v8816 = vpack.c.b16 %v7056, %v7040
    %v8817 = vpack.c.b16 %v7057, %v7041
    %v8818 = vpack.c.b16 %v7058, %v7042
    %v8819 = vpack.c.b16 %v7075, %v7059
    %v8820 = vpack.c.b16 %v7076, %v7060
    %v8821 = vpack.c.b16 %v7077, %v7061
    %v8822 = vpack.c.b16 %v7078, %v7062
    %v8823 = vpack.c.b16 %v7079, %v7063
    %v8824 = vpack.c.b16 %v7080, %v7064
    %v8825 = vpack.c.b16 %v7081, %v7065
    %v8826 = vpack.c.b16 %v7082, %v7066
    %v8827 = vpack.c.b16 %v7083, %v7067
    %v8828 = vpack.c.b16 %v7084, %v7068
    %v8829 = vpack.c.b16 %v7085, %v7069
    %v8830 = vpack.c.b16 %v7086, %v7070
    %v8831 = vpack.c.b16 %v7087, %v7071
    %v8832 = vpack.c.b16 %v7088, %v7072
    %v8833 = vpack.c.b16 %v7089, %v7073
    %v8834 = vpack.c.b16 %v7090, %v7074
    %v8835 = vpack.c.b16 %v7107, %v7091
    %v8836 = vpack.c.b16 %v7108, %v7092
    %v8837 = vpack.c.b16 %v7109, %v7093
    %v8838 = vpack.c.b16 %v7110, %v7094
    %v8839 = vpack.c.b16 %v7111, %v7095
    %v8840 = vpack.c.b16 %v7112, %v7096
    %v8841 = vpack.c.b16 %v7113, %v7097
    %v8842 = vpack.c.b16 %v7114, %v7098
    %v8843 = vpack.c.b16 %v7115, %v7099
    %v8844 = vpack.c.b16 %v7116, %v7100
    %v8845 = vpack.c.b16 %v7117, %v7101
    %v8846 = vpack.c.b16 %v7118, %v7102
    %v8847 = vpack.c.b16 %v7119, %v7103
    %v8848 = vpack.c.b16 %v7120, %v7104
    %v8849 = vpack.c.b16 %v7121, %v7105
    %v8850 = vpack.c.b16 %v7122, %v7106
    %v8851 = vpack.c.b16 %v7139, %v7123
    %v8852 = vpack.c.b16 %v7140, %v7124
    %v8853 = vpack.c.b16 %v7141, %v7125
    %v8854 = vpack.c.b16 %v7142, %v7126
    %v8855 = vpack.c.b16 %v7143, %v7127
    %v8856 = vpack.c.b16 %v7144, %v7128
    %v8857 = vpack.c.b16 %v7145, %v7129
    %v8858 = vpack.c.b16 %v7146, %v7130
    %v8859 = vpack.c.b16 %v7147, %v7131
    %v8860 = vpack.c.b16 %v7148, %v7132
    %v8861 = vpack.c.b16 %v7149, %v7133
    %v8862 = vpack.c.b16 %v7150, %v7134
    %v8863 = vpack.c.b16 %v7151, %v7135
    %v8864 = vpack.c.b16 %v7152, %v7136
    %v8865 = vpack.c.b16 %v7153, %v7137
    %v8866 = vpack.c.b16 %v7154, %v7138
    %v8867 = vpack.c.b16 %v7171, %v7155
    %v8868 = vpack.c.b16 %v7172, %v7156
    %v8869 = vpack.c.b16 %v7173, %v7157
    %v8870 = vpack.c.b16 %v7174, %v7158
    %v8871 = vpack.c.b16 %v7175, %v7159
    %v8872 = vpack.c.b16 %v7176, %v7160
    %v8873 = vpack.c.b16 %v7177, %v7161
    %v8874 = vpack.c.b16 %v7178, %v7162
    %v8875 = vpack.c.b16 %v7179, %v7163
    %v8876 = vpack.c.b16 %v7180, %v7164
    %v8877 = vpack.c.b16 %v7181, %v7165
    %v8878 = vpack.c.b16 %v7182, %v7166
    %v8879 = vpack.c.b16 %v7183, %v7167
    %v8880 = vpack.c.b16 %v7184, %v7168
    %v8881 = vpack.c.b16 %v7185, %v7169
    %v8882 = vpack.c.b16 %v7186, %v7170
    %v8883 = vpack.c.b16 %v7203, %v7187
    %v8884 = vpack.c.b16 %v7204, %v7188
    %v8885 = vpack.c.b16 %v7205, %v7189
    %v8886 = vpack.c.b16 %v7206, %v7190
    %v8887 = vpack.c.b16 %v7207, %v7191
    %v8888 = vpack.c.b16 %v7208, %v7192
    %v8889 = vpack.c.b16 %v7209, %v7193
    %v8890 = vpack.c.b16 %v7210, %v7194
    %v8891 = vpack.c.b16 %v7211, %v7195
    %v8892 = vpack.c.b16 %v7212, %v7196
    %v8893 = vpack.c.b16 %v7213, %v7197
    %v8894 = vpack.c.b16 %v7214, %v7198
    %v8895 = vpack.c.b16 %v7215, %v7199
    %v8896 = vpack.c.b16 %v7216, %v7200
    %v8897 = vpack.c.b16 %v7217, %v7201
    %v8898 = vpack.c.b16 %v7218, %v7202
    %v8899 = vpack.c.b16 %v7235, %v7219
    %v8900 = vpack.c.b16 %v7236, %v7220
    %v8901 = vpack.c.b16 %v7237, %v7221
    %v8902 = vpack.c.b16 %v7238, %v7222
    %v8903 = vpack.c.b16 %v7239, %v7223
    %v8904 = vpack.c.b16 %v7240, %v7224
    %v8905 = vpack.c.b16 %v7241, %v7225
    %v8906 = vpack.c.b16 %v7242, %v7226
    %v8907 = vpack.c.b16 %v7243, %v7227
    %v8908 = vpack.c.b16 %v7244, %v7228
    %v8909 = vpack.c.b16 %v7245, %v7229
    %v8910 = vpack.c.b16 %v7246, %v7230
    %v8911 = vpack.c.b16 %v7247, %v7231
    %v8912 = vpack.c.b16 %v7248, %v7232
    %v8913 = vpack.c.b16 %v7249, %v7233
    %v8914 = vpack.c.b16 %v7250, %v7234
    %v8915 = vpack.c.b16 %v7267, %v7251
    %v8916 = vpack.c.b16 %v7268, %v7252
    %v8917 = vpack.c.b16 %v7269, %v7253
    %v8918 = vpack.c.b16 %v7270, %v7254
    %v8919 = vpack.c.b16 %v7271, %v7255
    %v8920 = vpack.c.b16 %v7272, %v7256
    %v8921 = vpack.c.b16 %v7273, %v7257
    %v8922 = vpack.c.b16 %v7274, %v7258
    %v8923 = vpack.c.b16 %v7275, %v7259
    %v8924 = vpack.c.b16 %v7276, %v7260
    %v8925 = vpack.c.b16 %v7277, %v7261
    %v8926 = vpack.c.b16 %v7278, %v7262
    %v8927 = vpack.c.b16 %v7279, %v7263
    %v8928 = vpack.c.b16 %v7280, %v7264
    %v8929 = vpack.c.b16 %v7281, %v7265
    %v8930 = vpack.c.b16 %v7282, %v7266
    %v8931 = vpack.c.b16 %v7299, %v7283
    %v8932 = vpack.c.b16 %v7300, %v7284
    %v8933 = vpack.c.b16 %v7301, %v7285
    %v8934 = vpack.c.b16 %v7302, %v7286
    %v8935 = vpack.c.b16 %v7303, %v7287
    %v8936 = vpack.c.b16 %v7304, %v7288
    %v8937 = vpack.c.b16 %v7305, %v7289
    %v8938 = vpack.c.b16 %v7306, %v7290
    %v8939 = vpack.c.b16 %v7307, %v7291
    %v8940 = vpack.c.b16 %v7308, %v7292
    %v8941 = vpack.c.b16 %v7309, %v7293
    %v8942 = vpack.c.b16 %v7310, %v7294
    %v8943 = vpack.c.b16 %v7311, %v7295
    %v8944 = vpack.c.b16 %v7312, %v7296
    %v8945 = vpack.c.b16 %v7313, %v7297
    %v8946 = vpack.c.b16 %v7314, %v7298
    %v8947 = vpack.c.b16 %v7331, %v7315
    %v8948 = vpack.c.b16 %v7332, %v7316
    %v8949 = vpack.c.b16 %v7333, %v7317
    %v8950 = vpack.c.b16 %v7334, %v7318
    %v8951 = vpack.c.b16 %v7335, %v7319
    %v8952 = vpack.c.b16 %v7336, %v7320
    %v8953 = vpack.c.b16 %v7337, %v7321
    %v8954 = vpack.c.b16 %v7338, %v7322
    %v8955 = vpack.c.b16 %v7339, %v7323
    %v8956 = vpack.c.b16 %v7340, %v7324
    %v8957 = vpack.c.b16 %v7341, %v7325
    %v8958 = vpack.c.b16 %v7342, %v7326
    %v8959 = vpack.c.b16 %v7343, %v7327
    %v8960 = vpack.c.b16 %v7344, %v7328
    %v8961 = vpack.c.b16 %v7345, %v7329
    %v8962 = vpack.c.b16 %v7346, %v7330
    %v8963 = vpack.c.b16 %v7363, %v7347
    %v8964 = vpack.c.b16 %v7364, %v7348
    %v8965 = vpack.c.b16 %v7365, %v7349
    %v8966 = vpack.c.b16 %v7366, %v7350
    %v8967 = vpack.c.b16 %v7367, %v7351
    %v8968 = vpack.c.b16 %v7368, %v7352
    %v8969 = vpack.c.b16 %v7369, %v7353
    %v8970 = vpack.c.b16 %v7370, %v7354
    %v8971 = vpack.c.b16 %v7371, %v7355
    %v8972 = vpack.c.b16 %v7372, %v7356
    %v8973 = vpack.c.b16 %v7373, %v7357
    %v8974 = vpack.c.b16 %v7374, %v7358
    %v8975 = vpack.c.b16 %v7375, %v7359
    %v8976 = vpack.c.b16 %v7376, %v7360
    %v8977 = vpack.c.b16 %v7377, %v7361
    %v8978 = vpack.c.b16 %v7378, %v7362
    %v8979 = vpack.c.b16 %v7395, %v7379
    %v8980 = vpack.c.b16 %v7396, %v7380
    %v8981 = vpack.c.b16 %v7397, %v7381
    %v8982 = vpack.c.b16 %v7398, %v7382
    %v8983 = vpack.c.b16 %v7399, %v7383
    %v8984 = vpack.c.b16 %v7400, %v7384
    %v8985 = vpack.c.b16 %v7401, %v7385
    %v8986 = vpack.c.b16 %v7402, %v7386
    %v8987 = vpack.c.b16 %v7403, %v7387
    %v8988 = vpack.c.b16 %v7404, %v7388
    %v8989 = vpack.c.b16 %v7405, %v7389
    %v8990 = vpack.c.b16 %v7406, %v7390
    %v8991 = vpack.c.b16 %v7407, %v7391
    %v8992 = vpack.c.b16 %v7408, %v7392
    %v8993 = vpack.c.b16 %v7409, %v7393
    %v8994 = vpack.c.b16 %v7410, %v7394
    %v8995 = vpack.c.b16 %v7427, %v7411
    %v8996 = vpack.c.b16 %v7428, %v7412
    %v8997 = vpack.c.b16 %v7429, %v7413
    %v8998 = vpack.c.b16 %v7430, %v7414
    %v8999 = vpack.c.b16 %v7431, %v7415
    %v9000 = vpack.c.b16 %v7432, %v7416
    %v9001 = vpack.c.b16 %v7433, %v7417
    %v9002 = vpack.c.b16 %v7434, %v7418
    %v9003 = vpack.c.b16 %v7435, %v7419
    %v9004 = vpack.c.b16 %v7436, %v7420
    %v9005 = vpack.c.b16 %v7437, %v7421
    %v9006 = vpack.c.b16 %v7438, %v7422
    %v9007 = vpack.c.b16 %v7439, %v7423
    %v9008 = vpack.c.b16 %v7440, %v7424
    %v9009 = vpack.c.b16 %v7441, %v7425
    %v9010 = vpack.c.b16 %v7442, %v7426
    %v9011 = vpack.c.b16 %v7459, %v7443
    %v9012 = vpack.c.b16 %v7460, %v7444
    %v9013 = vpack.c.b16 %v7461, %v7445
    %v9014 = vpack.c.b16 %v7462, %v7446
    %v9015 = vpack.c.b16 %v7463, %v7447
    %v9016 = vpack.c.b16 %v7464, %v7448
    %v9017 = vpack.c.b16 %v7465, %v7449
    %v9018 = vpack.c.b16 %v7466, %v7450
    %v9019 = vpack.c.b16 %v7467, %v7451
    %v9020 = vpack.c.b16 %v7468, %v7452
    %v9021 = vpack.c.b16 %v7469, %v7453
    %v9022 = vpack.c.b16 %v7470, %v7454
    %v9023 = vpack.c.b16 %v7471, %v7455
    %v9024 = vpack.c.b16 %v7472, %v7456
    %v9025 = vpack.c.b16 %v7473, %v7457
    %v9026 = vpack.c.b16 %v7474, %v7458
    %v9027 = vpack.c.b16 %v7491, %v7475
    %v9028 = vpack.c.b16 %v7492, %v7476
    %v9029 = vpack.c.b16 %v7493, %v7477
    %v9030 = vpack.c.b16 %v7494, %v7478
    %v9031 = vpack.c.b16 %v7495, %v7479
    %v9032 = vpack.c.b16 %v7496, %v7480
    %v9033 = vpack.c.b16 %v7497, %v7481
    %v9034 = vpack.c.b16 %v7498, %v7482
    %v9035 = vpack.c.b16 %v7499, %v7483
    %v9036 = vpack.c.b16 %v7500, %v7484
    %v9037 = vpack.c.b16 %v7501, %v7485
    %v9038 = vpack.c.b16 %v7502, %v7486
    %v9039 = vpack.c.b16 %v7503, %v7487
    %v9040 = vpack.c.b16 %v7504, %v7488
    %v9041 = vpack.c.b16 %v7505, %v7489
    %v9042 = vpack.c.b16 %v7506, %v7490
    %v9043 = vpack.c.b16 %v7523, %v7507
    %v9044 = vpack.c.b16 %v7524, %v7508
    %v9045 = vpack.c.b16 %v7525, %v7509
    %v9046 = vpack.c.b16 %v7526, %v7510
    %v9047 = vpack.c.b16 %v7527, %v7511
    %v9048 = vpack.c.b16 %v7528, %v7512
    %v9049 = vpack.c.b16 %v7529, %v7513
    %v9050 = vpack.c.b16 %v7530, %v7514
    %v9051 = vpack.c.b16 %v7531, %v7515
    %v9052 = vpack.c.b16 %v7532, %v7516
    %v9053 = vpack.c.b16 %v7533, %v7517
    %v9054 = vpack.c.b16 %v7534, %v7518
    %v9055 = vpack.c.b16 %v7535, %v7519
    %v9056 = vpack.c.b16 %v7536, %v7520
    %v9057 = vpack.c.b16 %v7537, %v7521
    %v9058 = vpack.c.b16 %v7538, %v7522
    %v9059 = vpack.c.b16 %v7555, %v7539
    %v9060 = vpack.c.b16 %v7556, %v7540
    %v9061 = vpack.c.b16 %v7557, %v7541
    %v9062 = vpack.c.b16 %v7558, %v7542
    %v9063 = vpack.c.b16 %v7559, %v7543
    %v9064 = vpack.c.b16 %v7560, %v7544
    %v9065 = vpack.c.b16 %v7561, %v7545
    %v9066 = vpack.c.b16 %v7562, %v7546
    %v9067 = vpack.c.b16 %v7563, %v7547
    %v9068 = vpack.c.b16 %v7564, %v7548
    %v9069 = vpack.c.b16 %v7565, %v7549
    %v9070 = vpack.c.b16 %v7566, %v7550
    %v9071 = vpack.c.b16 %v7567, %v7551
    %v9072 = vpack.c.b16 %v7568, %v7552
    %v9073 = vpack.c.b16 %v7569, %v7553
    %v9074 = vpack.c.b16 %v7570, %v7554
    %v9075 = vpack.c.b16 %v7587, %v7571
    %v9076 = vpack.c.b16 %v7588, %v7572
    %v9077 = vpack.c.b16 %v7589, %v7573
    %v9078 = vpack.c.b16 %v7590, %v7574
    %v9079 = vpack.c.b16 %v7591, %v7575
    %v9080 = vpack.c.b16 %v7592, %v7576
    %v9081 = vpack.c.b16 %v7593, %v7577
    %v9082 = vpack.c.b16 %v7594, %v7578
    %v9083 = vpack.c.b16 %v7595, %v7579
    %v9084 = vpack.c.b16 %v7596, %v7580
    %v9085 = vpack.c.b16 %v7597, %v7581
    %v9086 = vpack.c.b16 %v7598, %v7582
    %v9087 = vpack.c.b16 %v7599, %v7583
    %v9088 = vpack.c.b16 %v7600, %v7584
    %v9089 = vpack.c.b16 %v7601, %v7585
    %v9090 = vpack.c.b16 %v7602, %v7586
    %v9091 = vpack.c.b16 %v7619, %v7603
    %v9092 = vpack.c.b16 %v7620, %v7604
    %v9093 = vpack.c.b16 %v7621, %v7605
    %v9094 = vpack.c.b16 %v7622, %v7606
    %v9095 = vpack.c.b16 %v7623, %v7607
    %v9096 = vpack.c.b16 %v7624, %v7608
    %v9097 = vpack.c.b16 %v7625, %v7609
    %v9098 = vpack.c.b16 %v7626, %v7610
    %v9099 = vpack.c.b16 %v7627, %v7611
    %v9100 = vpack.c.b16 %v7628, %v7612
    %v9101 = vpack.c.b16 %v7629, %v7613
    %v9102 = vpack.c.b16 %v7630, %v7614
    %v9103 = vpack.c.b16 %v7631, %v7615
    %v9104 = vpack.c.b16 %v7632, %v7616
    %v9105 = vpack.c.b16 %v7633, %v7617
    %v9106 = vpack.c.b16 %v7634, %v7618
    %v9107 = vpack.c.b16 %v7651, %v7635
    %v9108 = vpack.c.b16 %v7652, %v7636
    %v9109 = vpack.c.b16 %v7653, %v7637
    %v9110 = vpack.c.b16 %v7654, %v7638
    %v9111 = vpack.c.b16 %v7655, %v7639
    %v9112 = vpack.c.b16 %v7656, %v7640
    %v9113 = vpack.c.b16 %v7657, %v7641
    %v9114 = vpack.c.b16 %v7658, %v7642
    %v9115 = vpack.c.b16 %v7659, %v7643
    %v9116 = vpack.c.b16 %v7660, %v7644
    %v9117 = vpack.c.b16 %v7661, %v7645
    %v9118 = vpack.c.b16 %v7662, %v7646
    %v9119 = vpack.c.b16 %v7663, %v7647
    %v9120 = vpack.c.b16 %v7664, %v7648
    %v9121 = vpack.c.b16 %v7665, %v7649
    %v9122 = vpack.c.b16 %v7666, %v7650
    %v9123 = vpack.c.b16 %v7683, %v7667
    %v9124 = vpack.c.b16 %v7684, %v7668
    %v9125 = vpack.c.b16 %v7685, %v7669
    %v9126 = vpack.c.b16 %v7686, %v7670
    %v9127 = vpack.c.b16 %v7687, %v7671
    %v9128 = vpack.c.b16 %v7688, %v7672
    %v9129 = vpack.c.b16 %v7689, %v7673
    %v9130 = vpack.c.b16 %v7690, %v7674
    %v9131 = vpack.c.b16 %v7691, %v7675
    %v9132 = vpack.c.b16 %v7692, %v7676
    %v9133 = vpack.c.b16 %v7693, %v7677
    %v9134 = vpack.c.b16 %v7694, %v7678
    %v9135 = vpack.c.b16 %v7695, %v7679
    %v9136 = vpack.c.b16 %v7696, %v7680
    %v9137 = vpack.c.b16 %v7697, %v7681
    %v9138 = vpack.c.b16 %v7698, %v7682
    %v9139 = vpack.c.b16 %v7715, %v7699
    %v9140 = vpack.c.b16 %v7716, %v7700
    %v9141 = vpack.c.b16 %v7717, %v7701
    %v9142 = vpack.c.b16 %v7718, %v7702
    %v9143 = vpack.c.b16 %v7719, %v7703
    %v9144 = vpack.c.b16 %v7720, %v7704
    %v9145 = vpack.c.b16 %v7721, %v7705
    %v9146 = vpack.c.b16 %v7722, %v7706
    %v9147 = vpack.c.b16 %v7723, %v7707
    %v9148 = vpack.c.b16 %v7724, %v7708
    %v9149 = vpack.c.b16 %v7725, %v7709
    %v9150 = vpack.c.b16 %v7726, %v7710
    %v9151 = vpack.c.b16 %v7727, %v7711
    %v9152 = vpack.c.b16 %v7728, %v7712
    %v9153 = vpack.c.b16 %v7729, %v7713
    %v9154 = vpack.c.b16 %v7730, %v7714
    %v9155 = vpack.c.b16 %v7747, %v7731
    %v9156 = vpack.c.b16 %v7748, %v7732
    %v9157 = vpack.c.b16 %v7749, %v7733
    %v9158 = vpack.c.b16 %v7750, %v7734
    %v9159 = vpack.c.b16 %v7751, %v7735
    %v9160 = vpack.c.b16 %v7752, %v7736
    %v9161 = vpack.c.b16 %v7753, %v7737
    %v9162 = vpack.c.b16 %v7754, %v7738
    %v9163 = vpack.c.b16 %v7755, %v7739
    %v9164 = vpack.c.b16 %v7756, %v7740
    %v9165 = vpack.c.b16 %v7757, %v7741
    %v9166 = vpack.c.b16 %v7758, %v7742
    %v9167 = vpack.c.b16 %v7759, %v7743
    %v9168 = vpack.c.b16 %v7760, %v7744
    %v9169 = vpack.c.b16 %v7761, %v7745
    %v9170 = vpack.c.b16 %v7762, %v7746
    %v9171 = vpack.c.b16 %v7779, %v7763
    %v9172 = vpack.c.b16 %v7780, %v7764
    %v9173 = vpack.c.b16 %v7781, %v7765
    %v9174 = vpack.c.b16 %v7782, %v7766
    %v9175 = vpack.c.b16 %v7783, %v7767
    %v9176 = vpack.c.b16 %v7784, %v7768
    %v9177 = vpack.c.b16 %v7785, %v7769
    %v9178 = vpack.c.b16 %v7786, %v7770
    %v9179 = vpack.c.b16 %v7787, %v7771
    %v9180 = vpack.c.b16 %v7788, %v7772
    %v9181 = vpack.c.b16 %v7789, %v7773
    %v9182 = vpack.c.b16 %v7790, %v7774
    %v9183 = vpack.c.b16 %v7791, %v7775
    %v9184 = vpack.c.b16 %v7792, %v7776
    %v9185 = vpack.c.b16 %v7793, %v7777
    %v9186 = vpack.c.b16 %v7794, %v7778
    %v9187 = vpack.c.b16 %v7811, %v7795
    %v9188 = vpack.c.b16 %v7812, %v7796
    %v9189 = vpack.c.b16 %v7813, %v7797
    %v9190 = vpack.c.b16 %v7814, %v7798
    %v9191 = vpack.c.b16 %v7815, %v7799
    %v9192 = vpack.c.b16 %v7816, %v7800
    %v9193 = vpack.c.b16 %v7817, %v7801
    %v9194 = vpack.c.b16 %v7818, %v7802
    %v9195 = vpack.c.b16 %v7819, %v7803
    %v9196 = vpack.c.b16 %v7820, %v7804
    %v9197 = vpack.c.b16 %v7821, %v7805
    %v9198 = vpack.c.b16 %v7822, %v7806
    %v9199 = vpack.c.b16 %v7823, %v7807
    %v9200 = vpack.c.b16 %v7824, %v7808
    %v9201 = vpack.c.b16 %v7825, %v7809
    %v9202 = vpack.c.b16 %v7826, %v7810
    %v9203 = vpack.c.b16 %v7843, %v7827
    %v9204 = vpack.c.b16 %v7844, %v7828
    %v9205 = vpack.c.b16 %v7845, %v7829
    %v9206 = vpack.c.b16 %v7846, %v7830
    %v9207 = vpack.c.b16 %v7847, %v7831
    %v9208 = vpack.c.b16 %v7848, %v7832
    %v9209 = vpack.c.b16 %v7849, %v7833
    %v9210 = vpack.c.b16 %v7850, %v7834
    %v9211 = vpack.c.b16 %v7851, %v7835
    %v9212 = vpack.c.b16 %v7852, %v7836
    %v9213 = vpack.c.b16 %v7853, %v7837
    %v9214 = vpack.c.b16 %v7854, %v7838
    %v9215 = vpack.c.b16 %v7855, %v7839
    %v9216 = vpack.c.b16 %v7856, %v7840
    %v9217 = vpack.c.b16 %v7857, %v7841
    %v9218 = vpack.c.b16 %v7858, %v7842
    %v9219 = vpack.c.b16 %v7875, %v7859
    %v9220 = vpack.c.b16 %v7876, %v7860
    %v9221 = vpack.c.b16 %v7877, %v7861
    %v9222 = vpack.c.b16 %v7878, %v7862
    %v9223 = vpack.c.b16 %v7879, %v7863
    %v9224 = vpack.c.b16 %v7880, %v7864
    %v9225 = vpack.c.b16 %v7881, %v7865
    %v9226 = vpack.c.b16 %v7882, %v7866
    %v9227 = vpack.c.b16 %v7883, %v7867
    %v9228 = vpack.c.b16 %v7884, %v7868
    %v9229 = vpack.c.b16 %v7885, %v7869
    %v9230 = vpack.c.b16 %v7886, %v7870
    %v9231 = vpack.c.b16 %v7887, %v7871
    %v9232 = vpack.c.b16 %v7888, %v7872
    %v9233 = vpack.c.b16 %v7889, %v7873
    %v9234 = vpack.c.b16 %v7890, %v7874
    %v9235 = vpack.c.b16 %v7907, %v7891
    %v9236 = vpack.c.b16 %v7908, %v7892
    %v9237 = vpack.c.b16 %v7909, %v7893
    %v9238 = vpack.c.b16 %v7910, %v7894
    %v9239 = vpack.c.b16 %v7911, %v7895
    %v9240 = vpack.c.b16 %v7912, %v7896
    %v9241 = vpack.c.b16 %v7913, %v7897
    %v9242 = vpack.c.b16 %v7914, %v7898
    %v9243 = vpack.c.b16 %v7915, %v7899
    %v9244 = vpack.c.b16 %v7916, %v7900
    %v9245 = vpack.c.b16 %v7917, %v7901
    %v9246 = vpack.c.b16 %v7918, %v7902
    %v9247 = vpack.c.b16 %v7919, %v7903
    %v9248 = vpack.c.b16 %v7920, %v7904
    %v9249 = vpack.c.b16 %v7921, %v7905
    %v9250 = vpack.c.b16 %v7922, %v7906
    %v9251 = vpack.c.b16 %v7939, %v7923
    %v9252 = vpack.c.b16 %v7940, %v7924
    %v9253 = vpack.c.b16 %v7941, %v7925
    %v9254 = vpack.c.b16 %v7942, %v7926
    %v9255 = vpack.c.b16 %v7943, %v7927
    %v9256 = vpack.c.b16 %v7944, %v7928
    %v9257 = vpack.c.b16 %v7945, %v7929
    %v9258 = vpack.c.b16 %v7946, %v7930
    %v9259 = vpack.c.b16 %v7947, %v7931
    %v9260 = vpack.c.b16 %v7948, %v7932
    %v9261 = vpack.c.b16 %v7949, %v7933
    %v9262 = vpack.c.b16 %v7950, %v7934
    %v9263 = vpack.c.b16 %v7951, %v7935
    %v9264 = vpack.c.b16 %v7952, %v7936
    %v9265 = vpack.c.b16 %v7953, %v7937
    %v9266 = vpack.c.b16 %v7954, %v7938
    %v9267 = vpack.c.b16 %v7971, %v7955
    %v9268 = vpack.c.b16 %v7972, %v7956
    %v9269 = vpack.c.b16 %v7973, %v7957
    %v9270 = vpack.c.b16 %v7974, %v7958
    %v9271 = vpack.c.b16 %v7975, %v7959
    %v9272 = vpack.c.b16 %v7976, %v7960
    %v9273 = vpack.c.b16 %v7977, %v7961
    %v9274 = vpack.c.b16 %v7978, %v7962
    %v9275 = vpack.c.b16 %v7979, %v7963
    %v9276 = vpack.c.b16 %v7980, %v7964
    %v9277 = vpack.c.b16 %v7981, %v7965
    %v9278 = vpack.c.b16 %v7982, %v7966
    %v9279 = vpack.c.b16 %v7983, %v7967
    %v9280 = vpack.c.b16 %v7984, %v7968
    %v9281 = vpack.c.b16 %v7985, %v7969
    %v9282 = vpack.c.b16 %v7986, %v7970
    %v9283 = vpack.c.b16 %v8003, %v7987
    %v9284 = vpack.c.b16 %v8004, %v7988
    %v9285 = vpack.c.b16 %v8005, %v7989
    %v9286 = vpack.c.b16 %v8006, %v7990
    %v9287 = vpack.c.b16 %v8007, %v7991
    %v9288 = vpack.c.b16 %v8008, %v7992
    %v9289 = vpack.c.b16 %v8009, %v7993
    %v9290 = vpack.c.b16 %v8010, %v7994
    %v9291 = vpack.c.b16 %v8011, %v7995
    %v9292 = vpack.c.b16 %v8012, %v7996
    %v9293 = vpack.c.b16 %v8013, %v7997
    %v9294 = vpack.c.b16 %v8014, %v7998
    %v9295 = vpack.c.b16 %v8015, %v7999
    %v9296 = vpack.c.b16 %v8016, %v8000
    %v9297 = vpack.c.b16 %v8017, %v8001
    %v9298 = vpack.c.b16 %v8018, %v8002
    %v9299 = vpack.c.b16 %v8035, %v8019
    %v9300 = vpack.c.b16 %v8036, %v8020
    %v9301 = vpack.c.b16 %v8037, %v8021
    %v9302 = vpack.c.b16 %v8038, %v8022
    %v9303 = vpack.c.b16 %v8039, %v8023
    %v9304 = vpack.c.b16 %v8040, %v8024
    %v9305 = vpack.c.b16 %v8041, %v8025
    %v9306 = vpack.c.b16 %v8042, %v8026
    %v9307 = vpack.c.b16 %v8043, %v8027
    %v9308 = vpack.c.b16 %v8044, %v8028
    %v9309 = vpack.c.b16 %v8045, %v8029
    %v9310 = vpack.c.b16 %v8046, %v8030
    %v9311 = vpack.c.b16 %v8047, %v8031
    %v9312 = vpack.c.b16 %v8048, %v8032
    %v9313 = vpack.c.b16 %v8049, %v8033
    %v9314 = vpack.c.b16 %v8050, %v8034
    %v9315 = vpack.c.b16 %v8067, %v8051
    %v9316 = vpack.c.b16 %v8068, %v8052
    %v9317 = vpack.c.b16 %v8069, %v8053
    %v9318 = vpack.c.b16 %v8070, %v8054
    %v9319 = vpack.c.b16 %v8071, %v8055
    %v9320 = vpack.c.b16 %v8072, %v8056
    %v9321 = vpack.c.b16 %v8073, %v8057
    %v9322 = vpack.c.b16 %v8074, %v8058
    %v9323 = vpack.c.b16 %v8075, %v8059
    %v9324 = vpack.c.b16 %v8076, %v8060
    %v9325 = vpack.c.b16 %v8077, %v8061
    %v9326 = vpack.c.b16 %v8078, %v8062
    %v9327 = vpack.c.b16 %v8079, %v8063
    %v9328 = vpack.c.b16 %v8080, %v8064
    %v9329 = vpack.c.b16 %v8081, %v8065
    %v9330 = vpack.c.b16 %v8082, %v8066
    %v9331 = vpack.c.b16 %v8099, %v8083
    %v9332 = vpack.c.b16 %v8100, %v8084
    %v9333 = vpack.c.b16 %v8101, %v8085
    %v9334 = vpack.c.b16 %v8102, %v8086
    %v9335 = vpack.c.b16 %v8103, %v8087
    %v9336 = vpack.c.b16 %v8104, %v8088
    %v9337 = vpack.c.b16 %v8105, %v8089
    %v9338 = vpack.c.b16 %v8106, %v8090
    %v9339 = vpack.c.b16 %v8107, %v8091
    %v9340 = vpack.c.b16 %v8108, %v8092
    %v9341 = vpack.c.b16 %v8109, %v8093
    %v9342 = vpack.c.b16 %v8110, %v8094
    %v9343 = vpack.c.b16 %v8111, %v8095
    %v9344 = vpack.c.b16 %v8112, %v8096
    %v9345 = vpack.c.b16 %v8113, %v8097
    %v9346 = vpack.c.b16 %v8114, %v8098
    %v9347 = vpack.c.b16 %v8131, %v8115
    %v9348 = vpack.c.b16 %v8132, %v8116
    %v9349 = vpack.c.b16 %v8133, %v8117
    %v9350 = vpack.c.b16 %v8134, %v8118
    %v9351 = vpack.c.b16 %v8135, %v8119
    %v9352 = vpack.c.b16 %v8136, %v8120
    %v9353 = vpack.c.b16 %v8137, %v8121
    %v9354 = vpack.c.b16 %v8138, %v8122
    %v9355 = vpack.c.b16 %v8139, %v8123
    %v9356 = vpack.c.b16 %v8140, %v8124
    %v9357 = vpack.c.b16 %v8141, %v8125
    %v9358 = vpack.c.b16 %v8142, %v8126
    %v9359 = vpack.c.b16 %v8143, %v8127
    %v9360 = vpack.c.b16 %v8144, %v8128
    %v9361 = vpack.c.b16 %v8145, %v8129
    %v9362 = vpack.c.b16 %v8146, %v8130
    %v9363 = vpack.c.b16 %v8163, %v8147
    %v9364 = vpack.c.b16 %v8164, %v8148
    %v9365 = vpack.c.b16 %v8165, %v8149
    %v9366 = vpack.c.b16 %v8166, %v8150
    %v9367 = vpack.c.b16 %v8167, %v8151
    %v9368 = vpack.c.b16 %v8168, %v8152
    %v9369 = vpack.c.b16 %v8169, %v8153
    %v9370 = vpack.c.b16 %v8170, %v8154
    %v9371 = vpack.c.b16 %v8171, %v8155
    %v9372 = vpack.c.b16 %v8172, %v8156
    %v9373 = vpack.c.b16 %v8173, %v8157
    %v9374 = vpack.c.b16 %v8174, %v8158
    %v9375 = vpack.c.b16 %v8175, %v8159
    %v9376 = vpack.c.b16 %v8176, %v8160
    %v9377 = vpack.c.b16 %v8177, %v8161
    %v9378 = vpack.c.b16 %v8178, %v8162
    %v9379 = vpack.c.b16 %v8195, %v8179
    %v9380 = vpack.c.b16 %v8196, %v8180
    %v9381 = vpack.c.b16 %v8197, %v8181
    %v9382 = vpack.c.b16 %v8198, %v8182
    %v9383 = vpack.c.b16 %v8199, %v8183
    %v9384 = vpack.c.b16 %v8200, %v8184
    %v9385 = vpack.c.b16 %v8201, %v8185
    %v9386 = vpack.c.b16 %v8202, %v8186
    %v9387 = vpack.c.b16 %v8203, %v8187
    %v9388 = vpack.c.b16 %v8204, %v8188
    %v9389 = vpack.c.b16 %v8205, %v8189
    %v9390 = vpack.c.b16 %v8206, %v8190
    %v9391 = vpack.c.b16 %v8207, %v8191
    %v9392 = vpack.c.b16 %v8208, %v8192
    %v9393 = vpack.c.b16 %v8209, %v8193
    %v9394 = vpack.c.b16 %v8210, %v8194
    %v9395 = vpack.c.b16 %v8227, %v8211
    %v9396 = vpack.c.b16 %v8228, %v8212
    %v9397 = vpack.c.b16 %v8229, %v8213
    %v9398 = vpack.c.b16 %v8230, %v8214
    %v9399 = vpack.c.b16 %v8231, %v8215
    %v9400 = vpack.c.b16 %v8232, %v8216
    %v9401 = vpack.c.b16 %v8233, %v8217
    %v9402 = vpack.c.b16 %v8234, %v8218
    %v9403 = vpack.c.b16 %v8235, %v8219
    %v9404 = vpack.c.b16 %v8236, %v8220
    %v9405 = vpack.c.b16 %v8237, %v8221
    %v9406 = vpack.c.b16 %v8238, %v8222
    %v9407 = vpack.c.b16 %v8239, %v8223
    %v9408 = vpack.c.b16 %v8240, %v8224
    %v9409 = vpack.c.b16 %v8241, %v8225
    %v9410 = vpack.c.b16 %v8242, %v8226
    %v9411 = vpack.c.b16 %v8259, %v8243
    %v9412 = vpack.c.b16 %v8260, %v8244
    %v9413 = vpack.c.b16 %v8261, %v8245
    %v9414 = vpack.c.b16 %v8262, %v8246
    %v9415 = vpack.c.b16 %v8263, %v8247
    %v9416 = vpack.c.b16 %v8264, %v8248
    %v9417 = vpack.c.b16 %v8265, %v8249
    %v9418 = vpack.c.b16 %v8266, %v8250
    %v9419 = vpack.c.b16 %v8267, %v8251
    %v9420 = vpack.c.b16 %v8268, %v8252
    %v9421 = vpack.c.b16 %v8269, %v8253
    %v9422 = vpack.c.b16 %v8270, %v8254
    %v9423 = vpack.c.b16 %v8271, %v8255
    %v9424 = vpack.c.b16 %v8272, %v8256
    %v9425 = vpack.c.b16 %v8273, %v8257
    %v9426 = vpack.c.b16 %v8274, %v8258
    %v9427 = vpack.c.b16 %v8291, %v8275
    %v9428 = vpack.c.b16 %v8292, %v8276
    %v9429 = vpack.c.b16 %v8293, %v8277
    %v9430 = vpack.c.b16 %v8294, %v8278
    %v9431 = vpack.c.b16 %v8295, %v8279
    %v9432 = vpack.c.b16 %v8296, %v8280
    %v9433 = vpack.c.b16 %v8297, %v8281
    %v9434 = vpack.c.b16 %v8298, %v8282
    %v9435 = vpack.c.b16 %v8299, %v8283
    %v9436 = vpack.c.b16 %v8300, %v8284
    %v9437 = vpack.c.b16 %v8301, %v8285
    %v9438 = vpack.c.b16 %v8302, %v8286
    %v9439 = vpack.c.b16 %v8303, %v8287
    %v9440 = vpack.c.b16 %v8304, %v8288
    %v9441 = vpack.c.b16 %v8305, %v8289
    %v9442 = vpack.c.b16 %v8306, %v8290
    %v9443 = vpack.c.b16 %v8323, %v8307
    %v9444 = vpack.c.b16 %v8324, %v8308
    %v9445 = vpack.c.b16 %v8325, %v8309
    %v9446 = vpack.c.b16 %v8326, %v8310
    %v9447 = vpack.c.b16 %v8327, %v8311
    %v9448 = vpack.c.b16 %v8328, %v8312
    %v9449 = vpack.c.b16 %v8329, %v8313
    %v9450 = vpack.c.b16 %v8330, %v8314
    %v9451 = vpack.c.b16 %v8331, %v8315
    %v9452 = vpack.c.b16 %v8332, %v8316
    %v9453 = vpack.c.b16 %v8333, %v8317
    %v9454 = vpack.c.b16 %v8334, %v8318
    %v9455 = vpack.c.b16 %v8335, %v8319
    %v9456 = vpack.c.b16 %v8336, %v8320
    %v9457 = vpack.c.b16 %v8337, %v8321
    %v9458 = vpack.c.b16 %v8338, %v8322
    %v9459 = vpack.c.b16 %v8355, %v8339
    %v9460 = vpack.c.b16 %v8356, %v8340
    %v9461 = vpack.c.b16 %v8357, %v8341
    %v9462 = vpack.c.b16 %v8358, %v8342
    %v9463 = vpack.c.b16 %v8359, %v8343
    %v9464 = vpack.c.b16 %v8360, %v8344
    %v9465 = vpack.c.b16 %v8361, %v8345
    %v9466 = vpack.c.b16 %v8362, %v8346
    %v9467 = vpack.c.b16 %v8363, %v8347
    %v9468 = vpack.c.b16 %v8364, %v8348
    %v9469 = vpack.c.b16 %v8365, %v8349
    %v9470 = vpack.c.b16 %v8366, %v8350
    %v9471 = vpack.c.b16 %v8367, %v8351
    %v9472 = vpack.c.b16 %v8368, %v8352
    %v9473 = vpack.c.b16 %v8369, %v8353
    %v9474 = vpack.c.b16 %v8370, %v8354
    %v9475 = vpack.c.b16 %v8387, %v8371
    %v9476 = vpack.c.b16 %v8388, %v8372
    %v9477 = vpack.c.b16 %v8389, %v8373
    %v9478 = vpack.c.b16 %v8390, %v8374
    %v9479 = vpack.c.b16 %v8391, %v8375
    %v9480 = vpack.c.b16 %v8392, %v8376
    %v9481 = vpack.c.b16 %v8393, %v8377
    %v9482 = vpack.c.b16 %v8394, %v8378
    %v9483 = vpack.c.b16 %v8395, %v8379
    %v9484 = vpack.c.b16 %v8396, %v8380
    %v9485 = vpack.c.b16 %v8397, %v8381
    %v9486 = vpack.c.b16 %v8398, %v8382
    %v9487 = vpack.c.b16 %v8399, %v8383
    %v9488 = vpack.c.b16 %v8400, %v8384
    %v9489 = vpack.c.b16 %v8401, %v8385
    %v9490 = vpack.c.b16 %v8402, %v8386
    %v9491 = vpack.c.b16 %v8419, %v8403
    %v9492 = vpack.c.b16 %v8420, %v8404
    %v9493 = vpack.c.b16 %v8421, %v8405
    %v9494 = vpack.c.b16 %v8422, %v8406
    %v9495 = vpack.c.b16 %v8423, %v8407
    %v9496 = vpack.c.b16 %v8424, %v8408
    %v9497 = vpack.c.b16 %v8425, %v8409
    %v9498 = vpack.c.b16 %v8426, %v8410
    %v9499 = vpack.c.b16 %v8427, %v8411
    %v9500 = vpack.c.b16 %v8428, %v8412
    %v9501 = vpack.c.b16 %v8429, %v8413
    %v9502 = vpack.c.b16 %v8430, %v8414
    %v9503 = vpack.c.b16 %v8431, %v8415
    %v9504 = vpack.c.b16 %v8432, %v8416
    %v9505 = vpack.c.b16 %v8433, %v8417
    %v9506 = vpack.c.b16 %v8434, %v8418
    %v9507 = vpack.c.b16 %v8451, %v8435
    %v9508 = vpack.c.b16 %v8452, %v8436
    %v9509 = vpack.c.b16 %v8453, %v8437
    %v9510 = vpack.c.b16 %v8454, %v8438
    %v9511 = vpack.c.b16 %v8455, %v8439
    %v9512 = vpack.c.b16 %v8456, %v8440
    %v9513 = vpack.c.b16 %v8457, %v8441
    %v9514 = vpack.c.b16 %v8458, %v8442
    %v9515 = vpack.c.b16 %v8459, %v8443
    %v9516 = vpack.c.b16 %v8460, %v8444
    %v9517 = vpack.c.b16 %v8461, %v8445
    %v9518 = vpack.c.b16 %v8462, %v8446
    %v9519 = vpack.c.b16 %v8463, %v8447
    %v9520 = vpack.c.b16 %v8464, %v8448
    %v9521 = vpack.c.b16 %v8465, %v8449
    %v9522 = vpack.c.b16 %v8466, %v8450
    %v9523 = vpack.c.b16 %v8483, %v8467
    %v9524 = vpack.c.b16 %v8484, %v8468
    %v9525 = vpack.c.b16 %v8485, %v8469
    %v9526 = vpack.c.b16 %v8486, %v8470
    %v9527 = vpack.c.b16 %v8487, %v8471
    %v9528 = vpack.c.b16 %v8488, %v8472
    %v9529 = vpack.c.b16 %v8489, %v8473
    %v9530 = vpack.c.b16 %v8490, %v8474
    %v9531 = vpack.c.b16 %v8491, %v8475
    %v9532 = vpack.c.b16 %v8492, %v8476
    %v9533 = vpack.c.b16 %v8493, %v8477
    %v9534 = vpack.c.b16 %v8494, %v8478
    %v9535 = vpack.c.b16 %v8495, %v8479
    %v9536 = vpack.c.b16 %v8496, %v8480
    %v9537 = vpack.c.b16 %v8497, %v8481
    %v9538 = vpack.c.b16 %v8498, %v8482
    %v9539 = vpack.c.b16 %v8515, %v8499
    %v9540 = vpack.c.b16 %v8516, %v8500
    %v9541 = vpack.c.b16 %v8517, %v8501
    %v9542 = vpack.c.b16 %v8518, %v8502
    %v9543 = vpack.c.b16 %v8519, %v8503
    %v9544 = vpack.c.b16 %v8520, %v8504
    %v9545 = vpack.c.b16 %v8521, %v8505
    %v9546 = vpack.c.b16 %v8522, %v8506
    %v9547 = vpack.c.b16 %v8523, %v8507
    %v9548 = vpack.c.b16 %v8524, %v8508
    %v9549 = vpack.c.b16 %v8525, %v8509
    %v9550 = vpack.c.b16 %v8526, %v8510
    %v9551 = vpack.c.b16 %v8527, %v8511
    %v9552 = vpack.c.b16 %v8528, %v8512
    %v9553 = vpack.c.b16 %v8529, %v8513
    %v9554 = vpack.c.b16 %v8530, %v8514
    %10579 = vmatprep.subr.bf16.mxu0 %v8532
    %10580 = vmatpush1.bf16.msra.mxu0 %v8531
    %10581 = vmatprep.subr.bf16.mxu0 %v8548
    %10582 = vmatpush1.bf16.msra.mxu0 %v8547
    %10583 = vmatprep.subr.bf16.mxu0 %v8564
    %10584 = vmatpush1.bf16.msra.mxu0 %v8563
    %10585 = vmatprep.subr.bf16.mxu0 %v8580
    %10586 = vmatpush1.bf16.msra.mxu0 %v8579
    %10587 = vmatprep.subr.bf16.mxu0 %v8596
    %10588 = vmatpush1.bf16.msra.mxu0 %v8595
    %10589 = vmatprep.subr.bf16.mxu0 %v8612
    %10590 = vmatpush1.bf16.msra.mxu0 %v8611
    %10591 = vmatprep.subr.bf16.mxu0 %v8628
    %10592 = vmatpush1.bf16.msra.mxu0 %v8627
    %10593 = vmatprep.subr.bf16.mxu0 %v8644
    %10594 = vmatpush1.bf16.msra.mxu0 %v8643
    %10595 = vmatprep.subr.bf16.mxu0 %v8660
    %10596 = vmatpush1.bf16.msra.mxu0 %v8659
    %10597 = vmatprep.subr.bf16.mxu0 %v8676
    %10598 = vmatpush1.bf16.msra.mxu0 %v8675
    %10599 = vmatprep.subr.bf16.mxu0 %v8692
    %10600 = vmatpush1.bf16.msra.mxu0 %v8691
    %10601 = vmatprep.subr.bf16.mxu0 %v8708
    %10602 = vmatpush1.bf16.msra.mxu0 %v8707
    %10603 = vmatprep.subr.bf16.mxu0 %v8724
    %10604 = vmatpush1.bf16.msra.mxu0 %v8723
    %10605 = vmatprep.subr.bf16.mxu0 %v8740
    %10606 = vmatpush1.bf16.msra.mxu0 %v8739
    %10607 = vmatprep.subr.bf16.mxu0 %v8756
    %10608 = vmatpush1.bf16.msra.mxu0 %v8755
    %10609 = vmatprep.subr.bf16.mxu0 %v8772
    %10610 = vmatpush1.bf16.msra.mxu0 %v8771
    %10611 = vmatprep.mubr.bf16.mxu0 %v4344
    %10612 = vmatmul.mubr.bf16.gmra.mrb[0].mxu0 %v4343
    %v10613 = vpop.f32.mrb[0].mxu0
    %v10614 = vadd.f32 %v5382, %v10613
    %v10615 = vpop.f32.mrb[0].mxu0
    %v10616 = vadd.f32 %v5386, %v10615
    %v10617 = vpop.f32.mrb[0].mxu0
    %v10618 = vadd.f32 %v5382, %v10617
    %v10619 = vpop.f32.mrb[0].mxu0
    %v10620 = vadd.f32 %v5386, %v10619
    %10621 = vdwg.mxu0
    %10622 = vmatprep.subr.bf16.mxu0 %v8788
    %10623 = vmatpush1.bf16.msra.mxu0 %v8787
    %10624 = vmatprep.subr.bf16.mxu0 %v8804
    %10625 = vmatpush1.bf16.msra.mxu0 %v8803
    %10626 = vmatprep.subr.bf16.mxu0 %v8820
    %10627 = vmatpush1.bf16.msra.mxu0 %v8819
    %10628 = vmatprep.subr.bf16.mxu0 %v8836
    %10629 = vmatpush1.bf16.msra.mxu0 %v8835
    %10630 = vmatprep.subr.bf16.mxu0 %v8852
    %10631 = vmatpush1.bf16.msra.mxu0 %v8851
    %10632 = vmatprep.subr.bf16.mxu0 %v8868
    %10633 = vmatpush1.bf16.msra.mxu0 %v8867
    %10634 = vmatprep.subr.bf16.mxu0 %v8884
    %10635 = vmatpush1.bf16.msra.mxu0 %v8883
    %10636 = vmatprep.subr.bf16.mxu0 %v8900
    %10637 = vmatpush1.bf16.msra.mxu0 %v8899
    %10638 = vmatprep.subr.bf16.mxu0 %v8916
    %10639 = vmatpush1.bf16.msra.mxu0 %v8915
    %10640 = vmatprep.subr.bf16.mxu0 %v8932
    %10641 = vmatpush1.bf16.msra.mxu0 %v8931
    %10642 = vmatprep.subr.bf16.mxu0 %v8948
    %10643 = vmatpush1.bf16.msra.mxu0 %v8947
    %10644 = vmatprep.subr.bf16.mxu0 %v8964
    %10645 = vmatpush1.bf16.msra.mxu0 %v8963
    %10646 = vmatprep.subr.bf16.mxu0 %v8980
    %10647 = vmatpush1.bf16.msra.mxu0 %v8979
    %10648 = vmatprep.subr.bf16.mxu0 %v8996
    %10649 = vmatpush1.bf16.msra.mxu0 %v8995
    %10650 = vmatprep.subr.bf16.mxu0 %v9012
    %10651 = vmatpush1.bf16.msra.mxu0 %v9011
    %10652 = vmatprep.subr.bf16.mxu0 %v9028
    %10653 = vmatpush1.bf16.msra.mxu0 %v9027
    %10654 = vmatprep.mubr.bf16.mxu0 %v4346
    %10655 = vmatmul.mubr.bf16.gmra.mrb[0].mxu0 %v4345
    %v10656 = vpop.f32.mrb[0].mxu0
    %v10657 = vadd.f32 %v10614, %v10656
    %v10658 = vpop.f32.mrb[0].mxu0
    %v10659 = vadd.f32 %v10616, %v10658
    %v10660 = vpop.f32.mrb[0].mxu0
    %v10661 = vadd.f32 %v10618, %v10660
    %v10662 = vpop.f32.mrb[0].mxu0
    %v10663 = vadd.f32 %v10620, %v10662
    %10664 = vdwg.mxu0
    %10665 = vmatprep.subr.bf16.mxu0 %v9044
    %10666 = vmatpush1.bf16.msra.mxu0 %v9043
    %10667 = vmatprep.subr.bf16.mxu0 %v9060
    %10668 = vmatpush1.bf16.msra.mxu0 %v9059
    %10669 = vmatprep.subr.bf16.mxu0 %v9076
    %10670 = vmatpush1.bf16.msra.mxu0 %v9075
    %10671 = vmatprep.subr.bf16.mxu0 %v9092
    %10672 = vmatpush1.bf16.msra.mxu0 %v9091
    %10673 = vmatprep.subr.bf16.mxu0 %v9108
    %10674 = vmatpush1.bf16.msra.mxu0 %v9107
    %10675 = vmatprep.subr.bf16.mxu0 %v9124
    %10676 = vmatpush1.bf16.msra.mxu0 %v9123
    %10677 = vmatprep.subr.bf16.mxu0 %v9140
    %10678 = vmatpush1.bf16.msra.mxu0 %v9139
    %10679 = vmatprep.subr.bf16.mxu0 %v9156
    %10680 = vmatpush1.bf16.msra.mxu0 %v9155
    %10681 = vmatprep.subr.bf16.mxu0 %v9172
    %10682 = vmatpush1.bf16.msra.mxu0 %v9171
    %10683 = vmatprep.subr.bf16.mxu0 %v9188
    %10684 = vmatpush1.bf16.msra.mxu0 %v9187
    %10685 = vmatprep.subr.bf16.mxu0 %v9204
    %10686 = vmatpush1.bf16.msra.mxu0 %v9203
    %10687 = vmatprep.subr.bf16.mxu0 %v9220
    %10688 = vmatpush1.bf16.msra.mxu0 %v9219
    %10689 = vmatprep.subr.bf16.mxu0 %v9236
    %10690 = vmatpush1.bf16.msra.mxu0 %v9235
    %10691 = vmatprep.subr.bf16.mxu0 %v9252
    %10692 = vmatpush1.bf16.msra.mxu0 %v9251
    %10693 = vmatprep.subr.bf16.mxu0 %v9268
    %10694 = vmatpush1.bf16.msra.mxu0 %v9267
    %10695 = vmatprep.subr.bf16.mxu0 %v9284
    %10696 = vmatpush1.bf16.msra.mxu0 %v9283
    %10697 = vmatprep.mubr.bf16.mxu0 %v4348
    %10698 = vmatmul.mubr.bf16.gmra.mrb[0].mxu0 %v4347
    %v10699 = vpop.f32.mrb[0].mxu0
    %v10700 = vadd.f32 %v10657, %v10699
    %v10701 = vpop.f32.mrb[0].mxu0
    %v10702 = vadd.f32 %v10659, %v10701
    %v10703 = vpop.f32.mrb[0].mxu0
    %v10704 = vadd.f32 %v10661, %v10703
    %v10705 = vpop.f32.mrb[0].mxu0
    %v10706 = vadd.f32 %v10663, %v10705
    %10707 = vdwg.mxu0
    %10708 = vmatprep.subr.bf16.mxu0 %v9300
    %10709 = vmatpush1.bf16.msra.mxu0 %v9299
    %10710 = vmatprep.subr.bf16.mxu0 %v9316
    %10711 = vmatpush1.bf16.msra.mxu0 %v9315
    %10712 = vmatprep.subr.bf16.mxu0 %v9332
    %10713 = vmatpush1.bf16.msra.mxu0 %v9331
    %10714 = vmatprep.subr.bf16.mxu0 %v9348
    %10715 = vmatpush1.bf16.msra.mxu0 %v9347
    %10716 = vmatprep.subr.bf16.mxu0 %v9364
    %10717 = vmatpush1.bf16.msra.mxu0 %v9363
    %10718 = vmatprep.subr.bf16.mxu0 %v9380
    %10719 = vmatpush1.bf16.msra.mxu0 %v9379
    %10720 = vmatprep.subr.bf16.mxu0 %v9396
    %10721 = vmatpush1.bf16.msra.mxu0 %v9395
    %10722 = vmatprep.subr.bf16.mxu0 %v9412
    %10723 = vmatpush1.bf16.msra.mxu0 %v9411
    %10724 = vmatprep.subr.bf16.mxu0 %v9428
    %10725 = vmatpush1.bf16.msra.mxu0 %v9427
    %10726 = vmatprep.subr.bf16.mxu0 %v9444
    %10727 = vmatpush1.bf16.msra.mxu0 %v9443
    %10728 = vmatprep.subr.bf16.mxu0 %v9460
    %10729 = vmatpush1.bf16.msra.mxu0 %v9459
    %10730 = vmatprep.subr.bf16.mxu0 %v9476
    %10731 = vmatpush1.bf16.msra.mxu0 %v9475
    %10732 = vmatprep.subr.bf16.mxu0 %v9492
    %10733 = vmatpush1.bf16.msra.mxu0 %v9491
    %10734 = vmatprep.subr.bf16.mxu0 %v9508
    %10735 = vmatpush1.bf16.msra.mxu0 %v9507
    %10736 = vmatprep.subr.bf16.mxu0 %v9524
    %10737 = vmatpush1.bf16.msra.mxu0 %v9523
    %10738 = vmatprep.subr.bf16.mxu0 %v9540
    %10739 = vmatpush1.bf16.msra.mxu0 %v9539
    %10740 = vmatprep.mubr.bf16.mxu0 %v4350
    %10741 = vmatmul.mubr.bf16.gmra.mrb[0].mxu0 %v4349
    %v10742 = vpop.f32.mrb[0].mxu0
    %v10743 = vadd.f32 %v10700, %v10742
    %v10744 = vpop.f32.mrb[0].mxu0
    %v10745 = vadd.f32 %v10702, %v10744
    %v10746 = vpop.f32.mrb[0].mxu0
    %v10747 = vadd.f32 %v10704, %v10746
    %v10748 = vpop.f32.mrb[0].mxu0
    %v10749 = vadd.f32 %v10706, %v10748
    %10750 = vdwg.mxu0
    %10751 = vmatprep.subr.bf16.mxu0 %v8534
    %10752 = vmatpush1.bf16.msra.mxu0 %v8533
    %10753 = vmatprep.subr.bf16.mxu0 %v8550
    %10754 = vmatpush1.bf16.msra.mxu0 %v8549
    %10755 = vmatprep.subr.bf16.mxu0 %v8566
    %10756 = vmatpush1.bf16.msra.mxu0 %v8565
    %10757 = vmatprep.subr.bf16.mxu0 %v8582
    %10758 = vmatpush1.bf16.msra.mxu0 %v8581
    %10759 = vmatprep.subr.bf16.mxu0 %v8598
    %10760 = vmatpush1.bf16.msra.mxu0 %v8597
    %10761 = vmatprep.subr.bf16.mxu0 %v8614
    %10762 = vmatpush1.bf16.msra.mxu0 %v8613
    %10763 = vmatprep.subr.bf16.mxu0 %v8630
    %10764 = vmatpush1.bf16.msra.mxu0 %v8629
    %10765 = vmatprep.subr.bf16.mxu0 %v8646
    %10766 = vmatpush1.bf16.msra.mxu0 %v8645
    %10767 = vmatprep.subr.bf16.mxu0 %v8662
    %10768 = vmatpush1.bf16.msra.mxu0 %v8661
    %10769 = vmatprep.subr.bf16.mxu0 %v8678
    %10770 = vmatpush1.bf16.msra.mxu0 %v8677
    %10771 = vmatprep.subr.bf16.mxu0 %v8694
    %10772 = vmatpush1.bf16.msra.mxu0 %v8693
    %10773 = vmatprep.subr.bf16.mxu0 %v8710
    %10774 = vmatpush1.bf16.msra.mxu0 %v8709
    %10775 = vmatprep.subr.bf16.mxu0 %v8726
    %10776 = vmatpush1.bf16.msra.mxu0 %v8725
    %10777 = vmatprep.subr.bf16.mxu0 %v8742
    %10778 = vmatpush1.bf16.msra.mxu0 %v8741
    %10779 = vmatprep.subr.bf16.mxu0 %v8758
    %10780 = vmatpush1.bf16.msra.mxu0 %v8757
    %10781 = vmatprep.subr.bf16.mxu0 %v8774
    %10782 = vmatpush1.bf16.msra.mxu0 %v8773
    %10783 = vmatprep.mubr.bf16.mxu0 %v4344
    %10784 = vmatmul.mubr.bf16.gmra.mrb[0].mxu0 %v4343
    %v10785 = vpop.f32.mrb[0].mxu0
    %v10786 = vadd.f32 %v5390, %v10785
    %v10787 = vpop.f32.mrb[0].mxu0
    %v10788 = vadd.f32 %v5394, %v10787
    %v10789 = vpop.f32.mrb[0].mxu0
    %v10790 = vadd.f32 %v5390, %v10789
    %v10791 = vpop.f32.mrb[0].mxu0
    %v10792 = vadd.f32 %v5394, %v10791
    %10793 = vdwg.mxu0
    %10794 = vmatprep.subr.bf16.mxu0 %v8790
    %10795 = vmatpush1.bf16.msra.mxu0 %v8789
    %10796 = vmatprep.subr.bf16.mxu0 %v8806
    %10797 = vmatpush1.bf16.msra.mxu0 %v8805
    %10798 = vmatprep.subr.bf16.mxu0 %v8822
    %10799 = vmatpush1.bf16.msra.mxu0 %v8821
    %10800 = vmatprep.subr.bf16.mxu0 %v8838
    %10801 = vmatpush1.bf16.msra.mxu0 %v8837
    %10802 = vmatprep.subr.bf16.mxu0 %v8854
    %10803 = vmatpush1.bf16.msra.mxu0 %v8853
    %10804 = vmatprep.subr.bf16.mxu0 %v8870
    %10805 = vmatpush1.bf16.msra.mxu0 %v8869
    %10806 = vmatprep.subr.bf16.mxu0 %v8886
    %10807 = vmatpush1.bf16.msra.mxu0 %v8885
    %10808 = vmatprep.subr.bf16.mxu0 %v8902
    %10809 = vmatpush1.bf16.msra.mxu0 %v8901
    %10810 = vmatprep.subr.bf16.mxu0 %v8918
    %10811 = vmatpush1.bf16.msra.mxu0 %v8917
    %10812 = vmatprep.subr.bf16.mxu0 %v8934
    %10813 = vmatpush1.bf16.msra.mxu0 %v8933
    %10814 = vmatprep.subr.bf16.mxu0 %v8950
    %10815 = vmatpush1.bf16.msra.mxu0 %v8949
    %10816 = vmatprep.subr.bf16.mxu0 %v8966
    %10817 = vmatpush1.bf16.msra.mxu0 %v8965
    %10818 = vmatprep.subr.bf16.mxu0 %v8982
    %10819 = vmatpush1.bf16.msra.mxu0 %v8981
    %10820 = vmatprep.subr.bf16.mxu0 %v8998
    %10821 = vmatpush1.bf16.msra.mxu0 %v8997
    %10822 = vmatprep.subr.bf16.mxu0 %v9014
    %10823 = vmatpush1.bf16.msra.mxu0 %v9013
    %10824 = vmatprep.subr.bf16.mxu0 %v9030
    %10825 = vmatpush1.bf16.msra.mxu0 %v9029
    %10826 = vmatprep.mubr.bf16.mxu0 %v4346
    %10827 = vmatmul.mubr.bf16.gmra.mrb[0].mxu0 %v4345
    %v10828 = vpop.f32.mrb[0].mxu0
    %v10829 = vadd.f32 %v10786, %v10828
    %v10830 = vpop.f32.mrb[0].mxu0
    %v10831 = vadd.f32 %v10788, %v10830
    %v10832 = vpop.f32.mrb[0].mxu0
    %v10833 = vadd.f32 %v10790, %v10832
    %v10834 = vpop.f32.mrb[0].mxu0
    %v10835 = vadd.f32 %v10792, %v10834
    %10836 = vdwg.mxu0
    %10837 = vmatprep.subr.bf16.mxu0 %v9046
    %10838 = vmatpush1.bf16.msra.mxu0 %v9045
    %10839 = vmatprep.subr.bf16.mxu0 %v9062
    %10840 = vmatpush1.bf16.msra.mxu0 %v9061
    %10841 = vmatprep.subr.bf16.mxu0 %v9078
    %10842 = vmatpush1.bf16.msra.mxu0 %v9077
    %10843 = vmatprep.subr.bf16.mxu0 %v9094
    %10844 = vmatpush1.bf16.msra.mxu0 %v9093
    %10845 = vmatprep.subr.bf16.mxu0 %v9110
    %10846 = vmatpush1.bf16.msra.mxu0 %v9109
    %10847 = vmatprep.subr.bf16.mxu0 %v9126
    %10848 = vmatpush1.bf16.msra.mxu0 %v9125
    %10849 = vmatprep.subr.bf16.mxu0 %v9142
    %10850 = vmatpush1.bf16.msra.mxu0 %v9141
    %10851 = vmatprep.subr.bf16.mxu0 %v9158
    %10852 = vmatpush1.bf16.msra.mxu0 %v9157
    %10853 = vmatprep.subr.bf16.mxu0 %v9174
    %10854 = vmatpush1.bf16.msra.mxu0 %v9173
    %10855 = vmatprep.subr.bf16.mxu0 %v9190
    %10856 = vmatpush1.bf16.msra.mxu0 %v9189
    %10857 = vmatprep.subr.bf16.mxu0 %v9206
    %10858 = vmatpush1.bf16.msra.mxu0 %v9205
    %10859 = vmatprep.subr.bf16.mxu0 %v9222
    %10860 = vmatpush1.bf16.msra.mxu0 %v9221
    %10861 = vmatprep.subr.bf16.mxu0 %v9238
    %10862 = vmatpush1.bf16.msra.mxu0 %v9237
    %10863 = vmatprep.subr.bf16.mxu0 %v9254
    %10864 = vmatpush1.bf16.msra.mxu0 %v9253
    %10865 = vmatprep.subr.bf16.mxu0 %v9270
    %10866 = vmatpush1.bf16.msra.mxu0 %v9269
    %10867 = vmatprep.subr.bf16.mxu0 %v9286
    %10868 = vmatpush1.bf16.msra.mxu0 %v9285
    %10869 = vmatprep.mubr.bf16.mxu0 %v4348
    %10870 = vmatmul.mubr.bf16.gmra.mrb[0].mxu0 %v4347
    %v10871 = vpop.f32.mrb[0].mxu0
    %v10872 = vadd.f32 %v10829, %v10871
    %v10873 = vpop.f32.mrb[0].mxu0
    %v10874 = vadd.f32 %v10831, %v10873
    %v10875 = vpop.f32.mrb[0].mxu0
    %v10876 = vadd.f32 %v10833, %v10875
    %v10877 = vpop.f32.mrb[0].mxu0
    %v10878 = vadd.f32 %v10835, %v10877
    %10879 = vdwg.mxu0
    %10880 = vmatprep.subr.bf16.mxu0 %v9302
    %10881 = vmatpush1.bf16.msra.mxu0 %v9301
    %10882 = vmatprep.subr.bf16.mxu0 %v9318
    %10883 = vmatpush1.bf16.msra.mxu0 %v9317
    %10884 = vmatprep.subr.bf16.mxu0 %v9334
    %10885 = vmatpush1.bf16.msra.mxu0 %v9333
    %10886 = vmatprep.subr.bf16.mxu0 %v9350
    %10887 = vmatpush1.bf16.msra.mxu0 %v9349
    %10888 = vmatprep.subr.bf16.mxu0 %v9366
    %10889 = vmatpush1.bf16.msra.mxu0 %v9365
    %10890 = vmatprep.subr.bf16.mxu0 %v9382
    %10891 = vmatpush1.bf16.msra.mxu0 %v9381
    %10892 = vmatprep.subr.bf16.mxu0 %v9398
    %10893 = vmatpush1.bf16.msra.mxu0 %v9397
    %10894 = vmatprep.subr.bf16.mxu0 %v9414
    %10895 = vmatpush1.bf16.msra.mxu0 %v9413
    %10896 = vmatprep.subr.bf16.mxu0 %v9430
    %10897 = vmatpush1.bf16.msra.mxu0 %v9429
    %10898 = vmatprep.subr.bf16.mxu0 %v9446
    %10899 = vmatpush1.bf16.msra.mxu0 %v9445
    %10900 = vmatprep.subr.bf16.mxu0 %v9462
    %10901 = vmatpush1.bf16.msra.mxu0 %v9461
    %10902 = vmatprep.subr.bf16.mxu0 %v9478
    %10903 = vmatpush1.bf16.msra.mxu0 %v9477
    %10904 = vmatprep.subr.bf16.mxu0 %v9494
    %10905 = vmatpush1.bf16.msra.mxu0 %v9493
    %10906 = vmatprep.subr.bf16.mxu0 %v9510
    %10907 = vmatpush1.bf16.msra.mxu0 %v9509
    %10908 = vmatprep.subr.bf16.mxu0 %v9526
    %10909 = vmatpush1.bf16.msra.mxu0 %v9525
    %10910 = vmatprep.subr.bf16.mxu0 %v9542
    %10911 = vmatpush1.bf16.msra.mxu0 %v9541
    %10912 = vmatprep.mubr.bf16.mxu0 %v4350
    %10913 = vmatmul.mubr.bf16.gmra.mrb[0].mxu0 %v4349
    %v10914 = vpop.f32.mrb[0].mxu0
    %v10915 = vadd.f32 %v10872, %v10914
    %v10916 = vpop.f32.mrb[0].mxu0
    %v10917 = vadd.f32 %v10874, %v10916
    %v10918 = vpop.f32.mrb[0].mxu0
    %v10919 = vadd.f32 %v10876, %v10918
    %v10920 = vpop.f32.mrb[0].mxu0
    %v10921 = vadd.f32 %v10878, %v10920
    %10922 = vdwg.mxu0
    %10923 = vmatprep.subr.bf16.mxu0 %v8536
    %10924 = vmatpush1.bf16.msra.mxu0 %v8535
    %10925 = vmatprep.subr.bf16.mxu0 %v8552
    %10926 = vmatpush1.bf16.msra.mxu0 %v8551
    %10927 = vmatprep.subr.bf16.mxu0 %v8568
    %10928 = vmatpush1.bf16.msra.mxu0 %v8567
    %10929 = vmatprep.subr.bf16.mxu0 %v8584
    %10930 = vmatpush1.bf16.msra.mxu0 %v8583
    %10931 = vmatprep.subr.bf16.mxu0 %v8600
    %10932 = vmatpush1.bf16.msra.mxu0 %v8599
    %10933 = vmatprep.subr.bf16.mxu0 %v8616
    %10934 = vmatpush1.bf16.msra.mxu0 %v8615
    %10935 = vmatprep.subr.bf16.mxu0 %v8632
    %10936 = vmatpush1.bf16.msra.mxu0 %v8631
    %10937 = vmatprep.subr.bf16.mxu0 %v8648
    %10938 = vmatpush1.bf16.msra.mxu0 %v8647
    %10939 = vmatprep.subr.bf16.mxu0 %v8664
    %10940 = vmatpush1.bf16.msra.mxu0 %v8663
    %10941 = vmatprep.subr.bf16.mxu0 %v8680
    %10942 = vmatpush1.bf16.msra.mxu0 %v8679
    %10943 = vmatprep.subr.bf16.mxu0 %v8696
    %10944 = vmatpush1.bf16.msra.mxu0 %v8695
    %10945 = vmatprep.subr.bf16.mxu0 %v8712
    %10946 = vmatpush1.bf16.msra.mxu0 %v8711
    %10947 = vmatprep.subr.bf16.mxu0 %v8728
    %10948 = vmatpush1.bf16.msra.mxu0 %v8727
    %10949 = vmatprep.subr.bf16.mxu0 %v8744
    %10950 = vmatpush1.bf16.msra.mxu0 %v8743
    %10951 = vmatprep.subr.bf16.mxu0 %v8760
    %10952 = vmatpush1.bf16.msra.mxu0 %v8759
    %10953 = vmatprep.subr.bf16.mxu0 %v8776
    %10954 = vmatpush1.bf16.msra.mxu0 %v8775
    %10955 = vmatprep.mubr.bf16.mxu0 %v4344
    %10956 = vmatmul.mubr.bf16.gmra.mrb[0].mxu0 %v4343
    %v10957 = vpop.f32.mrb[0].mxu0
    %v10958 = vadd.f32 %v5398, %v10957
    %v10959 = vpop.f32.mrb[0].mxu0
    %v10960 = vadd.f32 %v5402, %v10959
    %v10961 = vpop.f32.mrb[0].mxu0
    %v10962 = vadd.f32 %v5398, %v10961
    %v10963 = vpop.f32.mrb[0].mxu0
    %v10964 = vadd.f32 %v5402, %v10963
    %10965 = vdwg.mxu0
    %10966 = vmatprep.subr.bf16.mxu0 %v8792
    %10967 = vmatpush1.bf16.msra.mxu0 %v8791
    %10968 = vmatprep.subr.bf16.mxu0 %v8808
    %10969 = vmatpush1.bf16.msra.mxu0 %v8807
    %10970 = vmatprep.subr.bf16.mxu0 %v8824
    %10971 = vmatpush1.bf16.msra.mxu0 %v8823
    %10972 = vmatprep.subr.bf16.mxu0 %v8840
    %10973 = vmatpush1.bf16.msra.mxu0 %v8839
    %10974 = vmatprep.subr.bf16.mxu0 %v8856
    %10975 = vmatpush1.bf16.msra.mxu0 %v8855
    %10976 = vmatprep.subr.bf16.mxu0 %v8872
    %10977 = vmatpush1.bf16.msra.mxu0 %v8871
    %10978 = vmatprep.subr.bf16.mxu0 %v8888
    %10979 = vmatpush1.bf16.msra.mxu0 %v8887
    %10980 = vmatprep.subr.bf16.mxu0 %v8904
    %10981 = vmatpush1.bf16.msra.mxu0 %v8903
    %10982 = vmatprep.subr.bf16.mxu0 %v8920
    %10983 = vmatpush1.bf16.msra.mxu0 %v8919
    %10984 = vmatprep.subr.bf16.mxu0 %v8936
    %10985 = vmatpush1.bf16.msra.mxu0 %v8935
    %10986 = vmatprep.subr.bf16.mxu0 %v8952
    %10987 = vmatpush1.bf16.msra.mxu0 %v8951
    %10988 = vmatprep.subr.bf16.mxu0 %v8968
    %10989 = vmatpush1.bf16.msra.mxu0 %v8967
    %10990 = vmatprep.subr.bf16.mxu0 %v8984
    %10991 = vmatpush1.bf16.msra.mxu0 %v8983
    %10992 = vmatprep.subr.bf16.mxu0 %v9000
    %10993 = vmatpush1.bf16.msra.mxu0 %v8999
    %10994 = vmatprep.subr.bf16.mxu0 %v9016
    %10995 = vmatpush1.bf16.msra.mxu0 %v9015
    %10996 = vmatprep.subr.bf16.mxu0 %v9032
    %10997 = vmatpush1.bf16.msra.mxu0 %v9031
    %10998 = vmatprep.mubr.bf16.mxu0 %v4346
    %10999 = vmatmul.mubr.bf16.gmra.mrb[0].mxu0 %v4345
    %v11000 = vpop.f32.mrb[0].mxu0
    %v11001 = vadd.f32 %v10958, %v11000
    %v11002 = vpop.f32.mrb[0].mxu0
    %v11003 = vadd.f32 %v10960, %v11002
    %v11004 = vpop.f32.mrb[0].mxu0
    %v11005 = vadd.f32 %v10962, %v11004
    %v11006 = vpop.f32.mrb[0].mxu0
    %v11007 = vadd.f32 %v10964, %v11006
    %11008 = vdwg.mxu0
    %11009 = vmatprep.subr.bf16.mxu0 %v9048
    %11010 = vmatpush1.bf16.msra.mxu0 %v9047
    %11011 = vmatprep.subr.bf16.mxu0 %v9064
    %11012 = vmatpush1.bf16.msra.mxu0 %v9063
    %11013 = vmatprep.subr.bf16.mxu0 %v9080
    %11014 = vmatpush1.bf16.msra.mxu0 %v9079
    %11015 = vmatprep.subr.bf16.mxu0 %v9096
    %11016 = vmatpush1.bf16.msra.mxu0 %v9095
    %11017 = vmatprep.subr.bf16.mxu0 %v9112
    %11018 = vmatpush1.bf16.msra.mxu0 %v9111
    %11019 = vmatprep.subr.bf16.mxu0 %v9128
    %11020 = vmatpush1.bf16.msra.mxu0 %v9127
    %11021 = vmatprep.subr.bf16.mxu0 %v9144
    %11022 = vmatpush1.bf16.msra.mxu0 %v9143
    %11023 = vmatprep.subr.bf16.mxu0 %v9160
    %11024 = vmatpush1.bf16.msra.mxu0 %v9159
    %11025 = vmatprep.subr.bf16.mxu0 %v9176
    %11026 = vmatpush1.bf16.msra.mxu0 %v9175
    %11027 = vmatprep.subr.bf16.mxu0 %v9192
    %11028 = vmatpush1.bf16.msra.mxu0 %v9191
    %11029 = vmatprep.subr.bf16.mxu0 %v9208
    %11030 = vmatpush1.bf16.msra.mxu0 %v9207
    %11031 = vmatprep.subr.bf16.mxu0 %v9224
    %11032 = vmatpush1.bf16.msra.mxu0 %v9223
    %11033 = vmatprep.subr.bf16.mxu0 %v9240
    %11034 = vmatpush1.bf16.msra.mxu0 %v9239
    %11035 = vmatprep.subr.bf16.mxu0 %v9256
    %11036 = vmatpush1.bf16.msra.mxu0 %v9255
    %11037 = vmatprep.subr.bf16.mxu0 %v9272
    %11038 = vmatpush1.bf16.msra.mxu0 %v9271
    %11039 = vmatprep.subr.bf16.mxu0 %v9288
    %11040 = vmatpush1.bf16.msra.mxu0 %v9287
    %11041 = vmatprep.mubr.bf16.mxu0 %v4348
    %11042 = vmatmul.mubr.bf16.gmra.mrb[0].mxu0 %v4347
    %v11043 = vpop.f32.mrb[0].mxu0
    %v11044 = vadd.f32 %v11001, %v11043
    %v11045 = vpop.f32.mrb[0].mxu0
    %v11046 = vadd.f32 %v11003, %v11045
    %v11047 = vpop.f32.mrb[0].mxu0
    %v11048 = vadd.f32 %v11005, %v11047
    %v11049 = vpop.f32.mrb[0].mxu0
    %v11050 = vadd.f32 %v11007, %v11049
    %11051 = vdwg.mxu0
    %11052 = vmatprep.subr.bf16.mxu0 %v9304
    %11053 = vmatpush1.bf16.msra.mxu0 %v9303
    %11054 = vmatprep.subr.bf16.mxu0 %v9320
    %11055 = vmatpush1.bf16.msra.mxu0 %v9319
    %11056 = vmatprep.subr.bf16.mxu0 %v9336
    %11057 = vmatpush1.bf16.msra.mxu0 %v9335
    %11058 = vmatprep.subr.bf16.mxu0 %v9352
    %11059 = vmatpush1.bf16.msra.mxu0 %v9351
    %11060 = vmatprep.subr.bf16.mxu0 %v9368
    %11061 = vmatpush1.bf16.msra.mxu0 %v9367
    %11062 = vmatprep.subr.bf16.mxu0 %v9384
    %11063 = vmatpush1.bf16.msra.mxu0 %v9383
    %11064 = vmatprep.subr.bf16.mxu0 %v9400
    %11065 = vmatpush1.bf16.msra.mxu0 %v9399
    %11066 = vmatprep.subr.bf16.mxu0 %v9416
    %11067 = vmatpush1.bf16.msra.mxu0 %v9415
    %11068 = vmatprep.subr.bf16.mxu0 %v9432
    %11069 = vmatpush1.bf16.msra.mxu0 %v9431
    %11070 = vmatprep.subr.bf16.mxu0 %v9448
    %11071 = vmatpush1.bf16.msra.mxu0 %v9447
    %11072 = vmatprep.subr.bf16.mxu0 %v9464
    %11073 = vmatpush1.bf16.msra.mxu0 %v9463
    %11074 = vmatprep.subr.bf16.mxu0 %v9480
    %11075 = vmatpush1.bf16.msra.mxu0 %v9479
    %11076 = vmatprep.subr.bf16.mxu0 %v9496
    %11077 = vmatpush1.bf16.msra.mxu0 %v9495
    %11078 = vmatprep.subr.bf16.mxu0 %v9512
    %11079 = vmatpush1.bf16.msra.mxu0 %v9511
    %11080 = vmatprep.subr.bf16.mxu0 %v9528
    %11081 = vmatpush1.bf16.msra.mxu0 %v9527
    %11082 = vmatprep.subr.bf16.mxu0 %v9544
    %11083 = vmatpush1.bf16.msra.mxu0 %v9543
    %11084 = vmatprep.mubr.bf16.mxu0 %v4350
    %11085 = vmatmul.mubr.bf16.gmra.mrb[0].mxu0 %v4349
    %v11086 = vpop.f32.mrb[0].mxu0
    %v11087 = vadd.f32 %v11044, %v11086
    %v11088 = vpop.f32.mrb[0].mxu0
    %v11089 = vadd.f32 %v11046, %v11088
    %v11090 = vpop.f32.mrb[0].mxu0
    %v11091 = vadd.f32 %v11048, %v11090
    %v11092 = vpop.f32.mrb[0].mxu0
    %v11093 = vadd.f32 %v11050, %v11092
    %11094 = vdwg.mxu0
    %11095 = vmatprep.subr.bf16.mxu0 %v8538
    %11096 = vmatpush1.bf16.msra.mxu0 %v8537
    %11097 = vmatprep.subr.bf16.mxu0 %v8554
    %11098 = vmatpush1.bf16.msra.mxu0 %v8553
    %11099 = vmatprep.subr.bf16.mxu0 %v8570
    %11100 = vmatpush1.bf16.msra.mxu0 %v8569
    %11101 = vmatprep.subr.bf16.mxu0 %v8586
    %11102 = vmatpush1.bf16.msra.mxu0 %v8585
    %11103 = vmatprep.subr.bf16.mxu0 %v8602
    %11104 = vmatpush1.bf16.msra.mxu0 %v8601
    %11105 = vmatprep.subr.bf16.mxu0 %v8618
    %11106 = vmatpush1.bf16.msra.mxu0 %v8617
    %11107 = vmatprep.subr.bf16.mxu0 %v8634
    %11108 = vmatpush1.bf16.msra.mxu0 %v8633
    %11109 = vmatprep.subr.bf16.mxu0 %v8650
    %11110 = vmatpush1.bf16.msra.mxu0 %v8649
    %11111 = vmatprep.subr.bf16.mxu0 %v8666
    %11112 = vmatpush1.bf16.msra.mxu0 %v8665
    %11113 = vmatprep.subr.bf16.mxu0 %v8682
    %11114 = vmatpush1.bf16.msra.mxu0 %v8681
    %11115 = vmatprep.subr.bf16.mxu0 %v8698
    %11116 = vmatpush1.bf16.msra.mxu0 %v8697
    %11117 = vmatprep.subr.bf16.mxu0 %v8714
    %11118 = vmatpush1.bf16.msra.mxu0 %v8713
    %11119 = vmatprep.subr.bf16.mxu0 %v8730
    %11120 = vmatpush1.bf16.msra.mxu0 %v8729
    %11121 = vmatprep.subr.bf16.mxu0 %v8746
    %11122 = vmatpush1.bf16.msra.mxu0 %v8745
    %11123 = vmatprep.subr.bf16.mxu0 %v8762
    %11124 = vmatpush1.bf16.msra.mxu0 %v8761
    %11125 = vmatprep.subr.bf16.mxu0 %v8778
    %11126 = vmatpush1.bf16.msra.mxu0 %v8777
    %11127 = vmatprep.mubr.bf16.mxu0 %v4344
    %11128 = vmatmul.mubr.bf16.gmra.mrb[0].mxu0 %v4343
    %v11129 = vpop.f32.mrb[0].mxu0
    %v11130 = vadd.f32 %v5406, %v11129
    %v11131 = vpop.f32.mrb[0].mxu0
    %v11132 = vadd.f32 %v5410, %v11131
    %v11133 = vpop.f32.mrb[0].mxu0
    %v11134 = vadd.f32 %v5406, %v11133
    %v11135 = vpop.f32.mrb[0].mxu0
    %v11136 = vadd.f32 %v5410, %v11135
    %11137 = vdwg.mxu0
    %11138 = vmatprep.subr.bf16.mxu0 %v8794
    %11139 = vmatpush1.bf16.msra.mxu0 %v8793
    %11140 = vmatprep.subr.bf16.mxu0 %v8810
    %11141 = vmatpush1.bf16.msra.mxu0 %v8809
    %11142 = vmatprep.subr.bf16.mxu0 %v8826
    %11143 = vmatpush1.bf16.msra.mxu0 %v8825
    %11144 = vmatprep.subr.bf16.mxu0 %v8842
    %11145 = vmatpush1.bf16.msra.mxu0 %v8841
    %11146 = vmatprep.subr.bf16.mxu0 %v8858
    %11147 = vmatpush1.bf16.msra.mxu0 %v8857
    %11148 = vmatprep.subr.bf16.mxu0 %v8874
    %11149 = vmatpush1.bf16.msra.mxu0 %v8873
    %11150 = vmatprep.subr.bf16.mxu0 %v8890
    %11151 = vmatpush1.bf16.msra.mxu0 %v8889
    %11152 = vmatprep.subr.bf16.mxu0 %v8906
    %11153 = vmatpush1.bf16.msra.mxu0 %v8905
    %11154 = vmatprep.subr.bf16.mxu0 %v8922
    %11155 = vmatpush1.bf16.msra.mxu0 %v8921
    %11156 = vmatprep.subr.bf16.mxu0 %v8938
    %11157 = vmatpush1.bf16.msra.mxu0 %v8937
    %11158 = vmatprep.subr.bf16.mxu0 %v8954
    %11159 = vmatpush1.bf16.msra.mxu0 %v8953
    %11160 = vmatprep.subr.bf16.mxu0 %v8970
    %11161 = vmatpush1.bf16.msra.mxu0 %v8969
    %11162 = vmatprep.subr.bf16.mxu0 %v8986
    %11163 = vmatpush1.bf16.msra.mxu0 %v8985
    %11164 = vmatprep.subr.bf16.mxu0 %v9002
    %11165 = vmatpush1.bf16.msra.mxu0 %v9001
    %11166 = vmatprep.subr.bf16.mxu0 %v9018
    %11167 = vmatpush1.bf16.msra.mxu0 %v9017
    %11168 = vmatprep.subr.bf16.mxu0 %v9034
    %11169 = vmatpush1.bf16.msra.mxu0 %v9033
    %11170 = vmatprep.mubr.bf16.mxu0 %v4346
    %11171 = vmatmul.mubr.bf16.gmra.mrb[0].mxu0 %v4345
    %v11172 = vpop.f32.mrb[0].mxu0
    %v11173 = vadd.f32 %v11130, %v11172
    %v11174 = vpop.f32.mrb[0].mxu0
    %v11175 = vadd.f32 %v11132, %v11174
    %v11176 = vpop.f32.mrb[0].mxu0
    %v11177 = vadd.f32 %v11134, %v11176
    %v11178 = vpop.f32.mrb[0].mxu0
    %v11179 = vadd.f32 %v11136, %v11178
    %11180 = vdwg.mxu0
    %11181 = vmatprep.subr.bf16.mxu0 %v9050
    %11182 = vmatpush1.bf16.msra.mxu0 %v9049
    %11183 = vmatprep.subr.bf16.mxu0 %v9066
    %11184 = vmatpush1.bf16.msra.mxu0 %v9065
    %11185 = vmatprep.subr.bf16.mxu0 %v9082
    %11186 = vmatpush1.bf16.msra.mxu0 %v9081
    %11187 = vmatprep.subr.bf16.mxu0 %v9098
    %11188 = vmatpush1.bf16.msra.mxu0 %v9097
    %11189 = vmatprep.subr.bf16.mxu0 %v9114
    %11190 = vmatpush1.bf16.msra.mxu0 %v9113
    %11191 = vmatprep.subr.bf16.mxu0 %v9130
    %11192 = vmatpush1.bf16.msra.mxu0 %v9129
    %11193 = vmatprep.subr.bf16.mxu0 %v9146
    %11194 = vmatpush1.bf16.msra.mxu0 %v9145
    %11195 = vmatprep.subr.bf16.mxu0 %v9162
    %11196 = vmatpush1.bf16.msra.mxu0 %v9161
    %11197 = vmatprep.subr.bf16.mxu0 %v9178
    %11198 = vmatpush1.bf16.msra.mxu0 %v9177
    %11199 = vmatprep.subr.bf16.mxu0 %v9194
    %11200 = vmatpush1.bf16.msra.mxu0 %v9193
    %11201 = vmatprep.subr.bf16.mxu0 %v9210
    %11202 = vmatpush1.bf16.msra.mxu0 %v9209
    %11203 = vmatprep.subr.bf16.mxu0 %v9226
    %11204 = vmatpush1.bf16.msra.mxu0 %v9225
    %11205 = vmatprep.subr.bf16.mxu0 %v9242
    %11206 = vmatpush1.bf16.msra.mxu0 %v9241
    %11207 = vmatprep.subr.bf16.mxu0 %v9258
    %11208 = vmatpush1.bf16.msra.mxu0 %v9257
    %11209 = vmatprep.subr.bf16.mxu0 %v9274
    %11210 = vmatpush1.bf16.msra.mxu0 %v9273
    %11211 = vmatprep.subr.bf16.mxu0 %v9290
    %11212 = vmatpush1.bf16.msra.mxu0 %v9289
    %11213 = vmatprep.mubr.bf16.mxu0 %v4348
    %11214 = vmatmul.mubr.bf16.gmra.mrb[0].mxu0 %v4347
    %v11215 = vpop.f32.mrb[0].mxu0
    %v11216 = vadd.f32 %v11173, %v11215
    %v11217 = vpop.f32.mrb[0].mxu0
    %v11218 = vadd.f32 %v11175, %v11217
    %v11219 = vpop.f32.mrb[0].mxu0
    %v11220 = vadd.f32 %v11177, %v11219
    %v11221 = vpop.f32.mrb[0].mxu0
    %v11222 = vadd.f32 %v11179, %v11221
    %11223 = vdwg.mxu0
    %11224 = vmatprep.subr.bf16.mxu0 %v9306
    %11225 = vmatpush1.bf16.msra.mxu0 %v9305
    %11226 = vmatprep.subr.bf16.mxu0 %v9322
    %11227 = vmatpush1.bf16.msra.mxu0 %v9321
    %11228 = vmatprep.subr.bf16.mxu0 %v9338
    %11229 = vmatpush1.bf16.msra.mxu0 %v9337
    %11230 = vmatprep.subr.bf16.mxu0 %v9354
    %11231 = vmatpush1.bf16.msra.mxu0 %v9353
    %11232 = vmatprep.subr.bf16.mxu0 %v9370
    %11233 = vmatpush1.bf16.msra.mxu0 %v9369
    %11234 = vmatprep.subr.bf16.mxu0 %v9386
    %11235 = vmatpush1.bf16.msra.mxu0 %v9385
    %11236 = vmatprep.subr.bf16.mxu0 %v9402
    %11237 = vmatpush1.bf16.msra.mxu0 %v9401
    %11238 = vmatprep.subr.bf16.mxu0 %v9418
    %11239 = vmatpush1.bf16.msra.mxu0 %v9417
    %11240 = vmatprep.subr.bf16.mxu0 %v9434
    %11241 = vmatpush1.bf16.msra.mxu0 %v9433
    %11242 = vmatprep.subr.bf16.mxu0 %v9450
    %11243 = vmatpush1.bf16.msra.mxu0 %v9449
    %11244 = vmatprep.subr.bf16.mxu0 %v9466
    %11245 = vmatpush1.bf16.msra.mxu0 %v9465
    %11246 = vmatprep.subr.bf16.mxu0 %v9482
    %11247 = vmatpush1.bf16.msra.mxu0 %v9481
    %11248 = vmatprep.subr.bf16.mxu0 %v9498
    %11249 = vmatpush1.bf16.msra.mxu0 %v9497
    %11250 = vmatprep.subr.bf16.mxu0 %v9514
    %11251 = vmatpush1.bf16.msra.mxu0 %v9513
    %11252 = vmatprep.subr.bf16.mxu0 %v9530
    %11253 = vmatpush1.bf16.msra.mxu0 %v9529
    %11254 = vmatprep.subr.bf16.mxu0 %v9546
    %11255 = vmatpush1.bf16.msra.mxu0 %v9545
    %11256 = vmatprep.mubr.bf16.mxu0 %v4350
    %11257 = vmatmul.mubr.bf16.gmra.mrb[0].mxu0 %v4349
    %v11258 = vpop.f32.mrb[0].mxu0
    %v11259 = vadd.f32 %v11216, %v11258
    %v11260 = vpop.f32.mrb[0].mxu0
    %v11261 = vadd.f32 %v11218, %v11260
    %v11262 = vpop.f32.mrb[0].mxu0
    %v11263 = vadd.f32 %v11220, %v11262
    %v11264 = vpop.f32.mrb[0].mxu0
    %v11265 = vadd.f32 %v11222, %v11264
    %11266 = vdwg.mxu0
    %11267 = vmatprep.subr.bf16.mxu0 %v8540
    %11268 = vmatpush1.bf16.msra.mxu0 %v8539
    %11269 = vmatprep.subr.bf16.mxu0 %v8556
    %11270 = vmatpush1.bf16.msra.mxu0 %v8555
    %11271 = vmatprep.subr.bf16.mxu0 %v8572
    %11272 = vmatpush1.bf16.msra.mxu0 %v8571
    %11273 = vmatprep.subr.bf16.mxu0 %v8588
    %11274 = vmatpush1.bf16.msra.mxu0 %v8587
    %11275 = vmatprep.subr.bf16.mxu0 %v8604
    %11276 = vmatpush1.bf16.msra.mxu0 %v8603
    %11277 = vmatprep.subr.bf16.mxu0 %v8620
    %11278 = vmatpush1.bf16.msra.mxu0 %v8619
    %11279 = vmatprep.subr.bf16.mxu0 %v8636
    %11280 = vmatpush1.bf16.msra.mxu0 %v8635
    %11281 = vmatprep.subr.bf16.mxu0 %v8652
    %11282 = vmatpush1.bf16.msra.mxu0 %v8651
    %11283 = vmatprep.subr.bf16.mxu0 %v8668
    %11284 = vmatpush1.bf16.msra.mxu0 %v8667
    %11285 = vmatprep.subr.bf16.mxu0 %v8684
    %11286 = vmatpush1.bf16.msra.mxu0 %v8683
    %11287 = vmatprep.subr.bf16.mxu0 %v8700
    %11288 = vmatpush1.bf16.msra.mxu0 %v8699
    %11289 = vmatprep.subr.bf16.mxu0 %v8716
    %11290 = vmatpush1.bf16.msra.mxu0 %v8715
    %11291 = vmatprep.subr.bf16.mxu0 %v8732
    %11292 = vmatpush1.bf16.msra.mxu0 %v8731
    %11293 = vmatprep.subr.bf16.mxu0 %v8748
    %11294 = vmatpush1.bf16.msra.mxu0 %v8747
    %11295 = vmatprep.subr.bf16.mxu0 %v8764
    %11296 = vmatpush1.bf16.msra.mxu0 %v8763
    %11297 = vmatprep.subr.bf16.mxu0 %v8780
    %11298 = vmatpush1.bf16.msra.mxu0 %v8779
    %11299 = vmatprep.mubr.bf16.mxu0 %v4344
    %11300 = vmatmul.mubr.bf16.gmra.mrb[0].mxu0 %v4343
    %v11301 = vpop.f32.mrb[0].mxu0
    %v11302 = vadd.f32 %v5414, %v11301
    %v11303 = vpop.f32.mrb[0].mxu0
    %v11304 = vadd.f32 %v5418, %v11303
    %v11305 = vpop.f32.mrb[0].mxu0
    %v11306 = vadd.f32 %v5414, %v11305
    %v11307 = vpop.f32.mrb[0].mxu0
    %v11308 = vadd.f32 %v5418, %v11307
    %11309 = vdwg.mxu0
    %11310 = vmatprep.subr.bf16.mxu0 %v8796
    %11311 = vmatpush1.bf16.msra.mxu0 %v8795
    %11312 = vmatprep.subr.bf16.mxu0 %v8812
    %11313 = vmatpush1.bf16.msra.mxu0 %v8811
    %11314 = vmatprep.subr.bf16.mxu0 %v8828
    %11315 = vmatpush1.bf16.msra.mxu0 %v8827
    %11316 = vmatprep.subr.bf16.mxu0 %v8844
    %11317 = vmatpush1.bf16.msra.mxu0 %v8843
    %11318 = vmatprep.subr.bf16.mxu0 %v8860
    %11319 = vmatpush1.bf16.msra.mxu0 %v8859
    %11320 = vmatprep.subr.bf16.mxu0 %v8876
    %11321 = vmatpush1.bf16.msra.mxu0 %v8875
    %11322 = vmatprep.subr.bf16.mxu0 %v8892
    %11323 = vmatpush1.bf16.msra.mxu0 %v8891
    %11324 = vmatprep.subr.bf16.mxu0 %v8908
    %11325 = vmatpush1.bf16.msra.mxu0 %v8907
    %11326 = vmatprep.subr.bf16.mxu0 %v8924
    %11327 = vmatpush1.bf16.msra.mxu0 %v8923
    %11328 = vmatprep.subr.bf16.mxu0 %v8940
    %11329 = vmatpush1.bf16.msra.mxu0 %v8939
    %11330 = vmatprep.subr.bf16.mxu0 %v8956
    %11331 = vmatpush1.bf16.msra.mxu0 %v8955
    %11332 = vmatprep.subr.bf16.mxu0 %v8972
    %11333 = vmatpush1.bf16.msra.mxu0 %v8971
    %11334 = vmatprep.subr.bf16.mxu0 %v8988
    %11335 = vmatpush1.bf16.msra.mxu0 %v8987
    %11336 = vmatprep.subr.bf16.mxu0 %v9004
    %11337 = vmatpush1.bf16.msra.mxu0 %v9003
    %11338 = vmatprep.subr.bf16.mxu0 %v9020
    %11339 = vmatpush1.bf16.msra.mxu0 %v9019
    %11340 = vmatprep.subr.bf16.mxu0 %v9036
    %11341 = vmatpush1.bf16.msra.mxu0 %v9035
    %11342 = vmatprep.mubr.bf16.mxu0 %v4346
    %11343 = vmatmul.mubr.bf16.gmra.mrb[0].mxu0 %v4345
    %v11344 = vpop.f32.mrb[0].mxu0
    %v11345 = vadd.f32 %v11302, %v11344
    %v11346 = vpop.f32.mrb[0].mxu0
    %v11347 = vadd.f32 %v11304, %v11346
    %v11348 = vpop.f32.mrb[0].mxu0
    %v11349 = vadd.f32 %v11306, %v11348
    %v11350 = vpop.f32.mrb[0].mxu0
    %v11351 = vadd.f32 %v11308, %v11350
    %11352 = vdwg.mxu0
    %11353 = vmatprep.subr.bf16.mxu0 %v9052
    %11354 = vmatpush1.bf16.msra.mxu0 %v9051
    %11355 = vmatprep.subr.bf16.mxu0 %v9068
    %11356 = vmatpush1.bf16.msra.mxu0 %v9067
    %11357 = vmatprep.subr.bf16.mxu0 %v9084
    %11358 = vmatpush1.bf16.msra.mxu0 %v9083
    %11359 = vmatprep.subr.bf16.mxu0 %v9100
    %11360 = vmatpush1.bf16.msra.mxu0 %v9099
    %11361 = vmatprep.subr.bf16.mxu0 %v9116
    %11362 = vmatpush1.bf16.msra.mxu0 %v9115
    %11363 = vmatprep.subr.bf16.mxu0 %v9132
    %11364 = vmatpush1.bf16.msra.mxu0 %v9131
    %11365 = vmatprep.subr.bf16.mxu0 %v9148
    %11366 = vmatpush1.bf16.msra.mxu0 %v9147
    %11367 = vmatprep.subr.bf16.mxu0 %v9164
    %11368 = vmatpush1.bf16.msra.mxu0 %v9163
    %11369 = vmatprep.subr.bf16.mxu0 %v9180
    %11370 = vmatpush1.bf16.msra.mxu0 %v9179
    %11371 = vmatprep.subr.bf16.mxu0 %v9196
    %11372 = vmatpush1.bf16.msra.mxu0 %v9195
    %11373 = vmatprep.subr.bf16.mxu0 %v9212
    %11374 = vmatpush1.bf16.msra.mxu0 %v9211
    %11375 = vmatprep.subr.bf16.mxu0 %v9228
    %11376 = vmatpush1.bf16.msra.mxu0 %v9227
    %11377 = vmatprep.subr.bf16.mxu0 %v9244
    %11378 = vmatpush1.bf16.msra.mxu0 %v9243
    %11379 = vmatprep.subr.bf16.mxu0 %v9260
    %11380 = vmatpush1.bf16.msra.mxu0 %v9259
    %11381 = vmatprep.subr.bf16.mxu0 %v9276
    %11382 = vmatpush1.bf16.msra.mxu0 %v9275
    %11383 = vmatprep.subr.bf16.mxu0 %v9292
    %11384 = vmatpush1.bf16.msra.mxu0 %v9291
    %11385 = vmatprep.mubr.bf16.mxu0 %v4348
    %11386 = vmatmul.mubr.bf16.gmra.mrb[0].mxu0 %v4347
    %v11387 = vpop.f32.mrb[0].mxu0
    %v11388 = vadd.f32 %v11345, %v11387
    %v11389 = vpop.f32.mrb[0].mxu0
    %v11390 = vadd.f32 %v11347, %v11389
    %v11391 = vpop.f32.mrb[0].mxu0
    %v11392 = vadd.f32 %v11349, %v11391
    %v11393 = vpop.f32.mrb[0].mxu0
    %v11394 = vadd.f32 %v11351, %v11393
    %11395 = vdwg.mxu0
    %11396 = vmatprep.subr.bf16.mxu0 %v9308
    %11397 = vmatpush1.bf16.msra.mxu0 %v9307
    %11398 = vmatprep.subr.bf16.mxu0 %v9324
    %11399 = vmatpush1.bf16.msra.mxu0 %v9323
    %11400 = vmatprep.subr.bf16.mxu0 %v9340
    %11401 = vmatpush1.bf16.msra.mxu0 %v9339
    %11402 = vmatprep.subr.bf16.mxu0 %v9356
    %11403 = vmatpush1.bf16.msra.mxu0 %v9355
    %11404 = vmatprep.subr.bf16.mxu0 %v9372
    %11405 = vmatpush1.bf16.msra.mxu0 %v9371
    %11406 = vmatprep.subr.bf16.mxu0 %v9388
    %11407 = vmatpush1.bf16.msra.mxu0 %v9387
    %11408 = vmatprep.subr.bf16.mxu0 %v9404
    %11409 = vmatpush1.bf16.msra.mxu0 %v9403
    %11410 = vmatprep.subr.bf16.mxu0 %v9420
    %11411 = vmatpush1.bf16.msra.mxu0 %v9419
    %11412 = vmatprep.subr.bf16.mxu0 %v9436
    %11413 = vmatpush1.bf16.msra.mxu0 %v9435
    %11414 = vmatprep.subr.bf16.mxu0 %v9452
    %11415 = vmatpush1.bf16.msra.mxu0 %v9451
    %11416 = vmatprep.subr.bf16.mxu0 %v9468
    %11417 = vmatpush1.bf16.msra.mxu0 %v9467
    %11418 = vmatprep.subr.bf16.mxu0 %v9484
    %11419 = vmatpush1.bf16.msra.mxu0 %v9483
    %11420 = vmatprep.subr.bf16.mxu0 %v9500
    %11421 = vmatpush1.bf16.msra.mxu0 %v9499
    %11422 = vmatprep.subr.bf16.mxu0 %v9516
    %11423 = vmatpush1.bf16.msra.mxu0 %v9515
    %11424 = vmatprep.subr.bf16.mxu0 %v9532
    %11425 = vmatpush1.bf16.msra.mxu0 %v9531
    %11426 = vmatprep.subr.bf16.mxu0 %v9548
    %11427 = vmatpush1.bf16.msra.mxu0 %v9547
    %11428 = vmatprep.mubr.bf16.mxu0 %v4350
    %11429 = vmatmul.mubr.bf16.gmra.mrb[0].mxu0 %v4349
    %v11430 = vpop.f32.mrb[0].mxu0
    %v11431 = vadd.f32 %v11388, %v11430
    %v11432 = vpop.f32.mrb[0].mxu0
    %v11433 = vadd.f32 %v11390, %v11432
    %v11434 = vpop.f32.mrb[0].mxu0
    %v11435 = vadd.f32 %v11392, %v11434
    %v11436 = vpop.f32.mrb[0].mxu0
    %v11437 = vadd.f32 %v11394, %v11436
    %11438 = vdwg.mxu0
    %11439 = vmatprep.subr.bf16.mxu0 %v8542
    %11440 = vmatpush1.bf16.msra.mxu0 %v8541
    %11441 = vmatprep.subr.bf16.mxu0 %v8558
    %11442 = vmatpush1.bf16.msra.mxu0 %v8557
    %11443 = vmatprep.subr.bf16.mxu0 %v8574
    %11444 = vmatpush1.bf16.msra.mxu0 %v8573
    %11445 = vmatprep.subr.bf16.mxu0 %v8590
    %11446 = vmatpush1.bf16.msra.mxu0 %v8589
    %11447 = vmatprep.subr.bf16.mxu0 %v8606
    %11448 = vmatpush1.bf16.msra.mxu0 %v8605
    %11449 = vmatprep.subr.bf16.mxu0 %v8622
    %11450 = vmatpush1.bf16.msra.mxu0 %v8621
    %11451 = vmatprep.subr.bf16.mxu0 %v8638
    %11452 = vmatpush1.bf16.msra.mxu0 %v8637
    %11453 = vmatprep.subr.bf16.mxu0 %v8654
    %11454 = vmatpush1.bf16.msra.mxu0 %v8653
    %11455 = vmatprep.subr.bf16.mxu0 %v8670
    %11456 = vmatpush1.bf16.msra.mxu0 %v8669
    %11457 = vmatprep.subr.bf16.mxu0 %v8686
    %11458 = vmatpush1.bf16.msra.mxu0 %v8685
    %11459 = vmatprep.subr.bf16.mxu0 %v8702
    %11460 = vmatpush1.bf16.msra.mxu0 %v8701
    %11461 = vmatprep.subr.bf16.mxu0 %v8718
    %11462 = vmatpush1.bf16.msra.mxu0 %v8717
    %11463 = vmatprep.subr.bf16.mxu0 %v8734
    %11464 = vmatpush1.bf16.msra.mxu0 %v8733
    %11465 = vmatprep.subr.bf16.mxu0 %v8750
    %11466 = vmatpush1.bf16.msra.mxu0 %v8749
    %11467 = vmatprep.subr.bf16.mxu0 %v8766
    %11468 = vmatpush1.bf16.msra.mxu0 %v8765
    %11469 = vmatprep.subr.bf16.mxu0 %v8782
    %11470 = vmatpush1.bf16.msra.mxu0 %v8781
    %11471 = vmatprep.mubr.bf16.mxu0 %v4344
    %11472 = vmatmul.mubr.bf16.gmra.mrb[0].mxu0 %v4343
    %v11473 = vpop.f32.mrb[0].mxu0
    %v11474 = vadd.f32 %v5422, %v11473
    %v11475 = vpop.f32.mrb[0].mxu0
    %v11476 = vadd.f32 %v5426, %v11475
    %v11477 = vpop.f32.mrb[0].mxu0
    %v11478 = vadd.f32 %v5422, %v11477
    %v11479 = vpop.f32.mrb[0].mxu0
    %v11480 = vadd.f32 %v5426, %v11479
    %11481 = vdwg.mxu0
    %11482 = vmatprep.subr.bf16.mxu0 %v8798
    %11483 = vmatpush1.bf16.msra.mxu0 %v8797
    %11484 = vmatprep.subr.bf16.mxu0 %v8814
    %11485 = vmatpush1.bf16.msra.mxu0 %v8813
    %11486 = vmatprep.subr.bf16.mxu0 %v8830
    %11487 = vmatpush1.bf16.msra.mxu0 %v8829
    %11488 = vmatprep.subr.bf16.mxu0 %v8846
    %11489 = vmatpush1.bf16.msra.mxu0 %v8845
    %11490 = vmatprep.subr.bf16.mxu0 %v8862
    %11491 = vmatpush1.bf16.msra.mxu0 %v8861
    %11492 = vmatprep.subr.bf16.mxu0 %v8878
    %11493 = vmatpush1.bf16.msra.mxu0 %v8877
    %11494 = vmatprep.subr.bf16.mxu0 %v8894
    %11495 = vmatpush1.bf16.msra.mxu0 %v8893
    %11496 = vmatprep.subr.bf16.mxu0 %v8910
    %11497 = vmatpush1.bf16.msra.mxu0 %v8909
    %11498 = vmatprep.subr.bf16.mxu0 %v8926
    %11499 = vmatpush1.bf16.msra.mxu0 %v8925
    %11500 = vmatprep.subr.bf16.mxu0 %v8942
    %11501 = vmatpush1.bf16.msra.mxu0 %v8941
    %11502 = vmatprep.subr.bf16.mxu0 %v8958
    %11503 = vmatpush1.bf16.msra.mxu0 %v8957
    %11504 = vmatprep.subr.bf16.mxu0 %v8974
    %11505 = vmatpush1.bf16.msra.mxu0 %v8973
    %11506 = vmatprep.subr.bf16.mxu0 %v8990
    %11507 = vmatpush1.bf16.msra.mxu0 %v8989
    %11508 = vmatprep.subr.bf16.mxu0 %v9006
    %11509 = vmatpush1.bf16.msra.mxu0 %v9005
    %11510 = vmatprep.subr.bf16.mxu0 %v9022
    %11511 = vmatpush1.bf16.msra.mxu0 %v9021
    %11512 = vmatprep.subr.bf16.mxu0 %v9038
    %11513 = vmatpush1.bf16.msra.mxu0 %v9037
    %11514 = vmatprep.mubr.bf16.mxu0 %v4346
    %11515 = vmatmul.mubr.bf16.gmra.mrb[0].mxu0 %v4345
    %v11516 = vpop.f32.mrb[0].mxu0
    %v11517 = vadd.f32 %v11474, %v11516
    %v11518 = vpop.f32.mrb[0].mxu0
    %v11519 = vadd.f32 %v11476, %v11518
    %v11520 = vpop.f32.mrb[0].mxu0
    %v11521 = vadd.f32 %v11478, %v11520
    %v11522 = vpop.f32.mrb[0].mxu0
    %v11523 = vadd.f32 %v11480, %v11522
    %11524 = vdwg.mxu0
    %11525 = vmatprep.subr.bf16.mxu0 %v9054
    %11526 = vmatpush1.bf16.msra.mxu0 %v9053
    %11527 = vmatprep.subr.bf16.mxu0 %v9070
    %11528 = vmatpush1.bf16.msra.mxu0 %v9069
    %11529 = vmatprep.subr.bf16.mxu0 %v9086
    %11530 = vmatpush1.bf16.msra.mxu0 %v9085
    %11531 = vmatprep.subr.bf16.mxu0 %v9102
    %11532 = vmatpush1.bf16.msra.mxu0 %v9101
    %11533 = vmatprep.subr.bf16.mxu0 %v9118
    %11534 = vmatpush1.bf16.msra.mxu0 %v9117
    %11535 = vmatprep.subr.bf16.mxu0 %v9134
    %11536 = vmatpush1.bf16.msra.mxu0 %v9133
    %11537 = vmatprep.subr.bf16.mxu0 %v9150
    %11538 = vmatpush1.bf16.msra.mxu0 %v9149
    %11539 = vmatprep.subr.bf16.mxu0 %v9166
    %11540 = vmatpush1.bf16.msra.mxu0 %v9165
    %11541 = vmatprep.subr.bf16.mxu0 %v9182
    %11542 = vmatpush1.bf16.msra.mxu0 %v9181
    %11543 = vmatprep.subr.bf16.mxu0 %v9198
    %11544 = vmatpush1.bf16.msra.mxu0 %v9197
    %11545 = vmatprep.subr.bf16.mxu0 %v9214
    %11546 = vmatpush1.bf16.msra.mxu0 %v9213
    %11547 = vmatprep.subr.bf16.mxu0 %v9230
    %11548 = vmatpush1.bf16.msra.mxu0 %v9229
    %11549 = vmatprep.subr.bf16.mxu0 %v9246
    %11550 = vmatpush1.bf16.msra.mxu0 %v9245
    %11551 = vmatprep.subr.bf16.mxu0 %v9262
    %11552 = vmatpush1.bf16.msra.mxu0 %v9261
    %11553 = vmatprep.subr.bf16.mxu0 %v9278
    %11554 = vmatpush1.bf16.msra.mxu0 %v9277
    %11555 = vmatprep.subr.bf16.mxu0 %v9294
    %11556 = vmatpush1.bf16.msra.mxu0 %v9293
    %11557 = vmatprep.mubr.bf16.mxu0 %v4348
    %11558 = vmatmul.mubr.bf16.gmra.mrb[0].mxu0 %v4347
    %v11559 = vpop.f32.mrb[0].mxu0
    %v11560 = vadd.f32 %v11517, %v11559
    %v11561 = vpop.f32.mrb[0].mxu0
    %v11562 = vadd.f32 %v11519, %v11561
    %v11563 = vpop.f32.mrb[0].mxu0
    %v11564 = vadd.f32 %v11521, %v11563
    %v11565 = vpop.f32.mrb[0].mxu0
    %v11566 = vadd.f32 %v11523, %v11565
    %11567 = vdwg.mxu0
    %11568 = vmatprep.subr.bf16.mxu0 %v9310
    %11569 = vmatpush1.bf16.msra.mxu0 %v9309
    %11570 = vmatprep.subr.bf16.mxu0 %v9326
    %11571 = vmatpush1.bf16.msra.mxu0 %v9325
    %11572 = vmatprep.subr.bf16.mxu0 %v9342
    %11573 = vmatpush1.bf16.msra.mxu0 %v9341
    %11574 = vmatprep.subr.bf16.mxu0 %v9358
    %11575 = vmatpush1.bf16.msra.mxu0 %v9357
    %11576 = vmatprep.subr.bf16.mxu0 %v9374
    %11577 = vmatpush1.bf16.msra.mxu0 %v9373
    %11578 = vmatprep.subr.bf16.mxu0 %v9390
    %11579 = vmatpush1.bf16.msra.mxu0 %v9389
    %11580 = vmatprep.subr.bf16.mxu0 %v9406
    %11581 = vmatpush1.bf16.msra.mxu0 %v9405
    %11582 = vmatprep.subr.bf16.mxu0 %v9422
    %11583 = vmatpush1.bf16.msra.mxu0 %v9421
    %11584 = vmatprep.subr.bf16.mxu0 %v9438
    %11585 = vmatpush1.bf16.msra.mxu0 %v9437
    %11586 = vmatprep.subr.bf16.mxu0 %v9454
    %11587 = vmatpush1.bf16.msra.mxu0 %v9453
    %11588 = vmatprep.subr.bf16.mxu0 %v9470
    %11589 = vmatpush1.bf16.msra.mxu0 %v9469
    %11590 = vmatprep.subr.bf16.mxu0 %v9486
    %11591 = vmatpush1.bf16.msra.mxu0 %v9485
    %11592 = vmatprep.subr.bf16.mxu0 %v9502
    %11593 = vmatpush1.bf16.msra.mxu0 %v9501
    %11594 = vmatprep.subr.bf16.mxu0 %v9518
    %11595 = vmatpush1.bf16.msra.mxu0 %v9517
    %11596 = vmatprep.subr.bf16.mxu0 %v9534
    %11597 = vmatpush1.bf16.msra.mxu0 %v9533
    %11598 = vmatprep.subr.bf16.mxu0 %v9550
    %11599 = vmatpush1.bf16.msra.mxu0 %v9549
    %11600 = vmatprep.mubr.bf16.mxu0 %v4350
    %11601 = vmatmul.mubr.bf16.gmra.mrb[0].mxu0 %v4349
    %v11602 = vpop.f32.mrb[0].mxu0
    %v11603 = vadd.f32 %v11560, %v11602
    %v11604 = vpop.f32.mrb[0].mxu0
    %v11605 = vadd.f32 %v11562, %v11604
    %v11606 = vpop.f32.mrb[0].mxu0
    %v11607 = vadd.f32 %v11564, %v11606
    %v11608 = vpop.f32.mrb[0].mxu0
    %v11609 = vadd.f32 %v11566, %v11608
    %11610 = vdwg.mxu0
    %11611 = vmatprep.subr.bf16.mxu0 %v8544
    %11612 = vmatpush1.bf16.msra.mxu0 %v8543
    %11613 = vmatprep.subr.bf16.mxu0 %v8560
    %11614 = vmatpush1.bf16.msra.mxu0 %v8559
    %11615 = vmatprep.subr.bf16.mxu0 %v8576
    %11616 = vmatpush1.bf16.msra.mxu0 %v8575
    %11617 = vmatprep.subr.bf16.mxu0 %v8592
    %11618 = vmatpush1.bf16.msra.mxu0 %v8591
    %11619 = vmatprep.subr.bf16.mxu0 %v8608
    %11620 = vmatpush1.bf16.msra.mxu0 %v8607
    %11621 = vmatprep.subr.bf16.mxu0 %v8624
    %11622 = vmatpush1.bf16.msra.mxu0 %v8623
    %11623 = vmatprep.subr.bf16.mxu0 %v8640
    %11624 = vmatpush1.bf16.msra.mxu0 %v8639
    %11625 = vmatprep.subr.bf16.mxu0 %v8656
    %11626 = vmatpush1.bf16.msra.mxu0 %v8655
    %11627 = vmatprep.subr.bf16.mxu0 %v8672
    %11628 = vmatpush1.bf16.msra.mxu0 %v8671
    %11629 = vmatprep.subr.bf16.mxu0 %v8688
    %11630 = vmatpush1.bf16.msra.mxu0 %v8687
    %11631 = vmatprep.subr.bf16.mxu0 %v8704
    %11632 = vmatpush1.bf16.msra.mxu0 %v8703
    %11633 = vmatprep.subr.bf16.mxu0 %v8720
    %11634 = vmatpush1.bf16.msra.mxu0 %v8719
    %11635 = vmatprep.subr.bf16.mxu0 %v8736
    %11636 = vmatpush1.bf16.msra.mxu0 %v8735
    %11637 = vmatprep.subr.bf16.mxu0 %v8752
    %11638 = vmatpush1.bf16.msra.mxu0 %v8751
    %11639 = vmatprep.subr.bf16.mxu0 %v8768
    %11640 = vmatpush1.bf16.msra.mxu0 %v8767
    %11641 = vmatprep.subr.bf16.mxu0 %v8784
    %11642 = vmatpush1.bf16.msra.mxu0 %v8783
    %11643 = vmatprep.mubr.bf16.mxu0 %v4344
    %11644 = vmatmul.mubr.bf16.gmra.mrb[0].mxu0 %v4343
    %v11645 = vpop.f32.mrb[0].mxu0
    %v11646 = vadd.f32 %v5430, %v11645
    %v11647 = vpop.f32.mrb[0].mxu0
    %v11648 = vadd.f32 %v5434, %v11647
    %v11649 = vpop.f32.mrb[0].mxu0
    %v11650 = vadd.f32 %v5430, %v11649
    %v11651 = vpop.f32.mrb[0].mxu0
    %v11652 = vadd.f32 %v5434, %v11651
    %11653 = vdwg.mxu0
    %11654 = vmatprep.subr.bf16.mxu0 %v8800
    %11655 = vmatpush1.bf16.msra.mxu0 %v8799
    %11656 = vmatprep.subr.bf16.mxu0 %v8816
    %11657 = vmatpush1.bf16.msra.mxu0 %v8815
    %11658 = vmatprep.subr.bf16.mxu0 %v8832
    %11659 = vmatpush1.bf16.msra.mxu0 %v8831
    %11660 = vmatprep.subr.bf16.mxu0 %v8848
    %11661 = vmatpush1.bf16.msra.mxu0 %v8847
    %11662 = vmatprep.subr.bf16.mxu0 %v8864
    %11663 = vmatpush1.bf16.msra.mxu0 %v8863
    %11664 = vmatprep.subr.bf16.mxu0 %v8880
    %11665 = vmatpush1.bf16.msra.mxu0 %v8879
    %11666 = vmatprep.subr.bf16.mxu0 %v8896
    %11667 = vmatpush1.bf16.msra.mxu0 %v8895
    %11668 = vmatprep.subr.bf16.mxu0 %v8912
    %11669 = vmatpush1.bf16.msra.mxu0 %v8911
    %11670 = vmatprep.subr.bf16.mxu0 %v8928
    %11671 = vmatpush1.bf16.msra.mxu0 %v8927
    %11672 = vmatprep.subr.bf16.mxu0 %v8944
    %11673 = vmatpush1.bf16.msra.mxu0 %v8943
    %11674 = vmatprep.subr.bf16.mxu0 %v8960
    %11675 = vmatpush1.bf16.msra.mxu0 %v8959
    %11676 = vmatprep.subr.bf16.mxu0 %v8976
    %11677 = vmatpush1.bf16.msra.mxu0 %v8975
    %11678 = vmatprep.subr.bf16.mxu0 %v8992
    %11679 = vmatpush1.bf16.msra.mxu0 %v8991
    %11680 = vmatprep.subr.bf16.mxu0 %v9008
    %11681 = vmatpush1.bf16.msra.mxu0 %v9007
    %11682 = vmatprep.subr.bf16.mxu0 %v9024
    %11683 = vmatpush1.bf16.msra.mxu0 %v9023
    %11684 = vmatprep.subr.bf16.mxu0 %v9040
    %11685 = vmatpush1.bf16.msra.mxu0 %v9039
    %11686 = vmatprep.mubr.bf16.mxu0 %v4346
    %11687 = vmatmul.mubr.bf16.gmra.mrb[0].mxu0 %v4345
    %v11688 = vpop.f32.mrb[0].mxu0
    %v11689 = vadd.f32 %v11646, %v11688
    %v11690 = vpop.f32.mrb[0].mxu0
    %v11691 = vadd.f32 %v11648, %v11690
    %v11692 = vpop.f32.mrb[0].mxu0
    %v11693 = vadd.f32 %v11650, %v11692
    %v11694 = vpop.f32.mrb[0].mxu0
    %v11695 = vadd.f32 %v11652, %v11694
    %11696 = vdwg.mxu0
    %11697 = vmatprep.subr.bf16.mxu0 %v9056
    %11698 = vmatpush1.bf16.msra.mxu0 %v9055
    %11699 = vmatprep.subr.bf16.mxu0 %v9072
    %11700 = vmatpush1.bf16.msra.mxu0 %v9071
    %11701 = vmatprep.subr.bf16.mxu0 %v9088
    %11702 = vmatpush1.bf16.msra.mxu0 %v9087
    %11703 = vmatprep.subr.bf16.mxu0 %v9104
    %11704 = vmatpush1.bf16.msra.mxu0 %v9103
    %11705 = vmatprep.subr.bf16.mxu0 %v9120
    %11706 = vmatpush1.bf16.msra.mxu0 %v9119
    %11707 = vmatprep.subr.bf16.mxu0 %v9136
    %11708 = vmatpush1.bf16.msra.mxu0 %v9135
    %11709 = vmatprep.subr.bf16.mxu0 %v9152
    %11710 = vmatpush1.bf16.msra.mxu0 %v9151
    %11711 = vmatprep.subr.bf16.mxu0 %v9168
    %11712 = vmatpush1.bf16.msra.mxu0 %v9167
    %11713 = vmatprep.subr.bf16.mxu0 %v9184
    %11714 = vmatpush1.bf16.msra.mxu0 %v9183
    %11715 = vmatprep.subr.bf16.mxu0 %v9200
    %11716 = vmatpush1.bf16.msra.mxu0 %v9199
    %11717 = vmatprep.subr.bf16.mxu0 %v9216
    %11718 = vmatpush1.bf16.msra.mxu0 %v9215
    %11719 = vmatprep.subr.bf16.mxu0 %v9232
    %11720 = vmatpush1.bf16.msra.mxu0 %v9231
    %11721 = vmatprep.subr.bf16.mxu0 %v9248
    %11722 = vmatpush1.bf16.msra.mxu0 %v9247
    %11723 = vmatprep.subr.bf16.mxu0 %v9264
    %11724 = vmatpush1.bf16.msra.mxu0 %v9263
    %11725 = vmatprep.subr.bf16.mxu0 %v9280
    %11726 = vmatpush1.bf16.msra.mxu0 %v9279
    %11727 = vmatprep.subr.bf16.mxu0 %v9296
    %11728 = vmatpush1.bf16.msra.mxu0 %v9295
    %11729 = vmatprep.mubr.bf16.mxu0 %v4348
    %11730 = vmatmul.mubr.bf16.gmra.mrb[0].mxu0 %v4347
    %v11731 = vpop.f32.mrb[0].mxu0
    %v11732 = vadd.f32 %v11689, %v11731
    %v11733 = vpop.f32.mrb[0].mxu0
    %v11734 = vadd.f32 %v11691, %v11733
    %v11735 = vpop.f32.mrb[0].mxu0
    %v11736 = vadd.f32 %v11693, %v11735
    %v11737 = vpop.f32.mrb[0].mxu0
    %v11738 = vadd.f32 %v11695, %v11737
    %11739 = vdwg.mxu0
    %11740 = vmatprep.subr.bf16.mxu0 %v9312
    %11741 = vmatpush1.bf16.msra.mxu0 %v9311
    %11742 = vmatprep.subr.bf16.mxu0 %v9328
    %11743 = vmatpush1.bf16.msra.mxu0 %v9327
    %11744 = vmatprep.subr.bf16.mxu0 %v9344
    %11745 = vmatpush1.bf16.msra.mxu0 %v9343
    %11746 = vmatprep.subr.bf16.mxu0 %v9360
    %11747 = vmatpush1.bf16.msra.mxu0 %v9359
    %11748 = vmatprep.subr.bf16.mxu0 %v9376
    %11749 = vmatpush1.bf16.msra.mxu0 %v9375
    %11750 = vmatprep.subr.bf16.mxu0 %v9392
    %11751 = vmatpush1.bf16.msra.mxu0 %v9391
    %11752 = vmatprep.subr.bf16.mxu0 %v9408
    %11753 = vmatpush1.bf16.msra.mxu0 %v9407
    %11754 = vmatprep.subr.bf16.mxu0 %v9424
    %11755 = vmatpush1.bf16.msra.mxu0 %v9423
    %11756 = vmatprep.subr.bf16.mxu0 %v9440
    %11757 = vmatpush1.bf16.msra.mxu0 %v9439
    %11758 = vmatprep.subr.bf16.mxu0 %v9456
    %11759 = vmatpush1.bf16.msra.mxu0 %v9455
    %11760 = vmatprep.subr.bf16.mxu0 %v9472
    %11761 = vmatpush1.bf16.msra.mxu0 %v9471
    %11762 = vmatprep.subr.bf16.mxu0 %v9488
    %11763 = vmatpush1.bf16.msra.mxu0 %v9487
    %11764 = vmatprep.subr.bf16.mxu0 %v9504
    %11765 = vmatpush1.bf16.msra.mxu0 %v9503
    %11766 = vmatprep.subr.bf16.mxu0 %v9520
    %11767 = vmatpush1.bf16.msra.mxu0 %v9519
    %11768 = vmatprep.subr.bf16.mxu0 %v9536
    %11769 = vmatpush1.bf16.msra.mxu0 %v9535
    %11770 = vmatprep.subr.bf16.mxu0 %v9552
    %11771 = vmatpush1.bf16.msra.mxu0 %v9551
    %11772 = vmatprep.mubr.bf16.mxu0 %v4350
    %11773 = vmatmul.mubr.bf16.gmra.mrb[0].mxu0 %v4349
    %v11774 = vpop.f32.mrb[0].mxu0
    %v11775 = vadd.f32 %v11732, %v11774
    %v11776 = vpop.f32.mrb[0].mxu0
    %v11777 = vadd.f32 %v11734, %v11776
    %v11778 = vpop.f32.mrb[0].mxu0
    %v11779 = vadd.f32 %v11736, %v11778
    %v11780 = vpop.f32.mrb[0].mxu0
    %v11781 = vadd.f32 %v11738, %v11780
    %11782 = vdwg.mxu0
    %11783 = vmatprep.subr.bf16.mxu0 %v8546
    %11784 = vmatpush1.bf16.msra.mxu0 %v8545
    %11785 = vmatprep.subr.bf16.mxu0 %v8562
    %11786 = vmatpush1.bf16.msra.mxu0 %v8561
    %11787 = vmatprep.subr.bf16.mxu0 %v8578
    %11788 = vmatpush1.bf16.msra.mxu0 %v8577
    %11789 = vmatprep.subr.bf16.mxu0 %v8594
    %11790 = vmatpush1.bf16.msra.mxu0 %v8593
    %11791 = vmatprep.subr.bf16.mxu0 %v8610
    %11792 = vmatpush1.bf16.msra.mxu0 %v8609
    %11793 = vmatprep.subr.bf16.mxu0 %v8626
    %11794 = vmatpush1.bf16.msra.mxu0 %v8625
    %11795 = vmatprep.subr.bf16.mxu0 %v8642
    %11796 = vmatpush1.bf16.msra.mxu0 %v8641
    %11797 = vmatprep.subr.bf16.mxu0 %v8658
    %11798 = vmatpush1.bf16.msra.mxu0 %v8657
    %11799 = vmatprep.subr.bf16.mxu0 %v8674
    %11800 = vmatpush1.bf16.msra.mxu0 %v8673
    %11801 = vmatprep.subr.bf16.mxu0 %v8690
    %11802 = vmatpush1.bf16.msra.mxu0 %v8689
    %11803 = vmatprep.subr.bf16.mxu0 %v8706
    %11804 = vmatpush1.bf16.msra.mxu0 %v8705
    %11805 = vmatprep.subr.bf16.mxu0 %v8722
    %11806 = vmatpush1.bf16.msra.mxu0 %v8721
    %11807 = vmatprep.subr.bf16.mxu0 %v8738
    %11808 = vmatpush1.bf16.msra.mxu0 %v8737
    %11809 = vmatprep.subr.bf16.mxu0 %v8754
    %11810 = vmatpush1.bf16.msra.mxu0 %v8753
    %11811 = vmatprep.subr.bf16.mxu0 %v8770
    %11812 = vmatpush1.bf16.msra.mxu0 %v8769
    %11813 = vmatprep.subr.bf16.mxu0 %v8786
    %11814 = vmatpush1.bf16.msra.mxu0 %v8785
    %11815 = vmatprep.mubr.bf16.mxu0 %v4344
    %11816 = vmatmul.mubr.bf16.gmra.mrb[0].mxu0 %v4343
    %v11817 = vpop.f32.mrb[0].mxu0
    %v11818 = vadd.f32 %v5438, %v11817
    %v11819 = vpop.f32.mrb[0].mxu0
    %v11820 = vadd.f32 %v5442, %v11819
    %v11821 = vpop.f32.mrb[0].mxu0
    %v11822 = vadd.f32 %v5438, %v11821
    %v11823 = vpop.f32.mrb[0].mxu0
    %v11824 = vadd.f32 %v5442, %v11823
    %11825 = vdwg.mxu0
    %11826 = vmatprep.subr.bf16.mxu0 %v8802
    %11827 = vmatpush1.bf16.msra.mxu0 %v8801
    %11828 = vmatprep.subr.bf16.mxu0 %v8818
    %11829 = vmatpush1.bf16.msra.mxu0 %v8817
    %11830 = vmatprep.subr.bf16.mxu0 %v8834
    %11831 = vmatpush1.bf16.msra.mxu0 %v8833
    %11832 = vmatprep.subr.bf16.mxu0 %v8850
    %11833 = vmatpush1.bf16.msra.mxu0 %v8849
    %11834 = vmatprep.subr.bf16.mxu0 %v8866
    %11835 = vmatpush1.bf16.msra.mxu0 %v8865
    %11836 = vmatprep.subr.bf16.mxu0 %v8882
    %11837 = vmatpush1.bf16.msra.mxu0 %v8881
    %11838 = vmatprep.subr.bf16.mxu0 %v8898
    %11839 = vmatpush1.bf16.msra.mxu0 %v8897
    %11840 = vmatprep.subr.bf16.mxu0 %v8914
    %11841 = vmatpush1.bf16.msra.mxu0 %v8913
    %11842 = vmatprep.subr.bf16.mxu0 %v8930
    %11843 = vmatpush1.bf16.msra.mxu0 %v8929
    %11844 = vmatprep.subr.bf16.mxu0 %v8946
    %11845 = vmatpush1.bf16.msra.mxu0 %v8945
    %11846 = vmatprep.subr.bf16.mxu0 %v8962
    %11847 = vmatpush1.bf16.msra.mxu0 %v8961
    %11848 = vmatprep.subr.bf16.mxu0 %v8978
    %11849 = vmatpush1.bf16.msra.mxu0 %v8977
    %11850 = vmatprep.subr.bf16.mxu0 %v8994
    %11851 = vmatpush1.bf16.msra.mxu0 %v8993
    %11852 = vmatprep.subr.bf16.mxu0 %v9010
    %11853 = vmatpush1.bf16.msra.mxu0 %v9009
    %11854 = vmatprep.subr.bf16.mxu0 %v9026
    %11855 = vmatpush1.bf16.msra.mxu0 %v9025
    %11856 = vmatprep.subr.bf16.mxu0 %v9042
    %11857 = vmatpush1.bf16.msra.mxu0 %v9041
    %11858 = vmatprep.mubr.bf16.mxu0 %v4346
    %11859 = vmatmul.mubr.bf16.gmra.mrb[0].mxu0 %v4345
    %v11860 = vpop.f32.mrb[0].mxu0
    %v11861 = vadd.f32 %v11818, %v11860
    %v11862 = vpop.f32.mrb[0].mxu0
    %v11863 = vadd.f32 %v11820, %v11862
    %v11864 = vpop.f32.mrb[0].mxu0
    %v11865 = vadd.f32 %v11822, %v11864
    %v11866 = vpop.f32.mrb[0].mxu0
    %v11867 = vadd.f32 %v11824, %v11866
    %11868 = vdwg.mxu0
    %11869 = vmatprep.subr.bf16.mxu0 %v9058
    %11870 = vmatpush1.bf16.msra.mxu0 %v9057
    %11871 = vmatprep.subr.bf16.mxu0 %v9074
    %11872 = vmatpush1.bf16.msra.mxu0 %v9073
    %11873 = vmatprep.subr.bf16.mxu0 %v9090
    %11874 = vmatpush1.bf16.msra.mxu0 %v9089
    %11875 = vmatprep.subr.bf16.mxu0 %v9106
    %11876 = vmatpush1.bf16.msra.mxu0 %v9105
    %11877 = vmatprep.subr.bf16.mxu0 %v9122
    %11878 = vmatpush1.bf16.msra.mxu0 %v9121
    %11879 = vmatprep.subr.bf16.mxu0 %v9138
    %11880 = vmatpush1.bf16.msra.mxu0 %v9137
    %11881 = vmatprep.subr.bf16.mxu0 %v9154
    %11882 = vmatpush1.bf16.msra.mxu0 %v9153
    %11883 = vmatprep.subr.bf16.mxu0 %v9170
    %11884 = vmatpush1.bf16.msra.mxu0 %v9169
    %11885 = vmatprep.subr.bf16.mxu0 %v9186
    %11886 = vmatpush1.bf16.msra.mxu0 %v9185
    %11887 = vmatprep.subr.bf16.mxu0 %v9202
    %11888 = vmatpush1.bf16.msra.mxu0 %v9201
    %11889 = vmatprep.subr.bf16.mxu0 %v9218
    %11890 = vmatpush1.bf16.msra.mxu0 %v9217
    %11891 = vmatprep.subr.bf16.mxu0 %v9234
    %11892 = vmatpush1.bf16.msra.mxu0 %v9233
    %11893 = vmatprep.subr.bf16.mxu0 %v9250
    %11894 = vmatpush1.bf16.msra.mxu0 %v9249
    %11895 = vmatprep.subr.bf16.mxu0 %v9266
    %11896 = vmatpush1.bf16.msra.mxu0 %v9265
    %11897 = vmatprep.subr.bf16.mxu0 %v9282
    %11898 = vmatpush1.bf16.msra.mxu0 %v9281
    %11899 = vmatprep.subr.bf16.mxu0 %v9298
    %11900 = vmatpush1.bf16.msra.mxu0 %v9297
    %11901 = vmatprep.mubr.bf16.mxu0 %v4348
    %11902 = vmatmul.mubr.bf16.gmra.mrb[0].mxu0 %v4347
    %v11903 = vpop.f32.mrb[0].mxu0
    %v11904 = vadd.f32 %v11861, %v11903
    %v11905 = vpop.f32.mrb[0].mxu0
    %v11906 = vadd.f32 %v11863, %v11905
    %v11907 = vpop.f32.mrb[0].mxu0
    %v11908 = vadd.f32 %v11865, %v11907
    %v11909 = vpop.f32.mrb[0].mxu0
    %v11910 = vadd.f32 %v11867, %v11909
    %11911 = vdwg.mxu0
    %11912 = vmatprep.subr.bf16.mxu0 %v9314
    %11913 = vmatpush1.bf16.msra.mxu0 %v9313
    %11914 = vmatprep.subr.bf16.mxu0 %v9330
    %11915 = vmatpush1.bf16.msra.mxu0 %v9329
    %11916 = vmatprep.subr.bf16.mxu0 %v9346
    %11917 = vmatpush1.bf16.msra.mxu0 %v9345
    %11918 = vmatprep.subr.bf16.mxu0 %v9362
    %11919 = vmatpush1.bf16.msra.mxu0 %v9361
    %11920 = vmatprep.subr.bf16.mxu0 %v9378
    %11921 = vmatpush1.bf16.msra.mxu0 %v9377
    %11922 = vmatprep.subr.bf16.mxu0 %v9394
    %11923 = vmatpush1.bf16.msra.mxu0 %v9393
    %11924 = vmatprep.subr.bf16.mxu0 %v9410
    %11925 = vmatpush1.bf16.msra.mxu0 %v9409
    %11926 = vmatprep.subr.bf16.mxu0 %v9426
    %11927 = vmatpush1.bf16.msra.mxu0 %v9425
    %11928 = vmatprep.subr.bf16.mxu0 %v9442
    %11929 = vmatpush1.bf16.msra.mxu0 %v9441
    %11930 = vmatprep.subr.bf16.mxu0 %v9458
    %11931 = vmatpush1.bf16.msra.mxu0 %v9457
    %11932 = vmatprep.subr.bf16.mxu0 %v9474
    %11933 = vmatpush1.bf16.msra.mxu0 %v9473
    %11934 = vmatprep.subr.bf16.mxu0 %v9490
    %11935 = vmatpush1.bf16.msra.mxu0 %v9489
    %11936 = vmatprep.subr.bf16.mxu0 %v9506
    %11937 = vmatpush1.bf16.msra.mxu0 %v9505
    %11938 = vmatprep.subr.bf16.mxu0 %v9522
    %11939 = vmatpush1.bf16.msra.mxu0 %v9521
    %11940 = vmatprep.subr.bf16.mxu0 %v9538
    %11941 = vmatpush1.bf16.msra.mxu0 %v9537
    %11942 = vmatprep.subr.bf16.mxu0 %v9554
    %11943 = vmatpush1.bf16.msra.mxu0 %v9553
    %11944 = vmatprep.mubr.bf16.mxu0 %v4350
    %11945 = vmatmul.mubr.bf16.gmra.mrb[0].mxu0 %v4349
    %v11946 = vpop.f32.mrb[0].mxu0
    %v11947 = vadd.f32 %v11904, %v11946
    %v11948 = vpop.f32.mrb[0].mxu0
    %v11949 = vadd.f32 %v11906, %v11948
    %v11950 = vpop.f32.mrb[0].mxu0
    %v11951 = vadd.f32 %v11908, %v11950
    %v11952 = vpop.f32.mrb[0].mxu0
    %v11953 = vadd.f32 %v11910, %v11952
    %11954 = vdwg.mxu0
    %vm11955 = vcmp.ge.f32.partialorder %v10743, 0.0
    %vm11956 = vcmp.ge.f32.partialorder %v10745, 0.0
    %vm11957 = vcmp.ge.f32.partialorder %v10915, 0.0
    %vm11958 = vcmp.ge.f32.partialorder %v10917, 0.0
    %vm11959 = vcmp.ge.f32.partialorder %v11087, 0.0
    %vm11960 = vcmp.ge.f32.partialorder %v11089, 0.0
    %vm11961 = vcmp.ge.f32.partialorder %v11259, 0.0
    %vm11962 = vcmp.ge.f32.partialorder %v11261, 0.0
    %vm11963 = vcmp.ge.f32.partialorder %v11431, 0.0
    %vm11964 = vcmp.ge.f32.partialorder %v11433, 0.0
    %vm11965 = vcmp.ge.f32.partialorder %v11603, 0.0
    %vm11966 = vcmp.ge.f32.partialorder %v11605, 0.0
    %vm11967 = vcmp.ge.f32.partialorder %v11775, 0.0
    %vm11968 = vcmp.ge.f32.partialorder %v11777, 0.0
    %vm11969 = vcmp.ge.f32.partialorder %v11947, 0.0
    %vm11970 = vcmp.ge.f32.partialorder %v11949, 0.0
    %vm11971 = vcmp.ge.f32.partialorder %v10747, 0.0
    %vm11972 = vcmp.ge.f32.partialorder %v10749, 0.0
    %vm11973 = vcmp.ge.f32.partialorder %v10919, 0.0
    %vm11974 = vcmp.ge.f32.partialorder %v10921, 0.0
    %vm11975 = vcmp.ge.f32.partialorder %v11091, 0.0
    %vm11976 = vcmp.ge.f32.partialorder %v11093, 0.0
    %vm11977 = vcmp.ge.f32.partialorder %v11263, 0.0
    %vm11978 = vcmp.ge.f32.partialorder %v11265, 0.0
    %vm11979 = vcmp.ge.f32.partialorder %v11435, 0.0
    %vm11980 = vcmp.ge.f32.partialorder %v11437, 0.0
    %vm11981 = vcmp.ge.f32.partialorder %v11607, 0.0
    %vm11982 = vcmp.ge.f32.partialorder %v11609, 0.0
    %vm11983 = vcmp.ge.f32.partialorder %v11779, 0.0
    %vm11984 = vcmp.ge.f32.partialorder %v11781, 0.0
    %vm11985 = vcmp.ge.f32.partialorder %v11951, 0.0
    %vm11986 = vcmp.ge.f32.partialorder %v11953, 0.0
    %v11987 = vmul.f32 %v10743, 0.01
    %v11988 = vmul.f32 %v10745, 0.01
    %v11989 = vmul.f32 %v10915, 0.01
    %v11990 = vmul.f32 %v10917, 0.01
    %v11991 = vmul.f32 %v11087, 0.01
    %v11992 = vmul.f32 %v11089, 0.01
    %v11993 = vmul.f32 %v11259, 0.01
    %v11994 = vmul.f32 %v11261, 0.01
    %v11995 = vmul.f32 %v11431, 0.01
    %v11996 = vmul.f32 %v11433, 0.01
    %v11997 = vmul.f32 %v11603, 0.01
    %v11998 = vmul.f32 %v11605, 0.01
    %v11999 = vmul.f32 %v11775, 0.01
    %v12000 = vmul.f32 %v11777, 0.01
    %v12001 = vmul.f32 %v11947, 0.01
    %v12002 = vmul.f32 %v11949, 0.01
    %v12003 = vmul.f32 %v10747, 0.01
    %v12004 = vmul.f32 %v10749, 0.01
    %v12005 = vmul.f32 %v10919, 0.01
    %v12006 = vmul.f32 %v10921, 0.01
    %v12007 = vmul.f32 %v11091, 0.01
    %v12008 = vmul.f32 %v11093, 0.01
    %v12009 = vmul.f32 %v11263, 0.01
    %v12010 = vmul.f32 %v11265, 0.01
    %v12011 = vmul.f32 %v11435, 0.01
    %v12012 = vmul.f32 %v11437, 0.01
    %v12013 = vmul.f32 %v11607, 0.01
    %v12014 = vmul.f32 %v11609, 0.01
    %v12015 = vmul.f32 %v11779, 0.01
    %v12016 = vmul.f32 %v11781, 0.01
    %v12017 = vmul.f32 %v11951, 0.01
    %v12018 = vmul.f32 %v11953, 0.01
    %v12019 = vsel %vm11955, %v10743, %v11987
    %v12020 = vsel %vm11956, %v10745, %v11988
    %v12021 = vsel %vm11957, %v10915, %v11989
    %v12022 = vsel %vm11958, %v10917, %v11990
    %v12023 = vsel %vm11959, %v11087, %v11991
    %v12024 = vsel %vm11960, %v11089, %v11992
    %v12025 = vsel %vm11961, %v11259, %v11993
    %v12026 = vsel %vm11962, %v11261, %v11994
    %v12027 = vsel %vm11963, %v11431, %v11995
    %v12028 = vsel %vm11964, %v11433, %v11996
    %v12029 = vsel %vm11965, %v11603, %v11997
    %v12030 = vsel %vm11966, %v11605, %v11998
    %v12031 = vsel %vm11967, %v11775, %v11999
    %v12032 = vsel %vm11968, %v11777, %v12000
    %v12033 = vsel %vm11969, %v11947, %v12001
    %v12034 = vsel %vm11970, %v11949, %v12002
    %v12035 = vsel %vm11971, %v10747, %v12003
    %v12036 = vsel %vm11972, %v10749, %v12004
    %v12037 = vsel %vm11973, %v10919, %v12005
    %v12038 = vsel %vm11974, %v10921, %v12006
    %v12039 = vsel %vm11975, %v11091, %v12007
    %v12040 = vsel %vm11976, %v11093, %v12008
    %v12041 = vsel %vm11977, %v11263, %v12009
    %v12042 = vsel %vm11978, %v11265, %v12010
    %v12043 = vsel %vm11979, %v11435, %v12011
    %v12044 = vsel %vm11980, %v11437, %v12012
    %v12045 = vsel %vm11981, %v11607, %v12013
    %v12046 = vsel %vm11982, %v11609, %v12014
    %v12047 = vsel %vm11983, %v11779, %v12015
    %v12048 = vsel %vm11984, %v11781, %v12016
    %v12049 = vsel %vm11985, %v11951, %v12017
    %v12050 = vsel %vm11986, %v11953, %v12018
    %v12051 = vpack.c.bf16 %v12035, %v12019
    %v12052 = vpack.c.bf16 %v12036, %v12020
    %v12053 = vpack.c.bf16 %v12037, %v12021
    %v12054 = vpack.c.bf16 %v12038, %v12022
    %v12055 = vpack.c.bf16 %v12039, %v12023
    %v12056 = vpack.c.bf16 %v12040, %v12024
    %v12057 = vpack.c.bf16 %v12041, %v12025
    %v12058 = vpack.c.bf16 %v12042, %v12026
    %v12059 = vpack.c.bf16 %v12043, %v12027
    %v12060 = vpack.c.bf16 %v12044, %v12028
    %v12061 = vpack.c.bf16 %v12045, %v12029
    %v12062 = vpack.c.bf16 %v12046, %v12030
    %v12063 = vpack.c.bf16 %v12047, %v12031
    %v12064 = vpack.c.bf16 %v12048, %v12032
    %v12065 = vpack.c.bf16 %v12049, %v12033
    %v12066 = vpack.c.bf16 %v12050, %v12034
    %v12083 = vunpack.c.l.b16 %v12051
    %v12084 = vunpack.c.l.b16 %v12052
    %v12085 = vunpack.c.l.b16 %v12053
    %v12086 = vunpack.c.l.b16 %v12054
    %v12087 = vunpack.c.l.b16 %v12055
    %v12088 = vunpack.c.l.b16 %v12056
    %v12089 = vunpack.c.l.b16 %v12057
    %v12090 = vunpack.c.l.b16 %v12058
    %v12091 = vunpack.c.l.b16 %v12059
    %v12092 = vunpack.c.l.b16 %v12060
    %v12093 = vunpack.c.l.b16 %v12061
    %v12094 = vunpack.c.l.b16 %v12062
    %v12095 = vunpack.c.l.b16 %v12063
    %v12096 = vunpack.c.l.b16 %v12064
    %v12097 = vunpack.c.l.b16 %v12065
    %v12098 = vunpack.c.l.b16 %v12066
    %v12099 = vunpack.c.h.b16 %v12051
    %v12100 = vunpack.c.h.b16 %v12052
    %v12101 = vunpack.c.h.b16 %v12053
    %v12102 = vunpack.c.h.b16 %v12054
    %v12103 = vunpack.c.h.b16 %v12055
    %v12104 = vunpack.c.h.b16 %v12056
    %v12105 = vunpack.c.h.b16 %v12057
    %v12106 = vunpack.c.h.b16 %v12058
    %v12107 = vunpack.c.h.b16 %v12059
    %v12108 = vunpack.c.h.b16 %v12060
    %v12109 = vunpack.c.h.b16 %v12061
    %v12110 = vunpack.c.h.b16 %v12062
    %v12111 = vunpack.c.h.b16 %v12063
    %v12112 = vunpack.c.h.b16 %v12064
    %v12113 = vunpack.c.h.b16 %v12065
    %v12114 = vunpack.c.h.b16 %v12066
    %v12115 = vpack.c.b16 %v12084, %v12083
    %v12116 = vpack.c.b16 %v12086, %v12085
    %v12117 = vpack.c.b16 %v12088, %v12087
    %v12118 = vpack.c.b16 %v12090, %v12089
    %v12119 = vpack.c.b16 %v12092, %v12091
    %v12120 = vpack.c.b16 %v12094, %v12093
    %v12121 = vpack.c.b16 %v12096, %v12095
    %v12122 = vpack.c.b16 %v12098, %v12097
    %v12123 = vpack.c.b16 %v12100, %v12099
    %v12124 = vpack.c.b16 %v12102, %v12101
    %v12125 = vpack.c.b16 %v12104, %v12103
    %v12126 = vpack.c.b16 %v12106, %v12105
    %v12127 = vpack.c.b16 %v12108, %v12107
    %v12128 = vpack.c.b16 %v12110, %v12109
    %v12129 = vpack.c.b16 %v12112, %v12111
    %v12130 = vpack.c.b16 %v12114, %v12113
    %12147 = vst [vmem:[#allocation14] sm:$0xff] %v12115
    %12148 = vst [vmem:[#allocation14 + $0x8] sm:$0xff] %v12116
    %12149 = vst [vmem:[#allocation14 + $0x10] sm:$0xff] %v12117
    %12150 = vst [vmem:[#allocation14 + $0x18] sm:$0xff] %v12118
    %12151 = vst [vmem:[#allocation14 + $0x20] sm:$0xff] %v12119
    %12152 = vst [vmem:[#allocation14 + $0x28] sm:$0xff] %v12120
    %12153 = vst [vmem:[#allocation14 + $0x30] sm:$0xff] %v12121
    %12154 = vst [vmem:[#allocation14 + $0x38] sm:$0xff] %v12122
    %12155 = vst [vmem:[#allocation14 + $0x40] sm:$0xff] %v12123
    %12156 = vst [vmem:[#allocation14 + $0x48] sm:$0xff] %v12124
    %12157 = vst [vmem:[#allocation14 + $0x50] sm:$0xff] %v12125
    %12158 = vst [vmem:[#allocation14 + $0x58] sm:$0xff] %v12126
    %12159 = vst [vmem:[#allocation14 + $0x60] sm:$0xff] %v12127
    %12160 = vst [vmem:[#allocation14 + $0x68] sm:$0xff] %v12128
    %12161 = vst [vmem:[#allocation14 + $0x70] sm:$0xff] %v12129
    %12162 = vst [vmem:[#allocation14 + $0x78] sm:$0xff] %v12130
    %12163 = vst [vmem:[#allocation15] sm:$0xff] %v12019
    %12164 = vst [vmem:[#allocation15 + $0x8] sm:$0xff] %v12020
    %12165 = vst [vmem:[#allocation15 + $0x10] sm:$0xff] %v12021
    %12166 = vst [vmem:[#allocation15 + $0x18] sm:$0xff] %v12022
    %12167 = vst [vmem:[#allocation15 + $0x20] sm:$0xff] %v12023
    %12168 = vst [vmem:[#allocation15 + $0x28] sm:$0xff] %v12024
    %12169 = vst [vmem:[#allocation15 + $0x30] sm:$0xff] %v12025
    %12170 = vst [vmem:[#allocation15 + $0x38] sm:$0xff] %v12026
    %12171 = vst [vmem:[#allocation15 + $0x40] sm:$0xff] %v12027
    %12172 = vst [vmem:[#allocation15 + $0x48] sm:$0xff] %v12028
    %12173 = vst [vmem:[#allocation15 + $0x50] sm:$0xff] %v12029
    %12174 = vst [vmem:[#allocation15 + $0x58] sm:$0xff] %v12030
    %12175 = vst [vmem:[#allocation15 + $0x60] sm:$0xff] %v12031
    %12176 = vst [vmem:[#allocation15 + $0x68] sm:$0xff] %v12032
    %12177 = vst [vmem:[#allocation15 + $0x70] sm:$0xff] %v12033
    %12178 = vst [vmem:[#allocation15 + $0x78] sm:$0xff] %v12034
    %12179 = vst [vmem:[#allocation15 + $0x80] sm:$0xff] %v12035
    %12180 = vst [vmem:[#allocation15 + $0x88] sm:$0xff] %v12036
    %12181 = vst [vmem:[#allocation15 + $0x90] sm:$0xff] %v12037
    %12182 = vst [vmem:[#allocation15 + $0x98] sm:$0xff] %v12038
    %12183 = vst [vmem:[#allocation15 + $0xa0] sm:$0xff] %v12039
    %12184 = vst [vmem:[#allocation15 + $0xa8] sm:$0xff] %v12040
    %12185 = vst [vmem:[#allocation15 + $0xb0] sm:$0xff] %v12041
    %12186 = vst [vmem:[#allocation15 + $0xb8] sm:$0xff] %v12042
    %12187 = vst [vmem:[#allocation15 + $0xc0] sm:$0xff] %v12043
    %12188 = vst [vmem:[#allocation15 + $0xc8] sm:$0xff] %v12044
    %12189 = vst [vmem:[#allocation15 + $0xd0] sm:$0xff] %v12045
    %12190 = vst [vmem:[#allocation15 + $0xd8] sm:$0xff] %v12046
    %12191 = vst [vmem:[#allocation15 + $0xe0] sm:$0xff] %v12047
    %12192 = vst [vmem:[#allocation15 + $0xe8] sm:$0xff] %v12048
    %12193 = vst [vmem:[#allocation15 + $0xf0] sm:$0xff] %v12049
    %12194 = vst [vmem:[#allocation15 + $0xf8] sm:$0xff] %v12050
    // Predicated region
    $region58: #{tpu_custom_call.1} parent=1 // pred_check
      _
    $region59: #{tpu_custom_call.1} parent=1 // pred_check_branch
      %12196 = sbr.rel (0) target = $region61
    $region60: #{tpu_custom_call.1} parent=1 // pred_region
      %s12198 = ssub.s32 2048, 2048
      %12199 = vsyncadd [#allocation4], %s12198
      %s12200 = sshll.u32 [#allocation14], 4
      %s12201 = int_to_ptr.vmem [resolvable:$true] %s12200
      %12206 = dma.vmem_to_hbm [thread:$0]  %s12201, 2048, %s7, [#allocation4], 1024, 1024, 64
    $region61: #{tpu_custom_call.1} parent=1 // pred_fallthru
      _
    // Predicated region
    $region62: #{tpu_custom_call.1} parent=1 // pred_check
      _
    $region63: #{tpu_custom_call.1} parent=1 // pred_check_branch
      %12208 = sbr.rel (0) target = $region65
    $region64: #{tpu_custom_call.1} parent=1 // pred_region
      %s12210 = ssub.s32 4096, 4096
      %12211 = vsyncadd [#allocation16], %s12210
      %s12212 = sshll.u32 [#allocation15], 4
      %s12213 = int_to_ptr.vmem [resolvable:$true] %s12212
      %12218 = dma.vmem_to_hbm [thread:$0]  %s12213, 4096, %s8, [#allocation16], 2048, 2048, 128
    $region65: #{tpu_custom_call.1} parent=1 // pred_fallthru
      _
    // Predicated region
    $region66: #{tpu_custom_call.1} parent=1 // pred_check
      _
    $region67: #{tpu_custom_call.1} parent=1 // pred_check_branch
      %12220 = sbr.rel (0) target = $region69
    $region68: #{tpu_custom_call.1} parent=1 // pred_region
      %12221 = dma.done [#allocation4], 2048
    $region69: #{tpu_custom_call.1} parent=1 // pred_fallthru
      _
    // Predicated region
    $region70: #{tpu_custom_call.1} parent=1 // pred_check
      _
    $region71: #{tpu_custom_call.1} parent=1 // pred_check_branch
      %12223 = sbr.rel (0) target = $region73
    $region72: #{tpu_custom_call.1} parent=1 // pred_region
      %12224 = dma.done [#allocation16], 4096
    $region73: #{tpu_custom_call.1} parent=1 // pred_fallthru
      _
    %12225 = vsyncpa [#allocation3], 1
    %12226 = vsyncpa [#allocation6], 1
    %12227 = vsyncpa [#allocation9], 1
    %12228 = vsyncpa [#allocation12], 1
    %12229 = vsyncpa [#allocation4], 1
    %12230 = vsyncpa [#allocation16], 1

</llo_original>
